<compile_context>
chip_gen: v7x
topology: tpu7x:2x2x1
jax: 0.10.0
libtpu: 0.0.40
codegen_flags: <defaults>
</compile_context>

<pallas_src>
import functools

import jax
import jax.numpy as jnp
from jax.experimental import pallas as pl
from jax.experimental.pallas import tpu as pltpu


# ----------------------------- padding helpers ------------------------------

def _round_up(x, m):
    return (x + m - 1) // m * m


def _pad_gate_cols(w, hp):
    """(in, 4H) -> (in, 4*hp): zero-pad each gate column block H -> hp (i|f|g|o order kept)."""
    n_in, h4 = w.shape
    h = h4 // 4
    w4 = w.reshape(n_in, 4, h)
    return jnp.pad(w4, ((0, 0), (0, 0), (0, hp - h))).reshape(n_in, 4 * hp)


def _pad_rows(w, hp_in):
    return jnp.pad(w, ((0, hp_in - w.shape[0]), (0, 0)))


def _pad_bias(b, hp):
    h = b.shape[0] // 4
    return jnp.pad(b.reshape(4, h), ((0, 0), (0, hp - h))).reshape(4 * hp)


# --------------------------------- kernel -----------------------------------

def _fused_lstm2_kernel(g1_ref, whh1_ref, wih2_ref, whh2_ref, b2_ref,
                        seq2_ref, h1, c1, h2, c2, *, chunk, hp):
    """One grid step == `chunk` timesteps of BOTH LSTM layers.

    g1_ref:   (chunk, Bp, 4*hp) f32  precomputed x@W_ih1 + b1 for this chunk
    whh1_ref: (hp, 4*hp)  bf16       layer-1 recurrent weights
    wih2_ref: (hp, 4*hp)  bf16       layer-2 input weights
    whh2_ref: (hp, 4*hp)  bf16       layer-2 recurrent weights
    b2_ref:   (1, 4*hp)   f32        layer-2 bias
    seq2_ref: (chunk, Bp, hp) f32    layer-2 hidden states for this chunk
    h1/c1/h2/c2: (Bp, hp) f32 VMEM scratch carried across grid steps.
    """

    @pl.when(pl.program_id(0) == 0)
    def _():
        h1[...] = jnp.zeros_like(h1)
        c1[...] = jnp.zeros_like(c1)
        h2[...] = jnp.zeros_like(h2)
        c2[...] = jnp.zeros_like(c2)

    w_dt = whh1_ref.dtype  # matmul operand dtype (bf16); accumulation is f32

    def cell(gates, c_prev):
        # 128-lane-aligned gate slices (hp is a multiple of 128)
        i_g = jax.nn.sigmoid(gates[:, 0 * hp:1 * hp])
        f_g = jax.nn.sigmoid(gates[:, 1 * hp:2 * hp])
        g_g = jnp.tanh(gates[:, 2 * hp:3 * hp])
        o_g = jax.nn.sigmoid(gates[:, 3 * hp:4 * hp])
        c_new = f_g * c_prev + i_g * g_g
        h_new = o_g * jnp.tanh(c_new)
        return h_new, c_new

    def step(tt, carry):
        # ---- layer 1: input projection already hoisted into g1_ref ----
        gates1 = g1_ref[tt] + jnp.dot(h1[...].astype(w_dt), whh1_ref[...],
                                      preferred_element_type=jnp.float32)
        h1_new, c1_new = cell(gates1, c1[...])
        h1[...] = h1_new
        c1[...] = c1_new

        # ---- layer 2: fed directly from layer-1 hidden (fused, no HBM trip) ----
        gates2 = (jnp.dot(h1_new.astype(w_dt), wih2_ref[...],
                          preferred_element_type=jnp.float32)
                  + jnp.dot(h2[...].astype(w_dt), whh2_ref[...],
                            preferred_element_type=jnp.float32)
                  + b2_ref[...])
        h2_new, c2_new = cell(gates2, c2[...])
        h2[...] = h2_new
        c2[...] = c2_new

        # accumulate into the chunk's output tile; one DMA writeback per chunk
        seq2_ref[tt] = h2_new.astype(seq2_ref.dtype)
        return carry

    jax.lax.fori_loop(0, chunk, step, 0, unroll=True)


# --------------------------------- wrapper ----------------------------------

@jax.jit
def multi_layer_lstm(x, w_ih1, w_hh1, b1, w_ih2, w_hh2, b2):
    """x: (B, T, D) batch-first.  Returns (out, hidden_all):
         out        = last hidden state of layer 2, shape (B, H)
         hidden_all = all hidden states of layer 2, shape (B, T, H)
    """
    B, T, D = x.shape
    H = w_hh1.shape[0]

    # padded sizes: per-gate hidden to 128 lanes, batch to 8 sublanes, time to chunk
    Hp = _round_up(H, 128)
    Bp = _round_up(max(B, 8), 8)
    chunk = min(T, 32)
    Tp = _round_up(T, chunk)

    # padded weights (zero-padded gate blocks keep padded hidden units exactly 0)
    w_dt = jnp.bfloat16
    w_ih1_p = _pad_gate_cols(w_ih1, Hp)                       # (D,  4Hp) f32 (used in XLA)
    w_hh1_p = _pad_rows(_pad_gate_cols(w_hh1, Hp), Hp)        # (Hp, 4Hp)
    b1_p = _pad_bias(b1, Hp)                                  # (4Hp,)
    w_ih2_p = _pad_rows(_pad_gate_cols(w_ih2, Hp), Hp)        # (Hp, 4Hp)
    w_hh2_p = _pad_rows(_pad_gate_cols(w_hh2, Hp), Hp)        # (Hp, 4Hp)
    b2_p = _pad_bias(b2, Hp).reshape(1, 4 * Hp)               # (1, 4Hp)

    # pad batch / time with zeros (padded rows/steps are discarded afterwards)
    x_p = jnp.pad(x, ((0, Bp - B), (0, Tp - T), (0, 0)))      # (Bp, Tp, D)

    # hoisted layer-1 input projection: one big matmul for the whole sequence,
    # written time-major so the kernel indexes timesteps along the leading axis.
    g1 = jnp.einsum('btd,dg->tbg', x_p, w_ih1_p) + b1_p[None, None, :]
    g1 = g1.astype(jnp.float32)                               # (Tp, Bp, 4Hp)

    kernel = functools.partial(_fused_lstm2_kernel, chunk=chunk, hp=Hp)

    grid_spec = pltpu.PrefetchScalarGridSpec(
        num_scalar_prefetch=0,
        grid=(Tp // chunk,),
        in_specs=[
            pl.BlockSpec((chunk, Bp, 4 * Hp), lambda c: (c, 0, 0)),  # g1 chunk
            pl.BlockSpec((Hp, 4 * Hp), lambda c: (0, 0)),            # W_hh1 (resident)
            pl.BlockSpec((Hp, 4 * Hp), lambda c: (0, 0)),            # W_ih2 (resident)
            pl.BlockSpec((Hp, 4 * Hp), lambda c: (0, 0)),            # W_hh2 (resident)
            pl.BlockSpec((1, 4 * Hp), lambda c: (0, 0)),             # bias2 (resident)
        ],
        out_specs=pl.BlockSpec((chunk, Bp, Hp), lambda c: (c, 0, 0)),
        scratch_shapes=[pltpu.VMEM((Bp, Hp), jnp.float32)
                        for _ in range(4)],                          # h1, c1, h2, c2
    )

    seq2 = pl.pallas_call(
        kernel,
        out_shape=jax.ShapeDtypeStruct((Tp, Bp, Hp), jnp.float32),
        grid_spec=grid_spec,
        compiler_params=pltpu.CompilerParams(
            dimension_semantics=("arbitrary",)),   # time recurrence is sequential
    )(g1,
      w_hh1_p.astype(w_dt),
      w_ih2_p.astype(w_dt),
      w_hh2_p.astype(w_dt),
      b2_p.astype(jnp.float32))

    seq2 = seq2[:T, :B, :H]                      # strip time/batch/hidden padding
    out = seq2[T - 1]                            # last hidden of layer 2: (B, H)
    hidden_all = jnp.transpose(seq2, (1, 0, 2))  # (B, T, H)
    return out, hidden_all


# --------------------------- params / reference ------------------------------

def init_lstm_params(key, input_size, hidden_size):
    """PyTorch-style uniform(-1/sqrt(H), 1/sqrt(H)) init; gate order i|f|g|o."""
    k1, k2, k3 = jax.random.split(key, 3)
    bound = 1.0 / jnp.sqrt(jnp.float32(hidden_size))
    w_ih = jax.random.uniform(k1, (input_size, 4 * hidden_size),
                              jnp.float32, -bound, bound)
    w_hh = jax.random.uniform(k2, (hidden_size, 4 * hidden_size),
                              jnp.float32, -bound, bound)
    b = jax.random.uniform(k3, (4 * hidden_size,), jnp.float32, -bound, bound)
    return w_ih, w_hh, b


def _lstm_ref(x_tm, w_ih, w_hh, b):
    """Pure-JAX f32 reference of one LSTM layer (time-major input)."""
    H = w_hh.shape[0]

    def step(carry, x_t):
        h, c = carry
        g = x_t @ w_ih + h @ w_hh + b
        i = jax.nn.sigmoid(g[:, 0 * H:1 * H])
        f = jax.nn.sigmoid(g[:, 1 * H:2 * H])
        gg = jnp.tanh(g[:, 2 * H:3 * H])
        o = jax.nn.sigmoid(g[:, 3 * H:4 * H])
        c = f * c + i * gg
        h = o * jnp.tanh(c)
        return (h, c), h

    B = x_tm.shape[1]
    init = (jnp.zeros((B, H), jnp.float32), jnp.zeros((B, H), jnp.float32))
    (h, _), hs = jax.lax.scan(step, init, x_tm)
    return hs, h


# ----------------------------------- main ------------------------------------

if __name__ == "__main__":
    B, T, D, H = 2, 8, 16, 32

    key = jax.random.PRNGKey(0)
    kx, k1, k2 = jax.random.split(key, 3)
    x = jax.random.normal(kx, (B, T, D), jnp.float32)

    p1 = init_lstm_params(k1, D, H)   # lstm1: input_size -> hidden_size
    p2 = init_lstm_params(k2, H, H)   # lstm2: hidden_size -> hidden_size

    out, hidden_all = multi_layer_lstm(x, *p1, *p2)
    jax.block_until_ready((out, hidden_all))

    assert out.shape == (B, H)
    assert hidden_all.shape == (B, T, H)

    # correctness vs pure-JAX f32 reference (loose tol: kernel uses bf16 weights)
    x_tm = jnp.transpose(x, (1, 0, 2))
    seq1, _ = _lstm_ref(x_tm, *p1)
    seq2, last2 = _lstm_ref(seq1, *p2)
    ref_out = last2
    ref_all = jnp.transpose(seq2, (1, 0, 2))
    assert jnp.allclose(out, ref_out, atol=5e-2, rtol=5e-2)
    assert jnp.allclose(hidden_all, ref_all, atol=5e-2, rtol=5e-2)

    print("KERNEL_OK")
</pallas_src>

<mosaic_0001>
module attributes {stable_mosaic.version = 11 : i64} {
  func.func @_fused_lstm2_kernel(%arg0: i32, %arg1: memref<8x8x512xf32, #tpu.memory_space<vmem>>, %arg2: memref<128x512xbf16, #tpu.memory_space<vmem>>, %arg3: memref<128x512xbf16, #tpu.memory_space<vmem>>, %arg4: memref<128x512xbf16, #tpu.memory_space<vmem>>, %arg5: memref<1x512xf32, #tpu.memory_space<vmem>>, %arg6: memref<8x8x128xf32, #tpu.memory_space<vmem>>, %arg7: memref<8x128xf32, #tpu.memory_space<vmem>>, %arg8: memref<8x128xf32, #tpu.memory_space<vmem>>, %arg9: memref<8x128xf32, #tpu.memory_space<vmem>>, %arg10: memref<8x128xf32, #tpu.memory_space<vmem>>) attributes {dimension_semantics = [#tpu.dimension_semantics<arbitrary>], iteration_bounds = array<i64: 1>, scalar_prefetch = 0 : i64, scratch_operands = 4 : i64, tpu.core_type = #tpu.core_type<tc>, window_params = [{transform_indices = @transform_0, window_bounds = array<i64: 8, 8, 512>}, {pipeline_mode = #tpu.pipeline_mode<synchronous>, transform_indices = @transform_1, window_bounds = array<i64: 128, 512>}, {pipeline_mode = #tpu.pipeline_mode<synchronous>, transform_indices = @transform_2, window_bounds = array<i64: 128, 512>}, {pipeline_mode = #tpu.pipeline_mode<synchronous>, transform_indices = @transform_3, window_bounds = array<i64: 128, 512>}, {pipeline_mode = #tpu.pipeline_mode<synchronous>, transform_indices = @transform_4, window_bounds = array<i64: 1, 512>}, {transform_indices = @transform_5, window_bounds = array<i64: 8, 8, 128>}]} {
    %c0_i32 = arith.constant 0 : i32
    %0 = arith.cmpi eq, %arg0, %c0_i32 : i32
    %1 = arith.extui %0 : i1 to i32
    %c0_i32_0 = arith.constant 0 : i32
    %2 = arith.cmpi ne, %1, %c0_i32_0 : i32
    scf.if %2 {
      %cst_296 = arith.constant 0.000000e+00 : f32
      %635 = vector.broadcast %cst_296 : f32 to vector<8x128xf32>
      %c0_297 = arith.constant 0 : index
      %c0_298 = arith.constant 0 : index
      %636 = vector.load %arg7[%c0_297, %c0_298] : memref<8x128xf32, #tpu.memory_space<vmem>>, vector<8x128xf32>
      tpu.vector_store %arg7[%c0_297, %c0_298], %635 {strides = array<i32>} : memref<8x128xf32, #tpu.memory_space<vmem>>, vector<8x128xf32>,
      %cst_299 = arith.constant 0.000000e+00 : f32
      %637 = vector.broadcast %cst_299 : f32 to vector<8x128xf32>
      %c0_300 = arith.constant 0 : index
      %c0_301 = arith.constant 0 : index
      %638 = vector.load %arg8[%c0_300, %c0_301] : memref<8x128xf32, #tpu.memory_space<vmem>>, vector<8x128xf32>
      tpu.vector_store %arg8[%c0_300, %c0_301], %637 {strides = array<i32>} : memref<8x128xf32, #tpu.memory_space<vmem>>, vector<8x128xf32>,
      %cst_302 = arith.constant 0.000000e+00 : f32
      %639 = vector.broadcast %cst_302 : f32 to vector<8x128xf32>
      %c0_303 = arith.constant 0 : index
      %c0_304 = arith.constant 0 : index
      %640 = vector.load %arg9[%c0_303, %c0_304] : memref<8x128xf32, #tpu.memory_space<vmem>>, vector<8x128xf32>
      tpu.vector_store %arg9[%c0_303, %c0_304], %639 {strides = array<i32>} : memref<8x128xf32, #tpu.memory_space<vmem>>, vector<8x128xf32>,
      %cst_305 = arith.constant 0.000000e+00 : f32
      %641 = vector.broadcast %cst_305 : f32 to vector<8x128xf32>
      %c0_306 = arith.constant 0 : index
      %c0_307 = arith.constant 0 : index
      %642 = vector.load %arg10[%c0_306, %c0_307] : memref<8x128xf32, #tpu.memory_space<vmem>>, vector<8x128xf32>
      tpu.vector_store %arg10[%c0_306, %c0_307], %641 {strides = array<i32>} : memref<8x128xf32, #tpu.memory_space<vmem>>, vector<8x128xf32>,
    } else {
    }
    %c0_i32_1 = arith.constant 0 : i32
    %3 = arith.index_cast %c0_i32_1 : i32 to index
    %c0 = arith.constant 0 : index
    %c0_2 = arith.constant 0 : index
    %4 = vector.load %arg1[%3, %c0, %c0_2] : memref<8x8x512xf32, #tpu.memory_space<vmem>>, vector<1x8x512xf32>
    %5 = vector.shape_cast %4 : vector<1x8x512xf32> to vector<8x512xf32>
    %c0_3 = arith.constant 0 : index
    %c0_4 = arith.constant 0 : index
    %6 = vector.load %arg7[%c0_3, %c0_4] : memref<8x128xf32, #tpu.memory_space<vmem>>, vector<8x128xf32>
    %7 = arith.truncf %6 : vector<8x128xf32> to vector<8x128xbf16>
    %c0_5 = arith.constant 0 : index
    %c0_6 = arith.constant 0 : index
    %8 = vector.load %arg2[%c0_5, %c0_6] : memref<128x512xbf16, #tpu.memory_space<vmem>>, vector<128x512xbf16>
    %cst = arith.constant dense<0.000000e+00> : vector<8x512xf32>
    %9 = tpu.matmul %7, %8, %cst {dimension_numbers = #tpu.dot_dimension_numbers<[1], [0], [0], [1], [0, 0, 1, 1], [], []>} : vector<8x128xbf16>, vector<128x512xbf16>, vector<8x512xf32> -> vector<8x512xf32>
    %10 = arith.addf %5, %9 : vector<8x512xf32>
    %c0_7 = arith.constant 0 : index
    %c0_8 = arith.constant 0 : index
    %11 = vector.load %arg8[%c0_7, %c0_8] : memref<8x128xf32, #tpu.memory_space<vmem>>, vector<8x128xf32>
    %12 = vector.extract_strided_slice %10 {offsets = [0, 0], sizes = [8, 128], strides = [1, 1]} : vector<8x512xf32> to vector<8x128xf32>
    %13 = arith.negf %12 : vector<8x128xf32>
    %14 = math.exp %13 : vector<8x128xf32>
    %cst_9 = arith.constant 1.000000e+00 : f32
    %15 = vector.broadcast %cst_9 : f32 to vector<8x128xf32>
    %16 = arith.addf %15, %14 : vector<8x128xf32>
    %17 = arith.divf %15, %16 : vector<8x128xf32>
    %18 = vector.extract_strided_slice %10 {offsets = [0, 128], sizes = [8, 128], strides = [1, 1]} : vector<8x512xf32> to vector<8x128xf32>
    %19 = arith.negf %18 : vector<8x128xf32>
    %20 = math.exp %19 : vector<8x128xf32>
    %cst_10 = arith.constant 1.000000e+00 : f32
    %21 = vector.broadcast %cst_10 : f32 to vector<8x128xf32>
    %22 = arith.addf %21, %20 : vector<8x128xf32>
    %23 = arith.divf %21, %22 : vector<8x128xf32>
    %24 = vector.extract_strided_slice %10 {offsets = [0, 256], sizes = [8, 128], strides = [1, 1]} : vector<8x512xf32> to vector<8x128xf32>
    %25 = math.tanh %24 : vector<8x128xf32>
    %26 = vector.extract_strided_slice %10 {offsets = [0, 384], sizes = [8, 128], strides = [1, 1]} : vector<8x512xf32> to vector<8x128xf32>
    %27 = arith.negf %26 : vector<8x128xf32>
    %28 = math.exp %27 : vector<8x128xf32>
    %cst_11 = arith.constant 1.000000e+00 : f32
    %29 = vector.broadcast %cst_11 : f32 to vector<8x128xf32>
    %30 = arith.addf %29, %28 : vector<8x128xf32>
    %31 = arith.divf %29, %30 : vector<8x128xf32>
    %32 = arith.mulf %23, %11 : vector<8x128xf32>
    %33 = arith.mulf %17, %25 : vector<8x128xf32>
    %34 = arith.addf %32, %33 : vector<8x128xf32>
    %35 = math.tanh %34 : vector<8x128xf32>
    %36 = arith.mulf %31, %35 : vector<8x128xf32>
    %c0_12 = arith.constant 0 : index
    %c0_13 = arith.constant 0 : index
    %37 = vector.load %arg7[%c0_12, %c0_13] : memref<8x128xf32, #tpu.memory_space<vmem>>, vector<8x128xf32>
    tpu.vector_store %arg7[%c0_12, %c0_13], %36 {strides = array<i32>} : memref<8x128xf32, #tpu.memory_space<vmem>>, vector<8x128xf32>,
    %c0_14 = arith.constant 0 : index
    %c0_15 = arith.constant 0 : index
    %38 = vector.load %arg8[%c0_14, %c0_15] : memref<8x128xf32, #tpu.memory_space<vmem>>, vector<8x128xf32>
    tpu.vector_store %arg8[%c0_14, %c0_15], %34 {strides = array<i32>} : memref<8x128xf32, #tpu.memory_space<vmem>>, vector<8x128xf32>,
    %39 = arith.truncf %36 : vector<8x128xf32> to vector<8x128xbf16>
    %c0_16 = arith.constant 0 : index
    %c0_17 = arith.constant 0 : index
    %40 = vector.load %arg3[%c0_16, %c0_17] : memref<128x512xbf16, #tpu.memory_space<vmem>>, vector<128x512xbf16>
    %cst_18 = arith.constant dense<0.000000e+00> : vector<8x512xf32>
    %41 = tpu.matmul %39, %40, %cst_18 {dimension_numbers = #tpu.dot_dimension_numbers<[1], [0], [0], [1], [0, 0, 1, 1], [], []>} : vector<8x128xbf16>, vector<128x512xbf16>, vector<8x512xf32> -> vector<8x512xf32>
    %c0_19 = arith.constant 0 : index
    %c0_20 = arith.constant 0 : index
    %42 = vector.load %arg9[%c0_19, %c0_20] : memref<8x128xf32, #tpu.memory_space<vmem>>, vector<8x128xf32>
    %43 = arith.truncf %42 : vector<8x128xf32> to vector<8x128xbf16>
    %c0_21 = arith.constant 0 : index
    %c0_22 = arith.constant 0 : index
    %44 = vector.load %arg4[%c0_21, %c0_22] : memref<128x512xbf16, #tpu.memory_space<vmem>>, vector<128x512xbf16>
    %cst_23 = arith.constant dense<0.000000e+00> : vector<8x512xf32>
    %45 = tpu.matmul %43, %44, %cst_23 {dimension_numbers = #tpu.dot_dimension_numbers<[1], [0], [0], [1], [0, 0, 1, 1], [], []>} : vector<8x128xbf16>, vector<128x512xbf16>, vector<8x512xf32> -> vector<8x512xf32>
    %46 = arith.addf %41, %45 : vector<8x512xf32>
    %c0_24 = arith.constant 0 : index
    %c0_25 = arith.constant 0 : index
    %47 = vector.load %arg5[%c0_24, %c0_25] : memref<1x512xf32, #tpu.memory_space<vmem>>, vector<1x512xf32>
    %48 = vector.broadcast %47 : vector<1x512xf32> to vector<8x512xf32>
    %49 = arith.addf %46, %48 : vector<8x512xf32>
    %c0_26 = arith.constant 0 : index
    %c0_27 = arith.constant 0 : index
    %50 = vector.load %arg10[%c0_26, %c0_27] : memref<8x128xf32, #tpu.memory_space<vmem>>, vector<8x128xf32>
    %51 = vector.extract_strided_slice %49 {offsets = [0, 0], sizes = [8, 128], strides = [1, 1]} : vector<8x512xf32> to vector<8x128xf32>
    %52 = arith.negf %51 : vector<8x128xf32>
    %53 = math.exp %52 : vector<8x128xf32>
    %cst_28 = arith.constant 1.000000e+00 : f32
    %54 = vector.broadcast %cst_28 : f32 to vector<8x128xf32>
    %55 = arith.addf %54, %53 : vector<8x128xf32>
    %56 = arith.divf %54, %55 : vector<8x128xf32>
    %57 = vector.extract_strided_slice %49 {offsets = [0, 128], sizes = [8, 128], strides = [1, 1]} : vector<8x512xf32> to vector<8x128xf32>
    %58 = arith.negf %57 : vector<8x128xf32>
    %59 = math.exp %58 : vector<8x128xf32>
    %cst_29 = arith.constant 1.000000e+00 : f32
    %60 = vector.broadcast %cst_29 : f32 to vector<8x128xf32>
    %61 = arith.addf %60, %59 : vector<8x128xf32>
    %62 = arith.divf %60, %61 : vector<8x128xf32>
    %63 = vector.extract_strided_slice %49 {offsets = [0, 256], sizes = [8, 128], strides = [1, 1]} : vector<8x512xf32> to vector<8x128xf32>
    %64 = math.tanh %63 : vector<8x128xf32>
    %65 = vector.extract_strided_slice %49 {offsets = [0, 384], sizes = [8, 128], strides = [1, 1]} : vector<8x512xf32> to vector<8x128xf32>
    %66 = arith.negf %65 : vector<8x128xf32>
    %67 = math.exp %66 : vector<8x128xf32>
    %cst_30 = arith.constant 1.000000e+00 : f32
    %68 = vector.broadcast %cst_30 : f32 to vector<8x128xf32>
    %69 = arith.addf %68, %67 : vector<8x128xf32>
    %70 = arith.divf %68, %69 : vector<8x128xf32>
    %71 = arith.mulf %62, %50 : vector<8x128xf32>
    %72 = arith.mulf %56, %64 : vector<8x128xf32>
    %73 = arith.addf %71, %72 : vector<8x128xf32>
    %74 = math.tanh %73 : vector<8x128xf32>
    %75 = arith.mulf %70, %74 : vector<8x128xf32>
    %c0_31 = arith.constant 0 : index
    %c0_32 = arith.constant 0 : index
    %76 = vector.load %arg9[%c0_31, %c0_32] : memref<8x128xf32, #tpu.memory_space<vmem>>, vector<8x128xf32>
    tpu.vector_store %arg9[%c0_31, %c0_32], %75 {strides = array<i32>} : memref<8x128xf32, #tpu.memory_space<vmem>>, vector<8x128xf32>,
    %c0_33 = arith.constant 0 : index
    %c0_34 = arith.constant 0 : index
    %77 = vector.load %arg10[%c0_33, %c0_34] : memref<8x128xf32, #tpu.memory_space<vmem>>, vector<8x128xf32>
    tpu.vector_store %arg10[%c0_33, %c0_34], %73 {strides = array<i32>} : memref<8x128xf32, #tpu.memory_space<vmem>>, vector<8x128xf32>,
    %78 = arith.index_cast %c0_i32_1 : i32 to index
    %c0_35 = arith.constant 0 : index
    %c0_36 = arith.constant 0 : index
    %79 = vector.load %arg6[%78, %c0_35, %c0_36] : memref<8x8x128xf32, #tpu.memory_space<vmem>>, vector<1x8x128xf32>
    %80 = vector.shape_cast %79 : vector<1x8x128xf32> to vector<8x128xf32>
    %81 = vector.shape_cast %75 : vector<8x128xf32> to vector<1x8x128xf32>
    tpu.vector_store %arg6[%78, %c0_35, %c0_36], %81 {strides = array<i32>} : memref<8x8x128xf32, #tpu.memory_space<vmem>>, vector<1x8x128xf32>,
    %c1_i32 = arith.constant 1 : i32
    %82 = arith.index_cast %c1_i32 : i32 to index
    %c0_37 = arith.constant 0 : index
    %c0_38 = arith.constant 0 : index
    %83 = vector.load %arg1[%82, %c0_37, %c0_38] : memref<8x8x512xf32, #tpu.memory_space<vmem>>, vector<1x8x512xf32>
    %84 = vector.shape_cast %83 : vector<1x8x512xf32> to vector<8x512xf32>
    %c0_39 = arith.constant 0 : index
    %c0_40 = arith.constant 0 : index
    %85 = vector.load %arg7[%c0_39, %c0_40] : memref<8x128xf32, #tpu.memory_space<vmem>>, vector<8x128xf32>
    %86 = arith.truncf %85 : vector<8x128xf32> to vector<8x128xbf16>
    %c0_41 = arith.constant 0 : index
    %c0_42 = arith.constant 0 : index
    %87 = vector.load %arg2[%c0_41, %c0_42] : memref<128x512xbf16, #tpu.memory_space<vmem>>, vector<128x512xbf16>
    %cst_43 = arith.constant dense<0.000000e+00> : vector<8x512xf32>
    %88 = tpu.matmul %86, %87, %cst_43 {dimension_numbers = #tpu.dot_dimension_numbers<[1], [0], [0], [1], [0, 0, 1, 1], [], []>} : vector<8x128xbf16>, vector<128x512xbf16>, vector<8x512xf32> -> vector<8x512xf32>
    %89 = arith.addf %84, %88 : vector<8x512xf32>
    %c0_44 = arith.constant 0 : index
    %c0_45 = arith.constant 0 : index
    %90 = vector.load %arg8[%c0_44, %c0_45] : memref<8x128xf32, #tpu.memory_space<vmem>>, vector<8x128xf32>
    %91 = vector.extract_strided_slice %89 {offsets = [0, 0], sizes = [8, 128], strides = [1, 1]} : vector<8x512xf32> to vector<8x128xf32>
    %92 = arith.negf %91 : vector<8x128xf32>
    %93 = math.exp %92 : vector<8x128xf32>
    %cst_46 = arith.constant 1.000000e+00 : f32
    %94 = vector.broadcast %cst_46 : f32 to vector<8x128xf32>
    %95 = arith.addf %94, %93 : vector<8x128xf32>
    %96 = arith.divf %94, %95 : vector<8x128xf32>
    %97 = vector.extract_strided_slice %89 {offsets = [0, 128], sizes = [8, 128], strides = [1, 1]} : vector<8x512xf32> to vector<8x128xf32>
    %98 = arith.negf %97 : vector<8x128xf32>
    %99 = math.exp %98 : vector<8x128xf32>
    %cst_47 = arith.constant 1.000000e+00 : f32
    %100 = vector.broadcast %cst_47 : f32 to vector<8x128xf32>
    %101 = arith.addf %100, %99 : vector<8x128xf32>
    %102 = arith.divf %100, %101 : vector<8x128xf32>
    %103 = vector.extract_strided_slice %89 {offsets = [0, 256], sizes = [8, 128], strides = [1, 1]} : vector<8x512xf32> to vector<8x128xf32>
    %104 = math.tanh %103 : vector<8x128xf32>
    %105 = vector.extract_strided_slice %89 {offsets = [0, 384], sizes = [8, 128], strides = [1, 1]} : vector<8x512xf32> to vector<8x128xf32>
    %106 = arith.negf %105 : vector<8x128xf32>
    %107 = math.exp %106 : vector<8x128xf32>
    %cst_48 = arith.constant 1.000000e+00 : f32
    %108 = vector.broadcast %cst_48 : f32 to vector<8x128xf32>
    %109 = arith.addf %108, %107 : vector<8x128xf32>
    %110 = arith.divf %108, %109 : vector<8x128xf32>
    %111 = arith.mulf %102, %90 : vector<8x128xf32>
    %112 = arith.mulf %96, %104 : vector<8x128xf32>
    %113 = arith.addf %111, %112 : vector<8x128xf32>
    %114 = math.tanh %113 : vector<8x128xf32>
    %115 = arith.mulf %110, %114 : vector<8x128xf32>
    %c0_49 = arith.constant 0 : index
    %c0_50 = arith.constant 0 : index
    %116 = vector.load %arg7[%c0_49, %c0_50] : memref<8x128xf32, #tpu.memory_space<vmem>>, vector<8x128xf32>
    tpu.vector_store %arg7[%c0_49, %c0_50], %115 {strides = array<i32>} : memref<8x128xf32, #tpu.memory_space<vmem>>, vector<8x128xf32>,
    %c0_51 = arith.constant 0 : index
    %c0_52 = arith.constant 0 : index
    %117 = vector.load %arg8[%c0_51, %c0_52] : memref<8x128xf32, #tpu.memory_space<vmem>>, vector<8x128xf32>
    tpu.vector_store %arg8[%c0_51, %c0_52], %113 {strides = array<i32>} : memref<8x128xf32, #tpu.memory_space<vmem>>, vector<8x128xf32>,
    %118 = arith.truncf %115 : vector<8x128xf32> to vector<8x128xbf16>
    %c0_53 = arith.constant 0 : index
    %c0_54 = arith.constant 0 : index
    %119 = vector.load %arg3[%c0_53, %c0_54] : memref<128x512xbf16, #tpu.memory_space<vmem>>, vector<128x512xbf16>
    %cst_55 = arith.constant dense<0.000000e+00> : vector<8x512xf32>
    %120 = tpu.matmul %118, %119, %cst_55 {dimension_numbers = #tpu.dot_dimension_numbers<[1], [0], [0], [1], [0, 0, 1, 1], [], []>} : vector<8x128xbf16>, vector<128x512xbf16>, vector<8x512xf32> -> vector<8x512xf32>
    %c0_56 = arith.constant 0 : index
    %c0_57 = arith.constant 0 : index
    %121 = vector.load %arg9[%c0_56, %c0_57] : memref<8x128xf32, #tpu.memory_space<vmem>>, vector<8x128xf32>
    %122 = arith.truncf %121 : vector<8x128xf32> to vector<8x128xbf16>
    %c0_58 = arith.constant 0 : index
    %c0_59 = arith.constant 0 : index
    %123 = vector.load %arg4[%c0_58, %c0_59] : memref<128x512xbf16, #tpu.memory_space<vmem>>, vector<128x512xbf16>
    %cst_60 = arith.constant dense<0.000000e+00> : vector<8x512xf32>
    %124 = tpu.matmul %122, %123, %cst_60 {dimension_numbers = #tpu.dot_dimension_numbers<[1], [0], [0], [1], [0, 0, 1, 1], [], []>} : vector<8x128xbf16>, vector<128x512xbf16>, vector<8x512xf32> -> vector<8x512xf32>
    %125 = arith.addf %120, %124 : vector<8x512xf32>
    %c0_61 = arith.constant 0 : index
    %c0_62 = arith.constant 0 : index
    %126 = vector.load %arg5[%c0_61, %c0_62] : memref<1x512xf32, #tpu.memory_space<vmem>>, vector<1x512xf32>
    %127 = vector.broadcast %126 : vector<1x512xf32> to vector<8x512xf32>
    %128 = arith.addf %125, %127 : vector<8x512xf32>
    %c0_63 = arith.constant 0 : index
    %c0_64 = arith.constant 0 : index
    %129 = vector.load %arg10[%c0_63, %c0_64] : memref<8x128xf32, #tpu.memory_space<vmem>>, vector<8x128xf32>
    %130 = vector.extract_strided_slice %128 {offsets = [0, 0], sizes = [8, 128], strides = [1, 1]} : vector<8x512xf32> to vector<8x128xf32>
    %131 = arith.negf %130 : vector<8x128xf32>
    %132 = math.exp %131 : vector<8x128xf32>
    %cst_65 = arith.constant 1.000000e+00 : f32
    %133 = vector.broadcast %cst_65 : f32 to vector<8x128xf32>
    %134 = arith.addf %133, %132 : vector<8x128xf32>
    %135 = arith.divf %133, %134 : vector<8x128xf32>
    %136 = vector.extract_strided_slice %128 {offsets = [0, 128], sizes = [8, 128], strides = [1, 1]} : vector<8x512xf32> to vector<8x128xf32>
    %137 = arith.negf %136 : vector<8x128xf32>
    %138 = math.exp %137 : vector<8x128xf32>
    %cst_66 = arith.constant 1.000000e+00 : f32
    %139 = vector.broadcast %cst_66 : f32 to vector<8x128xf32>
    %140 = arith.addf %139, %138 : vector<8x128xf32>
    %141 = arith.divf %139, %140 : vector<8x128xf32>
    %142 = vector.extract_strided_slice %128 {offsets = [0, 256], sizes = [8, 128], strides = [1, 1]} : vector<8x512xf32> to vector<8x128xf32>
    %143 = math.tanh %142 : vector<8x128xf32>
    %144 = vector.extract_strided_slice %128 {offsets = [0, 384], sizes = [8, 128], strides = [1, 1]} : vector<8x512xf32> to vector<8x128xf32>
    %145 = arith.negf %144 : vector<8x128xf32>
    %146 = math.exp %145 : vector<8x128xf32>
    %cst_67 = arith.constant 1.000000e+00 : f32
    %147 = vector.broadcast %cst_67 : f32 to vector<8x128xf32>
    %148 = arith.addf %147, %146 : vector<8x128xf32>
    %149 = arith.divf %147, %148 : vector<8x128xf32>
    %150 = arith.mulf %141, %129 : vector<8x128xf32>
    %151 = arith.mulf %135, %143 : vector<8x128xf32>
    %152 = arith.addf %150, %151 : vector<8x128xf32>
    %153 = math.tanh %152 : vector<8x128xf32>
    %154 = arith.mulf %149, %153 : vector<8x128xf32>
    %c0_68 = arith.constant 0 : index
    %c0_69 = arith.constant 0 : index
    %155 = vector.load %arg9[%c0_68, %c0_69] : memref<8x128xf32, #tpu.memory_space<vmem>>, vector<8x128xf32>
    tpu.vector_store %arg9[%c0_68, %c0_69], %154 {strides = array<i32>} : memref<8x128xf32, #tpu.memory_space<vmem>>, vector<8x128xf32>,
    %c0_70 = arith.constant 0 : index
    %c0_71 = arith.constant 0 : index
    %156 = vector.load %arg10[%c0_70, %c0_71] : memref<8x128xf32, #tpu.memory_space<vmem>>, vector<8x128xf32>
    tpu.vector_store %arg10[%c0_70, %c0_71], %152 {strides = array<i32>} : memref<8x128xf32, #tpu.memory_space<vmem>>, vector<8x128xf32>,
    %157 = arith.index_cast %c1_i32 : i32 to index
    %c0_72 = arith.constant 0 : index
    %c0_73 = arith.constant 0 : index
    %158 = vector.load %arg6[%157, %c0_72, %c0_73] : memref<8x8x128xf32, #tpu.memory_space<vmem>>, vector<1x8x128xf32>
    %159 = vector.shape_cast %158 : vector<1x8x128xf32> to vector<8x128xf32>
    %160 = vector.shape_cast %154 : vector<8x128xf32> to vector<1x8x128xf32>
    tpu.vector_store %arg6[%157, %c0_72, %c0_73], %160 {strides = array<i32>} : memref<8x8x128xf32, #tpu.memory_space<vmem>>, vector<1x8x128xf32>,
    %c2_i32 = arith.constant 2 : i32
    %161 = arith.index_cast %c2_i32 : i32 to index
    %c0_74 = arith.constant 0 : index
    %c0_75 = arith.constant 0 : index
    %162 = vector.load %arg1[%161, %c0_74, %c0_75] : memref<8x8x512xf32, #tpu.memory_space<vmem>>, vector<1x8x512xf32>
    %163 = vector.shape_cast %162 : vector<1x8x512xf32> to vector<8x512xf32>
    %c0_76 = arith.constant 0 : index
    %c0_77 = arith.constant 0 : index
    %164 = vector.load %arg7[%c0_76, %c0_77] : memref<8x128xf32, #tpu.memory_space<vmem>>, vector<8x128xf32>
    %165 = arith.truncf %164 : vector<8x128xf32> to vector<8x128xbf16>
    %c0_78 = arith.constant 0 : index
    %c0_79 = arith.constant 0 : index
    %166 = vector.load %arg2[%c0_78, %c0_79] : memref<128x512xbf16, #tpu.memory_space<vmem>>, vector<128x512xbf16>
    %cst_80 = arith.constant dense<0.000000e+00> : vector<8x512xf32>
    %167 = tpu.matmul %165, %166, %cst_80 {dimension_numbers = #tpu.dot_dimension_numbers<[1], [0], [0], [1], [0, 0, 1, 1], [], []>} : vector<8x128xbf16>, vector<128x512xbf16>, vector<8x512xf32> -> vector<8x512xf32>
    %168 = arith.addf %163, %167 : vector<8x512xf32>
    %c0_81 = arith.constant 0 : index
    %c0_82 = arith.constant 0 : index
    %169 = vector.load %arg8[%c0_81, %c0_82] : memref<8x128xf32, #tpu.memory_space<vmem>>, vector<8x128xf32>
    %170 = vector.extract_strided_slice %168 {offsets = [0, 0], sizes = [8, 128], strides = [1, 1]} : vector<8x512xf32> to vector<8x128xf32>
    %171 = arith.negf %170 : vector<8x128xf32>
    %172 = math.exp %171 : vector<8x128xf32>
    %cst_83 = arith.constant 1.000000e+00 : f32
    %173 = vector.broadcast %cst_83 : f32 to vector<8x128xf32>
    %174 = arith.addf %173, %172 : vector<8x128xf32>
    %175 = arith.divf %173, %174 : vector<8x128xf32>
    %176 = vector.extract_strided_slice %168 {offsets = [0, 128], sizes = [8, 128], strides = [1, 1]} : vector<8x512xf32> to vector<8x128xf32>
    %177 = arith.negf %176 : vector<8x128xf32>
    %178 = math.exp %177 : vector<8x128xf32>
    %cst_84 = arith.constant 1.000000e+00 : f32
    %179 = vector.broadcast %cst_84 : f32 to vector<8x128xf32>
    %180 = arith.addf %179, %178 : vector<8x128xf32>
    %181 = arith.divf %179, %180 : vector<8x128xf32>
    %182 = vector.extract_strided_slice %168 {offsets = [0, 256], sizes = [8, 128], strides = [1, 1]} : vector<8x512xf32> to vector<8x128xf32>
    %183 = math.tanh %182 : vector<8x128xf32>
    %184 = vector.extract_strided_slice %168 {offsets = [0, 384], sizes = [8, 128], strides = [1, 1]} : vector<8x512xf32> to vector<8x128xf32>
    %185 = arith.negf %184 : vector<8x128xf32>
    %186 = math.exp %185 : vector<8x128xf32>
    %cst_85 = arith.constant 1.000000e+00 : f32
    %187 = vector.broadcast %cst_85 : f32 to vector<8x128xf32>
    %188 = arith.addf %187, %186 : vector<8x128xf32>
    %189 = arith.divf %187, %188 : vector<8x128xf32>
    %190 = arith.mulf %181, %169 : vector<8x128xf32>
    %191 = arith.mulf %175, %183 : vector<8x128xf32>
    %192 = arith.addf %190, %191 : vector<8x128xf32>
    %193 = math.tanh %192 : vector<8x128xf32>
    %194 = arith.mulf %189, %193 : vector<8x128xf32>
    %c0_86 = arith.constant 0 : index
    %c0_87 = arith.constant 0 : index
    %195 = vector.load %arg7[%c0_86, %c0_87] : memref<8x128xf32, #tpu.memory_space<vmem>>, vector<8x128xf32>
    tpu.vector_store %arg7[%c0_86, %c0_87], %194 {strides = array<i32>} : memref<8x128xf32, #tpu.memory_space<vmem>>, vector<8x128xf32>,
    %c0_88 = arith.constant 0 : index
    %c0_89 = arith.constant 0 : index
    %196 = vector.load %arg8[%c0_88, %c0_89] : memref<8x128xf32, #tpu.memory_space<vmem>>, vector<8x128xf32>
    tpu.vector_store %arg8[%c0_88, %c0_89], %192 {strides = array<i32>} : memref<8x128xf32, #tpu.memory_space<vmem>>, vector<8x128xf32>,
    %197 = arith.truncf %194 : vector<8x128xf32> to vector<8x128xbf16>
    %c0_90 = arith.constant 0 : index
    %c0_91 = arith.constant 0 : index
    %198 = vector.load %arg3[%c0_90, %c0_91] : memref<128x512xbf16, #tpu.memory_space<vmem>>, vector<128x512xbf16>
    %cst_92 = arith.constant dense<0.000000e+00> : vector<8x512xf32>
    %199 = tpu.matmul %197, %198, %cst_92 {dimension_numbers = #tpu.dot_dimension_numbers<[1], [0], [0], [1], [0, 0, 1, 1], [], []>} : vector<8x128xbf16>, vector<128x512xbf16>, vector<8x512xf32> -> vector<8x512xf32>
    %c0_93 = arith.constant 0 : index
    %c0_94 = arith.constant 0 : index
    %200 = vector.load %arg9[%c0_93, %c0_94] : memref<8x128xf32, #tpu.memory_space<vmem>>, vector<8x128xf32>
    %201 = arith.truncf %200 : vector<8x128xf32> to vector<8x128xbf16>
    %c0_95 = arith.constant 0 : index
    %c0_96 = arith.constant 0 : index
    %202 = vector.load %arg4[%c0_95, %c0_96] : memref<128x512xbf16, #tpu.memory_space<vmem>>, vector<128x512xbf16>
    %cst_97 = arith.constant dense<0.000000e+00> : vector<8x512xf32>
    %203 = tpu.matmul %201, %202, %cst_97 {dimension_numbers = #tpu.dot_dimension_numbers<[1], [0], [0], [1], [0, 0, 1, 1], [], []>} : vector<8x128xbf16>, vector<128x512xbf16>, vector<8x512xf32> -> vector<8x512xf32>
    %204 = arith.addf %199, %203 : vector<8x512xf32>
    %c0_98 = arith.constant 0 : index
    %c0_99 = arith.constant 0 : index
    %205 = vector.load %arg5[%c0_98, %c0_99] : memref<1x512xf32, #tpu.memory_space<vmem>>, vector<1x512xf32>
    %206 = vector.broadcast %205 : vector<1x512xf32> to vector<8x512xf32>
    %207 = arith.addf %204, %206 : vector<8x512xf32>
    %c0_100 = arith.constant 0 : index
    %c0_101 = arith.constant 0 : index
    %208 = vector.load %arg10[%c0_100, %c0_101] : memref<8x128xf32, #tpu.memory_space<vmem>>, vector<8x128xf32>
    %209 = vector.extract_strided_slice %207 {offsets = [0, 0], sizes = [8, 128], strides = [1, 1]} : vector<8x512xf32> to vector<8x128xf32>
    %210 = arith.negf %209 : vector<8x128xf32>
    %211 = math.exp %210 : vector<8x128xf32>
    %cst_102 = arith.constant 1.000000e+00 : f32
    %212 = vector.broadcast %cst_102 : f32 to vector<8x128xf32>
    %213 = arith.addf %212, %211 : vector<8x128xf32>
    %214 = arith.divf %212, %213 : vector<8x128xf32>
    %215 = vector.extract_strided_slice %207 {offsets = [0, 128], sizes = [8, 128], strides = [1, 1]} : vector<8x512xf32> to vector<8x128xf32>
    %216 = arith.negf %215 : vector<8x128xf32>
    %217 = math.exp %216 : vector<8x128xf32>
    %cst_103 = arith.constant 1.000000e+00 : f32
    %218 = vector.broadcast %cst_103 : f32 to vector<8x128xf32>
    %219 = arith.addf %218, %217 : vector<8x128xf32>
    %220 = arith.divf %218, %219 : vector<8x128xf32>
    %221 = vector.extract_strided_slice %207 {offsets = [0, 256], sizes = [8, 128], strides = [1, 1]} : vector<8x512xf32> to vector<8x128xf32>
    %222 = math.tanh %221 : vector<8x128xf32>
    %223 = vector.extract_strided_slice %207 {offsets = [0, 384], sizes = [8, 128], strides = [1, 1]} : vector<8x512xf32> to vector<8x128xf32>
    %224 = arith.negf %223 : vector<8x128xf32>
    %225 = math.exp %224 : vector<8x128xf32>
    %cst_104 = arith.constant 1.000000e+00 : f32
    %226 = vector.broadcast %cst_104 : f32 to vector<8x128xf32>
    %227 = arith.addf %226, %225 : vector<8x128xf32>
    %228 = arith.divf %226, %227 : vector<8x128xf32>
    %229 = arith.mulf %220, %208 : vector<8x128xf32>
    %230 = arith.mulf %214, %222 : vector<8x128xf32>
    %231 = arith.addf %229, %230 : vector<8x128xf32>
    %232 = math.tanh %231 : vector<8x128xf32>
    %233 = arith.mulf %228, %232 : vector<8x128xf32>
    %c0_105 = arith.constant 0 : index
    %c0_106 = arith.constant 0 : index
    %234 = vector.load %arg9[%c0_105, %c0_106] : memref<8x128xf32, #tpu.memory_space<vmem>>, vector<8x128xf32>
    tpu.vector_store %arg9[%c0_105, %c0_106], %233 {strides = array<i32>} : memref<8x128xf32, #tpu.memory_space<vmem>>, vector<8x128xf32>,
    %c0_107 = arith.constant 0 : index
    %c0_108 = arith.constant 0 : index
    %235 = vector.load %arg10[%c0_107, %c0_108] : memref<8x128xf32, #tpu.memory_space<vmem>>, vector<8x128xf32>
    tpu.vector_store %arg10[%c0_107, %c0_108], %231 {strides = array<i32>} : memref<8x128xf32, #tpu.memory_space<vmem>>, vector<8x128xf32>,
    %236 = arith.index_cast %c2_i32 : i32 to index
    %c0_109 = arith.constant 0 : index
    %c0_110 = arith.constant 0 : index
    %237 = vector.load %arg6[%236, %c0_109, %c0_110] : memref<8x8x128xf32, #tpu.memory_space<vmem>>, vector<1x8x128xf32>
    %238 = vector.shape_cast %237 : vector<1x8x128xf32> to vector<8x128xf32>
    %239 = vector.shape_cast %233 : vector<8x128xf32> to vector<1x8x128xf32>
    tpu.vector_store %arg6[%236, %c0_109, %c0_110], %239 {strides = array<i32>} : memref<8x8x128xf32, #tpu.memory_space<vmem>>, vector<1x8x128xf32>,
    %c3_i32 = arith.constant 3 : i32
    %240 = arith.index_cast %c3_i32 : i32 to index
    %c0_111 = arith.constant 0 : index
    %c0_112 = arith.constant 0 : index
    %241 = vector.load %arg1[%240, %c0_111, %c0_112] : memref<8x8x512xf32, #tpu.memory_space<vmem>>, vector<1x8x512xf32>
    %242 = vector.shape_cast %241 : vector<1x8x512xf32> to vector<8x512xf32>
    %c0_113 = arith.constant 0 : index
    %c0_114 = arith.constant 0 : index
    %243 = vector.load %arg7[%c0_113, %c0_114] : memref<8x128xf32, #tpu.memory_space<vmem>>, vector<8x128xf32>
    %244 = arith.truncf %243 : vector<8x128xf32> to vector<8x128xbf16>
    %c0_115 = arith.constant 0 : index
    %c0_116 = arith.constant 0 : index
    %245 = vector.load %arg2[%c0_115, %c0_116] : memref<128x512xbf16, #tpu.memory_space<vmem>>, vector<128x512xbf16>
    %cst_117 = arith.constant dense<0.000000e+00> : vector<8x512xf32>
    %246 = tpu.matmul %244, %245, %cst_117 {dimension_numbers = #tpu.dot_dimension_numbers<[1], [0], [0], [1], [0, 0, 1, 1], [], []>} : vector<8x128xbf16>, vector<128x512xbf16>, vector<8x512xf32> -> vector<8x512xf32>
    %247 = arith.addf %242, %246 : vector<8x512xf32>
    %c0_118 = arith.constant 0 : index
    %c0_119 = arith.constant 0 : index
    %248 = vector.load %arg8[%c0_118, %c0_119] : memref<8x128xf32, #tpu.memory_space<vmem>>, vector<8x128xf32>
    %249 = vector.extract_strided_slice %247 {offsets = [0, 0], sizes = [8, 128], strides = [1, 1]} : vector<8x512xf32> to vector<8x128xf32>
    %250 = arith.negf %249 : vector<8x128xf32>
    %251 = math.exp %250 : vector<8x128xf32>
    %cst_120 = arith.constant 1.000000e+00 : f32
    %252 = vector.broadcast %cst_120 : f32 to vector<8x128xf32>
    %253 = arith.addf %252, %251 : vector<8x128xf32>
    %254 = arith.divf %252, %253 : vector<8x128xf32>
    %255 = vector.extract_strided_slice %247 {offsets = [0, 128], sizes = [8, 128], strides = [1, 1]} : vector<8x512xf32> to vector<8x128xf32>
    %256 = arith.negf %255 : vector<8x128xf32>
    %257 = math.exp %256 : vector<8x128xf32>
    %cst_121 = arith.constant 1.000000e+00 : f32
    %258 = vector.broadcast %cst_121 : f32 to vector<8x128xf32>
    %259 = arith.addf %258, %257 : vector<8x128xf32>
    %260 = arith.divf %258, %259 : vector<8x128xf32>
    %261 = vector.extract_strided_slice %247 {offsets = [0, 256], sizes = [8, 128], strides = [1, 1]} : vector<8x512xf32> to vector<8x128xf32>
    %262 = math.tanh %261 : vector<8x128xf32>
    %263 = vector.extract_strided_slice %247 {offsets = [0, 384], sizes = [8, 128], strides = [1, 1]} : vector<8x512xf32> to vector<8x128xf32>
    %264 = arith.negf %263 : vector<8x128xf32>
    %265 = math.exp %264 : vector<8x128xf32>
    %cst_122 = arith.constant 1.000000e+00 : f32
    %266 = vector.broadcast %cst_122 : f32 to vector<8x128xf32>
    %267 = arith.addf %266, %265 : vector<8x128xf32>
    %268 = arith.divf %266, %267 : vector<8x128xf32>
    %269 = arith.mulf %260, %248 : vector<8x128xf32>
    %270 = arith.mulf %254, %262 : vector<8x128xf32>
    %271 = arith.addf %269, %270 : vector<8x128xf32>
    %272 = math.tanh %271 : vector<8x128xf32>
    %273 = arith.mulf %268, %272 : vector<8x128xf32>
    %c0_123 = arith.constant 0 : index
    %c0_124 = arith.constant 0 : index
    %274 = vector.load %arg7[%c0_123, %c0_124] : memref<8x128xf32, #tpu.memory_space<vmem>>, vector<8x128xf32>
    tpu.vector_store %arg7[%c0_123, %c0_124], %273 {strides = array<i32>} : memref<8x128xf32, #tpu.memory_space<vmem>>, vector<8x128xf32>,
    %c0_125 = arith.constant 0 : index
    %c0_126 = arith.constant 0 : index
    %275 = vector.load %arg8[%c0_125, %c0_126] : memref<8x128xf32, #tpu.memory_space<vmem>>, vector<8x128xf32>
    tpu.vector_store %arg8[%c0_125, %c0_126], %271 {strides = array<i32>} : memref<8x128xf32, #tpu.memory_space<vmem>>, vector<8x128xf32>,
    %276 = arith.truncf %273 : vector<8x128xf32> to vector<8x128xbf16>
    %c0_127 = arith.constant 0 : index
    %c0_128 = arith.constant 0 : index
    %277 = vector.load %arg3[%c0_127, %c0_128] : memref<128x512xbf16, #tpu.memory_space<vmem>>, vector<128x512xbf16>
    %cst_129 = arith.constant dense<0.000000e+00> : vector<8x512xf32>
    %278 = tpu.matmul %276, %277, %cst_129 {dimension_numbers = #tpu.dot_dimension_numbers<[1], [0], [0], [1], [0, 0, 1, 1], [], []>} : vector<8x128xbf16>, vector<128x512xbf16>, vector<8x512xf32> -> vector<8x512xf32>
    %c0_130 = arith.constant 0 : index
    %c0_131 = arith.constant 0 : index
    %279 = vector.load %arg9[%c0_130, %c0_131] : memref<8x128xf32, #tpu.memory_space<vmem>>, vector<8x128xf32>
    %280 = arith.truncf %279 : vector<8x128xf32> to vector<8x128xbf16>
    %c0_132 = arith.constant 0 : index
    %c0_133 = arith.constant 0 : index
    %281 = vector.load %arg4[%c0_132, %c0_133] : memref<128x512xbf16, #tpu.memory_space<vmem>>, vector<128x512xbf16>
    %cst_134 = arith.constant dense<0.000000e+00> : vector<8x512xf32>
    %282 = tpu.matmul %280, %281, %cst_134 {dimension_numbers = #tpu.dot_dimension_numbers<[1], [0], [0], [1], [0, 0, 1, 1], [], []>} : vector<8x128xbf16>, vector<128x512xbf16>, vector<8x512xf32> -> vector<8x512xf32>
    %283 = arith.addf %278, %282 : vector<8x512xf32>
    %c0_135 = arith.constant 0 : index
    %c0_136 = arith.constant 0 : index
    %284 = vector.load %arg5[%c0_135, %c0_136] : memref<1x512xf32, #tpu.memory_space<vmem>>, vector<1x512xf32>
    %285 = vector.broadcast %284 : vector<1x512xf32> to vector<8x512xf32>
    %286 = arith.addf %283, %285 : vector<8x512xf32>
    %c0_137 = arith.constant 0 : index
    %c0_138 = arith.constant 0 : index
    %287 = vector.load %arg10[%c0_137, %c0_138] : memref<8x128xf32, #tpu.memory_space<vmem>>, vector<8x128xf32>
    %288 = vector.extract_strided_slice %286 {offsets = [0, 0], sizes = [8, 128], strides = [1, 1]} : vector<8x512xf32> to vector<8x128xf32>
    %289 = arith.negf %288 : vector<8x128xf32>
    %290 = math.exp %289 : vector<8x128xf32>
    %cst_139 = arith.constant 1.000000e+00 : f32
    %291 = vector.broadcast %cst_139 : f32 to vector<8x128xf32>
    %292 = arith.addf %291, %290 : vector<8x128xf32>
    %293 = arith.divf %291, %292 : vector<8x128xf32>
    %294 = vector.extract_strided_slice %286 {offsets = [0, 128], sizes = [8, 128], strides = [1, 1]} : vector<8x512xf32> to vector<8x128xf32>
    %295 = arith.negf %294 : vector<8x128xf32>
    %296 = math.exp %295 : vector<8x128xf32>
    %cst_140 = arith.constant 1.000000e+00 : f32
    %297 = vector.broadcast %cst_140 : f32 to vector<8x128xf32>
    %298 = arith.addf %297, %296 : vector<8x128xf32>
    %299 = arith.divf %297, %298 : vector<8x128xf32>
    %300 = vector.extract_strided_slice %286 {offsets = [0, 256], sizes = [8, 128], strides = [1, 1]} : vector<8x512xf32> to vector<8x128xf32>
    %301 = math.tanh %300 : vector<8x128xf32>
    %302 = vector.extract_strided_slice %286 {offsets = [0, 384], sizes = [8, 128], strides = [1, 1]} : vector<8x512xf32> to vector<8x128xf32>
    %303 = arith.negf %302 : vector<8x128xf32>
    %304 = math.exp %303 : vector<8x128xf32>
    %cst_141 = arith.constant 1.000000e+00 : f32
    %305 = vector.broadcast %cst_141 : f32 to vector<8x128xf32>
    %306 = arith.addf %305, %304 : vector<8x128xf32>
    %307 = arith.divf %305, %306 : vector<8x128xf32>
    %308 = arith.mulf %299, %287 : vector<8x128xf32>
    %309 = arith.mulf %293, %301 : vector<8x128xf32>
    %310 = arith.addf %308, %309 : vector<8x128xf32>
    %311 = math.tanh %310 : vector<8x128xf32>
    %312 = arith.mulf %307, %311 : vector<8x128xf32>
    %c0_142 = arith.constant 0 : index
    %c0_143 = arith.constant 0 : index
    %313 = vector.load %arg9[%c0_142, %c0_143] : memref<8x128xf32, #tpu.memory_space<vmem>>, vector<8x128xf32>
    tpu.vector_store %arg9[%c0_142, %c0_143], %312 {strides = array<i32>} : memref<8x128xf32, #tpu.memory_space<vmem>>, vector<8x128xf32>,
    %c0_144 = arith.constant 0 : index
    %c0_145 = arith.constant 0 : index
    %314 = vector.load %arg10[%c0_144, %c0_145] : memref<8x128xf32, #tpu.memory_space<vmem>>, vector<8x128xf32>
    tpu.vector_store %arg10[%c0_144, %c0_145], %310 {strides = array<i32>} : memref<8x128xf32, #tpu.memory_space<vmem>>, vector<8x128xf32>,
    %315 = arith.index_cast %c3_i32 : i32 to index
    %c0_146 = arith.constant 0 : index
    %c0_147 = arith.constant 0 : index
    %316 = vector.load %arg6[%315, %c0_146, %c0_147] : memref<8x8x128xf32, #tpu.memory_space<vmem>>, vector<1x8x128xf32>
    %317 = vector.shape_cast %316 : vector<1x8x128xf32> to vector<8x128xf32>
    %318 = vector.shape_cast %312 : vector<8x128xf32> to vector<1x8x128xf32>
    tpu.vector_store %arg6[%315, %c0_146, %c0_147], %318 {strides = array<i32>} : memref<8x8x128xf32, #tpu.memory_space<vmem>>, vector<1x8x128xf32>,
    %c4_i32 = arith.constant 4 : i32
    %319 = arith.index_cast %c4_i32 : i32 to index
    %c0_148 = arith.constant 0 : index
    %c0_149 = arith.constant 0 : index
    %320 = vector.load %arg1[%319, %c0_148, %c0_149] : memref<8x8x512xf32, #tpu.memory_space<vmem>>, vector<1x8x512xf32>
    %321 = vector.shape_cast %320 : vector<1x8x512xf32> to vector<8x512xf32>
    %c0_150 = arith.constant 0 : index
    %c0_151 = arith.constant 0 : index
    %322 = vector.load %arg7[%c0_150, %c0_151] : memref<8x128xf32, #tpu.memory_space<vmem>>, vector<8x128xf32>
    %323 = arith.truncf %322 : vector<8x128xf32> to vector<8x128xbf16>
    %c0_152 = arith.constant 0 : index
    %c0_153 = arith.constant 0 : index
    %324 = vector.load %arg2[%c0_152, %c0_153] : memref<128x512xbf16, #tpu.memory_space<vmem>>, vector<128x512xbf16>
    %cst_154 = arith.constant dense<0.000000e+00> : vector<8x512xf32>
    %325 = tpu.matmul %323, %324, %cst_154 {dimension_numbers = #tpu.dot_dimension_numbers<[1], [0], [0], [1], [0, 0, 1, 1], [], []>} : vector<8x128xbf16>, vector<128x512xbf16>, vector<8x512xf32> -> vector<8x512xf32>
    %326 = arith.addf %321, %325 : vector<8x512xf32>
    %c0_155 = arith.constant 0 : index
    %c0_156 = arith.constant 0 : index
    %327 = vector.load %arg8[%c0_155, %c0_156] : memref<8x128xf32, #tpu.memory_space<vmem>>, vector<8x128xf32>
    %328 = vector.extract_strided_slice %326 {offsets = [0, 0], sizes = [8, 128], strides = [1, 1]} : vector<8x512xf32> to vector<8x128xf32>
    %329 = arith.negf %328 : vector<8x128xf32>
    %330 = math.exp %329 : vector<8x128xf32>
    %cst_157 = arith.constant 1.000000e+00 : f32
    %331 = vector.broadcast %cst_157 : f32 to vector<8x128xf32>
    %332 = arith.addf %331, %330 : vector<8x128xf32>
    %333 = arith.divf %331, %332 : vector<8x128xf32>
    %334 = vector.extract_strided_slice %326 {offsets = [0, 128], sizes = [8, 128], strides = [1, 1]} : vector<8x512xf32> to vector<8x128xf32>
    %335 = arith.negf %334 : vector<8x128xf32>
    %336 = math.exp %335 : vector<8x128xf32>
    %cst_158 = arith.constant 1.000000e+00 : f32
    %337 = vector.broadcast %cst_158 : f32 to vector<8x128xf32>
    %338 = arith.addf %337, %336 : vector<8x128xf32>
    %339 = arith.divf %337, %338 : vector<8x128xf32>
    %340 = vector.extract_strided_slice %326 {offsets = [0, 256], sizes = [8, 128], strides = [1, 1]} : vector<8x512xf32> to vector<8x128xf32>
    %341 = math.tanh %340 : vector<8x128xf32>
    %342 = vector.extract_strided_slice %326 {offsets = [0, 384], sizes = [8, 128], strides = [1, 1]} : vector<8x512xf32> to vector<8x128xf32>
    %343 = arith.negf %342 : vector<8x128xf32>
    %344 = math.exp %343 : vector<8x128xf32>
    %cst_159 = arith.constant 1.000000e+00 : f32
    %345 = vector.broadcast %cst_159 : f32 to vector<8x128xf32>
    %346 = arith.addf %345, %344 : vector<8x128xf32>
    %347 = arith.divf %345, %346 : vector<8x128xf32>
    %348 = arith.mulf %339, %327 : vector<8x128xf32>
    %349 = arith.mulf %333, %341 : vector<8x128xf32>
    %350 = arith.addf %348, %349 : vector<8x128xf32>
    %351 = math.tanh %350 : vector<8x128xf32>
    %352 = arith.mulf %347, %351 : vector<8x128xf32>
    %c0_160 = arith.constant 0 : index
    %c0_161 = arith.constant 0 : index
    %353 = vector.load %arg7[%c0_160, %c0_161] : memref<8x128xf32, #tpu.memory_space<vmem>>, vector<8x128xf32>
    tpu.vector_store %arg7[%c0_160, %c0_161], %352 {strides = array<i32>} : memref<8x128xf32, #tpu.memory_space<vmem>>, vector<8x128xf32>,
    %c0_162 = arith.constant 0 : index
    %c0_163 = arith.constant 0 : index
    %354 = vector.load %arg8[%c0_162, %c0_163] : memref<8x128xf32, #tpu.memory_space<vmem>>, vector<8x128xf32>
    tpu.vector_store %arg8[%c0_162, %c0_163], %350 {strides = array<i32>} : memref<8x128xf32, #tpu.memory_space<vmem>>, vector<8x128xf32>,
    %355 = arith.truncf %352 : vector<8x128xf32> to vector<8x128xbf16>
    %c0_164 = arith.constant 0 : index
    %c0_165 = arith.constant 0 : index
    %356 = vector.load %arg3[%c0_164, %c0_165] : memref<128x512xbf16, #tpu.memory_space<vmem>>, vector<128x512xbf16>
    %cst_166 = arith.constant dense<0.000000e+00> : vector<8x512xf32>
    %357 = tpu.matmul %355, %356, %cst_166 {dimension_numbers = #tpu.dot_dimension_numbers<[1], [0], [0], [1], [0, 0, 1, 1], [], []>} : vector<8x128xbf16>, vector<128x512xbf16>, vector<8x512xf32> -> vector<8x512xf32>
    %c0_167 = arith.constant 0 : index
    %c0_168 = arith.constant 0 : index
    %358 = vector.load %arg9[%c0_167, %c0_168] : memref<8x128xf32, #tpu.memory_space<vmem>>, vector<8x128xf32>
    %359 = arith.truncf %358 : vector<8x128xf32> to vector<8x128xbf16>
    %c0_169 = arith.constant 0 : index
    %c0_170 = arith.constant 0 : index
    %360 = vector.load %arg4[%c0_169, %c0_170] : memref<128x512xbf16, #tpu.memory_space<vmem>>, vector<128x512xbf16>
    %cst_171 = arith.constant dense<0.000000e+00> : vector<8x512xf32>
    %361 = tpu.matmul %359, %360, %cst_171 {dimension_numbers = #tpu.dot_dimension_numbers<[1], [0], [0], [1], [0, 0, 1, 1], [], []>} : vector<8x128xbf16>, vector<128x512xbf16>, vector<8x512xf32> -> vector<8x512xf32>
    %362 = arith.addf %357, %361 : vector<8x512xf32>
    %c0_172 = arith.constant 0 : index
    %c0_173 = arith.constant 0 : index
    %363 = vector.load %arg5[%c0_172, %c0_173] : memref<1x512xf32, #tpu.memory_space<vmem>>, vector<1x512xf32>
    %364 = vector.broadcast %363 : vector<1x512xf32> to vector<8x512xf32>
    %365 = arith.addf %362, %364 : vector<8x512xf32>
    %c0_174 = arith.constant 0 : index
    %c0_175 = arith.constant 0 : index
    %366 = vector.load %arg10[%c0_174, %c0_175] : memref<8x128xf32, #tpu.memory_space<vmem>>, vector<8x128xf32>
    %367 = vector.extract_strided_slice %365 {offsets = [0, 0], sizes = [8, 128], strides = [1, 1]} : vector<8x512xf32> to vector<8x128xf32>
    %368 = arith.negf %367 : vector<8x128xf32>
    %369 = math.exp %368 : vector<8x128xf32>
    %cst_176 = arith.constant 1.000000e+00 : f32
    %370 = vector.broadcast %cst_176 : f32 to vector<8x128xf32>
    %371 = arith.addf %370, %369 : vector<8x128xf32>
    %372 = arith.divf %370, %371 : vector<8x128xf32>
    %373 = vector.extract_strided_slice %365 {offsets = [0, 128], sizes = [8, 128], strides = [1, 1]} : vector<8x512xf32> to vector<8x128xf32>
    %374 = arith.negf %373 : vector<8x128xf32>
    %375 = math.exp %374 : vector<8x128xf32>
    %cst_177 = arith.constant 1.000000e+00 : f32
    %376 = vector.broadcast %cst_177 : f32 to vector<8x128xf32>
    %377 = arith.addf %376, %375 : vector<8x128xf32>
    %378 = arith.divf %376, %377 : vector<8x128xf32>
    %379 = vector.extract_strided_slice %365 {offsets = [0, 256], sizes = [8, 128], strides = [1, 1]} : vector<8x512xf32> to vector<8x128xf32>
    %380 = math.tanh %379 : vector<8x128xf32>
    %381 = vector.extract_strided_slice %365 {offsets = [0, 384], sizes = [8, 128], strides = [1, 1]} : vector<8x512xf32> to vector<8x128xf32>
    %382 = arith.negf %381 : vector<8x128xf32>
    %383 = math.exp %382 : vector<8x128xf32>
    %cst_178 = arith.constant 1.000000e+00 : f32
    %384 = vector.broadcast %cst_178 : f32 to vector<8x128xf32>
    %385 = arith.addf %384, %383 : vector<8x128xf32>
    %386 = arith.divf %384, %385 : vector<8x128xf32>
    %387 = arith.mulf %378, %366 : vector<8x128xf32>
    %388 = arith.mulf %372, %380 : vector<8x128xf32>
    %389 = arith.addf %387, %388 : vector<8x128xf32>
    %390 = math.tanh %389 : vector<8x128xf32>
    %391 = arith.mulf %386, %390 : vector<8x128xf32>
    %c0_179 = arith.constant 0 : index
    %c0_180 = arith.constant 0 : index
    %392 = vector.load %arg9[%c0_179, %c0_180] : memref<8x128xf32, #tpu.memory_space<vmem>>, vector<8x128xf32>
    tpu.vector_store %arg9[%c0_179, %c0_180], %391 {strides = array<i32>} : memref<8x128xf32, #tpu.memory_space<vmem>>, vector<8x128xf32>,
    %c0_181 = arith.constant 0 : index
    %c0_182 = arith.constant 0 : index
    %393 = vector.load %arg10[%c0_181, %c0_182] : memref<8x128xf32, #tpu.memory_space<vmem>>, vector<8x128xf32>
    tpu.vector_store %arg10[%c0_181, %c0_182], %389 {strides = array<i32>} : memref<8x128xf32, #tpu.memory_space<vmem>>, vector<8x128xf32>,
    %394 = arith.index_cast %c4_i32 : i32 to index
    %c0_183 = arith.constant 0 : index
    %c0_184 = arith.constant 0 : index
    %395 = vector.load %arg6[%394, %c0_183, %c0_184] : memref<8x8x128xf32, #tpu.memory_space<vmem>>, vector<1x8x128xf32>
    %396 = vector.shape_cast %395 : vector<1x8x128xf32> to vector<8x128xf32>
    %397 = vector.shape_cast %391 : vector<8x128xf32> to vector<1x8x128xf32>
    tpu.vector_store %arg6[%394, %c0_183, %c0_184], %397 {strides = array<i32>} : memref<8x8x128xf32, #tpu.memory_space<vmem>>, vector<1x8x128xf32>,
    %c5_i32 = arith.constant 5 : i32
    %398 = arith.index_cast %c5_i32 : i32 to index
    %c0_185 = arith.constant 0 : index
    %c0_186 = arith.constant 0 : index
    %399 = vector.load %arg1[%398, %c0_185, %c0_186] : memref<8x8x512xf32, #tpu.memory_space<vmem>>, vector<1x8x512xf32>
    %400 = vector.shape_cast %399 : vector<1x8x512xf32> to vector<8x512xf32>
    %c0_187 = arith.constant 0 : index
    %c0_188 = arith.constant 0 : index
    %401 = vector.load %arg7[%c0_187, %c0_188] : memref<8x128xf32, #tpu.memory_space<vmem>>, vector<8x128xf32>
    %402 = arith.truncf %401 : vector<8x128xf32> to vector<8x128xbf16>
    %c0_189 = arith.constant 0 : index
    %c0_190 = arith.constant 0 : index
    %403 = vector.load %arg2[%c0_189, %c0_190] : memref<128x512xbf16, #tpu.memory_space<vmem>>, vector<128x512xbf16>
    %cst_191 = arith.constant dense<0.000000e+00> : vector<8x512xf32>
    %404 = tpu.matmul %402, %403, %cst_191 {dimension_numbers = #tpu.dot_dimension_numbers<[1], [0], [0], [1], [0, 0, 1, 1], [], []>} : vector<8x128xbf16>, vector<128x512xbf16>, vector<8x512xf32> -> vector<8x512xf32>
    %405 = arith.addf %400, %404 : vector<8x512xf32>
    %c0_192 = arith.constant 0 : index
    %c0_193 = arith.constant 0 : index
    %406 = vector.load %arg8[%c0_192, %c0_193] : memref<8x128xf32, #tpu.memory_space<vmem>>, vector<8x128xf32>
    %407 = vector.extract_strided_slice %405 {offsets = [0, 0], sizes = [8, 128], strides = [1, 1]} : vector<8x512xf32> to vector<8x128xf32>
    %408 = arith.negf %407 : vector<8x128xf32>
    %409 = math.exp %408 : vector<8x128xf32>
    %cst_194 = arith.constant 1.000000e+00 : f32
    %410 = vector.broadcast %cst_194 : f32 to vector<8x128xf32>
    %411 = arith.addf %410, %409 : vector<8x128xf32>
    %412 = arith.divf %410, %411 : vector<8x128xf32>
    %413 = vector.extract_strided_slice %405 {offsets = [0, 128], sizes = [8, 128], strides = [1, 1]} : vector<8x512xf32> to vector<8x128xf32>
    %414 = arith.negf %413 : vector<8x128xf32>
    %415 = math.exp %414 : vector<8x128xf32>
    %cst_195 = arith.constant 1.000000e+00 : f32
    %416 = vector.broadcast %cst_195 : f32 to vector<8x128xf32>
    %417 = arith.addf %416, %415 : vector<8x128xf32>
    %418 = arith.divf %416, %417 : vector<8x128xf32>
    %419 = vector.extract_strided_slice %405 {offsets = [0, 256], sizes = [8, 128], strides = [1, 1]} : vector<8x512xf32> to vector<8x128xf32>
    %420 = math.tanh %419 : vector<8x128xf32>
    %421 = vector.extract_strided_slice %405 {offsets = [0, 384], sizes = [8, 128], strides = [1, 1]} : vector<8x512xf32> to vector<8x128xf32>
    %422 = arith.negf %421 : vector<8x128xf32>
    %423 = math.exp %422 : vector<8x128xf32>
    %cst_196 = arith.constant 1.000000e+00 : f32
    %424 = vector.broadcast %cst_196 : f32 to vector<8x128xf32>
    %425 = arith.addf %424, %423 : vector<8x128xf32>
    %426 = arith.divf %424, %425 : vector<8x128xf32>
    %427 = arith.mulf %418, %406 : vector<8x128xf32>
    %428 = arith.mulf %412, %420 : vector<8x128xf32>
    %429 = arith.addf %427, %428 : vector<8x128xf32>
    %430 = math.tanh %429 : vector<8x128xf32>
    %431 = arith.mulf %426, %430 : vector<8x128xf32>
    %c0_197 = arith.constant 0 : index
    %c0_198 = arith.constant 0 : index
    %432 = vector.load %arg7[%c0_197, %c0_198] : memref<8x128xf32, #tpu.memory_space<vmem>>, vector<8x128xf32>
    tpu.vector_store %arg7[%c0_197, %c0_198], %431 {strides = array<i32>} : memref<8x128xf32, #tpu.memory_space<vmem>>, vector<8x128xf32>,
    %c0_199 = arith.constant 0 : index
    %c0_200 = arith.constant 0 : index
    %433 = vector.load %arg8[%c0_199, %c0_200] : memref<8x128xf32, #tpu.memory_space<vmem>>, vector<8x128xf32>
    tpu.vector_store %arg8[%c0_199, %c0_200], %429 {strides = array<i32>} : memref<8x128xf32, #tpu.memory_space<vmem>>, vector<8x128xf32>,
    %434 = arith.truncf %431 : vector<8x128xf32> to vector<8x128xbf16>
    %c0_201 = arith.constant 0 : index
    %c0_202 = arith.constant 0 : index
    %435 = vector.load %arg3[%c0_201, %c0_202] : memref<128x512xbf16, #tpu.memory_space<vmem>>, vector<128x512xbf16>
    %cst_203 = arith.constant dense<0.000000e+00> : vector<8x512xf32>
    %436 = tpu.matmul %434, %435, %cst_203 {dimension_numbers = #tpu.dot_dimension_numbers<[1], [0], [0], [1], [0, 0, 1, 1], [], []>} : vector<8x128xbf16>, vector<128x512xbf16>, vector<8x512xf32> -> vector<8x512xf32>
    %c0_204 = arith.constant 0 : index
    %c0_205 = arith.constant 0 : index
    %437 = vector.load %arg9[%c0_204, %c0_205] : memref<8x128xf32, #tpu.memory_space<vmem>>, vector<8x128xf32>
    %438 = arith.truncf %437 : vector<8x128xf32> to vector<8x128xbf16>
    %c0_206 = arith.constant 0 : index
    %c0_207 = arith.constant 0 : index
    %439 = vector.load %arg4[%c0_206, %c0_207] : memref<128x512xbf16, #tpu.memory_space<vmem>>, vector<128x512xbf16>
    %cst_208 = arith.constant dense<0.000000e+00> : vector<8x512xf32>
    %440 = tpu.matmul %438, %439, %cst_208 {dimension_numbers = #tpu.dot_dimension_numbers<[1], [0], [0], [1], [0, 0, 1, 1], [], []>} : vector<8x128xbf16>, vector<128x512xbf16>, vector<8x512xf32> -> vector<8x512xf32>
    %441 = arith.addf %436, %440 : vector<8x512xf32>
    %c0_209 = arith.constant 0 : index
    %c0_210 = arith.constant 0 : index
    %442 = vector.load %arg5[%c0_209, %c0_210] : memref<1x512xf32, #tpu.memory_space<vmem>>, vector<1x512xf32>
    %443 = vector.broadcast %442 : vector<1x512xf32> to vector<8x512xf32>
    %444 = arith.addf %441, %443 : vector<8x512xf32>
    %c0_211 = arith.constant 0 : index
    %c0_212 = arith.constant 0 : index
    %445 = vector.load %arg10[%c0_211, %c0_212] : memref<8x128xf32, #tpu.memory_space<vmem>>, vector<8x128xf32>
    %446 = vector.extract_strided_slice %444 {offsets = [0, 0], sizes = [8, 128], strides = [1, 1]} : vector<8x512xf32> to vector<8x128xf32>
    %447 = arith.negf %446 : vector<8x128xf32>
    %448 = math.exp %447 : vector<8x128xf32>
    %cst_213 = arith.constant 1.000000e+00 : f32
    %449 = vector.broadcast %cst_213 : f32 to vector<8x128xf32>
    %450 = arith.addf %449, %448 : vector<8x128xf32>
    %451 = arith.divf %449, %450 : vector<8x128xf32>
    %452 = vector.extract_strided_slice %444 {offsets = [0, 128], sizes = [8, 128], strides = [1, 1]} : vector<8x512xf32> to vector<8x128xf32>
    %453 = arith.negf %452 : vector<8x128xf32>
    %454 = math.exp %453 : vector<8x128xf32>
    %cst_214 = arith.constant 1.000000e+00 : f32
    %455 = vector.broadcast %cst_214 : f32 to vector<8x128xf32>
    %456 = arith.addf %455, %454 : vector<8x128xf32>
    %457 = arith.divf %455, %456 : vector<8x128xf32>
    %458 = vector.extract_strided_slice %444 {offsets = [0, 256], sizes = [8, 128], strides = [1, 1]} : vector<8x512xf32> to vector<8x128xf32>
    %459 = math.tanh %458 : vector<8x128xf32>
    %460 = vector.extract_strided_slice %444 {offsets = [0, 384], sizes = [8, 128], strides = [1, 1]} : vector<8x512xf32> to vector<8x128xf32>
    %461 = arith.negf %460 : vector<8x128xf32>
    %462 = math.exp %461 : vector<8x128xf32>
    %cst_215 = arith.constant 1.000000e+00 : f32
    %463 = vector.broadcast %cst_215 : f32 to vector<8x128xf32>
    %464 = arith.addf %463, %462 : vector<8x128xf32>
    %465 = arith.divf %463, %464 : vector<8x128xf32>
    %466 = arith.mulf %457, %445 : vector<8x128xf32>
    %467 = arith.mulf %451, %459 : vector<8x128xf32>
    %468 = arith.addf %466, %467 : vector<8x128xf32>
    %469 = math.tanh %468 : vector<8x128xf32>
    %470 = arith.mulf %465, %469 : vector<8x128xf32>
    %c0_216 = arith.constant 0 : index
    %c0_217 = arith.constant 0 : index
    %471 = vector.load %arg9[%c0_216, %c0_217] : memref<8x128xf32, #tpu.memory_space<vmem>>, vector<8x128xf32>
    tpu.vector_store %arg9[%c0_216, %c0_217], %470 {strides = array<i32>} : memref<8x128xf32, #tpu.memory_space<vmem>>, vector<8x128xf32>,
    %c0_218 = arith.constant 0 : index
    %c0_219 = arith.constant 0 : index
    %472 = vector.load %arg10[%c0_218, %c0_219] : memref<8x128xf32, #tpu.memory_space<vmem>>, vector<8x128xf32>
    tpu.vector_store %arg10[%c0_218, %c0_219], %468 {strides = array<i32>} : memref<8x128xf32, #tpu.memory_space<vmem>>, vector<8x128xf32>,
    %473 = arith.index_cast %c5_i32 : i32 to index
    %c0_220 = arith.constant 0 : index
    %c0_221 = arith.constant 0 : index
    %474 = vector.load %arg6[%473, %c0_220, %c0_221] : memref<8x8x128xf32, #tpu.memory_space<vmem>>, vector<1x8x128xf32>
    %475 = vector.shape_cast %474 : vector<1x8x128xf32> to vector<8x128xf32>
    %476 = vector.shape_cast %470 : vector<8x128xf32> to vector<1x8x128xf32>
    tpu.vector_store %arg6[%473, %c0_220, %c0_221], %476 {strides = array<i32>} : memref<8x8x128xf32, #tpu.memory_space<vmem>>, vector<1x8x128xf32>,
    %c6_i32 = arith.constant 6 : i32
    %477 = arith.index_cast %c6_i32 : i32 to index
    %c0_222 = arith.constant 0 : index
    %c0_223 = arith.constant 0 : index
    %478 = vector.load %arg1[%477, %c0_222, %c0_223] : memref<8x8x512xf32, #tpu.memory_space<vmem>>, vector<1x8x512xf32>
    %479 = vector.shape_cast %478 : vector<1x8x512xf32> to vector<8x512xf32>
    %c0_224 = arith.constant 0 : index
    %c0_225 = arith.constant 0 : index
    %480 = vector.load %arg7[%c0_224, %c0_225] : memref<8x128xf32, #tpu.memory_space<vmem>>, vector<8x128xf32>
    %481 = arith.truncf %480 : vector<8x128xf32> to vector<8x128xbf16>
    %c0_226 = arith.constant 0 : index
    %c0_227 = arith.constant 0 : index
    %482 = vector.load %arg2[%c0_226, %c0_227] : memref<128x512xbf16, #tpu.memory_space<vmem>>, vector<128x512xbf16>
    %cst_228 = arith.constant dense<0.000000e+00> : vector<8x512xf32>
    %483 = tpu.matmul %481, %482, %cst_228 {dimension_numbers = #tpu.dot_dimension_numbers<[1], [0], [0], [1], [0, 0, 1, 1], [], []>} : vector<8x128xbf16>, vector<128x512xbf16>, vector<8x512xf32> -> vector<8x512xf32>
    %484 = arith.addf %479, %483 : vector<8x512xf32>
    %c0_229 = arith.constant 0 : index
    %c0_230 = arith.constant 0 : index
    %485 = vector.load %arg8[%c0_229, %c0_230] : memref<8x128xf32, #tpu.memory_space<vmem>>, vector<8x128xf32>
    %486 = vector.extract_strided_slice %484 {offsets = [0, 0], sizes = [8, 128], strides = [1, 1]} : vector<8x512xf32> to vector<8x128xf32>
    %487 = arith.negf %486 : vector<8x128xf32>
    %488 = math.exp %487 : vector<8x128xf32>
    %cst_231 = arith.constant 1.000000e+00 : f32
    %489 = vector.broadcast %cst_231 : f32 to vector<8x128xf32>
    %490 = arith.addf %489, %488 : vector<8x128xf32>
    %491 = arith.divf %489, %490 : vector<8x128xf32>
    %492 = vector.extract_strided_slice %484 {offsets = [0, 128], sizes = [8, 128], strides = [1, 1]} : vector<8x512xf32> to vector<8x128xf32>
    %493 = arith.negf %492 : vector<8x128xf32>
    %494 = math.exp %493 : vector<8x128xf32>
    %cst_232 = arith.constant 1.000000e+00 : f32
    %495 = vector.broadcast %cst_232 : f32 to vector<8x128xf32>
    %496 = arith.addf %495, %494 : vector<8x128xf32>
    %497 = arith.divf %495, %496 : vector<8x128xf32>
    %498 = vector.extract_strided_slice %484 {offsets = [0, 256], sizes = [8, 128], strides = [1, 1]} : vector<8x512xf32> to vector<8x128xf32>
    %499 = math.tanh %498 : vector<8x128xf32>
    %500 = vector.extract_strided_slice %484 {offsets = [0, 384], sizes = [8, 128], strides = [1, 1]} : vector<8x512xf32> to vector<8x128xf32>
    %501 = arith.negf %500 : vector<8x128xf32>
    %502 = math.exp %501 : vector<8x128xf32>
    %cst_233 = arith.constant 1.000000e+00 : f32
    %503 = vector.broadcast %cst_233 : f32 to vector<8x128xf32>
    %504 = arith.addf %503, %502 : vector<8x128xf32>
    %505 = arith.divf %503, %504 : vector<8x128xf32>
    %506 = arith.mulf %497, %485 : vector<8x128xf32>
    %507 = arith.mulf %491, %499 : vector<8x128xf32>
    %508 = arith.addf %506, %507 : vector<8x128xf32>
    %509 = math.tanh %508 : vector<8x128xf32>
    %510 = arith.mulf %505, %509 : vector<8x128xf32>
    %c0_234 = arith.constant 0 : index
    %c0_235 = arith.constant 0 : index
    %511 = vector.load %arg7[%c0_234, %c0_235] : memref<8x128xf32, #tpu.memory_space<vmem>>, vector<8x128xf32>
    tpu.vector_store %arg7[%c0_234, %c0_235], %510 {strides = array<i32>} : memref<8x128xf32, #tpu.memory_space<vmem>>, vector<8x128xf32>,
    %c0_236 = arith.constant 0 : index
    %c0_237 = arith.constant 0 : index
    %512 = vector.load %arg8[%c0_236, %c0_237] : memref<8x128xf32, #tpu.memory_space<vmem>>, vector<8x128xf32>
    tpu.vector_store %arg8[%c0_236, %c0_237], %508 {strides = array<i32>} : memref<8x128xf32, #tpu.memory_space<vmem>>, vector<8x128xf32>,
    %513 = arith.truncf %510 : vector<8x128xf32> to vector<8x128xbf16>
    %c0_238 = arith.constant 0 : index
    %c0_239 = arith.constant 0 : index
    %514 = vector.load %arg3[%c0_238, %c0_239] : memref<128x512xbf16, #tpu.memory_space<vmem>>, vector<128x512xbf16>
    %cst_240 = arith.constant dense<0.000000e+00> : vector<8x512xf32>
    %515 = tpu.matmul %513, %514, %cst_240 {dimension_numbers = #tpu.dot_dimension_numbers<[1], [0], [0], [1], [0, 0, 1, 1], [], []>} : vector<8x128xbf16>, vector<128x512xbf16>, vector<8x512xf32> -> vector<8x512xf32>
    %c0_241 = arith.constant 0 : index
    %c0_242 = arith.constant 0 : index
    %516 = vector.load %arg9[%c0_241, %c0_242] : memref<8x128xf32, #tpu.memory_space<vmem>>, vector<8x128xf32>
    %517 = arith.truncf %516 : vector<8x128xf32> to vector<8x128xbf16>
    %c0_243 = arith.constant 0 : index
    %c0_244 = arith.constant 0 : index
    %518 = vector.load %arg4[%c0_243, %c0_244] : memref<128x512xbf16, #tpu.memory_space<vmem>>, vector<128x512xbf16>
    %cst_245 = arith.constant dense<0.000000e+00> : vector<8x512xf32>
    %519 = tpu.matmul %517, %518, %cst_245 {dimension_numbers = #tpu.dot_dimension_numbers<[1], [0], [0], [1], [0, 0, 1, 1], [], []>} : vector<8x128xbf16>, vector<128x512xbf16>, vector<8x512xf32> -> vector<8x512xf32>
    %520 = arith.addf %515, %519 : vector<8x512xf32>
    %c0_246 = arith.constant 0 : index
    %c0_247 = arith.constant 0 : index
    %521 = vector.load %arg5[%c0_246, %c0_247] : memref<1x512xf32, #tpu.memory_space<vmem>>, vector<1x512xf32>
    %522 = vector.broadcast %521 : vector<1x512xf32> to vector<8x512xf32>
    %523 = arith.addf %520, %522 : vector<8x512xf32>
    %c0_248 = arith.constant 0 : index
    %c0_249 = arith.constant 0 : index
    %524 = vector.load %arg10[%c0_248, %c0_249] : memref<8x128xf32, #tpu.memory_space<vmem>>, vector<8x128xf32>
    %525 = vector.extract_strided_slice %523 {offsets = [0, 0], sizes = [8, 128], strides = [1, 1]} : vector<8x512xf32> to vector<8x128xf32>
    %526 = arith.negf %525 : vector<8x128xf32>
    %527 = math.exp %526 : vector<8x128xf32>
    %cst_250 = arith.constant 1.000000e+00 : f32
    %528 = vector.broadcast %cst_250 : f32 to vector<8x128xf32>
    %529 = arith.addf %528, %527 : vector<8x128xf32>
    %530 = arith.divf %528, %529 : vector<8x128xf32>
    %531 = vector.extract_strided_slice %523 {offsets = [0, 128], sizes = [8, 128], strides = [1, 1]} : vector<8x512xf32> to vector<8x128xf32>
    %532 = arith.negf %531 : vector<8x128xf32>
    %533 = math.exp %532 : vector<8x128xf32>
    %cst_251 = arith.constant 1.000000e+00 : f32
    %534 = vector.broadcast %cst_251 : f32 to vector<8x128xf32>
    %535 = arith.addf %534, %533 : vector<8x128xf32>
    %536 = arith.divf %534, %535 : vector<8x128xf32>
    %537 = vector.extract_strided_slice %523 {offsets = [0, 256], sizes = [8, 128], strides = [1, 1]} : vector<8x512xf32> to vector<8x128xf32>
    %538 = math.tanh %537 : vector<8x128xf32>
    %539 = vector.extract_strided_slice %523 {offsets = [0, 384], sizes = [8, 128], strides = [1, 1]} : vector<8x512xf32> to vector<8x128xf32>
    %540 = arith.negf %539 : vector<8x128xf32>
    %541 = math.exp %540 : vector<8x128xf32>
    %cst_252 = arith.constant 1.000000e+00 : f32
    %542 = vector.broadcast %cst_252 : f32 to vector<8x128xf32>
    %543 = arith.addf %542, %541 : vector<8x128xf32>
    %544 = arith.divf %542, %543 : vector<8x128xf32>
    %545 = arith.mulf %536, %524 : vector<8x128xf32>
    %546 = arith.mulf %530, %538 : vector<8x128xf32>
    %547 = arith.addf %545, %546 : vector<8x128xf32>
    %548 = math.tanh %547 : vector<8x128xf32>
    %549 = arith.mulf %544, %548 : vector<8x128xf32>
    %c0_253 = arith.constant 0 : index
    %c0_254 = arith.constant 0 : index
    %550 = vector.load %arg9[%c0_253, %c0_254] : memref<8x128xf32, #tpu.memory_space<vmem>>, vector<8x128xf32>
    tpu.vector_store %arg9[%c0_253, %c0_254], %549 {strides = array<i32>} : memref<8x128xf32, #tpu.memory_space<vmem>>, vector<8x128xf32>,
    %c0_255 = arith.constant 0 : index
    %c0_256 = arith.constant 0 : index
    %551 = vector.load %arg10[%c0_255, %c0_256] : memref<8x128xf32, #tpu.memory_space<vmem>>, vector<8x128xf32>
    tpu.vector_store %arg10[%c0_255, %c0_256], %547 {strides = array<i32>} : memref<8x128xf32, #tpu.memory_space<vmem>>, vector<8x128xf32>,
    %552 = arith.index_cast %c6_i32 : i32 to index
    %c0_257 = arith.constant 0 : index
    %c0_258 = arith.constant 0 : index
    %553 = vector.load %arg6[%552, %c0_257, %c0_258] : memref<8x8x128xf32, #tpu.memory_space<vmem>>, vector<1x8x128xf32>
    %554 = vector.shape_cast %553 : vector<1x8x128xf32> to vector<8x128xf32>
    %555 = vector.shape_cast %549 : vector<8x128xf32> to vector<1x8x128xf32>
    tpu.vector_store %arg6[%552, %c0_257, %c0_258], %555 {strides = array<i32>} : memref<8x8x128xf32, #tpu.memory_space<vmem>>, vector<1x8x128xf32>,
    %c7_i32 = arith.constant 7 : i32
    %556 = arith.index_cast %c7_i32 : i32 to index
    %c0_259 = arith.constant 0 : index
    %c0_260 = arith.constant 0 : index
    %557 = vector.load %arg1[%556, %c0_259, %c0_260] : memref<8x8x512xf32, #tpu.memory_space<vmem>>, vector<1x8x512xf32>
    %558 = vector.shape_cast %557 : vector<1x8x512xf32> to vector<8x512xf32>
    %c0_261 = arith.constant 0 : index
    %c0_262 = arith.constant 0 : index
    %559 = vector.load %arg7[%c0_261, %c0_262] : memref<8x128xf32, #tpu.memory_space<vmem>>, vector<8x128xf32>
    %560 = arith.truncf %559 : vector<8x128xf32> to vector<8x128xbf16>
    %c0_263 = arith.constant 0 : index
    %c0_264 = arith.constant 0 : index
    %561 = vector.load %arg2[%c0_263, %c0_264] : memref<128x512xbf16, #tpu.memory_space<vmem>>, vector<128x512xbf16>
    %cst_265 = arith.constant dense<0.000000e+00> : vector<8x512xf32>
    %562 = tpu.matmul %560, %561, %cst_265 {dimension_numbers = #tpu.dot_dimension_numbers<[1], [0], [0], [1], [0, 0, 1, 1], [], []>} : vector<8x128xbf16>, vector<128x512xbf16>, vector<8x512xf32> -> vector<8x512xf32>
    %563 = arith.addf %558, %562 : vector<8x512xf32>
    %c0_266 = arith.constant 0 : index
    %c0_267 = arith.constant 0 : index
    %564 = vector.load %arg8[%c0_266, %c0_267] : memref<8x128xf32, #tpu.memory_space<vmem>>, vector<8x128xf32>
    %565 = vector.extract_strided_slice %563 {offsets = [0, 0], sizes = [8, 128], strides = [1, 1]} : vector<8x512xf32> to vector<8x128xf32>
    %566 = arith.negf %565 : vector<8x128xf32>
    %567 = math.exp %566 : vector<8x128xf32>
    %cst_268 = arith.constant 1.000000e+00 : f32
    %568 = vector.broadcast %cst_268 : f32 to vector<8x128xf32>
    %569 = arith.addf %568, %567 : vector<8x128xf32>
    %570 = arith.divf %568, %569 : vector<8x128xf32>
    %571 = vector.extract_strided_slice %563 {offsets = [0, 128], sizes = [8, 128], strides = [1, 1]} : vector<8x512xf32> to vector<8x128xf32>
    %572 = arith.negf %571 : vector<8x128xf32>
    %573 = math.exp %572 : vector<8x128xf32>
    %cst_269 = arith.constant 1.000000e+00 : f32
    %574 = vector.broadcast %cst_269 : f32 to vector<8x128xf32>
    %575 = arith.addf %574, %573 : vector<8x128xf32>
    %576 = arith.divf %574, %575 : vector<8x128xf32>
    %577 = vector.extract_strided_slice %563 {offsets = [0, 256], sizes = [8, 128], strides = [1, 1]} : vector<8x512xf32> to vector<8x128xf32>
    %578 = math.tanh %577 : vector<8x128xf32>
    %579 = vector.extract_strided_slice %563 {offsets = [0, 384], sizes = [8, 128], strides = [1, 1]} : vector<8x512xf32> to vector<8x128xf32>
    %580 = arith.negf %579 : vector<8x128xf32>
    %581 = math.exp %580 : vector<8x128xf32>
    %cst_270 = arith.constant 1.000000e+00 : f32
    %582 = vector.broadcast %cst_270 : f32 to vector<8x128xf32>
    %583 = arith.addf %582, %581 : vector<8x128xf32>
    %584 = arith.divf %582, %583 : vector<8x128xf32>
    %585 = arith.mulf %576, %564 : vector<8x128xf32>
    %586 = arith.mulf %570, %578 : vector<8x128xf32>
    %587 = arith.addf %585, %586 : vector<8x128xf32>
    %588 = math.tanh %587 : vector<8x128xf32>
    %589 = arith.mulf %584, %588 : vector<8x128xf32>
    %c0_271 = arith.constant 0 : index
    %c0_272 = arith.constant 0 : index
    %590 = vector.load %arg7[%c0_271, %c0_272] : memref<8x128xf32, #tpu.memory_space<vmem>>, vector<8x128xf32>
    tpu.vector_store %arg7[%c0_271, %c0_272], %589 {strides = array<i32>} : memref<8x128xf32, #tpu.memory_space<vmem>>, vector<8x128xf32>,
    %c0_273 = arith.constant 0 : index
    %c0_274 = arith.constant 0 : index
    %591 = vector.load %arg8[%c0_273, %c0_274] : memref<8x128xf32, #tpu.memory_space<vmem>>, vector<8x128xf32>
    tpu.vector_store %arg8[%c0_273, %c0_274], %587 {strides = array<i32>} : memref<8x128xf32, #tpu.memory_space<vmem>>, vector<8x128xf32>,
    %592 = arith.truncf %589 : vector<8x128xf32> to vector<8x128xbf16>
    %c0_275 = arith.constant 0 : index
    %c0_276 = arith.constant 0 : index
    %593 = vector.load %arg3[%c0_275, %c0_276] : memref<128x512xbf16, #tpu.memory_space<vmem>>, vector<128x512xbf16>
    %cst_277 = arith.constant dense<0.000000e+00> : vector<8x512xf32>
    %594 = tpu.matmul %592, %593, %cst_277 {dimension_numbers = #tpu.dot_dimension_numbers<[1], [0], [0], [1], [0, 0, 1, 1], [], []>} : vector<8x128xbf16>, vector<128x512xbf16>, vector<8x512xf32> -> vector<8x512xf32>
    %c0_278 = arith.constant 0 : index
    %c0_279 = arith.constant 0 : index
    %595 = vector.load %arg9[%c0_278, %c0_279] : memref<8x128xf32, #tpu.memory_space<vmem>>, vector<8x128xf32>
    %596 = arith.truncf %595 : vector<8x128xf32> to vector<8x128xbf16>
    %c0_280 = arith.constant 0 : index
    %c0_281 = arith.constant 0 : index
    %597 = vector.load %arg4[%c0_280, %c0_281] : memref<128x512xbf16, #tpu.memory_space<vmem>>, vector<128x512xbf16>
    %cst_282 = arith.constant dense<0.000000e+00> : vector<8x512xf32>
    %598 = tpu.matmul %596, %597, %cst_282 {dimension_numbers = #tpu.dot_dimension_numbers<[1], [0], [0], [1], [0, 0, 1, 1], [], []>} : vector<8x128xbf16>, vector<128x512xbf16>, vector<8x512xf32> -> vector<8x512xf32>
    %599 = arith.addf %594, %598 : vector<8x512xf32>
    %c0_283 = arith.constant 0 : index
    %c0_284 = arith.constant 0 : index
    %600 = vector.load %arg5[%c0_283, %c0_284] : memref<1x512xf32, #tpu.memory_space<vmem>>, vector<1x512xf32>
    %601 = vector.broadcast %600 : vector<1x512xf32> to vector<8x512xf32>
    %602 = arith.addf %599, %601 : vector<8x512xf32>
    %c0_285 = arith.constant 0 : index
    %c0_286 = arith.constant 0 : index
    %603 = vector.load %arg10[%c0_285, %c0_286] : memref<8x128xf32, #tpu.memory_space<vmem>>, vector<8x128xf32>
    %604 = vector.extract_strided_slice %602 {offsets = [0, 0], sizes = [8, 128], strides = [1, 1]} : vector<8x512xf32> to vector<8x128xf32>
    %605 = arith.negf %604 : vector<8x128xf32>
    %606 = math.exp %605 : vector<8x128xf32>
    %cst_287 = arith.constant 1.000000e+00 : f32
    %607 = vector.broadcast %cst_287 : f32 to vector<8x128xf32>
    %608 = arith.addf %607, %606 : vector<8x128xf32>
    %609 = arith.divf %607, %608 : vector<8x128xf32>
    %610 = vector.extract_strided_slice %602 {offsets = [0, 128], sizes = [8, 128], strides = [1, 1]} : vector<8x512xf32> to vector<8x128xf32>
    %611 = arith.negf %610 : vector<8x128xf32>
    %612 = math.exp %611 : vector<8x128xf32>
    %cst_288 = arith.constant 1.000000e+00 : f32
    %613 = vector.broadcast %cst_288 : f32 to vector<8x128xf32>
    %614 = arith.addf %613, %612 : vector<8x128xf32>
    %615 = arith.divf %613, %614 : vector<8x128xf32>
    %616 = vector.extract_strided_slice %602 {offsets = [0, 256], sizes = [8, 128], strides = [1, 1]} : vector<8x512xf32> to vector<8x128xf32>
    %617 = math.tanh %616 : vector<8x128xf32>
    %618 = vector.extract_strided_slice %602 {offsets = [0, 384], sizes = [8, 128], strides = [1, 1]} : vector<8x512xf32> to vector<8x128xf32>
    %619 = arith.negf %618 : vector<8x128xf32>
    %620 = math.exp %619 : vector<8x128xf32>
    %cst_289 = arith.constant 1.000000e+00 : f32
    %621 = vector.broadcast %cst_289 : f32 to vector<8x128xf32>
    %622 = arith.addf %621, %620 : vector<8x128xf32>
    %623 = arith.divf %621, %622 : vector<8x128xf32>
    %624 = arith.mulf %615, %603 : vector<8x128xf32>
    %625 = arith.mulf %609, %617 : vector<8x128xf32>
    %626 = arith.addf %624, %625 : vector<8x128xf32>
    %627 = math.tanh %626 : vector<8x128xf32>
    %628 = arith.mulf %623, %627 : vector<8x128xf32>
    %c0_290 = arith.constant 0 : index
    %c0_291 = arith.constant 0 : index
    %629 = vector.load %arg9[%c0_290, %c0_291] : memref<8x128xf32, #tpu.memory_space<vmem>>, vector<8x128xf32>
    tpu.vector_store %arg9[%c0_290, %c0_291], %628 {strides = array<i32>} : memref<8x128xf32, #tpu.memory_space<vmem>>, vector<8x128xf32>,
    %c0_292 = arith.constant 0 : index
    %c0_293 = arith.constant 0 : index
    %630 = vector.load %arg10[%c0_292, %c0_293] : memref<8x128xf32, #tpu.memory_space<vmem>>, vector<8x128xf32>
    tpu.vector_store %arg10[%c0_292, %c0_293], %626 {strides = array<i32>} : memref<8x128xf32, #tpu.memory_space<vmem>>, vector<8x128xf32>,
    %631 = arith.index_cast %c7_i32 : i32 to index
    %c0_294 = arith.constant 0 : index
    %c0_295 = arith.constant 0 : index
    %632 = vector.load %arg6[%631, %c0_294, %c0_295] : memref<8x8x128xf32, #tpu.memory_space<vmem>>, vector<1x8x128xf32>
    %633 = vector.shape_cast %632 : vector<1x8x128xf32> to vector<8x128xf32>
    %634 = vector.shape_cast %628 : vector<8x128xf32> to vector<1x8x128xf32>
    tpu.vector_store %arg6[%631, %c0_294, %c0_295], %634 {strides = array<i32>} : memref<8x8x128xf32, #tpu.memory_space<vmem>>, vector<1x8x128xf32>,
    %c8_i32 = arith.constant 8 : i32
    return
  }
  func.func @transform_0(%arg0: i32) -> (i32, i32, i32) {
    %c0_i32 = arith.constant 0 : i32
    %c0_i32_0 = arith.constant 0 : i32
    %c0_i32_1 = arith.constant 0 : i32
    return %arg0, %c0_i32, %c0_i32_0 : i32, i32, i32
  }
  func.func @transform_1(%arg0: i32) -> (i32, i32) {
    %c0_i32 = arith.constant 0 : i32
    %c0_i32_0 = arith.constant 0 : i32
    %c0_i32_1 = arith.constant 0 : i32
    return %c0_i32, %c0_i32_0 : i32, i32
  }
  func.func @transform_2(%arg0: i32) -> (i32, i32) {
    %c0_i32 = arith.constant 0 : i32
    %c0_i32_0 = arith.constant 0 : i32
    %c0_i32_1 = arith.constant 0 : i32
    return %c0_i32, %c0_i32_0 : i32, i32
  }
  func.func @transform_3(%arg0: i32) -> (i32, i32) {
    %c0_i32 = arith.constant 0 : i32
    %c0_i32_0 = arith.constant 0 : i32
    %c0_i32_1 = arith.constant 0 : i32
    return %c0_i32, %c0_i32_0 : i32, i32
  }
  func.func @transform_4(%arg0: i32) -> (i32, i32) {
    %c0_i32 = arith.constant 0 : i32
    %c0_i32_0 = arith.constant 0 : i32
    %c0_i32_1 = arith.constant 0 : i32
    return %c0_i32, %c0_i32_0 : i32, i32
  }
  func.func @transform_5(%arg0: i32) -> (i32, i32, i32) {
    %c0_i32 = arith.constant 0 : i32
    %c0_i32_0 = arith.constant 0 : i32
    %c0_i32_1 = arith.constant 0 : i32
    return %arg0, %c0_i32, %c0_i32_0 : i32, i32, i32
  }
}

</mosaic_0001>

<llo_original>
// kernel: multi_layer_lstm.1
$region0: #{multi_layer_lstm.1}
  #allocation0 [shape = 'u32[]', space=smem, size = 0x4, offset = 0x4, fixed_abs, tag = 'smem constant byte address 0x4 - core index']
  #allocation1 [shape = 'u32[144,128]{1,0:T(1,128)}', space=vmem, size = 0x12000, scoped, tag = 'internal scratch']
  #allocation2 [shape = 'f32[8,128]{1,0:T(8,128)}', space=vmem, size = 0x1000, scoped, tag = 'scratch operand']
  #allocation3 [shape = 'f32[8,128]{1,0:T(8,128)}', space=vmem, size = 0x1000, scoped, tag = 'scratch operand']
  #allocation4 [shape = 'f32[8,128]{1,0:T(8,128)}', space=vmem, size = 0x1000, scoped, tag = 'scratch operand']
  #allocation5 [shape = 'f32[8,128]{1,0:T(8,128)}', space=vmem, size = 0x1000, scoped, tag = 'scratch operand']
  %s0 = inlined_call_operand.vmem [shape: f32[8,8,512], index: 0, kind: input, shape index: {}]
  %s1 = inlined_call_operand.vmem [shape: bf16[128,512], index: 1, kind: input, shape index: {}]
  %s2 = inlined_call_operand.vmem [shape: bf16[128,512], index: 2, kind: input, shape index: {}]
  %s3 = inlined_call_operand.vmem [shape: bf16[128,512], index: 3, kind: input, shape index: {}]
  %s4 = inlined_call_operand.vmem [shape: f32[1,512], index: 4, kind: input, shape index: {}]
  %s5 = inlined_call_operand.vmem [shape: f32[8,8,128], index: 5, kind: output, shape index: {}]
  %s6 = sld [smem:[#allocation0]]
  $region34: #{multi_layer_lstm.1} parent=0
    _
  %s8 = ssub.s32 1, %s6
  %s9 = scalar_select 0, %s8, %s6
  // Predicated region
  $region2: #{multi_layer_lstm.1} parent=0 // pred_check
    _
  $region3: #{multi_layer_lstm.1} parent=0 // pred_check_branch
    %11 = sbr.rel (0) target = $region5
  $region4: #{multi_layer_lstm.1} parent=0 // pred_region
    _
  $region5: #{multi_layer_lstm.1} parent=0 // pred_fallthru
    _
  // Predicated region
  $region6: #{multi_layer_lstm.1} parent=0 // pred_check
    _
  $region7: #{multi_layer_lstm.1} parent=0 // pred_check_branch
    %13 = sbr.rel (0) target = $region9
  $region8: #{multi_layer_lstm.1} parent=0 // pred_region
    _
  $region9: #{multi_layer_lstm.1} parent=0 // pred_fallthru
    _
  // Predicated region
  $region10: #{multi_layer_lstm.1} parent=0 // pred_check
    _
  $region11: #{multi_layer_lstm.1} parent=0 // pred_check_branch
    %15 = sbr.rel (0) target = $region13
  $region12: #{multi_layer_lstm.1} parent=0 // pred_region
    _
  $region13: #{multi_layer_lstm.1} parent=0 // pred_fallthru
    _
  // Predicated region
  $region14: #{multi_layer_lstm.1} parent=0 // pred_check
    _
  $region15: #{multi_layer_lstm.1} parent=0 // pred_check_branch
    %17 = sbr.rel (0) target = $region17
  $region16: #{multi_layer_lstm.1} parent=0 // pred_region
    _
  $region17: #{multi_layer_lstm.1} parent=0 // pred_fallthru
    _
  // Predicated region
  $region18: #{multi_layer_lstm.1} parent=0 // pred_check
    _
  $region19: #{multi_layer_lstm.1} parent=0 // pred_check_branch
    %19 = sbr.rel (0) target = $region21
  $region20: #{multi_layer_lstm.1} parent=0 // pred_region
    _
  $region21: #{multi_layer_lstm.1} parent=0 // pred_fallthru
    _
  %p21 = scmp.eq.s32.totalorder 0, 0
  // Predicated region
  $region22: #{multi_layer_lstm.1} parent=0 // pred_check
    %p22 = pneg %p21
  $region23: #{multi_layer_lstm.1} parent=0 // pred_check_branch
    %24 = sbr.rel (%p22) target = $region25
  $region24: #{multi_layer_lstm.1} parent=0 // pred_region
    %25 = vst [vmem:[#allocation2] sm:$0xff] 0.0
    %26 = vst [vmem:[#allocation3] sm:$0xff] 0.0
    %27 = vst [vmem:[#allocation4] sm:$0xff] 0.0
    %28 = vst [vmem:[#allocation5] sm:$0xff] 0.0
  $region25: #{multi_layer_lstm.1} parent=0 // pred_fallthru
    _
  %v29 = vld [vmem:[%s0] sm:$0xff]
  %v30 = vld [vmem:[%s0 + $0x8] sm:$0xff]
  %v31 = vld [vmem:[%s0 + $0x10] sm:$0xff]
  %v32 = vld [vmem:[%s0 + $0x18] sm:$0xff]
  %v33 = vld [vmem:[#allocation2] sm:$0xff]
  %v34 = vpack.c.bf16 %v33, %v33
  %v35 = vld [vmem:[%s1] sm:$0xff]
  %v36 = vld [vmem:[%s1 + $0x8] sm:$0xff]
  %v37 = vld [vmem:[%s1 + $0x10] sm:$0xff]
  %v38 = vld [vmem:[%s1 + $0x18] sm:$0xff]
  %v39 = vld [vmem:[%s1 + $0x20] sm:$0xff]
  %v40 = vld [vmem:[%s1 + $0x28] sm:$0xff]
  %v41 = vld [vmem:[%s1 + $0x30] sm:$0xff]
  %v42 = vld [vmem:[%s1 + $0x38] sm:$0xff]
  %v43 = vld [vmem:[%s1 + $0x40] sm:$0xff]
  %v44 = vld [vmem:[%s1 + $0x48] sm:$0xff]
  %v45 = vld [vmem:[%s1 + $0x50] sm:$0xff]
  %v46 = vld [vmem:[%s1 + $0x58] sm:$0xff]
  %v47 = vld [vmem:[%s1 + $0x60] sm:$0xff]
  %v48 = vld [vmem:[%s1 + $0x68] sm:$0xff]
  %v49 = vld [vmem:[%s1 + $0x70] sm:$0xff]
  %v50 = vld [vmem:[%s1 + $0x78] sm:$0xff]
  %v51 = vld [vmem:[%s1 + $0x80] sm:$0xff]
  %v52 = vld [vmem:[%s1 + $0x88] sm:$0xff]
  %v53 = vld [vmem:[%s1 + $0x90] sm:$0xff]
  %v54 = vld [vmem:[%s1 + $0x98] sm:$0xff]
  %v55 = vld [vmem:[%s1 + $0xa0] sm:$0xff]
  %v56 = vld [vmem:[%s1 + $0xa8] sm:$0xff]
  %v57 = vld [vmem:[%s1 + $0xb0] sm:$0xff]
  %v58 = vld [vmem:[%s1 + $0xb8] sm:$0xff]
  %v59 = vld [vmem:[%s1 + $0xc0] sm:$0xff]
  %v60 = vld [vmem:[%s1 + $0xc8] sm:$0xff]
  %v61 = vld [vmem:[%s1 + $0xd0] sm:$0xff]
  %v62 = vld [vmem:[%s1 + $0xd8] sm:$0xff]
  %v63 = vld [vmem:[%s1 + $0xe0] sm:$0xff]
  %v64 = vld [vmem:[%s1 + $0xe8] sm:$0xff]
  %v65 = vld [vmem:[%s1 + $0xf0] sm:$0xff]
  %v66 = vld [vmem:[%s1 + $0xf8] sm:$0xff]
  %v99 = vunpack.c.l.b16 %v35
  %v100 = vunpack.c.h.b16 %v35
  %v101 = vunpack.c.l.b16 %v36
  %v102 = vunpack.c.h.b16 %v36
  %v103 = vunpack.c.l.b16 %v37
  %v104 = vunpack.c.h.b16 %v37
  %v105 = vunpack.c.l.b16 %v38
  %v106 = vunpack.c.h.b16 %v38
  %v107 = vunpack.c.l.b16 %v39
  %v108 = vunpack.c.h.b16 %v39
  %v109 = vunpack.c.l.b16 %v40
  %v110 = vunpack.c.h.b16 %v40
  %v111 = vunpack.c.l.b16 %v41
  %v112 = vunpack.c.h.b16 %v41
  %v113 = vunpack.c.l.b16 %v42
  %v114 = vunpack.c.h.b16 %v42
  %v115 = vunpack.c.l.b16 %v43
  %v116 = vunpack.c.h.b16 %v43
  %v117 = vunpack.c.l.b16 %v44
  %v118 = vunpack.c.h.b16 %v44
  %v119 = vunpack.c.l.b16 %v45
  %v120 = vunpack.c.h.b16 %v45
  %v121 = vunpack.c.l.b16 %v46
  %v122 = vunpack.c.h.b16 %v46
  %v123 = vunpack.c.l.b16 %v47
  %v124 = vunpack.c.h.b16 %v47
  %v125 = vunpack.c.l.b16 %v48
  %v126 = vunpack.c.h.b16 %v48
  %v127 = vunpack.c.l.b16 %v49
  %v128 = vunpack.c.h.b16 %v49
  %v129 = vunpack.c.l.b16 %v50
  %v130 = vunpack.c.h.b16 %v50
  %v131 = vunpack.c.l.b16 %v51
  %v132 = vunpack.c.h.b16 %v51
  %v133 = vunpack.c.l.b16 %v52
  %v134 = vunpack.c.h.b16 %v52
  %v135 = vunpack.c.l.b16 %v53
  %v136 = vunpack.c.h.b16 %v53
  %v137 = vunpack.c.l.b16 %v54
  %v138 = vunpack.c.h.b16 %v54
  %v139 = vunpack.c.l.b16 %v55
  %v140 = vunpack.c.h.b16 %v55
  %v141 = vunpack.c.l.b16 %v56
  %v142 = vunpack.c.h.b16 %v56
  %v143 = vunpack.c.l.b16 %v57
  %v144 = vunpack.c.h.b16 %v57
  %v145 = vunpack.c.l.b16 %v58
  %v146 = vunpack.c.h.b16 %v58
  %v147 = vunpack.c.l.b16 %v59
  %v148 = vunpack.c.h.b16 %v59
  %v149 = vunpack.c.l.b16 %v60
  %v150 = vunpack.c.h.b16 %v60
  %v151 = vunpack.c.l.b16 %v61
  %v152 = vunpack.c.h.b16 %v61
  %v153 = vunpack.c.l.b16 %v62
  %v154 = vunpack.c.h.b16 %v62
  %v155 = vunpack.c.l.b16 %v63
  %v156 = vunpack.c.h.b16 %v63
  %v157 = vunpack.c.l.b16 %v64
  %v158 = vunpack.c.h.b16 %v64
  %v159 = vunpack.c.l.b16 %v65
  %v160 = vunpack.c.h.b16 %v65
  %v161 = vunpack.c.l.b16 %v66
  %v162 = vunpack.c.h.b16 %v66
  %v163 = vpack.c.b16 %v103, %v99
  %v164 = vpack.c.b16 %v104, %v100
  %v165 = vpack.c.b16 %v105, %v101
  %v166 = vpack.c.b16 %v106, %v102
  %v167 = vpack.c.b16 %v111, %v107
  %v168 = vpack.c.b16 %v112, %v108
  %v169 = vpack.c.b16 %v113, %v109
  %v170 = vpack.c.b16 %v114, %v110
  %v171 = vpack.c.b16 %v119, %v115
  %v172 = vpack.c.b16 %v120, %v116
  %v173 = vpack.c.b16 %v121, %v117
  %v174 = vpack.c.b16 %v122, %v118
  %v175 = vpack.c.b16 %v127, %v123
  %v176 = vpack.c.b16 %v128, %v124
  %v177 = vpack.c.b16 %v129, %v125
  %v178 = vpack.c.b16 %v130, %v126
  %v179 = vpack.c.b16 %v135, %v131
  %v180 = vpack.c.b16 %v136, %v132
  %v181 = vpack.c.b16 %v137, %v133
  %v182 = vpack.c.b16 %v138, %v134
  %v183 = vpack.c.b16 %v143, %v139
  %v184 = vpack.c.b16 %v144, %v140
  %v185 = vpack.c.b16 %v145, %v141
  %v186 = vpack.c.b16 %v146, %v142
  %v187 = vpack.c.b16 %v151, %v147
  %v188 = vpack.c.b16 %v152, %v148
  %v189 = vpack.c.b16 %v153, %v149
  %v190 = vpack.c.b16 %v154, %v150
  %v191 = vpack.c.b16 %v159, %v155
  %v192 = vpack.c.b16 %v160, %v156
  %v193 = vpack.c.b16 %v161, %v157
  %v194 = vpack.c.b16 %v162, %v158
  %227 = vmatprep.subr.bf16.mxu0 %v164
  %228 = vmatpush1.bf16.msra.mxu0 %v163
  %229 = vmatprep.subr.bf16.mxu0 %v168
  %230 = vmatpush1.bf16.msra.mxu0 %v167
  %231 = vmatprep.subr.bf16.mxu0 %v172
  %232 = vmatpush1.bf16.msra.mxu0 %v171
  %233 = vmatprep.subr.bf16.mxu0 %v176
  %234 = vmatpush1.bf16.msra.mxu0 %v175
  %235 = vmatprep.subr.bf16.mxu0 %v180
  %236 = vmatpush1.bf16.msra.mxu0 %v179
  %237 = vmatprep.subr.bf16.mxu0 %v184
  %238 = vmatpush1.bf16.msra.mxu0 %v183
  %239 = vmatprep.subr.bf16.mxu0 %v188
  %240 = vmatpush1.bf16.msra.mxu0 %v187
  %241 = vmatprep.subr.bf16.mxu0 %v192
  %242 = vmatpush1.bf16.msra.mxu0 %v191
  %243 = vmatprep.subr.bf16.mxu0 0
  %244 = vmatpush1.bf16.msra.mxu0 0
  %245 = vmatprep.subr.bf16.mxu0 0
  %246 = vmatpush1.bf16.msra.mxu0 0
  %247 = vmatprep.subr.bf16.mxu0 0
  %248 = vmatpush1.bf16.msra.mxu0 0
  %249 = vmatprep.subr.bf16.mxu0 0
  %250 = vmatpush1.bf16.msra.mxu0 0
  %251 = vmatprep.subr.bf16.mxu0 0
  %252 = vmatpush1.bf16.msra.mxu0 0
  %253 = vmatprep.subr.bf16.mxu0 0
  %254 = vmatpush1.bf16.msra.mxu0 0
  %255 = vmatprep.subr.bf16.mxu0 0
  %256 = vmatpush1.bf16.msra.mxu0 0
  %257 = vmatprep.subr.bf16.mxu0 0
  %258 = vmatpush1.bf16.msra.mxu0 0
  %259 = vmatprep.mubr.bf16.mxu0 0
  %260 = vmatmul.mubr.bf16.gmra.mrb[0].mxu0 %v34
  %v261 = vpop.f32.mrb[0].mxu0
  %v262 = vadd.f32 0.0, %v261
  %v263 = vpop.f32.mrb[0].mxu0
  %v264 = vadd.f32 0.0, %v263
  %v265 = vpop.f32.mrb[0].mxu0
  %v266 = vpop.f32.mrb[0].mxu0
  %267 = vdwg.mxu0
  %268 = vmatprep.subr.bf16.mxu0 %v166
  %269 = vmatpush1.bf16.msra.mxu0 %v165
  %270 = vmatprep.subr.bf16.mxu0 %v170
  %271 = vmatpush1.bf16.msra.mxu0 %v169
  %272 = vmatprep.subr.bf16.mxu0 %v174
  %273 = vmatpush1.bf16.msra.mxu0 %v173
  %274 = vmatprep.subr.bf16.mxu0 %v178
  %275 = vmatpush1.bf16.msra.mxu0 %v177
  %276 = vmatprep.subr.bf16.mxu0 %v182
  %277 = vmatpush1.bf16.msra.mxu0 %v181
  %278 = vmatprep.subr.bf16.mxu0 %v186
  %279 = vmatpush1.bf16.msra.mxu0 %v185
  %280 = vmatprep.subr.bf16.mxu0 %v190
  %281 = vmatpush1.bf16.msra.mxu0 %v189
  %282 = vmatprep.subr.bf16.mxu0 %v194
  %283 = vmatpush1.bf16.msra.mxu0 %v193
  %284 = vmatprep.subr.bf16.mxu0 0
  %285 = vmatpush1.bf16.msra.mxu0 0
  %286 = vmatprep.subr.bf16.mxu0 0
  %287 = vmatpush1.bf16.msra.mxu0 0
  %288 = vmatprep.subr.bf16.mxu0 0
  %289 = vmatpush1.bf16.msra.mxu0 0
  %290 = vmatprep.subr.bf16.mxu0 0
  %291 = vmatpush1.bf16.msra.mxu0 0
  %292 = vmatprep.subr.bf16.mxu0 0
  %293 = vmatpush1.bf16.msra.mxu0 0
  %294 = vmatprep.subr.bf16.mxu0 0
  %295 = vmatpush1.bf16.msra.mxu0 0
  %296 = vmatprep.subr.bf16.mxu0 0
  %297 = vmatpush1.bf16.msra.mxu0 0
  %298 = vmatprep.subr.bf16.mxu0 0
  %299 = vmatpush1.bf16.msra.mxu0 0
  %300 = vmatprep.mubr.bf16.mxu0 0
  %301 = vmatmul.mubr.bf16.gmra.mrb[0].mxu0 %v34
  %v302 = vpop.f32.mrb[0].mxu0
  %v303 = vadd.f32 0.0, %v302
  %v304 = vpop.f32.mrb[0].mxu0
  %v305 = vadd.f32 0.0, %v304
  %v306 = vpop.f32.mrb[0].mxu0
  %v307 = vpop.f32.mrb[0].mxu0
  %308 = vdwg.mxu0
  %v309 = vadd.f32 %v29, %v262
  %v310 = vadd.f32 %v30, %v264
  %v311 = vadd.f32 %v31, %v303
  %v312 = vadd.f32 %v32, %v305
  %v313 = vld [vmem:[#allocation3] sm:$0xff]
  %v314 = vxor.u32 %v309, 2147483648
  %v315 = vmul.f32 %v314, 1.442695
  %v316 = vpow.pop %v315
  %v317 = vadd.f32 %v316, 1.0
  %v318 = vrcp.pop %v317
  %v319 = vmul.f32 1.0, %v318
  %v320 = vxor.u32 %v310, 2147483648
  %v321 = vmul.f32 %v320, 1.442695
  %v322 = vpow.pop %v321
  %v323 = vadd.f32 %v322, 1.0
  %v324 = vrcp.pop %v323
  %v325 = vmul.f32 1.0, %v324
  %v326 = vtanh.pop %v311
  %v327 = vxor.u32 %v312, 2147483648
  %v328 = vmul.f32 %v327, 1.442695
  %v329 = vpow.pop %v328
  %v330 = vadd.f32 %v329, 1.0
  %v331 = vrcp.pop %v330
  %v332 = vmul.f32 1.0, %v331
  %v333 = vmul.f32 %v325, %v313
  %v334 = vmul.f32 %v319, %v326
  %v335 = vadd.f32 %v333, %v334
  %v336 = vtanh.pop %v335
  %v337 = vmul.f32 %v332, %v336
  %338 = vst [vmem:[#allocation2] sm:$0xff] %v337
  %339 = vst [vmem:[#allocation3] sm:$0xff] %v335
  %v340 = vpack.c.bf16 %v337, %v337
  %v341 = vld [vmem:[%s2] sm:$0xff]
  %v342 = vld [vmem:[%s2 + $0x8] sm:$0xff]
  %v343 = vld [vmem:[%s2 + $0x10] sm:$0xff]
  %v344 = vld [vmem:[%s2 + $0x18] sm:$0xff]
  %v345 = vld [vmem:[%s2 + $0x20] sm:$0xff]
  %v346 = vld [vmem:[%s2 + $0x28] sm:$0xff]
  %v347 = vld [vmem:[%s2 + $0x30] sm:$0xff]
  %v348 = vld [vmem:[%s2 + $0x38] sm:$0xff]
  %v349 = vld [vmem:[%s2 + $0x40] sm:$0xff]
  %v350 = vld [vmem:[%s2 + $0x48] sm:$0xff]
  %v351 = vld [vmem:[%s2 + $0x50] sm:$0xff]
  %v352 = vld [vmem:[%s2 + $0x58] sm:$0xff]
  %v353 = vld [vmem:[%s2 + $0x60] sm:$0xff]
  %v354 = vld [vmem:[%s2 + $0x68] sm:$0xff]
  %v355 = vld [vmem:[%s2 + $0x70] sm:$0xff]
  %v356 = vld [vmem:[%s2 + $0x78] sm:$0xff]
  %v357 = vld [vmem:[%s2 + $0x80] sm:$0xff]
  %v358 = vld [vmem:[%s2 + $0x88] sm:$0xff]
  %v359 = vld [vmem:[%s2 + $0x90] sm:$0xff]
  %v360 = vld [vmem:[%s2 + $0x98] sm:$0xff]
  %v361 = vld [vmem:[%s2 + $0xa0] sm:$0xff]
  %v362 = vld [vmem:[%s2 + $0xa8] sm:$0xff]
  %v363 = vld [vmem:[%s2 + $0xb0] sm:$0xff]
  %v364 = vld [vmem:[%s2 + $0xb8] sm:$0xff]
  %v365 = vld [vmem:[%s2 + $0xc0] sm:$0xff]
  %v366 = vld [vmem:[%s2 + $0xc8] sm:$0xff]
  %v367 = vld [vmem:[%s2 + $0xd0] sm:$0xff]
  %v368 = vld [vmem:[%s2 + $0xd8] sm:$0xff]
  %v369 = vld [vmem:[%s2 + $0xe0] sm:$0xff]
  %v370 = vld [vmem:[%s2 + $0xe8] sm:$0xff]
  %v371 = vld [vmem:[%s2 + $0xf0] sm:$0xff]
  %v372 = vld [vmem:[%s2 + $0xf8] sm:$0xff]
  %v373 = vld [vmem:[#allocation4] sm:$0xff]
  %v374 = vpack.c.bf16 %v373, %v373
  %v375 = vld [vmem:[%s3] sm:$0xff]
  %v376 = vld [vmem:[%s3 + $0x8] sm:$0xff]
  %v377 = vld [vmem:[%s3 + $0x10] sm:$0xff]
  %v378 = vld [vmem:[%s3 + $0x18] sm:$0xff]
  %v379 = vld [vmem:[%s3 + $0x20] sm:$0xff]
  %v380 = vld [vmem:[%s3 + $0x28] sm:$0xff]
  %v381 = vld [vmem:[%s3 + $0x30] sm:$0xff]
  %v382 = vld [vmem:[%s3 + $0x38] sm:$0xff]
  %v383 = vld [vmem:[%s3 + $0x40] sm:$0xff]
  %v384 = vld [vmem:[%s3 + $0x48] sm:$0xff]
  %v385 = vld [vmem:[%s3 + $0x50] sm:$0xff]
  %v386 = vld [vmem:[%s3 + $0x58] sm:$0xff]
  %v387 = vld [vmem:[%s3 + $0x60] sm:$0xff]
  %v388 = vld [vmem:[%s3 + $0x68] sm:$0xff]
  %v389 = vld [vmem:[%s3 + $0x70] sm:$0xff]
  %v390 = vld [vmem:[%s3 + $0x78] sm:$0xff]
  %v391 = vld [vmem:[%s3 + $0x80] sm:$0xff]
  %v392 = vld [vmem:[%s3 + $0x88] sm:$0xff]
  %v393 = vld [vmem:[%s3 + $0x90] sm:$0xff]
  %v394 = vld [vmem:[%s3 + $0x98] sm:$0xff]
  %v395 = vld [vmem:[%s3 + $0xa0] sm:$0xff]
  %v396 = vld [vmem:[%s3 + $0xa8] sm:$0xff]
  %v397 = vld [vmem:[%s3 + $0xb0] sm:$0xff]
  %v398 = vld [vmem:[%s3 + $0xb8] sm:$0xff]
  %v399 = vld [vmem:[%s3 + $0xc0] sm:$0xff]
  %v400 = vld [vmem:[%s3 + $0xc8] sm:$0xff]
  %v401 = vld [vmem:[%s3 + $0xd0] sm:$0xff]
  %v402 = vld [vmem:[%s3 + $0xd8] sm:$0xff]
  %v403 = vld [vmem:[%s3 + $0xe0] sm:$0xff]
  %v404 = vld [vmem:[%s3 + $0xe8] sm:$0xff]
  %v405 = vld [vmem:[%s3 + $0xf0] sm:$0xff]
  %v406 = vld [vmem:[%s3 + $0xf8] sm:$0xff]
  %v439 = vunpack.c.l.b16 %v375
  %v440 = vunpack.c.h.b16 %v375
  %v441 = vunpack.c.l.b16 %v376
  %v442 = vunpack.c.h.b16 %v376
  %v443 = vunpack.c.l.b16 %v377
  %v444 = vunpack.c.h.b16 %v377
  %v445 = vunpack.c.l.b16 %v378
  %v446 = vunpack.c.h.b16 %v378
  %v447 = vunpack.c.l.b16 %v379
  %v448 = vunpack.c.h.b16 %v379
  %v449 = vunpack.c.l.b16 %v380
  %v450 = vunpack.c.h.b16 %v380
  %v451 = vunpack.c.l.b16 %v381
  %v452 = vunpack.c.h.b16 %v381
  %v453 = vunpack.c.l.b16 %v382
  %v454 = vunpack.c.h.b16 %v382
  %v455 = vunpack.c.l.b16 %v383
  %v456 = vunpack.c.h.b16 %v383
  %v457 = vunpack.c.l.b16 %v384
  %v458 = vunpack.c.h.b16 %v384
  %v459 = vunpack.c.l.b16 %v385
  %v460 = vunpack.c.h.b16 %v385
  %v461 = vunpack.c.l.b16 %v386
  %v462 = vunpack.c.h.b16 %v386
  %v463 = vunpack.c.l.b16 %v387
  %v464 = vunpack.c.h.b16 %v387
  %v465 = vunpack.c.l.b16 %v388
  %v466 = vunpack.c.h.b16 %v388
  %v467 = vunpack.c.l.b16 %v389
  %v468 = vunpack.c.h.b16 %v389
  %v469 = vunpack.c.l.b16 %v390
  %v470 = vunpack.c.h.b16 %v390
  %v471 = vunpack.c.l.b16 %v391
  %v472 = vunpack.c.h.b16 %v391
  %v473 = vunpack.c.l.b16 %v392
  %v474 = vunpack.c.h.b16 %v392
  %v475 = vunpack.c.l.b16 %v393
  %v476 = vunpack.c.h.b16 %v393
  %v477 = vunpack.c.l.b16 %v394
  %v478 = vunpack.c.h.b16 %v394
  %v479 = vunpack.c.l.b16 %v395
  %v480 = vunpack.c.h.b16 %v395
  %v481 = vunpack.c.l.b16 %v396
  %v482 = vunpack.c.h.b16 %v396
  %v483 = vunpack.c.l.b16 %v397
  %v484 = vunpack.c.h.b16 %v397
  %v485 = vunpack.c.l.b16 %v398
  %v486 = vunpack.c.h.b16 %v398
  %v487 = vunpack.c.l.b16 %v399
  %v488 = vunpack.c.h.b16 %v399
  %v489 = vunpack.c.l.b16 %v400
  %v490 = vunpack.c.h.b16 %v400
  %v491 = vunpack.c.l.b16 %v401
  %v492 = vunpack.c.h.b16 %v401
  %v493 = vunpack.c.l.b16 %v402
  %v494 = vunpack.c.h.b16 %v402
  %v495 = vunpack.c.l.b16 %v403
  %v496 = vunpack.c.h.b16 %v403
  %v497 = vunpack.c.l.b16 %v404
  %v498 = vunpack.c.h.b16 %v404
  %v499 = vunpack.c.l.b16 %v405
  %v500 = vunpack.c.h.b16 %v405
  %v501 = vunpack.c.l.b16 %v406
  %v502 = vunpack.c.h.b16 %v406
  %v503 = vpack.c.b16 %v443, %v439
  %v504 = vpack.c.b16 %v444, %v440
  %v505 = vpack.c.b16 %v445, %v441
  %v506 = vpack.c.b16 %v446, %v442
  %v507 = vpack.c.b16 %v451, %v447
  %v508 = vpack.c.b16 %v452, %v448
  %v509 = vpack.c.b16 %v453, %v449
  %v510 = vpack.c.b16 %v454, %v450
  %v511 = vpack.c.b16 %v459, %v455
  %v512 = vpack.c.b16 %v460, %v456
  %v513 = vpack.c.b16 %v461, %v457
  %v514 = vpack.c.b16 %v462, %v458
  %v515 = vpack.c.b16 %v467, %v463
  %v516 = vpack.c.b16 %v468, %v464
  %v517 = vpack.c.b16 %v469, %v465
  %v518 = vpack.c.b16 %v470, %v466
  %v519 = vpack.c.b16 %v475, %v471
  %v520 = vpack.c.b16 %v476, %v472
  %v521 = vpack.c.b16 %v477, %v473
  %v522 = vpack.c.b16 %v478, %v474
  %v523 = vpack.c.b16 %v483, %v479
  %v524 = vpack.c.b16 %v484, %v480
  %v525 = vpack.c.b16 %v485, %v481
  %v526 = vpack.c.b16 %v486, %v482
  %v527 = vpack.c.b16 %v491, %v487
  %v528 = vpack.c.b16 %v492, %v488
  %v529 = vpack.c.b16 %v493, %v489
  %v530 = vpack.c.b16 %v494, %v490
  %v531 = vpack.c.b16 %v499, %v495
  %v532 = vpack.c.b16 %v500, %v496
  %v533 = vpack.c.b16 %v501, %v497
  %v534 = vpack.c.b16 %v502, %v498
  %567 = vmatprep.subr.bf16.mxu0 %v504
  %568 = vmatpush1.bf16.msra.mxu0 %v503
  %569 = vmatprep.subr.bf16.mxu0 %v508
  %570 = vmatpush1.bf16.msra.mxu0 %v507
  %571 = vmatprep.subr.bf16.mxu0 %v512
  %572 = vmatpush1.bf16.msra.mxu0 %v511
  %573 = vmatprep.subr.bf16.mxu0 %v516
  %574 = vmatpush1.bf16.msra.mxu0 %v515
  %575 = vmatprep.subr.bf16.mxu0 %v520
  %576 = vmatpush1.bf16.msra.mxu0 %v519
  %577 = vmatprep.subr.bf16.mxu0 %v524
  %578 = vmatpush1.bf16.msra.mxu0 %v523
  %579 = vmatprep.subr.bf16.mxu0 %v528
  %580 = vmatpush1.bf16.msra.mxu0 %v527
  %581 = vmatprep.subr.bf16.mxu0 %v532
  %582 = vmatpush1.bf16.msra.mxu0 %v531
  %583 = vmatprep.subr.bf16.mxu0 0
  %584 = vmatpush1.bf16.msra.mxu0 0
  %585 = vmatprep.subr.bf16.mxu0 0
  %586 = vmatpush1.bf16.msra.mxu0 0
  %587 = vmatprep.subr.bf16.mxu0 0
  %588 = vmatpush1.bf16.msra.mxu0 0
  %589 = vmatprep.subr.bf16.mxu0 0
  %590 = vmatpush1.bf16.msra.mxu0 0
  %591 = vmatprep.subr.bf16.mxu0 0
  %592 = vmatpush1.bf16.msra.mxu0 0
  %593 = vmatprep.subr.bf16.mxu0 0
  %594 = vmatpush1.bf16.msra.mxu0 0
  %595 = vmatprep.subr.bf16.mxu0 0
  %596 = vmatpush1.bf16.msra.mxu0 0
  %597 = vmatprep.subr.bf16.mxu0 0
  %598 = vmatpush1.bf16.msra.mxu0 0
  %599 = vmatprep.mubr.bf16.mxu0 0
  %600 = vmatmul.mubr.bf16.gmra.mrb[0].mxu0 %v374
  %v601 = vpop.f32.mrb[0].mxu0
  %v602 = vadd.f32 0.0, %v601
  %v603 = vpop.f32.mrb[0].mxu0
  %v604 = vadd.f32 0.0, %v603
  %v605 = vpop.f32.mrb[0].mxu0
  %v606 = vpop.f32.mrb[0].mxu0
  %607 = vdwg.mxu0
  %608 = vmatprep.subr.bf16.mxu0 %v506
  %609 = vmatpush1.bf16.msra.mxu0 %v505
  %610 = vmatprep.subr.bf16.mxu0 %v510
  %611 = vmatpush1.bf16.msra.mxu0 %v509
  %612 = vmatprep.subr.bf16.mxu0 %v514
  %613 = vmatpush1.bf16.msra.mxu0 %v513
  %614 = vmatprep.subr.bf16.mxu0 %v518
  %615 = vmatpush1.bf16.msra.mxu0 %v517
  %616 = vmatprep.subr.bf16.mxu0 %v522
  %617 = vmatpush1.bf16.msra.mxu0 %v521
  %618 = vmatprep.subr.bf16.mxu0 %v526
  %619 = vmatpush1.bf16.msra.mxu0 %v525
  %620 = vmatprep.subr.bf16.mxu0 %v530
  %621 = vmatpush1.bf16.msra.mxu0 %v529
  %622 = vmatprep.subr.bf16.mxu0 %v534
  %623 = vmatpush1.bf16.msra.mxu0 %v533
  %624 = vmatprep.subr.bf16.mxu0 0
  %625 = vmatpush1.bf16.msra.mxu0 0
  %626 = vmatprep.subr.bf16.mxu0 0
  %627 = vmatpush1.bf16.msra.mxu0 0
  %628 = vmatprep.subr.bf16.mxu0 0
  %629 = vmatpush1.bf16.msra.mxu0 0
  %630 = vmatprep.subr.bf16.mxu0 0
  %631 = vmatpush1.bf16.msra.mxu0 0
  %632 = vmatprep.subr.bf16.mxu0 0
  %633 = vmatpush1.bf16.msra.mxu0 0
  %634 = vmatprep.subr.bf16.mxu0 0
  %635 = vmatpush1.bf16.msra.mxu0 0
  %636 = vmatprep.subr.bf16.mxu0 0
  %637 = vmatpush1.bf16.msra.mxu0 0
  %638 = vmatprep.subr.bf16.mxu0 0
  %639 = vmatpush1.bf16.msra.mxu0 0
  %640 = vmatprep.mubr.bf16.mxu0 0
  %641 = vmatmul.mubr.bf16.gmra.mrb[0].mxu0 %v374
  %v642 = vpop.f32.mrb[0].mxu0
  %v643 = vadd.f32 0.0, %v642
  %v644 = vpop.f32.mrb[0].mxu0
  %v645 = vadd.f32 0.0, %v644
  %v646 = vpop.f32.mrb[0].mxu0
  %v647 = vpop.f32.mrb[0].mxu0
  %648 = vdwg.mxu0
  %v681 = vunpack.c.l.b16 %v341
  %v682 = vunpack.c.h.b16 %v341
  %v683 = vunpack.c.l.b16 %v342
  %v684 = vunpack.c.h.b16 %v342
  %v685 = vunpack.c.l.b16 %v343
  %v686 = vunpack.c.h.b16 %v343
  %v687 = vunpack.c.l.b16 %v344
  %v688 = vunpack.c.h.b16 %v344
  %v689 = vunpack.c.l.b16 %v345
  %v690 = vunpack.c.h.b16 %v345
  %v691 = vunpack.c.l.b16 %v346
  %v692 = vunpack.c.h.b16 %v346
  %v693 = vunpack.c.l.b16 %v347
  %v694 = vunpack.c.h.b16 %v347
  %v695 = vunpack.c.l.b16 %v348
  %v696 = vunpack.c.h.b16 %v348
  %v697 = vunpack.c.l.b16 %v349
  %v698 = vunpack.c.h.b16 %v349
  %v699 = vunpack.c.l.b16 %v350
  %v700 = vunpack.c.h.b16 %v350
  %v701 = vunpack.c.l.b16 %v351
  %v702 = vunpack.c.h.b16 %v351
  %v703 = vunpack.c.l.b16 %v352
  %v704 = vunpack.c.h.b16 %v352
  %v705 = vunpack.c.l.b16 %v353
  %v706 = vunpack.c.h.b16 %v353
  %v707 = vunpack.c.l.b16 %v354
  %v708 = vunpack.c.h.b16 %v354
  %v709 = vunpack.c.l.b16 %v355
  %v710 = vunpack.c.h.b16 %v355
  %v711 = vunpack.c.l.b16 %v356
  %v712 = vunpack.c.h.b16 %v356
  %v713 = vunpack.c.l.b16 %v357
  %v714 = vunpack.c.h.b16 %v357
  %v715 = vunpack.c.l.b16 %v358
  %v716 = vunpack.c.h.b16 %v358
  %v717 = vunpack.c.l.b16 %v359
  %v718 = vunpack.c.h.b16 %v359
  %v719 = vunpack.c.l.b16 %v360
  %v720 = vunpack.c.h.b16 %v360
  %v721 = vunpack.c.l.b16 %v361
  %v722 = vunpack.c.h.b16 %v361
  %v723 = vunpack.c.l.b16 %v362
  %v724 = vunpack.c.h.b16 %v362
  %v725 = vunpack.c.l.b16 %v363
  %v726 = vunpack.c.h.b16 %v363
  %v727 = vunpack.c.l.b16 %v364
  %v728 = vunpack.c.h.b16 %v364
  %v729 = vunpack.c.l.b16 %v365
  %v730 = vunpack.c.h.b16 %v365
  %v731 = vunpack.c.l.b16 %v366
  %v732 = vunpack.c.h.b16 %v366
  %v733 = vunpack.c.l.b16 %v367
  %v734 = vunpack.c.h.b16 %v367
  %v735 = vunpack.c.l.b16 %v368
  %v736 = vunpack.c.h.b16 %v368
  %v737 = vunpack.c.l.b16 %v369
  %v738 = vunpack.c.h.b16 %v369
  %v739 = vunpack.c.l.b16 %v370
  %v740 = vunpack.c.h.b16 %v370
  %v741 = vunpack.c.l.b16 %v371
  %v742 = vunpack.c.h.b16 %v371
  %v743 = vunpack.c.l.b16 %v372
  %v744 = vunpack.c.h.b16 %v372
  %v745 = vpack.c.b16 %v685, %v681
  %v746 = vpack.c.b16 %v686, %v682
  %v747 = vpack.c.b16 %v687, %v683
  %v748 = vpack.c.b16 %v688, %v684
  %v749 = vpack.c.b16 %v693, %v689
  %v750 = vpack.c.b16 %v694, %v690
  %v751 = vpack.c.b16 %v695, %v691
  %v752 = vpack.c.b16 %v696, %v692
  %v753 = vpack.c.b16 %v701, %v697
  %v754 = vpack.c.b16 %v702, %v698
  %v755 = vpack.c.b16 %v703, %v699
  %v756 = vpack.c.b16 %v704, %v700
  %v757 = vpack.c.b16 %v709, %v705
  %v758 = vpack.c.b16 %v710, %v706
  %v759 = vpack.c.b16 %v711, %v707
  %v760 = vpack.c.b16 %v712, %v708
  %v761 = vpack.c.b16 %v717, %v713
  %v762 = vpack.c.b16 %v718, %v714
  %v763 = vpack.c.b16 %v719, %v715
  %v764 = vpack.c.b16 %v720, %v716
  %v765 = vpack.c.b16 %v725, %v721
  %v766 = vpack.c.b16 %v726, %v722
  %v767 = vpack.c.b16 %v727, %v723
  %v768 = vpack.c.b16 %v728, %v724
  %v769 = vpack.c.b16 %v733, %v729
  %v770 = vpack.c.b16 %v734, %v730
  %v771 = vpack.c.b16 %v735, %v731
  %v772 = vpack.c.b16 %v736, %v732
  %v773 = vpack.c.b16 %v741, %v737
  %v774 = vpack.c.b16 %v742, %v738
  %v775 = vpack.c.b16 %v743, %v739
  %v776 = vpack.c.b16 %v744, %v740
  %809 = vmatprep.subr.bf16.mxu0 %v746
  %810 = vmatpush1.bf16.msra.mxu0 %v745
  %811 = vmatprep.subr.bf16.mxu0 %v750
  %812 = vmatpush1.bf16.msra.mxu0 %v749
  %813 = vmatprep.subr.bf16.mxu0 %v754
  %814 = vmatpush1.bf16.msra.mxu0 %v753
  %815 = vmatprep.subr.bf16.mxu0 %v758
  %816 = vmatpush1.bf16.msra.mxu0 %v757
  %817 = vmatprep.subr.bf16.mxu0 %v762
  %818 = vmatpush1.bf16.msra.mxu0 %v761
  %819 = vmatprep.subr.bf16.mxu0 %v766
  %820 = vmatpush1.bf16.msra.mxu0 %v765
  %821 = vmatprep.subr.bf16.mxu0 %v770
  %822 = vmatpush1.bf16.msra.mxu0 %v769
  %823 = vmatprep.subr.bf16.mxu0 %v774
  %824 = vmatpush1.bf16.msra.mxu0 %v773
  %825 = vmatprep.subr.bf16.mxu0 0
  %826 = vmatpush1.bf16.msra.mxu0 0
  %827 = vmatprep.subr.bf16.mxu0 0
  %828 = vmatpush1.bf16.msra.mxu0 0
  %829 = vmatprep.subr.bf16.mxu0 0
  %830 = vmatpush1.bf16.msra.mxu0 0
  %831 = vmatprep.subr.bf16.mxu0 0
  %832 = vmatpush1.bf16.msra.mxu0 0
  %833 = vmatprep.subr.bf16.mxu0 0
  %834 = vmatpush1.bf16.msra.mxu0 0
  %835 = vmatprep.subr.bf16.mxu0 0
  %836 = vmatpush1.bf16.msra.mxu0 0
  %837 = vmatprep.subr.bf16.mxu0 0
  %838 = vmatpush1.bf16.msra.mxu0 0
  %839 = vmatprep.subr.bf16.mxu0 0
  %840 = vmatpush1.bf16.msra.mxu0 0
  %841 = vmatprep.mubr.bf16.mxu0 0
  %842 = vmatmul.mubr.bf16.gmra.mrb[0].mxu0 %v340
  %v843 = vpop.f32.mrb[0].mxu0
  %v844 = vadd.f32 %v602, %v843
  %v845 = vpop.f32.mrb[0].mxu0
  %v846 = vadd.f32 %v604, %v845
  %v847 = vpop.f32.mrb[0].mxu0
  %v848 = vpop.f32.mrb[0].mxu0
  %849 = vdwg.mxu0
  %850 = vmatprep.subr.bf16.mxu0 %v748
  %851 = vmatpush1.bf16.msra.mxu0 %v747
  %852 = vmatprep.subr.bf16.mxu0 %v752
  %853 = vmatpush1.bf16.msra.mxu0 %v751
  %854 = vmatprep.subr.bf16.mxu0 %v756
  %855 = vmatpush1.bf16.msra.mxu0 %v755
  %856 = vmatprep.subr.bf16.mxu0 %v760
  %857 = vmatpush1.bf16.msra.mxu0 %v759
  %858 = vmatprep.subr.bf16.mxu0 %v764
  %859 = vmatpush1.bf16.msra.mxu0 %v763
  %860 = vmatprep.subr.bf16.mxu0 %v768
  %861 = vmatpush1.bf16.msra.mxu0 %v767
  %862 = vmatprep.subr.bf16.mxu0 %v772
  %863 = vmatpush1.bf16.msra.mxu0 %v771
  %864 = vmatprep.subr.bf16.mxu0 %v776
  %865 = vmatpush1.bf16.msra.mxu0 %v775
  %866 = vmatprep.subr.bf16.mxu0 0
  %867 = vmatpush1.bf16.msra.mxu0 0
  %868 = vmatprep.subr.bf16.mxu0 0
  %869 = vmatpush1.bf16.msra.mxu0 0
  %870 = vmatprep.subr.bf16.mxu0 0
  %871 = vmatpush1.bf16.msra.mxu0 0
  %872 = vmatprep.subr.bf16.mxu0 0
  %873 = vmatpush1.bf16.msra.mxu0 0
  %874 = vmatprep.subr.bf16.mxu0 0
  %875 = vmatpush1.bf16.msra.mxu0 0
  %876 = vmatprep.subr.bf16.mxu0 0
  %877 = vmatpush1.bf16.msra.mxu0 0
  %878 = vmatprep.subr.bf16.mxu0 0
  %879 = vmatpush1.bf16.msra.mxu0 0
  %880 = vmatprep.subr.bf16.mxu0 0
  %881 = vmatpush1.bf16.msra.mxu0 0
  %882 = vmatprep.mubr.bf16.mxu0 0
  %883 = vmatmul.mubr.bf16.gmra.mrb[0].mxu0 %v340
  %v884 = vpop.f32.mrb[0].mxu0
  %v885 = vadd.f32 %v643, %v884
  %v886 = vpop.f32.mrb[0].mxu0
  %v887 = vadd.f32 %v645, %v886
  %v888 = vpop.f32.mrb[0].mxu0
  %v889 = vpop.f32.mrb[0].mxu0
  %890 = vdwg.mxu0
  %v891 = vld [vmem:[%s4] sm:$0xf]
  %v893 = vlaneseq
  %v894 = vshrl.u32 %v893, 7
  %v895 = vsub.s32 0, %v894
  %v896 = vrot.slane %v891, %v895
  %v897 = vlaneseq
  %v898 = vshrl.u32 %v897, 7
  %v899 = vsub.s32 1, %v898
  %v900 = vrot.slane %v891, %v899
  %v901 = vlaneseq
  %v902 = vshrl.u32 %v901, 7
  %v903 = vsub.s32 2, %v902
  %v904 = vrot.slane %v891, %v903
  %v905 = vlaneseq
  %v906 = vshrl.u32 %v905, 7
  %v907 = vsub.s32 3, %v906
  %v908 = vrot.slane %v891, %v907
  %v913 = vadd.f32 %v844, %v896
  %v914 = vadd.f32 %v846, %v900
  %v915 = vadd.f32 %v885, %v904
  %v916 = vadd.f32 %v887, %v908
  %v917 = vld [vmem:[#allocation5] sm:$0xff]
  %v918 = vxor.u32 %v913, 2147483648
  %v919 = vmul.f32 %v918, 1.442695
  %v920 = vpow.pop %v919
  %v921 = vadd.f32 %v920, 1.0
  %v922 = vrcp.pop %v921
  %v923 = vmul.f32 1.0, %v922
  %v924 = vxor.u32 %v914, 2147483648
  %v925 = vmul.f32 %v924, 1.442695
  %v926 = vpow.pop %v925
  %v927 = vadd.f32 %v926, 1.0
  %v928 = vrcp.pop %v927
  %v929 = vmul.f32 1.0, %v928
  %v930 = vtanh.pop %v915
  %v931 = vxor.u32 %v916, 2147483648
  %v932 = vmul.f32 %v931, 1.442695
  %v933 = vpow.pop %v932
  %v934 = vadd.f32 %v933, 1.0
  %v935 = vrcp.pop %v934
  %v936 = vmul.f32 1.0, %v935
  %v937 = vmul.f32 %v929, %v917
  %v938 = vmul.f32 %v923, %v930
  %v939 = vadd.f32 %v937, %v938
  %v940 = vtanh.pop %v939
  %v941 = vmul.f32 %v936, %v940
  %942 = vst [vmem:[#allocation4] sm:$0xff] %v941
  %943 = vst [vmem:[#allocation5] sm:$0xff] %v939
  %944 = vst [vmem:[%s5] sm:$0xff] %v941
  %s945 = scalar_lea.vmem %s0, 32
  %v946 = vld [vmem:[%s945] sm:$0xff]
  %v947 = vld [vmem:[%s945 + $0x8] sm:$0xff]
  %v948 = vld [vmem:[%s945 + $0x10] sm:$0xff]
  %v949 = vld [vmem:[%s945 + $0x18] sm:$0xff]
  %v950 = vld [vmem:[#allocation2] sm:$0xff]
  %v951 = vpack.c.bf16 %v950, %v950
  %v952 = vld [vmem:[%s1] sm:$0xff]
  %v953 = vld [vmem:[%s1 + $0x8] sm:$0xff]
  %v954 = vld [vmem:[%s1 + $0x10] sm:$0xff]
  %v955 = vld [vmem:[%s1 + $0x18] sm:$0xff]
  %v956 = vld [vmem:[%s1 + $0x20] sm:$0xff]
  %v957 = vld [vmem:[%s1 + $0x28] sm:$0xff]
  %v958 = vld [vmem:[%s1 + $0x30] sm:$0xff]
  %v959 = vld [vmem:[%s1 + $0x38] sm:$0xff]
  %v960 = vld [vmem:[%s1 + $0x40] sm:$0xff]
  %v961 = vld [vmem:[%s1 + $0x48] sm:$0xff]
  %v962 = vld [vmem:[%s1 + $0x50] sm:$0xff]
  %v963 = vld [vmem:[%s1 + $0x58] sm:$0xff]
  %v964 = vld [vmem:[%s1 + $0x60] sm:$0xff]
  %v965 = vld [vmem:[%s1 + $0x68] sm:$0xff]
  %v966 = vld [vmem:[%s1 + $0x70] sm:$0xff]
  %v967 = vld [vmem:[%s1 + $0x78] sm:$0xff]
  %v968 = vld [vmem:[%s1 + $0x80] sm:$0xff]
  %v969 = vld [vmem:[%s1 + $0x88] sm:$0xff]
  %v970 = vld [vmem:[%s1 + $0x90] sm:$0xff]
  %v971 = vld [vmem:[%s1 + $0x98] sm:$0xff]
  %v972 = vld [vmem:[%s1 + $0xa0] sm:$0xff]
  %v973 = vld [vmem:[%s1 + $0xa8] sm:$0xff]
  %v974 = vld [vmem:[%s1 + $0xb0] sm:$0xff]
  %v975 = vld [vmem:[%s1 + $0xb8] sm:$0xff]
  %v976 = vld [vmem:[%s1 + $0xc0] sm:$0xff]
  %v977 = vld [vmem:[%s1 + $0xc8] sm:$0xff]
  %v978 = vld [vmem:[%s1 + $0xd0] sm:$0xff]
  %v979 = vld [vmem:[%s1 + $0xd8] sm:$0xff]
  %v980 = vld [vmem:[%s1 + $0xe0] sm:$0xff]
  %v981 = vld [vmem:[%s1 + $0xe8] sm:$0xff]
  %v982 = vld [vmem:[%s1 + $0xf0] sm:$0xff]
  %v983 = vld [vmem:[%s1 + $0xf8] sm:$0xff]
  %v1016 = vunpack.c.l.b16 %v952
  %v1017 = vunpack.c.h.b16 %v952
  %v1018 = vunpack.c.l.b16 %v953
  %v1019 = vunpack.c.h.b16 %v953
  %v1020 = vunpack.c.l.b16 %v954
  %v1021 = vunpack.c.h.b16 %v954
  %v1022 = vunpack.c.l.b16 %v955
  %v1023 = vunpack.c.h.b16 %v955
  %v1024 = vunpack.c.l.b16 %v956
  %v1025 = vunpack.c.h.b16 %v956
  %v1026 = vunpack.c.l.b16 %v957
  %v1027 = vunpack.c.h.b16 %v957
  %v1028 = vunpack.c.l.b16 %v958
  %v1029 = vunpack.c.h.b16 %v958
  %v1030 = vunpack.c.l.b16 %v959
  %v1031 = vunpack.c.h.b16 %v959
  %v1032 = vunpack.c.l.b16 %v960
  %v1033 = vunpack.c.h.b16 %v960
  %v1034 = vunpack.c.l.b16 %v961
  %v1035 = vunpack.c.h.b16 %v961
  %v1036 = vunpack.c.l.b16 %v962
  %v1037 = vunpack.c.h.b16 %v962
  %v1038 = vunpack.c.l.b16 %v963
  %v1039 = vunpack.c.h.b16 %v963
  %v1040 = vunpack.c.l.b16 %v964
  %v1041 = vunpack.c.h.b16 %v964
  %v1042 = vunpack.c.l.b16 %v965
  %v1043 = vunpack.c.h.b16 %v965
  %v1044 = vunpack.c.l.b16 %v966
  %v1045 = vunpack.c.h.b16 %v966
  %v1046 = vunpack.c.l.b16 %v967
  %v1047 = vunpack.c.h.b16 %v967
  %v1048 = vunpack.c.l.b16 %v968
  %v1049 = vunpack.c.h.b16 %v968
  %v1050 = vunpack.c.l.b16 %v969
  %v1051 = vunpack.c.h.b16 %v969
  %v1052 = vunpack.c.l.b16 %v970
  %v1053 = vunpack.c.h.b16 %v970
  %v1054 = vunpack.c.l.b16 %v971
  %v1055 = vunpack.c.h.b16 %v971
  %v1056 = vunpack.c.l.b16 %v972
  %v1057 = vunpack.c.h.b16 %v972
  %v1058 = vunpack.c.l.b16 %v973
  %v1059 = vunpack.c.h.b16 %v973
  %v1060 = vunpack.c.l.b16 %v974
  %v1061 = vunpack.c.h.b16 %v974
  %v1062 = vunpack.c.l.b16 %v975
  %v1063 = vunpack.c.h.b16 %v975
  %v1064 = vunpack.c.l.b16 %v976
  %v1065 = vunpack.c.h.b16 %v976
  %v1066 = vunpack.c.l.b16 %v977
  %v1067 = vunpack.c.h.b16 %v977
  %v1068 = vunpack.c.l.b16 %v978
  %v1069 = vunpack.c.h.b16 %v978
  %v1070 = vunpack.c.l.b16 %v979
  %v1071 = vunpack.c.h.b16 %v979
  %v1072 = vunpack.c.l.b16 %v980
  %v1073 = vunpack.c.h.b16 %v980
  %v1074 = vunpack.c.l.b16 %v981
  %v1075 = vunpack.c.h.b16 %v981
  %v1076 = vunpack.c.l.b16 %v982
  %v1077 = vunpack.c.h.b16 %v982
  %v1078 = vunpack.c.l.b16 %v983
  %v1079 = vunpack.c.h.b16 %v983
  %v1080 = vpack.c.b16 %v1020, %v1016
  %v1081 = vpack.c.b16 %v1021, %v1017
  %v1082 = vpack.c.b16 %v1022, %v1018
  %v1083 = vpack.c.b16 %v1023, %v1019
  %v1084 = vpack.c.b16 %v1028, %v1024
  %v1085 = vpack.c.b16 %v1029, %v1025
  %v1086 = vpack.c.b16 %v1030, %v1026
  %v1087 = vpack.c.b16 %v1031, %v1027
  %v1088 = vpack.c.b16 %v1036, %v1032
  %v1089 = vpack.c.b16 %v1037, %v1033
  %v1090 = vpack.c.b16 %v1038, %v1034
  %v1091 = vpack.c.b16 %v1039, %v1035
  %v1092 = vpack.c.b16 %v1044, %v1040
  %v1093 = vpack.c.b16 %v1045, %v1041
  %v1094 = vpack.c.b16 %v1046, %v1042
  %v1095 = vpack.c.b16 %v1047, %v1043
  %v1096 = vpack.c.b16 %v1052, %v1048
  %v1097 = vpack.c.b16 %v1053, %v1049
  %v1098 = vpack.c.b16 %v1054, %v1050
  %v1099 = vpack.c.b16 %v1055, %v1051
  %v1100 = vpack.c.b16 %v1060, %v1056
  %v1101 = vpack.c.b16 %v1061, %v1057
  %v1102 = vpack.c.b16 %v1062, %v1058
  %v1103 = vpack.c.b16 %v1063, %v1059
  %v1104 = vpack.c.b16 %v1068, %v1064
  %v1105 = vpack.c.b16 %v1069, %v1065
  %v1106 = vpack.c.b16 %v1070, %v1066
  %v1107 = vpack.c.b16 %v1071, %v1067
  %v1108 = vpack.c.b16 %v1076, %v1072
  %v1109 = vpack.c.b16 %v1077, %v1073
  %v1110 = vpack.c.b16 %v1078, %v1074
  %v1111 = vpack.c.b16 %v1079, %v1075
  %1144 = vmatprep.subr.bf16.mxu0 %v1081
  %1145 = vmatpush1.bf16.msra.mxu0 %v1080
  %1146 = vmatprep.subr.bf16.mxu0 %v1085
  %1147 = vmatpush1.bf16.msra.mxu0 %v1084
  %1148 = vmatprep.subr.bf16.mxu0 %v1089
  %1149 = vmatpush1.bf16.msra.mxu0 %v1088
  %1150 = vmatprep.subr.bf16.mxu0 %v1093
  %1151 = vmatpush1.bf16.msra.mxu0 %v1092
  %1152 = vmatprep.subr.bf16.mxu0 %v1097
  %1153 = vmatpush1.bf16.msra.mxu0 %v1096
  %1154 = vmatprep.subr.bf16.mxu0 %v1101
  %1155 = vmatpush1.bf16.msra.mxu0 %v1100
  %1156 = vmatprep.subr.bf16.mxu0 %v1105
  %1157 = vmatpush1.bf16.msra.mxu0 %v1104
  %1158 = vmatprep.subr.bf16.mxu0 %v1109
  %1159 = vmatpush1.bf16.msra.mxu0 %v1108
  %1160 = vmatprep.subr.bf16.mxu0 0
  %1161 = vmatpush1.bf16.msra.mxu0 0
  %1162 = vmatprep.subr.bf16.mxu0 0
  %1163 = vmatpush1.bf16.msra.mxu0 0
  %1164 = vmatprep.subr.bf16.mxu0 0
  %1165 = vmatpush1.bf16.msra.mxu0 0
  %1166 = vmatprep.subr.bf16.mxu0 0
  %1167 = vmatpush1.bf16.msra.mxu0 0
  %1168 = vmatprep.subr.bf16.mxu0 0
  %1169 = vmatpush1.bf16.msra.mxu0 0
  %1170 = vmatprep.subr.bf16.mxu0 0
  %1171 = vmatpush1.bf16.msra.mxu0 0
  %1172 = vmatprep.subr.bf16.mxu0 0
  %1173 = vmatpush1.bf16.msra.mxu0 0
  %1174 = vmatprep.subr.bf16.mxu0 0
  %1175 = vmatpush1.bf16.msra.mxu0 0
  %1176 = vmatprep.mubr.bf16.mxu0 0
  %1177 = vmatmul.mubr.bf16.gmra.mrb[0].mxu0 %v951
  %v1178 = vpop.f32.mrb[0].mxu0
  %v1179 = vadd.f32 0.0, %v1178
  %v1180 = vpop.f32.mrb[0].mxu0
  %v1181 = vadd.f32 0.0, %v1180
  %v1182 = vpop.f32.mrb[0].mxu0
  %v1183 = vpop.f32.mrb[0].mxu0
  %1184 = vdwg.mxu0
  %1185 = vmatprep.subr.bf16.mxu0 %v1083
  %1186 = vmatpush1.bf16.msra.mxu0 %v1082
  %1187 = vmatprep.subr.bf16.mxu0 %v1087
  %1188 = vmatpush1.bf16.msra.mxu0 %v1086
  %1189 = vmatprep.subr.bf16.mxu0 %v1091
  %1190 = vmatpush1.bf16.msra.mxu0 %v1090
  %1191 = vmatprep.subr.bf16.mxu0 %v1095
  %1192 = vmatpush1.bf16.msra.mxu0 %v1094
  %1193 = vmatprep.subr.bf16.mxu0 %v1099
  %1194 = vmatpush1.bf16.msra.mxu0 %v1098
  %1195 = vmatprep.subr.bf16.mxu0 %v1103
  %1196 = vmatpush1.bf16.msra.mxu0 %v1102
  %1197 = vmatprep.subr.bf16.mxu0 %v1107
  %1198 = vmatpush1.bf16.msra.mxu0 %v1106
  %1199 = vmatprep.subr.bf16.mxu0 %v1111
  %1200 = vmatpush1.bf16.msra.mxu0 %v1110
  %1201 = vmatprep.subr.bf16.mxu0 0
  %1202 = vmatpush1.bf16.msra.mxu0 0
  %1203 = vmatprep.subr.bf16.mxu0 0
  %1204 = vmatpush1.bf16.msra.mxu0 0
  %1205 = vmatprep.subr.bf16.mxu0 0
  %1206 = vmatpush1.bf16.msra.mxu0 0
  %1207 = vmatprep.subr.bf16.mxu0 0
  %1208 = vmatpush1.bf16.msra.mxu0 0
  %1209 = vmatprep.subr.bf16.mxu0 0
  %1210 = vmatpush1.bf16.msra.mxu0 0
  %1211 = vmatprep.subr.bf16.mxu0 0
  %1212 = vmatpush1.bf16.msra.mxu0 0
  %1213 = vmatprep.subr.bf16.mxu0 0
  %1214 = vmatpush1.bf16.msra.mxu0 0
  %1215 = vmatprep.subr.bf16.mxu0 0
  %1216 = vmatpush1.bf16.msra.mxu0 0
  %1217 = vmatprep.mubr.bf16.mxu0 0
  %1218 = vmatmul.mubr.bf16.gmra.mrb[0].mxu0 %v951
  %v1219 = vpop.f32.mrb[0].mxu0
  %v1220 = vadd.f32 0.0, %v1219
  %v1221 = vpop.f32.mrb[0].mxu0
  %v1222 = vadd.f32 0.0, %v1221
  %v1223 = vpop.f32.mrb[0].mxu0
  %v1224 = vpop.f32.mrb[0].mxu0
  %1225 = vdwg.mxu0
  %v1226 = vadd.f32 %v946, %v1179
  %v1227 = vadd.f32 %v947, %v1181
  %v1228 = vadd.f32 %v948, %v1220
  %v1229 = vadd.f32 %v949, %v1222
  %v1230 = vld [vmem:[#allocation3] sm:$0xff]
  %v1231 = vxor.u32 %v1226, 2147483648
  %v1232 = vmul.f32 %v1231, 1.442695
  %v1233 = vpow.pop %v1232
  %v1234 = vadd.f32 %v1233, 1.0
  %v1235 = vrcp.pop %v1234
  %v1236 = vmul.f32 1.0, %v1235
  %v1237 = vxor.u32 %v1227, 2147483648
  %v1238 = vmul.f32 %v1237, 1.442695
  %v1239 = vpow.pop %v1238
  %v1240 = vadd.f32 %v1239, 1.0
  %v1241 = vrcp.pop %v1240
  %v1242 = vmul.f32 1.0, %v1241
  %v1243 = vtanh.pop %v1228
  %v1244 = vxor.u32 %v1229, 2147483648
  %v1245 = vmul.f32 %v1244, 1.442695
  %v1246 = vpow.pop %v1245
  %v1247 = vadd.f32 %v1246, 1.0
  %v1248 = vrcp.pop %v1247
  %v1249 = vmul.f32 1.0, %v1248
  %v1250 = vmul.f32 %v1242, %v1230
  %v1251 = vmul.f32 %v1236, %v1243
  %v1252 = vadd.f32 %v1250, %v1251
  %v1253 = vtanh.pop %v1252
  %v1254 = vmul.f32 %v1249, %v1253
  %1255 = vst [vmem:[#allocation2] sm:$0xff] %v1254
  %1256 = vst [vmem:[#allocation3] sm:$0xff] %v1252
  %v1257 = vpack.c.bf16 %v1254, %v1254
  %v1258 = vld [vmem:[%s2] sm:$0xff]
  %v1259 = vld [vmem:[%s2 + $0x8] sm:$0xff]
  %v1260 = vld [vmem:[%s2 + $0x10] sm:$0xff]
  %v1261 = vld [vmem:[%s2 + $0x18] sm:$0xff]
  %v1262 = vld [vmem:[%s2 + $0x20] sm:$0xff]
  %v1263 = vld [vmem:[%s2 + $0x28] sm:$0xff]
  %v1264 = vld [vmem:[%s2 + $0x30] sm:$0xff]
  %v1265 = vld [vmem:[%s2 + $0x38] sm:$0xff]
  %v1266 = vld [vmem:[%s2 + $0x40] sm:$0xff]
  %v1267 = vld [vmem:[%s2 + $0x48] sm:$0xff]
  %v1268 = vld [vmem:[%s2 + $0x50] sm:$0xff]
  %v1269 = vld [vmem:[%s2 + $0x58] sm:$0xff]
  %v1270 = vld [vmem:[%s2 + $0x60] sm:$0xff]
  %v1271 = vld [vmem:[%s2 + $0x68] sm:$0xff]
  %v1272 = vld [vmem:[%s2 + $0x70] sm:$0xff]
  %v1273 = vld [vmem:[%s2 + $0x78] sm:$0xff]
  %v1274 = vld [vmem:[%s2 + $0x80] sm:$0xff]
  %v1275 = vld [vmem:[%s2 + $0x88] sm:$0xff]
  %v1276 = vld [vmem:[%s2 + $0x90] sm:$0xff]
  %v1277 = vld [vmem:[%s2 + $0x98] sm:$0xff]
  %v1278 = vld [vmem:[%s2 + $0xa0] sm:$0xff]
  %v1279 = vld [vmem:[%s2 + $0xa8] sm:$0xff]
  %v1280 = vld [vmem:[%s2 + $0xb0] sm:$0xff]
  %v1281 = vld [vmem:[%s2 + $0xb8] sm:$0xff]
  %v1282 = vld [vmem:[%s2 + $0xc0] sm:$0xff]
  %v1283 = vld [vmem:[%s2 + $0xc8] sm:$0xff]
  %v1284 = vld [vmem:[%s2 + $0xd0] sm:$0xff]
  %v1285 = vld [vmem:[%s2 + $0xd8] sm:$0xff]
  %v1286 = vld [vmem:[%s2 + $0xe0] sm:$0xff]
  %v1287 = vld [vmem:[%s2 + $0xe8] sm:$0xff]
  %v1288 = vld [vmem:[%s2 + $0xf0] sm:$0xff]
  %v1289 = vld [vmem:[%s2 + $0xf8] sm:$0xff]
  %v1290 = vld [vmem:[#allocation4] sm:$0xff]
  %v1291 = vpack.c.bf16 %v1290, %v1290
  %v1292 = vld [vmem:[%s3] sm:$0xff]
  %v1293 = vld [vmem:[%s3 + $0x8] sm:$0xff]
  %v1294 = vld [vmem:[%s3 + $0x10] sm:$0xff]
  %v1295 = vld [vmem:[%s3 + $0x18] sm:$0xff]
  %v1296 = vld [vmem:[%s3 + $0x20] sm:$0xff]
  %v1297 = vld [vmem:[%s3 + $0x28] sm:$0xff]
  %v1298 = vld [vmem:[%s3 + $0x30] sm:$0xff]
  %v1299 = vld [vmem:[%s3 + $0x38] sm:$0xff]
  %v1300 = vld [vmem:[%s3 + $0x40] sm:$0xff]
  %v1301 = vld [vmem:[%s3 + $0x48] sm:$0xff]
  %v1302 = vld [vmem:[%s3 + $0x50] sm:$0xff]
  %v1303 = vld [vmem:[%s3 + $0x58] sm:$0xff]
  %v1304 = vld [vmem:[%s3 + $0x60] sm:$0xff]
  %v1305 = vld [vmem:[%s3 + $0x68] sm:$0xff]
  %v1306 = vld [vmem:[%s3 + $0x70] sm:$0xff]
  %v1307 = vld [vmem:[%s3 + $0x78] sm:$0xff]
  %v1308 = vld [vmem:[%s3 + $0x80] sm:$0xff]
  %v1309 = vld [vmem:[%s3 + $0x88] sm:$0xff]
  %v1310 = vld [vmem:[%s3 + $0x90] sm:$0xff]
  %v1311 = vld [vmem:[%s3 + $0x98] sm:$0xff]
  %v1312 = vld [vmem:[%s3 + $0xa0] sm:$0xff]
  %v1313 = vld [vmem:[%s3 + $0xa8] sm:$0xff]
  %v1314 = vld [vmem:[%s3 + $0xb0] sm:$0xff]
  %v1315 = vld [vmem:[%s3 + $0xb8] sm:$0xff]
  %v1316 = vld [vmem:[%s3 + $0xc0] sm:$0xff]
  %v1317 = vld [vmem:[%s3 + $0xc8] sm:$0xff]
  %v1318 = vld [vmem:[%s3 + $0xd0] sm:$0xff]
  %v1319 = vld [vmem:[%s3 + $0xd8] sm:$0xff]
  %v1320 = vld [vmem:[%s3 + $0xe0] sm:$0xff]
  %v1321 = vld [vmem:[%s3 + $0xe8] sm:$0xff]
  %v1322 = vld [vmem:[%s3 + $0xf0] sm:$0xff]
  %v1323 = vld [vmem:[%s3 + $0xf8] sm:$0xff]
  %v1356 = vunpack.c.l.b16 %v1292
  %v1357 = vunpack.c.h.b16 %v1292
  %v1358 = vunpack.c.l.b16 %v1293
  %v1359 = vunpack.c.h.b16 %v1293
  %v1360 = vunpack.c.l.b16 %v1294
  %v1361 = vunpack.c.h.b16 %v1294
  %v1362 = vunpack.c.l.b16 %v1295
  %v1363 = vunpack.c.h.b16 %v1295
  %v1364 = vunpack.c.l.b16 %v1296
  %v1365 = vunpack.c.h.b16 %v1296
  %v1366 = vunpack.c.l.b16 %v1297
  %v1367 = vunpack.c.h.b16 %v1297
  %v1368 = vunpack.c.l.b16 %v1298
  %v1369 = vunpack.c.h.b16 %v1298
  %v1370 = vunpack.c.l.b16 %v1299
  %v1371 = vunpack.c.h.b16 %v1299
  %v1372 = vunpack.c.l.b16 %v1300
  %v1373 = vunpack.c.h.b16 %v1300
  %v1374 = vunpack.c.l.b16 %v1301
  %v1375 = vunpack.c.h.b16 %v1301
  %v1376 = vunpack.c.l.b16 %v1302
  %v1377 = vunpack.c.h.b16 %v1302
  %v1378 = vunpack.c.l.b16 %v1303
  %v1379 = vunpack.c.h.b16 %v1303
  %v1380 = vunpack.c.l.b16 %v1304
  %v1381 = vunpack.c.h.b16 %v1304
  %v1382 = vunpack.c.l.b16 %v1305
  %v1383 = vunpack.c.h.b16 %v1305
  %v1384 = vunpack.c.l.b16 %v1306
  %v1385 = vunpack.c.h.b16 %v1306
  %v1386 = vunpack.c.l.b16 %v1307
  %v1387 = vunpack.c.h.b16 %v1307
  %v1388 = vunpack.c.l.b16 %v1308
  %v1389 = vunpack.c.h.b16 %v1308
  %v1390 = vunpack.c.l.b16 %v1309
  %v1391 = vunpack.c.h.b16 %v1309
  %v1392 = vunpack.c.l.b16 %v1310
  %v1393 = vunpack.c.h.b16 %v1310
  %v1394 = vunpack.c.l.b16 %v1311
  %v1395 = vunpack.c.h.b16 %v1311
  %v1396 = vunpack.c.l.b16 %v1312
  %v1397 = vunpack.c.h.b16 %v1312
  %v1398 = vunpack.c.l.b16 %v1313
  %v1399 = vunpack.c.h.b16 %v1313
  %v1400 = vunpack.c.l.b16 %v1314
  %v1401 = vunpack.c.h.b16 %v1314
  %v1402 = vunpack.c.l.b16 %v1315
  %v1403 = vunpack.c.h.b16 %v1315
  %v1404 = vunpack.c.l.b16 %v1316
  %v1405 = vunpack.c.h.b16 %v1316
  %v1406 = vunpack.c.l.b16 %v1317
  %v1407 = vunpack.c.h.b16 %v1317
  %v1408 = vunpack.c.l.b16 %v1318
  %v1409 = vunpack.c.h.b16 %v1318
  %v1410 = vunpack.c.l.b16 %v1319
  %v1411 = vunpack.c.h.b16 %v1319
  %v1412 = vunpack.c.l.b16 %v1320
  %v1413 = vunpack.c.h.b16 %v1320
  %v1414 = vunpack.c.l.b16 %v1321
  %v1415 = vunpack.c.h.b16 %v1321
  %v1416 = vunpack.c.l.b16 %v1322
  %v1417 = vunpack.c.h.b16 %v1322
  %v1418 = vunpack.c.l.b16 %v1323
  %v1419 = vunpack.c.h.b16 %v1323
  %v1420 = vpack.c.b16 %v1360, %v1356
  %v1421 = vpack.c.b16 %v1361, %v1357
  %v1422 = vpack.c.b16 %v1362, %v1358
  %v1423 = vpack.c.b16 %v1363, %v1359
  %v1424 = vpack.c.b16 %v1368, %v1364
  %v1425 = vpack.c.b16 %v1369, %v1365
  %v1426 = vpack.c.b16 %v1370, %v1366
  %v1427 = vpack.c.b16 %v1371, %v1367
  %v1428 = vpack.c.b16 %v1376, %v1372
  %v1429 = vpack.c.b16 %v1377, %v1373
  %v1430 = vpack.c.b16 %v1378, %v1374
  %v1431 = vpack.c.b16 %v1379, %v1375
  %v1432 = vpack.c.b16 %v1384, %v1380
  %v1433 = vpack.c.b16 %v1385, %v1381
  %v1434 = vpack.c.b16 %v1386, %v1382
  %v1435 = vpack.c.b16 %v1387, %v1383
  %v1436 = vpack.c.b16 %v1392, %v1388
  %v1437 = vpack.c.b16 %v1393, %v1389
  %v1438 = vpack.c.b16 %v1394, %v1390
  %v1439 = vpack.c.b16 %v1395, %v1391
  %v1440 = vpack.c.b16 %v1400, %v1396
  %v1441 = vpack.c.b16 %v1401, %v1397
  %v1442 = vpack.c.b16 %v1402, %v1398
  %v1443 = vpack.c.b16 %v1403, %v1399
  %v1444 = vpack.c.b16 %v1408, %v1404
  %v1445 = vpack.c.b16 %v1409, %v1405
  %v1446 = vpack.c.b16 %v1410, %v1406
  %v1447 = vpack.c.b16 %v1411, %v1407
  %v1448 = vpack.c.b16 %v1416, %v1412
  %v1449 = vpack.c.b16 %v1417, %v1413
  %v1450 = vpack.c.b16 %v1418, %v1414
  %v1451 = vpack.c.b16 %v1419, %v1415
  %1484 = vmatprep.subr.bf16.mxu0 %v1421
  %1485 = vmatpush1.bf16.msra.mxu0 %v1420
  %1486 = vmatprep.subr.bf16.mxu0 %v1425
  %1487 = vmatpush1.bf16.msra.mxu0 %v1424
  %1488 = vmatprep.subr.bf16.mxu0 %v1429
  %1489 = vmatpush1.bf16.msra.mxu0 %v1428
  %1490 = vmatprep.subr.bf16.mxu0 %v1433
  %1491 = vmatpush1.bf16.msra.mxu0 %v1432
  %1492 = vmatprep.subr.bf16.mxu0 %v1437
  %1493 = vmatpush1.bf16.msra.mxu0 %v1436
  %1494 = vmatprep.subr.bf16.mxu0 %v1441
  %1495 = vmatpush1.bf16.msra.mxu0 %v1440
  %1496 = vmatprep.subr.bf16.mxu0 %v1445
  %1497 = vmatpush1.bf16.msra.mxu0 %v1444
  %1498 = vmatprep.subr.bf16.mxu0 %v1449
  %1499 = vmatpush1.bf16.msra.mxu0 %v1448
  %1500 = vmatprep.subr.bf16.mxu0 0
  %1501 = vmatpush1.bf16.msra.mxu0 0
  %1502 = vmatprep.subr.bf16.mxu0 0
  %1503 = vmatpush1.bf16.msra.mxu0 0
  %1504 = vmatprep.subr.bf16.mxu0 0
  %1505 = vmatpush1.bf16.msra.mxu0 0
  %1506 = vmatprep.subr.bf16.mxu0 0
  %1507 = vmatpush1.bf16.msra.mxu0 0
  %1508 = vmatprep.subr.bf16.mxu0 0
  %1509 = vmatpush1.bf16.msra.mxu0 0
  %1510 = vmatprep.subr.bf16.mxu0 0
  %1511 = vmatpush1.bf16.msra.mxu0 0
  %1512 = vmatprep.subr.bf16.mxu0 0
  %1513 = vmatpush1.bf16.msra.mxu0 0
  %1514 = vmatprep.subr.bf16.mxu0 0
  %1515 = vmatpush1.bf16.msra.mxu0 0
  %1516 = vmatprep.mubr.bf16.mxu0 0
  %1517 = vmatmul.mubr.bf16.gmra.mrb[0].mxu0 %v1291
  %v1518 = vpop.f32.mrb[0].mxu0
  %v1519 = vadd.f32 0.0, %v1518
  %v1520 = vpop.f32.mrb[0].mxu0
  %v1521 = vadd.f32 0.0, %v1520
  %v1522 = vpop.f32.mrb[0].mxu0
  %v1523 = vpop.f32.mrb[0].mxu0
  %1524 = vdwg.mxu0
  %1525 = vmatprep.subr.bf16.mxu0 %v1423
  %1526 = vmatpush1.bf16.msra.mxu0 %v1422
  %1527 = vmatprep.subr.bf16.mxu0 %v1427
  %1528 = vmatpush1.bf16.msra.mxu0 %v1426
  %1529 = vmatprep.subr.bf16.mxu0 %v1431
  %1530 = vmatpush1.bf16.msra.mxu0 %v1430
  %1531 = vmatprep.subr.bf16.mxu0 %v1435
  %1532 = vmatpush1.bf16.msra.mxu0 %v1434
  %1533 = vmatprep.subr.bf16.mxu0 %v1439
  %1534 = vmatpush1.bf16.msra.mxu0 %v1438
  %1535 = vmatprep.subr.bf16.mxu0 %v1443
  %1536 = vmatpush1.bf16.msra.mxu0 %v1442
  %1537 = vmatprep.subr.bf16.mxu0 %v1447
  %1538 = vmatpush1.bf16.msra.mxu0 %v1446
  %1539 = vmatprep.subr.bf16.mxu0 %v1451
  %1540 = vmatpush1.bf16.msra.mxu0 %v1450
  %1541 = vmatprep.subr.bf16.mxu0 0
  %1542 = vmatpush1.bf16.msra.mxu0 0
  %1543 = vmatprep.subr.bf16.mxu0 0
  %1544 = vmatpush1.bf16.msra.mxu0 0
  %1545 = vmatprep.subr.bf16.mxu0 0
  %1546 = vmatpush1.bf16.msra.mxu0 0
  %1547 = vmatprep.subr.bf16.mxu0 0
  %1548 = vmatpush1.bf16.msra.mxu0 0
  %1549 = vmatprep.subr.bf16.mxu0 0
  %1550 = vmatpush1.bf16.msra.mxu0 0
  %1551 = vmatprep.subr.bf16.mxu0 0
  %1552 = vmatpush1.bf16.msra.mxu0 0
  %1553 = vmatprep.subr.bf16.mxu0 0
  %1554 = vmatpush1.bf16.msra.mxu0 0
  %1555 = vmatprep.subr.bf16.mxu0 0
  %1556 = vmatpush1.bf16.msra.mxu0 0
  %1557 = vmatprep.mubr.bf16.mxu0 0
  %1558 = vmatmul.mubr.bf16.gmra.mrb[0].mxu0 %v1291
  %v1559 = vpop.f32.mrb[0].mxu0
  %v1560 = vadd.f32 0.0, %v1559
  %v1561 = vpop.f32.mrb[0].mxu0
  %v1562 = vadd.f32 0.0, %v1561
  %v1563 = vpop.f32.mrb[0].mxu0
  %v1564 = vpop.f32.mrb[0].mxu0
  %1565 = vdwg.mxu0
  %v1598 = vunpack.c.l.b16 %v1258
  %v1599 = vunpack.c.h.b16 %v1258
  %v1600 = vunpack.c.l.b16 %v1259
  %v1601 = vunpack.c.h.b16 %v1259
  %v1602 = vunpack.c.l.b16 %v1260
  %v1603 = vunpack.c.h.b16 %v1260
  %v1604 = vunpack.c.l.b16 %v1261
  %v1605 = vunpack.c.h.b16 %v1261
  %v1606 = vunpack.c.l.b16 %v1262
  %v1607 = vunpack.c.h.b16 %v1262
  %v1608 = vunpack.c.l.b16 %v1263
  %v1609 = vunpack.c.h.b16 %v1263
  %v1610 = vunpack.c.l.b16 %v1264
  %v1611 = vunpack.c.h.b16 %v1264
  %v1612 = vunpack.c.l.b16 %v1265
  %v1613 = vunpack.c.h.b16 %v1265
  %v1614 = vunpack.c.l.b16 %v1266
  %v1615 = vunpack.c.h.b16 %v1266
  %v1616 = vunpack.c.l.b16 %v1267
  %v1617 = vunpack.c.h.b16 %v1267
  %v1618 = vunpack.c.l.b16 %v1268
  %v1619 = vunpack.c.h.b16 %v1268
  %v1620 = vunpack.c.l.b16 %v1269
  %v1621 = vunpack.c.h.b16 %v1269
  %v1622 = vunpack.c.l.b16 %v1270
  %v1623 = vunpack.c.h.b16 %v1270
  %v1624 = vunpack.c.l.b16 %v1271
  %v1625 = vunpack.c.h.b16 %v1271
  %v1626 = vunpack.c.l.b16 %v1272
  %v1627 = vunpack.c.h.b16 %v1272
  %v1628 = vunpack.c.l.b16 %v1273
  %v1629 = vunpack.c.h.b16 %v1273
  %v1630 = vunpack.c.l.b16 %v1274
  %v1631 = vunpack.c.h.b16 %v1274
  %v1632 = vunpack.c.l.b16 %v1275
  %v1633 = vunpack.c.h.b16 %v1275
  %v1634 = vunpack.c.l.b16 %v1276
  %v1635 = vunpack.c.h.b16 %v1276
  %v1636 = vunpack.c.l.b16 %v1277
  %v1637 = vunpack.c.h.b16 %v1277
  %v1638 = vunpack.c.l.b16 %v1278
  %v1639 = vunpack.c.h.b16 %v1278
  %v1640 = vunpack.c.l.b16 %v1279
  %v1641 = vunpack.c.h.b16 %v1279
  %v1642 = vunpack.c.l.b16 %v1280
  %v1643 = vunpack.c.h.b16 %v1280
  %v1644 = vunpack.c.l.b16 %v1281
  %v1645 = vunpack.c.h.b16 %v1281
  %v1646 = vunpack.c.l.b16 %v1282
  %v1647 = vunpack.c.h.b16 %v1282
  %v1648 = vunpack.c.l.b16 %v1283
  %v1649 = vunpack.c.h.b16 %v1283
  %v1650 = vunpack.c.l.b16 %v1284
  %v1651 = vunpack.c.h.b16 %v1284
  %v1652 = vunpack.c.l.b16 %v1285
  %v1653 = vunpack.c.h.b16 %v1285
  %v1654 = vunpack.c.l.b16 %v1286
  %v1655 = vunpack.c.h.b16 %v1286
  %v1656 = vunpack.c.l.b16 %v1287
  %v1657 = vunpack.c.h.b16 %v1287
  %v1658 = vunpack.c.l.b16 %v1288
  %v1659 = vunpack.c.h.b16 %v1288
  %v1660 = vunpack.c.l.b16 %v1289
  %v1661 = vunpack.c.h.b16 %v1289
  %v1662 = vpack.c.b16 %v1602, %v1598
  %v1663 = vpack.c.b16 %v1603, %v1599
  %v1664 = vpack.c.b16 %v1604, %v1600
  %v1665 = vpack.c.b16 %v1605, %v1601
  %v1666 = vpack.c.b16 %v1610, %v1606
  %v1667 = vpack.c.b16 %v1611, %v1607
  %v1668 = vpack.c.b16 %v1612, %v1608
  %v1669 = vpack.c.b16 %v1613, %v1609
  %v1670 = vpack.c.b16 %v1618, %v1614
  %v1671 = vpack.c.b16 %v1619, %v1615
  %v1672 = vpack.c.b16 %v1620, %v1616
  %v1673 = vpack.c.b16 %v1621, %v1617
  %v1674 = vpack.c.b16 %v1626, %v1622
  %v1675 = vpack.c.b16 %v1627, %v1623
  %v1676 = vpack.c.b16 %v1628, %v1624
  %v1677 = vpack.c.b16 %v1629, %v1625
  %v1678 = vpack.c.b16 %v1634, %v1630
  %v1679 = vpack.c.b16 %v1635, %v1631
  %v1680 = vpack.c.b16 %v1636, %v1632
  %v1681 = vpack.c.b16 %v1637, %v1633
  %v1682 = vpack.c.b16 %v1642, %v1638
  %v1683 = vpack.c.b16 %v1643, %v1639
  %v1684 = vpack.c.b16 %v1644, %v1640
  %v1685 = vpack.c.b16 %v1645, %v1641
  %v1686 = vpack.c.b16 %v1650, %v1646
  %v1687 = vpack.c.b16 %v1651, %v1647
  %v1688 = vpack.c.b16 %v1652, %v1648
  %v1689 = vpack.c.b16 %v1653, %v1649
  %v1690 = vpack.c.b16 %v1658, %v1654
  %v1691 = vpack.c.b16 %v1659, %v1655
  %v1692 = vpack.c.b16 %v1660, %v1656
  %v1693 = vpack.c.b16 %v1661, %v1657
  %1726 = vmatprep.subr.bf16.mxu0 %v1663
  %1727 = vmatpush1.bf16.msra.mxu0 %v1662
  %1728 = vmatprep.subr.bf16.mxu0 %v1667
  %1729 = vmatpush1.bf16.msra.mxu0 %v1666
  %1730 = vmatprep.subr.bf16.mxu0 %v1671
  %1731 = vmatpush1.bf16.msra.mxu0 %v1670
  %1732 = vmatprep.subr.bf16.mxu0 %v1675
  %1733 = vmatpush1.bf16.msra.mxu0 %v1674
  %1734 = vmatprep.subr.bf16.mxu0 %v1679
  %1735 = vmatpush1.bf16.msra.mxu0 %v1678
  %1736 = vmatprep.subr.bf16.mxu0 %v1683
  %1737 = vmatpush1.bf16.msra.mxu0 %v1682
  %1738 = vmatprep.subr.bf16.mxu0 %v1687
  %1739 = vmatpush1.bf16.msra.mxu0 %v1686
  %1740 = vmatprep.subr.bf16.mxu0 %v1691
  %1741 = vmatpush1.bf16.msra.mxu0 %v1690
  %1742 = vmatprep.subr.bf16.mxu0 0
  %1743 = vmatpush1.bf16.msra.mxu0 0
  %1744 = vmatprep.subr.bf16.mxu0 0
  %1745 = vmatpush1.bf16.msra.mxu0 0
  %1746 = vmatprep.subr.bf16.mxu0 0
  %1747 = vmatpush1.bf16.msra.mxu0 0
  %1748 = vmatprep.subr.bf16.mxu0 0
  %1749 = vmatpush1.bf16.msra.mxu0 0
  %1750 = vmatprep.subr.bf16.mxu0 0
  %1751 = vmatpush1.bf16.msra.mxu0 0
  %1752 = vmatprep.subr.bf16.mxu0 0
  %1753 = vmatpush1.bf16.msra.mxu0 0
  %1754 = vmatprep.subr.bf16.mxu0 0
  %1755 = vmatpush1.bf16.msra.mxu0 0
  %1756 = vmatprep.subr.bf16.mxu0 0
  %1757 = vmatpush1.bf16.msra.mxu0 0
  %1758 = vmatprep.mubr.bf16.mxu0 0
  %1759 = vmatmul.mubr.bf16.gmra.mrb[0].mxu0 %v1257
  %v1760 = vpop.f32.mrb[0].mxu0
  %v1761 = vadd.f32 %v1519, %v1760
  %v1762 = vpop.f32.mrb[0].mxu0
  %v1763 = vadd.f32 %v1521, %v1762
  %v1764 = vpop.f32.mrb[0].mxu0
  %v1765 = vpop.f32.mrb[0].mxu0
  %1766 = vdwg.mxu0
  %1767 = vmatprep.subr.bf16.mxu0 %v1665
  %1768 = vmatpush1.bf16.msra.mxu0 %v1664
  %1769 = vmatprep.subr.bf16.mxu0 %v1669
  %1770 = vmatpush1.bf16.msra.mxu0 %v1668
  %1771 = vmatprep.subr.bf16.mxu0 %v1673
  %1772 = vmatpush1.bf16.msra.mxu0 %v1672
  %1773 = vmatprep.subr.bf16.mxu0 %v1677
  %1774 = vmatpush1.bf16.msra.mxu0 %v1676
  %1775 = vmatprep.subr.bf16.mxu0 %v1681
  %1776 = vmatpush1.bf16.msra.mxu0 %v1680
  %1777 = vmatprep.subr.bf16.mxu0 %v1685
  %1778 = vmatpush1.bf16.msra.mxu0 %v1684
  %1779 = vmatprep.subr.bf16.mxu0 %v1689
  %1780 = vmatpush1.bf16.msra.mxu0 %v1688
  %1781 = vmatprep.subr.bf16.mxu0 %v1693
  %1782 = vmatpush1.bf16.msra.mxu0 %v1692
  %1783 = vmatprep.subr.bf16.mxu0 0
  %1784 = vmatpush1.bf16.msra.mxu0 0
  %1785 = vmatprep.subr.bf16.mxu0 0
  %1786 = vmatpush1.bf16.msra.mxu0 0
  %1787 = vmatprep.subr.bf16.mxu0 0
  %1788 = vmatpush1.bf16.msra.mxu0 0
  %1789 = vmatprep.subr.bf16.mxu0 0
  %1790 = vmatpush1.bf16.msra.mxu0 0
  %1791 = vmatprep.subr.bf16.mxu0 0
  %1792 = vmatpush1.bf16.msra.mxu0 0
  %1793 = vmatprep.subr.bf16.mxu0 0
  %1794 = vmatpush1.bf16.msra.mxu0 0
  %1795 = vmatprep.subr.bf16.mxu0 0
  %1796 = vmatpush1.bf16.msra.mxu0 0
  %1797 = vmatprep.subr.bf16.mxu0 0
  %1798 = vmatpush1.bf16.msra.mxu0 0
  %1799 = vmatprep.mubr.bf16.mxu0 0
  %1800 = vmatmul.mubr.bf16.gmra.mrb[0].mxu0 %v1257
  %v1801 = vpop.f32.mrb[0].mxu0
  %v1802 = vadd.f32 %v1560, %v1801
  %v1803 = vpop.f32.mrb[0].mxu0
  %v1804 = vadd.f32 %v1562, %v1803
  %v1805 = vpop.f32.mrb[0].mxu0
  %v1806 = vpop.f32.mrb[0].mxu0
  %1807 = vdwg.mxu0
  %v1808 = vld [vmem:[%s4] sm:$0xf]
  %v1810 = vlaneseq
  %v1811 = vshrl.u32 %v1810, 7
  %v1812 = vsub.s32 0, %v1811
  %v1813 = vrot.slane %v1808, %v1812
  %v1814 = vlaneseq
  %v1815 = vshrl.u32 %v1814, 7
  %v1816 = vsub.s32 1, %v1815
  %v1817 = vrot.slane %v1808, %v1816
  %v1818 = vlaneseq
  %v1819 = vshrl.u32 %v1818, 7
  %v1820 = vsub.s32 2, %v1819
  %v1821 = vrot.slane %v1808, %v1820
  %v1822 = vlaneseq
  %v1823 = vshrl.u32 %v1822, 7
  %v1824 = vsub.s32 3, %v1823
  %v1825 = vrot.slane %v1808, %v1824
  %v1830 = vadd.f32 %v1761, %v1813
  %v1831 = vadd.f32 %v1763, %v1817
  %v1832 = vadd.f32 %v1802, %v1821
  %v1833 = vadd.f32 %v1804, %v1825
  %v1834 = vld [vmem:[#allocation5] sm:$0xff]
  %v1835 = vxor.u32 %v1830, 2147483648
  %v1836 = vmul.f32 %v1835, 1.442695
  %v1837 = vpow.pop %v1836
  %v1838 = vadd.f32 %v1837, 1.0
  %v1839 = vrcp.pop %v1838
  %v1840 = vmul.f32 1.0, %v1839
  %v1841 = vxor.u32 %v1831, 2147483648
  %v1842 = vmul.f32 %v1841, 1.442695
  %v1843 = vpow.pop %v1842
  %v1844 = vadd.f32 %v1843, 1.0
  %v1845 = vrcp.pop %v1844
  %v1846 = vmul.f32 1.0, %v1845
  %v1847 = vtanh.pop %v1832
  %v1848 = vxor.u32 %v1833, 2147483648
  %v1849 = vmul.f32 %v1848, 1.442695
  %v1850 = vpow.pop %v1849
  %v1851 = vadd.f32 %v1850, 1.0
  %v1852 = vrcp.pop %v1851
  %v1853 = vmul.f32 1.0, %v1852
  %v1854 = vmul.f32 %v1846, %v1834
  %v1855 = vmul.f32 %v1840, %v1847
  %v1856 = vadd.f32 %v1854, %v1855
  %v1857 = vtanh.pop %v1856
  %v1858 = vmul.f32 %v1853, %v1857
  %1859 = vst [vmem:[#allocation4] sm:$0xff] %v1858
  %1860 = vst [vmem:[#allocation5] sm:$0xff] %v1856
  %s1861 = scalar_lea.vmem %s5, 8
  %1862 = vst [vmem:[%s1861] sm:$0xff] %v1858
  %s1863 = scalar_lea.vmem %s0, 64
  %v1864 = vld [vmem:[%s1863] sm:$0xff]
  %v1865 = vld [vmem:[%s1863 + $0x8] sm:$0xff]
  %v1866 = vld [vmem:[%s1863 + $0x10] sm:$0xff]
  %v1867 = vld [vmem:[%s1863 + $0x18] sm:$0xff]
  %v1868 = vld [vmem:[#allocation2] sm:$0xff]
  %v1869 = vpack.c.bf16 %v1868, %v1868
  %v1870 = vld [vmem:[%s1] sm:$0xff]
  %v1871 = vld [vmem:[%s1 + $0x8] sm:$0xff]
  %v1872 = vld [vmem:[%s1 + $0x10] sm:$0xff]
  %v1873 = vld [vmem:[%s1 + $0x18] sm:$0xff]
  %v1874 = vld [vmem:[%s1 + $0x20] sm:$0xff]
  %v1875 = vld [vmem:[%s1 + $0x28] sm:$0xff]
  %v1876 = vld [vmem:[%s1 + $0x30] sm:$0xff]
  %v1877 = vld [vmem:[%s1 + $0x38] sm:$0xff]
  %v1878 = vld [vmem:[%s1 + $0x40] sm:$0xff]
  %v1879 = vld [vmem:[%s1 + $0x48] sm:$0xff]
  %v1880 = vld [vmem:[%s1 + $0x50] sm:$0xff]
  %v1881 = vld [vmem:[%s1 + $0x58] sm:$0xff]
  %v1882 = vld [vmem:[%s1 + $0x60] sm:$0xff]
  %v1883 = vld [vmem:[%s1 + $0x68] sm:$0xff]
  %v1884 = vld [vmem:[%s1 + $0x70] sm:$0xff]
  %v1885 = vld [vmem:[%s1 + $0x78] sm:$0xff]
  %v1886 = vld [vmem:[%s1 + $0x80] sm:$0xff]
  %v1887 = vld [vmem:[%s1 + $0x88] sm:$0xff]
  %v1888 = vld [vmem:[%s1 + $0x90] sm:$0xff]
  %v1889 = vld [vmem:[%s1 + $0x98] sm:$0xff]
  %v1890 = vld [vmem:[%s1 + $0xa0] sm:$0xff]
  %v1891 = vld [vmem:[%s1 + $0xa8] sm:$0xff]
  %v1892 = vld [vmem:[%s1 + $0xb0] sm:$0xff]
  %v1893 = vld [vmem:[%s1 + $0xb8] sm:$0xff]
  %v1894 = vld [vmem:[%s1 + $0xc0] sm:$0xff]
  %v1895 = vld [vmem:[%s1 + $0xc8] sm:$0xff]
  %v1896 = vld [vmem:[%s1 + $0xd0] sm:$0xff]
  %v1897 = vld [vmem:[%s1 + $0xd8] sm:$0xff]
  %v1898 = vld [vmem:[%s1 + $0xe0] sm:$0xff]
  %v1899 = vld [vmem:[%s1 + $0xe8] sm:$0xff]
  %v1900 = vld [vmem:[%s1 + $0xf0] sm:$0xff]
  %v1901 = vld [vmem:[%s1 + $0xf8] sm:$0xff]
  %v1934 = vunpack.c.l.b16 %v1870
  %v1935 = vunpack.c.h.b16 %v1870
  %v1936 = vunpack.c.l.b16 %v1871
  %v1937 = vunpack.c.h.b16 %v1871
  %v1938 = vunpack.c.l.b16 %v1872
  %v1939 = vunpack.c.h.b16 %v1872
  %v1940 = vunpack.c.l.b16 %v1873
  %v1941 = vunpack.c.h.b16 %v1873
  %v1942 = vunpack.c.l.b16 %v1874
  %v1943 = vunpack.c.h.b16 %v1874
  %v1944 = vunpack.c.l.b16 %v1875
  %v1945 = vunpack.c.h.b16 %v1875
  %v1946 = vunpack.c.l.b16 %v1876
  %v1947 = vunpack.c.h.b16 %v1876
  %v1948 = vunpack.c.l.b16 %v1877
  %v1949 = vunpack.c.h.b16 %v1877
  %v1950 = vunpack.c.l.b16 %v1878
  %v1951 = vunpack.c.h.b16 %v1878
  %v1952 = vunpack.c.l.b16 %v1879
  %v1953 = vunpack.c.h.b16 %v1879
  %v1954 = vunpack.c.l.b16 %v1880
  %v1955 = vunpack.c.h.b16 %v1880
  %v1956 = vunpack.c.l.b16 %v1881
  %v1957 = vunpack.c.h.b16 %v1881
  %v1958 = vunpack.c.l.b16 %v1882
  %v1959 = vunpack.c.h.b16 %v1882
  %v1960 = vunpack.c.l.b16 %v1883
  %v1961 = vunpack.c.h.b16 %v1883
  %v1962 = vunpack.c.l.b16 %v1884
  %v1963 = vunpack.c.h.b16 %v1884
  %v1964 = vunpack.c.l.b16 %v1885
  %v1965 = vunpack.c.h.b16 %v1885
  %v1966 = vunpack.c.l.b16 %v1886
  %v1967 = vunpack.c.h.b16 %v1886
  %v1968 = vunpack.c.l.b16 %v1887
  %v1969 = vunpack.c.h.b16 %v1887
  %v1970 = vunpack.c.l.b16 %v1888
  %v1971 = vunpack.c.h.b16 %v1888
  %v1972 = vunpack.c.l.b16 %v1889
  %v1973 = vunpack.c.h.b16 %v1889
  %v1974 = vunpack.c.l.b16 %v1890
  %v1975 = vunpack.c.h.b16 %v1890
  %v1976 = vunpack.c.l.b16 %v1891
  %v1977 = vunpack.c.h.b16 %v1891
  %v1978 = vunpack.c.l.b16 %v1892
  %v1979 = vunpack.c.h.b16 %v1892
  %v1980 = vunpack.c.l.b16 %v1893
  %v1981 = vunpack.c.h.b16 %v1893
  %v1982 = vunpack.c.l.b16 %v1894
  %v1983 = vunpack.c.h.b16 %v1894
  %v1984 = vunpack.c.l.b16 %v1895
  %v1985 = vunpack.c.h.b16 %v1895
  %v1986 = vunpack.c.l.b16 %v1896
  %v1987 = vunpack.c.h.b16 %v1896
  %v1988 = vunpack.c.l.b16 %v1897
  %v1989 = vunpack.c.h.b16 %v1897
  %v1990 = vunpack.c.l.b16 %v1898
  %v1991 = vunpack.c.h.b16 %v1898
  %v1992 = vunpack.c.l.b16 %v1899
  %v1993 = vunpack.c.h.b16 %v1899
  %v1994 = vunpack.c.l.b16 %v1900
  %v1995 = vunpack.c.h.b16 %v1900
  %v1996 = vunpack.c.l.b16 %v1901
  %v1997 = vunpack.c.h.b16 %v1901
  %v1998 = vpack.c.b16 %v1938, %v1934
  %v1999 = vpack.c.b16 %v1939, %v1935
  %v2000 = vpack.c.b16 %v1940, %v1936
  %v2001 = vpack.c.b16 %v1941, %v1937
  %v2002 = vpack.c.b16 %v1946, %v1942
  %v2003 = vpack.c.b16 %v1947, %v1943
  %v2004 = vpack.c.b16 %v1948, %v1944
  %v2005 = vpack.c.b16 %v1949, %v1945
  %v2006 = vpack.c.b16 %v1954, %v1950
  %v2007 = vpack.c.b16 %v1955, %v1951
  %v2008 = vpack.c.b16 %v1956, %v1952
  %v2009 = vpack.c.b16 %v1957, %v1953
  %v2010 = vpack.c.b16 %v1962, %v1958
  %v2011 = vpack.c.b16 %v1963, %v1959
  %v2012 = vpack.c.b16 %v1964, %v1960
  %v2013 = vpack.c.b16 %v1965, %v1961
  %v2014 = vpack.c.b16 %v1970, %v1966
  %v2015 = vpack.c.b16 %v1971, %v1967
  %v2016 = vpack.c.b16 %v1972, %v1968
  %v2017 = vpack.c.b16 %v1973, %v1969
  %v2018 = vpack.c.b16 %v1978, %v1974
  %v2019 = vpack.c.b16 %v1979, %v1975
  %v2020 = vpack.c.b16 %v1980, %v1976
  %v2021 = vpack.c.b16 %v1981, %v1977
  %v2022 = vpack.c.b16 %v1986, %v1982
  %v2023 = vpack.c.b16 %v1987, %v1983
  %v2024 = vpack.c.b16 %v1988, %v1984
  %v2025 = vpack.c.b16 %v1989, %v1985
  %v2026 = vpack.c.b16 %v1994, %v1990
  %v2027 = vpack.c.b16 %v1995, %v1991
  %v2028 = vpack.c.b16 %v1996, %v1992
  %v2029 = vpack.c.b16 %v1997, %v1993
  %2062 = vmatprep.subr.bf16.mxu0 %v1999
  %2063 = vmatpush1.bf16.msra.mxu0 %v1998
  %2064 = vmatprep.subr.bf16.mxu0 %v2003
  %2065 = vmatpush1.bf16.msra.mxu0 %v2002
  %2066 = vmatprep.subr.bf16.mxu0 %v2007
  %2067 = vmatpush1.bf16.msra.mxu0 %v2006
  %2068 = vmatprep.subr.bf16.mxu0 %v2011
  %2069 = vmatpush1.bf16.msra.mxu0 %v2010
  %2070 = vmatprep.subr.bf16.mxu0 %v2015
  %2071 = vmatpush1.bf16.msra.mxu0 %v2014
  %2072 = vmatprep.subr.bf16.mxu0 %v2019
  %2073 = vmatpush1.bf16.msra.mxu0 %v2018
  %2074 = vmatprep.subr.bf16.mxu0 %v2023
  %2075 = vmatpush1.bf16.msra.mxu0 %v2022
  %2076 = vmatprep.subr.bf16.mxu0 %v2027
  %2077 = vmatpush1.bf16.msra.mxu0 %v2026
  %2078 = vmatprep.subr.bf16.mxu0 0
  %2079 = vmatpush1.bf16.msra.mxu0 0
  %2080 = vmatprep.subr.bf16.mxu0 0
  %2081 = vmatpush1.bf16.msra.mxu0 0
  %2082 = vmatprep.subr.bf16.mxu0 0
  %2083 = vmatpush1.bf16.msra.mxu0 0
  %2084 = vmatprep.subr.bf16.mxu0 0
  %2085 = vmatpush1.bf16.msra.mxu0 0
  %2086 = vmatprep.subr.bf16.mxu0 0
  %2087 = vmatpush1.bf16.msra.mxu0 0
  %2088 = vmatprep.subr.bf16.mxu0 0
  %2089 = vmatpush1.bf16.msra.mxu0 0
  %2090 = vmatprep.subr.bf16.mxu0 0
  %2091 = vmatpush1.bf16.msra.mxu0 0
  %2092 = vmatprep.subr.bf16.mxu0 0
  %2093 = vmatpush1.bf16.msra.mxu0 0
  %2094 = vmatprep.mubr.bf16.mxu0 0
  %2095 = vmatmul.mubr.bf16.gmra.mrb[0].mxu0 %v1869
  %v2096 = vpop.f32.mrb[0].mxu0
  %v2097 = vadd.f32 0.0, %v2096
  %v2098 = vpop.f32.mrb[0].mxu0
  %v2099 = vadd.f32 0.0, %v2098
  %v2100 = vpop.f32.mrb[0].mxu0
  %v2101 = vpop.f32.mrb[0].mxu0
  %2102 = vdwg.mxu0
  %2103 = vmatprep.subr.bf16.mxu0 %v2001
  %2104 = vmatpush1.bf16.msra.mxu0 %v2000
  %2105 = vmatprep.subr.bf16.mxu0 %v2005
  %2106 = vmatpush1.bf16.msra.mxu0 %v2004
  %2107 = vmatprep.subr.bf16.mxu0 %v2009
  %2108 = vmatpush1.bf16.msra.mxu0 %v2008
  %2109 = vmatprep.subr.bf16.mxu0 %v2013
  %2110 = vmatpush1.bf16.msra.mxu0 %v2012
  %2111 = vmatprep.subr.bf16.mxu0 %v2017
  %2112 = vmatpush1.bf16.msra.mxu0 %v2016
  %2113 = vmatprep.subr.bf16.mxu0 %v2021
  %2114 = vmatpush1.bf16.msra.mxu0 %v2020
  %2115 = vmatprep.subr.bf16.mxu0 %v2025
  %2116 = vmatpush1.bf16.msra.mxu0 %v2024
  %2117 = vmatprep.subr.bf16.mxu0 %v2029
  %2118 = vmatpush1.bf16.msra.mxu0 %v2028
  %2119 = vmatprep.subr.bf16.mxu0 0
  %2120 = vmatpush1.bf16.msra.mxu0 0
  %2121 = vmatprep.subr.bf16.mxu0 0
  %2122 = vmatpush1.bf16.msra.mxu0 0
  %2123 = vmatprep.subr.bf16.mxu0 0
  %2124 = vmatpush1.bf16.msra.mxu0 0
  %2125 = vmatprep.subr.bf16.mxu0 0
  %2126 = vmatpush1.bf16.msra.mxu0 0
  %2127 = vmatprep.subr.bf16.mxu0 0
  %2128 = vmatpush1.bf16.msra.mxu0 0
  %2129 = vmatprep.subr.bf16.mxu0 0
  %2130 = vmatpush1.bf16.msra.mxu0 0
  %2131 = vmatprep.subr.bf16.mxu0 0
  %2132 = vmatpush1.bf16.msra.mxu0 0
  %2133 = vmatprep.subr.bf16.mxu0 0
  %2134 = vmatpush1.bf16.msra.mxu0 0
  %2135 = vmatprep.mubr.bf16.mxu0 0
  %2136 = vmatmul.mubr.bf16.gmra.mrb[0].mxu0 %v1869
  %v2137 = vpop.f32.mrb[0].mxu0
  %v2138 = vadd.f32 0.0, %v2137
  %v2139 = vpop.f32.mrb[0].mxu0
  %v2140 = vadd.f32 0.0, %v2139
  %v2141 = vpop.f32.mrb[0].mxu0
  %v2142 = vpop.f32.mrb[0].mxu0
  %2143 = vdwg.mxu0
  %v2144 = vadd.f32 %v1864, %v2097
  %v2145 = vadd.f32 %v1865, %v2099
  %v2146 = vadd.f32 %v1866, %v2138
  %v2147 = vadd.f32 %v1867, %v2140
  %v2148 = vld [vmem:[#allocation3] sm:$0xff]
  %v2149 = vxor.u32 %v2144, 2147483648
  %v2150 = vmul.f32 %v2149, 1.442695
  %v2151 = vpow.pop %v2150
  %v2152 = vadd.f32 %v2151, 1.0
  %v2153 = vrcp.pop %v2152
  %v2154 = vmul.f32 1.0, %v2153
  %v2155 = vxor.u32 %v2145, 2147483648
  %v2156 = vmul.f32 %v2155, 1.442695
  %v2157 = vpow.pop %v2156
  %v2158 = vadd.f32 %v2157, 1.0
  %v2159 = vrcp.pop %v2158
  %v2160 = vmul.f32 1.0, %v2159
  %v2161 = vtanh.pop %v2146
  %v2162 = vxor.u32 %v2147, 2147483648
  %v2163 = vmul.f32 %v2162, 1.442695
  %v2164 = vpow.pop %v2163
  %v2165 = vadd.f32 %v2164, 1.0
  %v2166 = vrcp.pop %v2165
  %v2167 = vmul.f32 1.0, %v2166
  %v2168 = vmul.f32 %v2160, %v2148
  %v2169 = vmul.f32 %v2154, %v2161
  %v2170 = vadd.f32 %v2168, %v2169
  %v2171 = vtanh.pop %v2170
  %v2172 = vmul.f32 %v2167, %v2171
  %2173 = vst [vmem:[#allocation2] sm:$0xff] %v2172
  %2174 = vst [vmem:[#allocation3] sm:$0xff] %v2170
  %v2175 = vpack.c.bf16 %v2172, %v2172
  %v2176 = vld [vmem:[%s2] sm:$0xff]
  %v2177 = vld [vmem:[%s2 + $0x8] sm:$0xff]
  %v2178 = vld [vmem:[%s2 + $0x10] sm:$0xff]
  %v2179 = vld [vmem:[%s2 + $0x18] sm:$0xff]
  %v2180 = vld [vmem:[%s2 + $0x20] sm:$0xff]
  %v2181 = vld [vmem:[%s2 + $0x28] sm:$0xff]
  %v2182 = vld [vmem:[%s2 + $0x30] sm:$0xff]
  %v2183 = vld [vmem:[%s2 + $0x38] sm:$0xff]
  %v2184 = vld [vmem:[%s2 + $0x40] sm:$0xff]
  %v2185 = vld [vmem:[%s2 + $0x48] sm:$0xff]
  %v2186 = vld [vmem:[%s2 + $0x50] sm:$0xff]
  %v2187 = vld [vmem:[%s2 + $0x58] sm:$0xff]
  %v2188 = vld [vmem:[%s2 + $0x60] sm:$0xff]
  %v2189 = vld [vmem:[%s2 + $0x68] sm:$0xff]
  %v2190 = vld [vmem:[%s2 + $0x70] sm:$0xff]
  %v2191 = vld [vmem:[%s2 + $0x78] sm:$0xff]
  %v2192 = vld [vmem:[%s2 + $0x80] sm:$0xff]
  %v2193 = vld [vmem:[%s2 + $0x88] sm:$0xff]
  %v2194 = vld [vmem:[%s2 + $0x90] sm:$0xff]
  %v2195 = vld [vmem:[%s2 + $0x98] sm:$0xff]
  %v2196 = vld [vmem:[%s2 + $0xa0] sm:$0xff]
  %v2197 = vld [vmem:[%s2 + $0xa8] sm:$0xff]
  %v2198 = vld [vmem:[%s2 + $0xb0] sm:$0xff]
  %v2199 = vld [vmem:[%s2 + $0xb8] sm:$0xff]
  %v2200 = vld [vmem:[%s2 + $0xc0] sm:$0xff]
  %v2201 = vld [vmem:[%s2 + $0xc8] sm:$0xff]
  %v2202 = vld [vmem:[%s2 + $0xd0] sm:$0xff]
  %v2203 = vld [vmem:[%s2 + $0xd8] sm:$0xff]
  %v2204 = vld [vmem:[%s2 + $0xe0] sm:$0xff]
  %v2205 = vld [vmem:[%s2 + $0xe8] sm:$0xff]
  %v2206 = vld [vmem:[%s2 + $0xf0] sm:$0xff]
  %v2207 = vld [vmem:[%s2 + $0xf8] sm:$0xff]
  %v2208 = vld [vmem:[#allocation4] sm:$0xff]
  %v2209 = vpack.c.bf16 %v2208, %v2208
  %v2210 = vld [vmem:[%s3] sm:$0xff]
  %v2211 = vld [vmem:[%s3 + $0x8] sm:$0xff]
  %v2212 = vld [vmem:[%s3 + $0x10] sm:$0xff]
  %v2213 = vld [vmem:[%s3 + $0x18] sm:$0xff]
  %v2214 = vld [vmem:[%s3 + $0x20] sm:$0xff]
  %v2215 = vld [vmem:[%s3 + $0x28] sm:$0xff]
  %v2216 = vld [vmem:[%s3 + $0x30] sm:$0xff]
  %v2217 = vld [vmem:[%s3 + $0x38] sm:$0xff]
  %v2218 = vld [vmem:[%s3 + $0x40] sm:$0xff]
  %v2219 = vld [vmem:[%s3 + $0x48] sm:$0xff]
  %v2220 = vld [vmem:[%s3 + $0x50] sm:$0xff]
  %v2221 = vld [vmem:[%s3 + $0x58] sm:$0xff]
  %v2222 = vld [vmem:[%s3 + $0x60] sm:$0xff]
  %v2223 = vld [vmem:[%s3 + $0x68] sm:$0xff]
  %v2224 = vld [vmem:[%s3 + $0x70] sm:$0xff]
  %v2225 = vld [vmem:[%s3 + $0x78] sm:$0xff]
  %v2226 = vld [vmem:[%s3 + $0x80] sm:$0xff]
  %v2227 = vld [vmem:[%s3 + $0x88] sm:$0xff]
  %v2228 = vld [vmem:[%s3 + $0x90] sm:$0xff]
  %v2229 = vld [vmem:[%s3 + $0x98] sm:$0xff]
  %v2230 = vld [vmem:[%s3 + $0xa0] sm:$0xff]
  %v2231 = vld [vmem:[%s3 + $0xa8] sm:$0xff]
  %v2232 = vld [vmem:[%s3 + $0xb0] sm:$0xff]
  %v2233 = vld [vmem:[%s3 + $0xb8] sm:$0xff]
  %v2234 = vld [vmem:[%s3 + $0xc0] sm:$0xff]
  %v2235 = vld [vmem:[%s3 + $0xc8] sm:$0xff]
  %v2236 = vld [vmem:[%s3 + $0xd0] sm:$0xff]
  %v2237 = vld [vmem:[%s3 + $0xd8] sm:$0xff]
  %v2238 = vld [vmem:[%s3 + $0xe0] sm:$0xff]
  %v2239 = vld [vmem:[%s3 + $0xe8] sm:$0xff]
  %v2240 = vld [vmem:[%s3 + $0xf0] sm:$0xff]
  %v2241 = vld [vmem:[%s3 + $0xf8] sm:$0xff]
  %v2274 = vunpack.c.l.b16 %v2210
  %v2275 = vunpack.c.h.b16 %v2210
  %v2276 = vunpack.c.l.b16 %v2211
  %v2277 = vunpack.c.h.b16 %v2211
  %v2278 = vunpack.c.l.b16 %v2212
  %v2279 = vunpack.c.h.b16 %v2212
  %v2280 = vunpack.c.l.b16 %v2213
  %v2281 = vunpack.c.h.b16 %v2213
  %v2282 = vunpack.c.l.b16 %v2214
  %v2283 = vunpack.c.h.b16 %v2214
  %v2284 = vunpack.c.l.b16 %v2215
  %v2285 = vunpack.c.h.b16 %v2215
  %v2286 = vunpack.c.l.b16 %v2216
  %v2287 = vunpack.c.h.b16 %v2216
  %v2288 = vunpack.c.l.b16 %v2217
  %v2289 = vunpack.c.h.b16 %v2217
  %v2290 = vunpack.c.l.b16 %v2218
  %v2291 = vunpack.c.h.b16 %v2218
  %v2292 = vunpack.c.l.b16 %v2219
  %v2293 = vunpack.c.h.b16 %v2219
  %v2294 = vunpack.c.l.b16 %v2220
  %v2295 = vunpack.c.h.b16 %v2220
  %v2296 = vunpack.c.l.b16 %v2221
  %v2297 = vunpack.c.h.b16 %v2221
  %v2298 = vunpack.c.l.b16 %v2222
  %v2299 = vunpack.c.h.b16 %v2222
  %v2300 = vunpack.c.l.b16 %v2223
  %v2301 = vunpack.c.h.b16 %v2223
  %v2302 = vunpack.c.l.b16 %v2224
  %v2303 = vunpack.c.h.b16 %v2224
  %v2304 = vunpack.c.l.b16 %v2225
  %v2305 = vunpack.c.h.b16 %v2225
  %v2306 = vunpack.c.l.b16 %v2226
  %v2307 = vunpack.c.h.b16 %v2226
  %v2308 = vunpack.c.l.b16 %v2227
  %v2309 = vunpack.c.h.b16 %v2227
  %v2310 = vunpack.c.l.b16 %v2228
  %v2311 = vunpack.c.h.b16 %v2228
  %v2312 = vunpack.c.l.b16 %v2229
  %v2313 = vunpack.c.h.b16 %v2229
  %v2314 = vunpack.c.l.b16 %v2230
  %v2315 = vunpack.c.h.b16 %v2230
  %v2316 = vunpack.c.l.b16 %v2231
  %v2317 = vunpack.c.h.b16 %v2231
  %v2318 = vunpack.c.l.b16 %v2232
  %v2319 = vunpack.c.h.b16 %v2232
  %v2320 = vunpack.c.l.b16 %v2233
  %v2321 = vunpack.c.h.b16 %v2233
  %v2322 = vunpack.c.l.b16 %v2234
  %v2323 = vunpack.c.h.b16 %v2234
  %v2324 = vunpack.c.l.b16 %v2235
  %v2325 = vunpack.c.h.b16 %v2235
  %v2326 = vunpack.c.l.b16 %v2236
  %v2327 = vunpack.c.h.b16 %v2236
  %v2328 = vunpack.c.l.b16 %v2237
  %v2329 = vunpack.c.h.b16 %v2237
  %v2330 = vunpack.c.l.b16 %v2238
  %v2331 = vunpack.c.h.b16 %v2238
  %v2332 = vunpack.c.l.b16 %v2239
  %v2333 = vunpack.c.h.b16 %v2239
  %v2334 = vunpack.c.l.b16 %v2240
  %v2335 = vunpack.c.h.b16 %v2240
  %v2336 = vunpack.c.l.b16 %v2241
  %v2337 = vunpack.c.h.b16 %v2241
  %v2338 = vpack.c.b16 %v2278, %v2274
  %v2339 = vpack.c.b16 %v2279, %v2275
  %v2340 = vpack.c.b16 %v2280, %v2276
  %v2341 = vpack.c.b16 %v2281, %v2277
  %v2342 = vpack.c.b16 %v2286, %v2282
  %v2343 = vpack.c.b16 %v2287, %v2283
  %v2344 = vpack.c.b16 %v2288, %v2284
  %v2345 = vpack.c.b16 %v2289, %v2285
  %v2346 = vpack.c.b16 %v2294, %v2290
  %v2347 = vpack.c.b16 %v2295, %v2291
  %v2348 = vpack.c.b16 %v2296, %v2292
  %v2349 = vpack.c.b16 %v2297, %v2293
  %v2350 = vpack.c.b16 %v2302, %v2298
  %v2351 = vpack.c.b16 %v2303, %v2299
  %v2352 = vpack.c.b16 %v2304, %v2300
  %v2353 = vpack.c.b16 %v2305, %v2301
  %v2354 = vpack.c.b16 %v2310, %v2306
  %v2355 = vpack.c.b16 %v2311, %v2307
  %v2356 = vpack.c.b16 %v2312, %v2308
  %v2357 = vpack.c.b16 %v2313, %v2309
  %v2358 = vpack.c.b16 %v2318, %v2314
  %v2359 = vpack.c.b16 %v2319, %v2315
  %v2360 = vpack.c.b16 %v2320, %v2316
  %v2361 = vpack.c.b16 %v2321, %v2317
  %v2362 = vpack.c.b16 %v2326, %v2322
  %v2363 = vpack.c.b16 %v2327, %v2323
  %v2364 = vpack.c.b16 %v2328, %v2324
  %v2365 = vpack.c.b16 %v2329, %v2325
  %v2366 = vpack.c.b16 %v2334, %v2330
  %v2367 = vpack.c.b16 %v2335, %v2331
  %v2368 = vpack.c.b16 %v2336, %v2332
  %v2369 = vpack.c.b16 %v2337, %v2333
  %2402 = vmatprep.subr.bf16.mxu0 %v2339
  %2403 = vmatpush1.bf16.msra.mxu0 %v2338
  %2404 = vmatprep.subr.bf16.mxu0 %v2343
  %2405 = vmatpush1.bf16.msra.mxu0 %v2342
  %2406 = vmatprep.subr.bf16.mxu0 %v2347
  %2407 = vmatpush1.bf16.msra.mxu0 %v2346
  %2408 = vmatprep.subr.bf16.mxu0 %v2351
  %2409 = vmatpush1.bf16.msra.mxu0 %v2350
  %2410 = vmatprep.subr.bf16.mxu0 %v2355
  %2411 = vmatpush1.bf16.msra.mxu0 %v2354
  %2412 = vmatprep.subr.bf16.mxu0 %v2359
  %2413 = vmatpush1.bf16.msra.mxu0 %v2358
  %2414 = vmatprep.subr.bf16.mxu0 %v2363
  %2415 = vmatpush1.bf16.msra.mxu0 %v2362
  %2416 = vmatprep.subr.bf16.mxu0 %v2367
  %2417 = vmatpush1.bf16.msra.mxu0 %v2366
  %2418 = vmatprep.subr.bf16.mxu0 0
  %2419 = vmatpush1.bf16.msra.mxu0 0
  %2420 = vmatprep.subr.bf16.mxu0 0
  %2421 = vmatpush1.bf16.msra.mxu0 0
  %2422 = vmatprep.subr.bf16.mxu0 0
  %2423 = vmatpush1.bf16.msra.mxu0 0
  %2424 = vmatprep.subr.bf16.mxu0 0
  %2425 = vmatpush1.bf16.msra.mxu0 0
  %2426 = vmatprep.subr.bf16.mxu0 0
  %2427 = vmatpush1.bf16.msra.mxu0 0
  %2428 = vmatprep.subr.bf16.mxu0 0
  %2429 = vmatpush1.bf16.msra.mxu0 0
  %2430 = vmatprep.subr.bf16.mxu0 0
  %2431 = vmatpush1.bf16.msra.mxu0 0
  %2432 = vmatprep.subr.bf16.mxu0 0
  %2433 = vmatpush1.bf16.msra.mxu0 0
  %2434 = vmatprep.mubr.bf16.mxu0 0
  %2435 = vmatmul.mubr.bf16.gmra.mrb[0].mxu0 %v2209
  %v2436 = vpop.f32.mrb[0].mxu0
  %v2437 = vadd.f32 0.0, %v2436
  %v2438 = vpop.f32.mrb[0].mxu0
  %v2439 = vadd.f32 0.0, %v2438
  %v2440 = vpop.f32.mrb[0].mxu0
  %v2441 = vpop.f32.mrb[0].mxu0
  %2442 = vdwg.mxu0
  %2443 = vmatprep.subr.bf16.mxu0 %v2341
  %2444 = vmatpush1.bf16.msra.mxu0 %v2340
  %2445 = vmatprep.subr.bf16.mxu0 %v2345
  %2446 = vmatpush1.bf16.msra.mxu0 %v2344
  %2447 = vmatprep.subr.bf16.mxu0 %v2349
  %2448 = vmatpush1.bf16.msra.mxu0 %v2348
  %2449 = vmatprep.subr.bf16.mxu0 %v2353
  %2450 = vmatpush1.bf16.msra.mxu0 %v2352
  %2451 = vmatprep.subr.bf16.mxu0 %v2357
  %2452 = vmatpush1.bf16.msra.mxu0 %v2356
  %2453 = vmatprep.subr.bf16.mxu0 %v2361
  %2454 = vmatpush1.bf16.msra.mxu0 %v2360
  %2455 = vmatprep.subr.bf16.mxu0 %v2365
  %2456 = vmatpush1.bf16.msra.mxu0 %v2364
  %2457 = vmatprep.subr.bf16.mxu0 %v2369
  %2458 = vmatpush1.bf16.msra.mxu0 %v2368
  %2459 = vmatprep.subr.bf16.mxu0 0
  %2460 = vmatpush1.bf16.msra.mxu0 0
  %2461 = vmatprep.subr.bf16.mxu0 0
  %2462 = vmatpush1.bf16.msra.mxu0 0
  %2463 = vmatprep.subr.bf16.mxu0 0
  %2464 = vmatpush1.bf16.msra.mxu0 0
  %2465 = vmatprep.subr.bf16.mxu0 0
  %2466 = vmatpush1.bf16.msra.mxu0 0
  %2467 = vmatprep.subr.bf16.mxu0 0
  %2468 = vmatpush1.bf16.msra.mxu0 0
  %2469 = vmatprep.subr.bf16.mxu0 0
  %2470 = vmatpush1.bf16.msra.mxu0 0
  %2471 = vmatprep.subr.bf16.mxu0 0
  %2472 = vmatpush1.bf16.msra.mxu0 0
  %2473 = vmatprep.subr.bf16.mxu0 0
  %2474 = vmatpush1.bf16.msra.mxu0 0
  %2475 = vmatprep.mubr.bf16.mxu0 0
  %2476 = vmatmul.mubr.bf16.gmra.mrb[0].mxu0 %v2209
  %v2477 = vpop.f32.mrb[0].mxu0
  %v2478 = vadd.f32 0.0, %v2477
  %v2479 = vpop.f32.mrb[0].mxu0
  %v2480 = vadd.f32 0.0, %v2479
  %v2481 = vpop.f32.mrb[0].mxu0
  %v2482 = vpop.f32.mrb[0].mxu0
  %2483 = vdwg.mxu0
  %v2516 = vunpack.c.l.b16 %v2176
  %v2517 = vunpack.c.h.b16 %v2176
  %v2518 = vunpack.c.l.b16 %v2177
  %v2519 = vunpack.c.h.b16 %v2177
  %v2520 = vunpack.c.l.b16 %v2178
  %v2521 = vunpack.c.h.b16 %v2178
  %v2522 = vunpack.c.l.b16 %v2179
  %v2523 = vunpack.c.h.b16 %v2179
  %v2524 = vunpack.c.l.b16 %v2180
  %v2525 = vunpack.c.h.b16 %v2180
  %v2526 = vunpack.c.l.b16 %v2181
  %v2527 = vunpack.c.h.b16 %v2181
  %v2528 = vunpack.c.l.b16 %v2182
  %v2529 = vunpack.c.h.b16 %v2182
  %v2530 = vunpack.c.l.b16 %v2183
  %v2531 = vunpack.c.h.b16 %v2183
  %v2532 = vunpack.c.l.b16 %v2184
  %v2533 = vunpack.c.h.b16 %v2184
  %v2534 = vunpack.c.l.b16 %v2185
  %v2535 = vunpack.c.h.b16 %v2185
  %v2536 = vunpack.c.l.b16 %v2186
  %v2537 = vunpack.c.h.b16 %v2186
  %v2538 = vunpack.c.l.b16 %v2187
  %v2539 = vunpack.c.h.b16 %v2187
  %v2540 = vunpack.c.l.b16 %v2188
  %v2541 = vunpack.c.h.b16 %v2188
  %v2542 = vunpack.c.l.b16 %v2189
  %v2543 = vunpack.c.h.b16 %v2189
  %v2544 = vunpack.c.l.b16 %v2190
  %v2545 = vunpack.c.h.b16 %v2190
  %v2546 = vunpack.c.l.b16 %v2191
  %v2547 = vunpack.c.h.b16 %v2191
  %v2548 = vunpack.c.l.b16 %v2192
  %v2549 = vunpack.c.h.b16 %v2192
  %v2550 = vunpack.c.l.b16 %v2193
  %v2551 = vunpack.c.h.b16 %v2193
  %v2552 = vunpack.c.l.b16 %v2194
  %v2553 = vunpack.c.h.b16 %v2194
  %v2554 = vunpack.c.l.b16 %v2195
  %v2555 = vunpack.c.h.b16 %v2195
  %v2556 = vunpack.c.l.b16 %v2196
  %v2557 = vunpack.c.h.b16 %v2196
  %v2558 = vunpack.c.l.b16 %v2197
  %v2559 = vunpack.c.h.b16 %v2197
  %v2560 = vunpack.c.l.b16 %v2198
  %v2561 = vunpack.c.h.b16 %v2198
  %v2562 = vunpack.c.l.b16 %v2199
  %v2563 = vunpack.c.h.b16 %v2199
  %v2564 = vunpack.c.l.b16 %v2200
  %v2565 = vunpack.c.h.b16 %v2200
  %v2566 = vunpack.c.l.b16 %v2201
  %v2567 = vunpack.c.h.b16 %v2201
  %v2568 = vunpack.c.l.b16 %v2202
  %v2569 = vunpack.c.h.b16 %v2202
  %v2570 = vunpack.c.l.b16 %v2203
  %v2571 = vunpack.c.h.b16 %v2203
  %v2572 = vunpack.c.l.b16 %v2204
  %v2573 = vunpack.c.h.b16 %v2204
  %v2574 = vunpack.c.l.b16 %v2205
  %v2575 = vunpack.c.h.b16 %v2205
  %v2576 = vunpack.c.l.b16 %v2206
  %v2577 = vunpack.c.h.b16 %v2206
  %v2578 = vunpack.c.l.b16 %v2207
  %v2579 = vunpack.c.h.b16 %v2207
  %v2580 = vpack.c.b16 %v2520, %v2516
  %v2581 = vpack.c.b16 %v2521, %v2517
  %v2582 = vpack.c.b16 %v2522, %v2518
  %v2583 = vpack.c.b16 %v2523, %v2519
  %v2584 = vpack.c.b16 %v2528, %v2524
  %v2585 = vpack.c.b16 %v2529, %v2525
  %v2586 = vpack.c.b16 %v2530, %v2526
  %v2587 = vpack.c.b16 %v2531, %v2527
  %v2588 = vpack.c.b16 %v2536, %v2532
  %v2589 = vpack.c.b16 %v2537, %v2533
  %v2590 = vpack.c.b16 %v2538, %v2534
  %v2591 = vpack.c.b16 %v2539, %v2535
  %v2592 = vpack.c.b16 %v2544, %v2540
  %v2593 = vpack.c.b16 %v2545, %v2541
  %v2594 = vpack.c.b16 %v2546, %v2542
  %v2595 = vpack.c.b16 %v2547, %v2543
  %v2596 = vpack.c.b16 %v2552, %v2548
  %v2597 = vpack.c.b16 %v2553, %v2549
  %v2598 = vpack.c.b16 %v2554, %v2550
  %v2599 = vpack.c.b16 %v2555, %v2551
  %v2600 = vpack.c.b16 %v2560, %v2556
  %v2601 = vpack.c.b16 %v2561, %v2557
  %v2602 = vpack.c.b16 %v2562, %v2558
  %v2603 = vpack.c.b16 %v2563, %v2559
  %v2604 = vpack.c.b16 %v2568, %v2564
  %v2605 = vpack.c.b16 %v2569, %v2565
  %v2606 = vpack.c.b16 %v2570, %v2566
  %v2607 = vpack.c.b16 %v2571, %v2567
  %v2608 = vpack.c.b16 %v2576, %v2572
  %v2609 = vpack.c.b16 %v2577, %v2573
  %v2610 = vpack.c.b16 %v2578, %v2574
  %v2611 = vpack.c.b16 %v2579, %v2575
  %2644 = vmatprep.subr.bf16.mxu0 %v2581
  %2645 = vmatpush1.bf16.msra.mxu0 %v2580
  %2646 = vmatprep.subr.bf16.mxu0 %v2585
  %2647 = vmatpush1.bf16.msra.mxu0 %v2584
  %2648 = vmatprep.subr.bf16.mxu0 %v2589
  %2649 = vmatpush1.bf16.msra.mxu0 %v2588
  %2650 = vmatprep.subr.bf16.mxu0 %v2593
  %2651 = vmatpush1.bf16.msra.mxu0 %v2592
  %2652 = vmatprep.subr.bf16.mxu0 %v2597
  %2653 = vmatpush1.bf16.msra.mxu0 %v2596
  %2654 = vmatprep.subr.bf16.mxu0 %v2601
  %2655 = vmatpush1.bf16.msra.mxu0 %v2600
  %2656 = vmatprep.subr.bf16.mxu0 %v2605
  %2657 = vmatpush1.bf16.msra.mxu0 %v2604
  %2658 = vmatprep.subr.bf16.mxu0 %v2609
  %2659 = vmatpush1.bf16.msra.mxu0 %v2608
  %2660 = vmatprep.subr.bf16.mxu0 0
  %2661 = vmatpush1.bf16.msra.mxu0 0
  %2662 = vmatprep.subr.bf16.mxu0 0
  %2663 = vmatpush1.bf16.msra.mxu0 0
  %2664 = vmatprep.subr.bf16.mxu0 0
  %2665 = vmatpush1.bf16.msra.mxu0 0
  %2666 = vmatprep.subr.bf16.mxu0 0
  %2667 = vmatpush1.bf16.msra.mxu0 0
  %2668 = vmatprep.subr.bf16.mxu0 0
  %2669 = vmatpush1.bf16.msra.mxu0 0
  %2670 = vmatprep.subr.bf16.mxu0 0
  %2671 = vmatpush1.bf16.msra.mxu0 0
  %2672 = vmatprep.subr.bf16.mxu0 0
  %2673 = vmatpush1.bf16.msra.mxu0 0
  %2674 = vmatprep.subr.bf16.mxu0 0
  %2675 = vmatpush1.bf16.msra.mxu0 0
  %2676 = vmatprep.mubr.bf16.mxu0 0
  %2677 = vmatmul.mubr.bf16.gmra.mrb[0].mxu0 %v2175
  %v2678 = vpop.f32.mrb[0].mxu0
  %v2679 = vadd.f32 %v2437, %v2678
  %v2680 = vpop.f32.mrb[0].mxu0
  %v2681 = vadd.f32 %v2439, %v2680
  %v2682 = vpop.f32.mrb[0].mxu0
  %v2683 = vpop.f32.mrb[0].mxu0
  %2684 = vdwg.mxu0
  %2685 = vmatprep.subr.bf16.mxu0 %v2583
  %2686 = vmatpush1.bf16.msra.mxu0 %v2582
  %2687 = vmatprep.subr.bf16.mxu0 %v2587
  %2688 = vmatpush1.bf16.msra.mxu0 %v2586
  %2689 = vmatprep.subr.bf16.mxu0 %v2591
  %2690 = vmatpush1.bf16.msra.mxu0 %v2590
  %2691 = vmatprep.subr.bf16.mxu0 %v2595
  %2692 = vmatpush1.bf16.msra.mxu0 %v2594
  %2693 = vmatprep.subr.bf16.mxu0 %v2599
  %2694 = vmatpush1.bf16.msra.mxu0 %v2598
  %2695 = vmatprep.subr.bf16.mxu0 %v2603
  %2696 = vmatpush1.bf16.msra.mxu0 %v2602
  %2697 = vmatprep.subr.bf16.mxu0 %v2607
  %2698 = vmatpush1.bf16.msra.mxu0 %v2606
  %2699 = vmatprep.subr.bf16.mxu0 %v2611
  %2700 = vmatpush1.bf16.msra.mxu0 %v2610
  %2701 = vmatprep.subr.bf16.mxu0 0
  %2702 = vmatpush1.bf16.msra.mxu0 0
  %2703 = vmatprep.subr.bf16.mxu0 0
  %2704 = vmatpush1.bf16.msra.mxu0 0
  %2705 = vmatprep.subr.bf16.mxu0 0
  %2706 = vmatpush1.bf16.msra.mxu0 0
  %2707 = vmatprep.subr.bf16.mxu0 0
  %2708 = vmatpush1.bf16.msra.mxu0 0
  %2709 = vmatprep.subr.bf16.mxu0 0
  %2710 = vmatpush1.bf16.msra.mxu0 0
  %2711 = vmatprep.subr.bf16.mxu0 0
  %2712 = vmatpush1.bf16.msra.mxu0 0
  %2713 = vmatprep.subr.bf16.mxu0 0
  %2714 = vmatpush1.bf16.msra.mxu0 0
  %2715 = vmatprep.subr.bf16.mxu0 0
  %2716 = vmatpush1.bf16.msra.mxu0 0
  %2717 = vmatprep.mubr.bf16.mxu0 0
  %2718 = vmatmul.mubr.bf16.gmra.mrb[0].mxu0 %v2175
  %v2719 = vpop.f32.mrb[0].mxu0
  %v2720 = vadd.f32 %v2478, %v2719
  %v2721 = vpop.f32.mrb[0].mxu0
  %v2722 = vadd.f32 %v2480, %v2721
  %v2723 = vpop.f32.mrb[0].mxu0
  %v2724 = vpop.f32.mrb[0].mxu0
  %2725 = vdwg.mxu0
  %v2726 = vld [vmem:[%s4] sm:$0xf]
  %v2728 = vlaneseq
  %v2729 = vshrl.u32 %v2728, 7
  %v2730 = vsub.s32 0, %v2729
  %v2731 = vrot.slane %v2726, %v2730
  %v2732 = vlaneseq
  %v2733 = vshrl.u32 %v2732, 7
  %v2734 = vsub.s32 1, %v2733
  %v2735 = vrot.slane %v2726, %v2734
  %v2736 = vlaneseq
  %v2737 = vshrl.u32 %v2736, 7
  %v2738 = vsub.s32 2, %v2737
  %v2739 = vrot.slane %v2726, %v2738
  %v2740 = vlaneseq
  %v2741 = vshrl.u32 %v2740, 7
  %v2742 = vsub.s32 3, %v2741
  %v2743 = vrot.slane %v2726, %v2742
  %v2748 = vadd.f32 %v2679, %v2731
  %v2749 = vadd.f32 %v2681, %v2735
  %v2750 = vadd.f32 %v2720, %v2739
  %v2751 = vadd.f32 %v2722, %v2743
  %v2752 = vld [vmem:[#allocation5] sm:$0xff]
  %v2753 = vxor.u32 %v2748, 2147483648
  %v2754 = vmul.f32 %v2753, 1.442695
  %v2755 = vpow.pop %v2754
  %v2756 = vadd.f32 %v2755, 1.0
  %v2757 = vrcp.pop %v2756
  %v2758 = vmul.f32 1.0, %v2757
  %v2759 = vxor.u32 %v2749, 2147483648
  %v2760 = vmul.f32 %v2759, 1.442695
  %v2761 = vpow.pop %v2760
  %v2762 = vadd.f32 %v2761, 1.0
  %v2763 = vrcp.pop %v2762
  %v2764 = vmul.f32 1.0, %v2763
  %v2765 = vtanh.pop %v2750
  %v2766 = vxor.u32 %v2751, 2147483648
  %v2767 = vmul.f32 %v2766, 1.442695
  %v2768 = vpow.pop %v2767
  %v2769 = vadd.f32 %v2768, 1.0
  %v2770 = vrcp.pop %v2769
  %v2771 = vmul.f32 1.0, %v2770
  %v2772 = vmul.f32 %v2764, %v2752
  %v2773 = vmul.f32 %v2758, %v2765
  %v2774 = vadd.f32 %v2772, %v2773
  %v2775 = vtanh.pop %v2774
  %v2776 = vmul.f32 %v2771, %v2775
  %2777 = vst [vmem:[#allocation4] sm:$0xff] %v2776
  %2778 = vst [vmem:[#allocation5] sm:$0xff] %v2774
  %s2779 = scalar_lea.vmem %s5, 16
  %2780 = vst [vmem:[%s2779] sm:$0xff] %v2776
  %s2781 = scalar_lea.vmem %s0, 96
  %v2782 = vld [vmem:[%s2781] sm:$0xff]
  %v2783 = vld [vmem:[%s2781 + $0x8] sm:$0xff]
  %v2784 = vld [vmem:[%s2781 + $0x10] sm:$0xff]
  %v2785 = vld [vmem:[%s2781 + $0x18] sm:$0xff]
  %v2786 = vld [vmem:[#allocation2] sm:$0xff]
  %v2787 = vpack.c.bf16 %v2786, %v2786
  %v2788 = vld [vmem:[%s1] sm:$0xff]
  %v2789 = vld [vmem:[%s1 + $0x8] sm:$0xff]
  %v2790 = vld [vmem:[%s1 + $0x10] sm:$0xff]
  %v2791 = vld [vmem:[%s1 + $0x18] sm:$0xff]
  %v2792 = vld [vmem:[%s1 + $0x20] sm:$0xff]
  %v2793 = vld [vmem:[%s1 + $0x28] sm:$0xff]
  %v2794 = vld [vmem:[%s1 + $0x30] sm:$0xff]
  %v2795 = vld [vmem:[%s1 + $0x38] sm:$0xff]
  %v2796 = vld [vmem:[%s1 + $0x40] sm:$0xff]
  %v2797 = vld [vmem:[%s1 + $0x48] sm:$0xff]
  %v2798 = vld [vmem:[%s1 + $0x50] sm:$0xff]
  %v2799 = vld [vmem:[%s1 + $0x58] sm:$0xff]
  %v2800 = vld [vmem:[%s1 + $0x60] sm:$0xff]
  %v2801 = vld [vmem:[%s1 + $0x68] sm:$0xff]
  %v2802 = vld [vmem:[%s1 + $0x70] sm:$0xff]
  %v2803 = vld [vmem:[%s1 + $0x78] sm:$0xff]
  %v2804 = vld [vmem:[%s1 + $0x80] sm:$0xff]
  %v2805 = vld [vmem:[%s1 + $0x88] sm:$0xff]
  %v2806 = vld [vmem:[%s1 + $0x90] sm:$0xff]
  %v2807 = vld [vmem:[%s1 + $0x98] sm:$0xff]
  %v2808 = vld [vmem:[%s1 + $0xa0] sm:$0xff]
  %v2809 = vld [vmem:[%s1 + $0xa8] sm:$0xff]
  %v2810 = vld [vmem:[%s1 + $0xb0] sm:$0xff]
  %v2811 = vld [vmem:[%s1 + $0xb8] sm:$0xff]
  %v2812 = vld [vmem:[%s1 + $0xc0] sm:$0xff]
  %v2813 = vld [vmem:[%s1 + $0xc8] sm:$0xff]
  %v2814 = vld [vmem:[%s1 + $0xd0] sm:$0xff]
  %v2815 = vld [vmem:[%s1 + $0xd8] sm:$0xff]
  %v2816 = vld [vmem:[%s1 + $0xe0] sm:$0xff]
  %v2817 = vld [vmem:[%s1 + $0xe8] sm:$0xff]
  %v2818 = vld [vmem:[%s1 + $0xf0] sm:$0xff]
  %v2819 = vld [vmem:[%s1 + $0xf8] sm:$0xff]
  %v2852 = vunpack.c.l.b16 %v2788
  %v2853 = vunpack.c.h.b16 %v2788
  %v2854 = vunpack.c.l.b16 %v2789
  %v2855 = vunpack.c.h.b16 %v2789
  %v2856 = vunpack.c.l.b16 %v2790
  %v2857 = vunpack.c.h.b16 %v2790
  %v2858 = vunpack.c.l.b16 %v2791
  %v2859 = vunpack.c.h.b16 %v2791
  %v2860 = vunpack.c.l.b16 %v2792
  %v2861 = vunpack.c.h.b16 %v2792
  %v2862 = vunpack.c.l.b16 %v2793
  %v2863 = vunpack.c.h.b16 %v2793
  %v2864 = vunpack.c.l.b16 %v2794
  %v2865 = vunpack.c.h.b16 %v2794
  %v2866 = vunpack.c.l.b16 %v2795
  %v2867 = vunpack.c.h.b16 %v2795
  %v2868 = vunpack.c.l.b16 %v2796
  %v2869 = vunpack.c.h.b16 %v2796
  %v2870 = vunpack.c.l.b16 %v2797
  %v2871 = vunpack.c.h.b16 %v2797
  %v2872 = vunpack.c.l.b16 %v2798
  %v2873 = vunpack.c.h.b16 %v2798
  %v2874 = vunpack.c.l.b16 %v2799
  %v2875 = vunpack.c.h.b16 %v2799
  %v2876 = vunpack.c.l.b16 %v2800
  %v2877 = vunpack.c.h.b16 %v2800
  %v2878 = vunpack.c.l.b16 %v2801
  %v2879 = vunpack.c.h.b16 %v2801
  %v2880 = vunpack.c.l.b16 %v2802
  %v2881 = vunpack.c.h.b16 %v2802
  %v2882 = vunpack.c.l.b16 %v2803
  %v2883 = vunpack.c.h.b16 %v2803
  %v2884 = vunpack.c.l.b16 %v2804
  %v2885 = vunpack.c.h.b16 %v2804
  %v2886 = vunpack.c.l.b16 %v2805
  %v2887 = vunpack.c.h.b16 %v2805
  %v2888 = vunpack.c.l.b16 %v2806
  %v2889 = vunpack.c.h.b16 %v2806
  %v2890 = vunpack.c.l.b16 %v2807
  %v2891 = vunpack.c.h.b16 %v2807
  %v2892 = vunpack.c.l.b16 %v2808
  %v2893 = vunpack.c.h.b16 %v2808
  %v2894 = vunpack.c.l.b16 %v2809
  %v2895 = vunpack.c.h.b16 %v2809
  %v2896 = vunpack.c.l.b16 %v2810
  %v2897 = vunpack.c.h.b16 %v2810
  %v2898 = vunpack.c.l.b16 %v2811
  %v2899 = vunpack.c.h.b16 %v2811
  %v2900 = vunpack.c.l.b16 %v2812
  %v2901 = vunpack.c.h.b16 %v2812
  %v2902 = vunpack.c.l.b16 %v2813
  %v2903 = vunpack.c.h.b16 %v2813
  %v2904 = vunpack.c.l.b16 %v2814
  %v2905 = vunpack.c.h.b16 %v2814
  %v2906 = vunpack.c.l.b16 %v2815
  %v2907 = vunpack.c.h.b16 %v2815
  %v2908 = vunpack.c.l.b16 %v2816
  %v2909 = vunpack.c.h.b16 %v2816
  %v2910 = vunpack.c.l.b16 %v2817
  %v2911 = vunpack.c.h.b16 %v2817
  %v2912 = vunpack.c.l.b16 %v2818
  %v2913 = vunpack.c.h.b16 %v2818
  %v2914 = vunpack.c.l.b16 %v2819
  %v2915 = vunpack.c.h.b16 %v2819
  %v2916 = vpack.c.b16 %v2856, %v2852
  %v2917 = vpack.c.b16 %v2857, %v2853
  %v2918 = vpack.c.b16 %v2858, %v2854
  %v2919 = vpack.c.b16 %v2859, %v2855
  %v2920 = vpack.c.b16 %v2864, %v2860
  %v2921 = vpack.c.b16 %v2865, %v2861
  %v2922 = vpack.c.b16 %v2866, %v2862
  %v2923 = vpack.c.b16 %v2867, %v2863
  %v2924 = vpack.c.b16 %v2872, %v2868
  %v2925 = vpack.c.b16 %v2873, %v2869
  %v2926 = vpack.c.b16 %v2874, %v2870
  %v2927 = vpack.c.b16 %v2875, %v2871
  %v2928 = vpack.c.b16 %v2880, %v2876
  %v2929 = vpack.c.b16 %v2881, %v2877
  %v2930 = vpack.c.b16 %v2882, %v2878
  %v2931 = vpack.c.b16 %v2883, %v2879
  %v2932 = vpack.c.b16 %v2888, %v2884
  %v2933 = vpack.c.b16 %v2889, %v2885
  %v2934 = vpack.c.b16 %v2890, %v2886
  %v2935 = vpack.c.b16 %v2891, %v2887
  %v2936 = vpack.c.b16 %v2896, %v2892
  %v2937 = vpack.c.b16 %v2897, %v2893
  %v2938 = vpack.c.b16 %v2898, %v2894
  %v2939 = vpack.c.b16 %v2899, %v2895
  %v2940 = vpack.c.b16 %v2904, %v2900
  %v2941 = vpack.c.b16 %v2905, %v2901
  %v2942 = vpack.c.b16 %v2906, %v2902
  %v2943 = vpack.c.b16 %v2907, %v2903
  %v2944 = vpack.c.b16 %v2912, %v2908
  %v2945 = vpack.c.b16 %v2913, %v2909
  %v2946 = vpack.c.b16 %v2914, %v2910
  %v2947 = vpack.c.b16 %v2915, %v2911
  %2980 = vmatprep.subr.bf16.mxu0 %v2917
  %2981 = vmatpush1.bf16.msra.mxu0 %v2916
  %2982 = vmatprep.subr.bf16.mxu0 %v2921
  %2983 = vmatpush1.bf16.msra.mxu0 %v2920
  %2984 = vmatprep.subr.bf16.mxu0 %v2925
  %2985 = vmatpush1.bf16.msra.mxu0 %v2924
  %2986 = vmatprep.subr.bf16.mxu0 %v2929
  %2987 = vmatpush1.bf16.msra.mxu0 %v2928
  %2988 = vmatprep.subr.bf16.mxu0 %v2933
  %2989 = vmatpush1.bf16.msra.mxu0 %v2932
  %2990 = vmatprep.subr.bf16.mxu0 %v2937
  %2991 = vmatpush1.bf16.msra.mxu0 %v2936
  %2992 = vmatprep.subr.bf16.mxu0 %v2941
  %2993 = vmatpush1.bf16.msra.mxu0 %v2940
  %2994 = vmatprep.subr.bf16.mxu0 %v2945
  %2995 = vmatpush1.bf16.msra.mxu0 %v2944
  %2996 = vmatprep.subr.bf16.mxu0 0
  %2997 = vmatpush1.bf16.msra.mxu0 0
  %2998 = vmatprep.subr.bf16.mxu0 0
  %2999 = vmatpush1.bf16.msra.mxu0 0
  %3000 = vmatprep.subr.bf16.mxu0 0
  %3001 = vmatpush1.bf16.msra.mxu0 0
  %3002 = vmatprep.subr.bf16.mxu0 0
  %3003 = vmatpush1.bf16.msra.mxu0 0
  %3004 = vmatprep.subr.bf16.mxu0 0
  %3005 = vmatpush1.bf16.msra.mxu0 0
  %3006 = vmatprep.subr.bf16.mxu0 0
  %3007 = vmatpush1.bf16.msra.mxu0 0
  %3008 = vmatprep.subr.bf16.mxu0 0
  %3009 = vmatpush1.bf16.msra.mxu0 0
  %3010 = vmatprep.subr.bf16.mxu0 0
  %3011 = vmatpush1.bf16.msra.mxu0 0
  %3012 = vmatprep.mubr.bf16.mxu0 0
  %3013 = vmatmul.mubr.bf16.gmra.mrb[0].mxu0 %v2787
  %v3014 = vpop.f32.mrb[0].mxu0
  %v3015 = vadd.f32 0.0, %v3014
  %v3016 = vpop.f32.mrb[0].mxu0
  %v3017 = vadd.f32 0.0, %v3016
  %v3018 = vpop.f32.mrb[0].mxu0
  %v3019 = vpop.f32.mrb[0].mxu0
  %3020 = vdwg.mxu0
  %3021 = vmatprep.subr.bf16.mxu0 %v2919
  %3022 = vmatpush1.bf16.msra.mxu0 %v2918
  %3023 = vmatprep.subr.bf16.mxu0 %v2923
  %3024 = vmatpush1.bf16.msra.mxu0 %v2922
  %3025 = vmatprep.subr.bf16.mxu0 %v2927
  %3026 = vmatpush1.bf16.msra.mxu0 %v2926
  %3027 = vmatprep.subr.bf16.mxu0 %v2931
  %3028 = vmatpush1.bf16.msra.mxu0 %v2930
  %3029 = vmatprep.subr.bf16.mxu0 %v2935
  %3030 = vmatpush1.bf16.msra.mxu0 %v2934
  %3031 = vmatprep.subr.bf16.mxu0 %v2939
  %3032 = vmatpush1.bf16.msra.mxu0 %v2938
  %3033 = vmatprep.subr.bf16.mxu0 %v2943
  %3034 = vmatpush1.bf16.msra.mxu0 %v2942
  %3035 = vmatprep.subr.bf16.mxu0 %v2947
  %3036 = vmatpush1.bf16.msra.mxu0 %v2946
  %3037 = vmatprep.subr.bf16.mxu0 0
  %3038 = vmatpush1.bf16.msra.mxu0 0
  %3039 = vmatprep.subr.bf16.mxu0 0
  %3040 = vmatpush1.bf16.msra.mxu0 0
  %3041 = vmatprep.subr.bf16.mxu0 0
  %3042 = vmatpush1.bf16.msra.mxu0 0
  %3043 = vmatprep.subr.bf16.mxu0 0
  %3044 = vmatpush1.bf16.msra.mxu0 0
  %3045 = vmatprep.subr.bf16.mxu0 0
  %3046 = vmatpush1.bf16.msra.mxu0 0
  %3047 = vmatprep.subr.bf16.mxu0 0
  %3048 = vmatpush1.bf16.msra.mxu0 0
  %3049 = vmatprep.subr.bf16.mxu0 0
  %3050 = vmatpush1.bf16.msra.mxu0 0
  %3051 = vmatprep.subr.bf16.mxu0 0
  %3052 = vmatpush1.bf16.msra.mxu0 0
  %3053 = vmatprep.mubr.bf16.mxu0 0
  %3054 = vmatmul.mubr.bf16.gmra.mrb[0].mxu0 %v2787
  %v3055 = vpop.f32.mrb[0].mxu0
  %v3056 = vadd.f32 0.0, %v3055
  %v3057 = vpop.f32.mrb[0].mxu0
  %v3058 = vadd.f32 0.0, %v3057
  %v3059 = vpop.f32.mrb[0].mxu0
  %v3060 = vpop.f32.mrb[0].mxu0
  %3061 = vdwg.mxu0
  %v3062 = vadd.f32 %v2782, %v3015
  %v3063 = vadd.f32 %v2783, %v3017
  %v3064 = vadd.f32 %v2784, %v3056
  %v3065 = vadd.f32 %v2785, %v3058
  %v3066 = vld [vmem:[#allocation3] sm:$0xff]
  %v3067 = vxor.u32 %v3062, 2147483648
  %v3068 = vmul.f32 %v3067, 1.442695
  %v3069 = vpow.pop %v3068
  %v3070 = vadd.f32 %v3069, 1.0
  %v3071 = vrcp.pop %v3070
  %v3072 = vmul.f32 1.0, %v3071
  %v3073 = vxor.u32 %v3063, 2147483648
  %v3074 = vmul.f32 %v3073, 1.442695
  %v3075 = vpow.pop %v3074
  %v3076 = vadd.f32 %v3075, 1.0
  %v3077 = vrcp.pop %v3076
  %v3078 = vmul.f32 1.0, %v3077
  %v3079 = vtanh.pop %v3064
  %v3080 = vxor.u32 %v3065, 2147483648
  %v3081 = vmul.f32 %v3080, 1.442695
  %v3082 = vpow.pop %v3081
  %v3083 = vadd.f32 %v3082, 1.0
  %v3084 = vrcp.pop %v3083
  %v3085 = vmul.f32 1.0, %v3084
  %v3086 = vmul.f32 %v3078, %v3066
  %v3087 = vmul.f32 %v3072, %v3079
  %v3088 = vadd.f32 %v3086, %v3087
  %v3089 = vtanh.pop %v3088
  %v3090 = vmul.f32 %v3085, %v3089
  %3091 = vst [vmem:[#allocation2] sm:$0xff] %v3090
  %3092 = vst [vmem:[#allocation3] sm:$0xff] %v3088
  %v3093 = vpack.c.bf16 %v3090, %v3090
  %v3094 = vld [vmem:[%s2] sm:$0xff]
  %v3095 = vld [vmem:[%s2 + $0x8] sm:$0xff]
  %v3096 = vld [vmem:[%s2 + $0x10] sm:$0xff]
  %v3097 = vld [vmem:[%s2 + $0x18] sm:$0xff]
  %v3098 = vld [vmem:[%s2 + $0x20] sm:$0xff]
  %v3099 = vld [vmem:[%s2 + $0x28] sm:$0xff]
  %v3100 = vld [vmem:[%s2 + $0x30] sm:$0xff]
  %v3101 = vld [vmem:[%s2 + $0x38] sm:$0xff]
  %v3102 = vld [vmem:[%s2 + $0x40] sm:$0xff]
  %v3103 = vld [vmem:[%s2 + $0x48] sm:$0xff]
  %v3104 = vld [vmem:[%s2 + $0x50] sm:$0xff]
  %v3105 = vld [vmem:[%s2 + $0x58] sm:$0xff]
  %v3106 = vld [vmem:[%s2 + $0x60] sm:$0xff]
  %v3107 = vld [vmem:[%s2 + $0x68] sm:$0xff]
  %v3108 = vld [vmem:[%s2 + $0x70] sm:$0xff]
  %v3109 = vld [vmem:[%s2 + $0x78] sm:$0xff]
  %v3110 = vld [vmem:[%s2 + $0x80] sm:$0xff]
  %v3111 = vld [vmem:[%s2 + $0x88] sm:$0xff]
  %v3112 = vld [vmem:[%s2 + $0x90] sm:$0xff]
  %v3113 = vld [vmem:[%s2 + $0x98] sm:$0xff]
  %v3114 = vld [vmem:[%s2 + $0xa0] sm:$0xff]
  %v3115 = vld [vmem:[%s2 + $0xa8] sm:$0xff]
  %v3116 = vld [vmem:[%s2 + $0xb0] sm:$0xff]
  %v3117 = vld [vmem:[%s2 + $0xb8] sm:$0xff]
  %v3118 = vld [vmem:[%s2 + $0xc0] sm:$0xff]
  %v3119 = vld [vmem:[%s2 + $0xc8] sm:$0xff]
  %v3120 = vld [vmem:[%s2 + $0xd0] sm:$0xff]
  %v3121 = vld [vmem:[%s2 + $0xd8] sm:$0xff]
  %v3122 = vld [vmem:[%s2 + $0xe0] sm:$0xff]
  %v3123 = vld [vmem:[%s2 + $0xe8] sm:$0xff]
  %v3124 = vld [vmem:[%s2 + $0xf0] sm:$0xff]
  %v3125 = vld [vmem:[%s2 + $0xf8] sm:$0xff]
  %v3126 = vld [vmem:[#allocation4] sm:$0xff]
  %v3127 = vpack.c.bf16 %v3126, %v3126
  %v3128 = vld [vmem:[%s3] sm:$0xff]
  %v3129 = vld [vmem:[%s3 + $0x8] sm:$0xff]
  %v3130 = vld [vmem:[%s3 + $0x10] sm:$0xff]
  %v3131 = vld [vmem:[%s3 + $0x18] sm:$0xff]
  %v3132 = vld [vmem:[%s3 + $0x20] sm:$0xff]
  %v3133 = vld [vmem:[%s3 + $0x28] sm:$0xff]
  %v3134 = vld [vmem:[%s3 + $0x30] sm:$0xff]
  %v3135 = vld [vmem:[%s3 + $0x38] sm:$0xff]
  %v3136 = vld [vmem:[%s3 + $0x40] sm:$0xff]
  %v3137 = vld [vmem:[%s3 + $0x48] sm:$0xff]
  %v3138 = vld [vmem:[%s3 + $0x50] sm:$0xff]
  %v3139 = vld [vmem:[%s3 + $0x58] sm:$0xff]
  %v3140 = vld [vmem:[%s3 + $0x60] sm:$0xff]
  %v3141 = vld [vmem:[%s3 + $0x68] sm:$0xff]
  %v3142 = vld [vmem:[%s3 + $0x70] sm:$0xff]
  %v3143 = vld [vmem:[%s3 + $0x78] sm:$0xff]
  %v3144 = vld [vmem:[%s3 + $0x80] sm:$0xff]
  %v3145 = vld [vmem:[%s3 + $0x88] sm:$0xff]
  %v3146 = vld [vmem:[%s3 + $0x90] sm:$0xff]
  %v3147 = vld [vmem:[%s3 + $0x98] sm:$0xff]
  %v3148 = vld [vmem:[%s3 + $0xa0] sm:$0xff]
  %v3149 = vld [vmem:[%s3 + $0xa8] sm:$0xff]
  %v3150 = vld [vmem:[%s3 + $0xb0] sm:$0xff]
  %v3151 = vld [vmem:[%s3 + $0xb8] sm:$0xff]
  %v3152 = vld [vmem:[%s3 + $0xc0] sm:$0xff]
  %v3153 = vld [vmem:[%s3 + $0xc8] sm:$0xff]
  %v3154 = vld [vmem:[%s3 + $0xd0] sm:$0xff]
  %v3155 = vld [vmem:[%s3 + $0xd8] sm:$0xff]
  %v3156 = vld [vmem:[%s3 + $0xe0] sm:$0xff]
  %v3157 = vld [vmem:[%s3 + $0xe8] sm:$0xff]
  %v3158 = vld [vmem:[%s3 + $0xf0] sm:$0xff]
  %v3159 = vld [vmem:[%s3 + $0xf8] sm:$0xff]
  %v3192 = vunpack.c.l.b16 %v3128
  %v3193 = vunpack.c.h.b16 %v3128
  %v3194 = vunpack.c.l.b16 %v3129
  %v3195 = vunpack.c.h.b16 %v3129
  %v3196 = vunpack.c.l.b16 %v3130
  %v3197 = vunpack.c.h.b16 %v3130
  %v3198 = vunpack.c.l.b16 %v3131
  %v3199 = vunpack.c.h.b16 %v3131
  %v3200 = vunpack.c.l.b16 %v3132
  %v3201 = vunpack.c.h.b16 %v3132
  %v3202 = vunpack.c.l.b16 %v3133
  %v3203 = vunpack.c.h.b16 %v3133
  %v3204 = vunpack.c.l.b16 %v3134
  %v3205 = vunpack.c.h.b16 %v3134
  %v3206 = vunpack.c.l.b16 %v3135
  %v3207 = vunpack.c.h.b16 %v3135
  %v3208 = vunpack.c.l.b16 %v3136
  %v3209 = vunpack.c.h.b16 %v3136
  %v3210 = vunpack.c.l.b16 %v3137
  %v3211 = vunpack.c.h.b16 %v3137
  %v3212 = vunpack.c.l.b16 %v3138
  %v3213 = vunpack.c.h.b16 %v3138
  %v3214 = vunpack.c.l.b16 %v3139
  %v3215 = vunpack.c.h.b16 %v3139
  %v3216 = vunpack.c.l.b16 %v3140
  %v3217 = vunpack.c.h.b16 %v3140
  %v3218 = vunpack.c.l.b16 %v3141
  %v3219 = vunpack.c.h.b16 %v3141
  %v3220 = vunpack.c.l.b16 %v3142
  %v3221 = vunpack.c.h.b16 %v3142
  %v3222 = vunpack.c.l.b16 %v3143
  %v3223 = vunpack.c.h.b16 %v3143
  %v3224 = vunpack.c.l.b16 %v3144
  %v3225 = vunpack.c.h.b16 %v3144
  %v3226 = vunpack.c.l.b16 %v3145
  %v3227 = vunpack.c.h.b16 %v3145
  %v3228 = vunpack.c.l.b16 %v3146
  %v3229 = vunpack.c.h.b16 %v3146
  %v3230 = vunpack.c.l.b16 %v3147
  %v3231 = vunpack.c.h.b16 %v3147
  %v3232 = vunpack.c.l.b16 %v3148
  %v3233 = vunpack.c.h.b16 %v3148
  %v3234 = vunpack.c.l.b16 %v3149
  %v3235 = vunpack.c.h.b16 %v3149
  %v3236 = vunpack.c.l.b16 %v3150
  %v3237 = vunpack.c.h.b16 %v3150
  %v3238 = vunpack.c.l.b16 %v3151
  %v3239 = vunpack.c.h.b16 %v3151
  %v3240 = vunpack.c.l.b16 %v3152
  %v3241 = vunpack.c.h.b16 %v3152
  %v3242 = vunpack.c.l.b16 %v3153
  %v3243 = vunpack.c.h.b16 %v3153
  %v3244 = vunpack.c.l.b16 %v3154
  %v3245 = vunpack.c.h.b16 %v3154
  %v3246 = vunpack.c.l.b16 %v3155
  %v3247 = vunpack.c.h.b16 %v3155
  %v3248 = vunpack.c.l.b16 %v3156
  %v3249 = vunpack.c.h.b16 %v3156
  %v3250 = vunpack.c.l.b16 %v3157
  %v3251 = vunpack.c.h.b16 %v3157
  %v3252 = vunpack.c.l.b16 %v3158
  %v3253 = vunpack.c.h.b16 %v3158
  %v3254 = vunpack.c.l.b16 %v3159
  %v3255 = vunpack.c.h.b16 %v3159
  %v3256 = vpack.c.b16 %v3196, %v3192
  %v3257 = vpack.c.b16 %v3197, %v3193
  %v3258 = vpack.c.b16 %v3198, %v3194
  %v3259 = vpack.c.b16 %v3199, %v3195
  %v3260 = vpack.c.b16 %v3204, %v3200
  %v3261 = vpack.c.b16 %v3205, %v3201
  %v3262 = vpack.c.b16 %v3206, %v3202
  %v3263 = vpack.c.b16 %v3207, %v3203
  %v3264 = vpack.c.b16 %v3212, %v3208
  %v3265 = vpack.c.b16 %v3213, %v3209
  %v3266 = vpack.c.b16 %v3214, %v3210
  %v3267 = vpack.c.b16 %v3215, %v3211
  %v3268 = vpack.c.b16 %v3220, %v3216
  %v3269 = vpack.c.b16 %v3221, %v3217
  %v3270 = vpack.c.b16 %v3222, %v3218
  %v3271 = vpack.c.b16 %v3223, %v3219
  %v3272 = vpack.c.b16 %v3228, %v3224
  %v3273 = vpack.c.b16 %v3229, %v3225
  %v3274 = vpack.c.b16 %v3230, %v3226
  %v3275 = vpack.c.b16 %v3231, %v3227
  %v3276 = vpack.c.b16 %v3236, %v3232
  %v3277 = vpack.c.b16 %v3237, %v3233
  %v3278 = vpack.c.b16 %v3238, %v3234
  %v3279 = vpack.c.b16 %v3239, %v3235
  %v3280 = vpack.c.b16 %v3244, %v3240
  %v3281 = vpack.c.b16 %v3245, %v3241
  %v3282 = vpack.c.b16 %v3246, %v3242
  %v3283 = vpack.c.b16 %v3247, %v3243
  %v3284 = vpack.c.b16 %v3252, %v3248
  %v3285 = vpack.c.b16 %v3253, %v3249
  %v3286 = vpack.c.b16 %v3254, %v3250
  %v3287 = vpack.c.b16 %v3255, %v3251
  %3320 = vmatprep.subr.bf16.mxu0 %v3257
  %3321 = vmatpush1.bf16.msra.mxu0 %v3256
  %3322 = vmatprep.subr.bf16.mxu0 %v3261
  %3323 = vmatpush1.bf16.msra.mxu0 %v3260
  %3324 = vmatprep.subr.bf16.mxu0 %v3265
  %3325 = vmatpush1.bf16.msra.mxu0 %v3264
  %3326 = vmatprep.subr.bf16.mxu0 %v3269
  %3327 = vmatpush1.bf16.msra.mxu0 %v3268
  %3328 = vmatprep.subr.bf16.mxu0 %v3273
  %3329 = vmatpush1.bf16.msra.mxu0 %v3272
  %3330 = vmatprep.subr.bf16.mxu0 %v3277
  %3331 = vmatpush1.bf16.msra.mxu0 %v3276
  %3332 = vmatprep.subr.bf16.mxu0 %v3281
  %3333 = vmatpush1.bf16.msra.mxu0 %v3280
  %3334 = vmatprep.subr.bf16.mxu0 %v3285
  %3335 = vmatpush1.bf16.msra.mxu0 %v3284
  %3336 = vmatprep.subr.bf16.mxu0 0
  %3337 = vmatpush1.bf16.msra.mxu0 0
  %3338 = vmatprep.subr.bf16.mxu0 0
  %3339 = vmatpush1.bf16.msra.mxu0 0
  %3340 = vmatprep.subr.bf16.mxu0 0
  %3341 = vmatpush1.bf16.msra.mxu0 0
  %3342 = vmatprep.subr.bf16.mxu0 0
  %3343 = vmatpush1.bf16.msra.mxu0 0
  %3344 = vmatprep.subr.bf16.mxu0 0
  %3345 = vmatpush1.bf16.msra.mxu0 0
  %3346 = vmatprep.subr.bf16.mxu0 0
  %3347 = vmatpush1.bf16.msra.mxu0 0
  %3348 = vmatprep.subr.bf16.mxu0 0
  %3349 = vmatpush1.bf16.msra.mxu0 0
  %3350 = vmatprep.subr.bf16.mxu0 0
  %3351 = vmatpush1.bf16.msra.mxu0 0
  %3352 = vmatprep.mubr.bf16.mxu0 0
  %3353 = vmatmul.mubr.bf16.gmra.mrb[0].mxu0 %v3127
  %v3354 = vpop.f32.mrb[0].mxu0
  %v3355 = vadd.f32 0.0, %v3354
  %v3356 = vpop.f32.mrb[0].mxu0
  %v3357 = vadd.f32 0.0, %v3356
  %v3358 = vpop.f32.mrb[0].mxu0
  %v3359 = vpop.f32.mrb[0].mxu0
  %3360 = vdwg.mxu0
  %3361 = vmatprep.subr.bf16.mxu0 %v3259
  %3362 = vmatpush1.bf16.msra.mxu0 %v3258
  %3363 = vmatprep.subr.bf16.mxu0 %v3263
  %3364 = vmatpush1.bf16.msra.mxu0 %v3262
  %3365 = vmatprep.subr.bf16.mxu0 %v3267
  %3366 = vmatpush1.bf16.msra.mxu0 %v3266
  %3367 = vmatprep.subr.bf16.mxu0 %v3271
  %3368 = vmatpush1.bf16.msra.mxu0 %v3270
  %3369 = vmatprep.subr.bf16.mxu0 %v3275
  %3370 = vmatpush1.bf16.msra.mxu0 %v3274
  %3371 = vmatprep.subr.bf16.mxu0 %v3279
  %3372 = vmatpush1.bf16.msra.mxu0 %v3278
  %3373 = vmatprep.subr.bf16.mxu0 %v3283
  %3374 = vmatpush1.bf16.msra.mxu0 %v3282
  %3375 = vmatprep.subr.bf16.mxu0 %v3287
  %3376 = vmatpush1.bf16.msra.mxu0 %v3286
  %3377 = vmatprep.subr.bf16.mxu0 0
  %3378 = vmatpush1.bf16.msra.mxu0 0
  %3379 = vmatprep.subr.bf16.mxu0 0
  %3380 = vmatpush1.bf16.msra.mxu0 0
  %3381 = vmatprep.subr.bf16.mxu0 0
  %3382 = vmatpush1.bf16.msra.mxu0 0
  %3383 = vmatprep.subr.bf16.mxu0 0
  %3384 = vmatpush1.bf16.msra.mxu0 0
  %3385 = vmatprep.subr.bf16.mxu0 0
  %3386 = vmatpush1.bf16.msra.mxu0 0
  %3387 = vmatprep.subr.bf16.mxu0 0
  %3388 = vmatpush1.bf16.msra.mxu0 0
  %3389 = vmatprep.subr.bf16.mxu0 0
  %3390 = vmatpush1.bf16.msra.mxu0 0
  %3391 = vmatprep.subr.bf16.mxu0 0
  %3392 = vmatpush1.bf16.msra.mxu0 0
  %3393 = vmatprep.mubr.bf16.mxu0 0
  %3394 = vmatmul.mubr.bf16.gmra.mrb[0].mxu0 %v3127
  %v3395 = vpop.f32.mrb[0].mxu0
  %v3396 = vadd.f32 0.0, %v3395
  %v3397 = vpop.f32.mrb[0].mxu0
  %v3398 = vadd.f32 0.0, %v3397
  %v3399 = vpop.f32.mrb[0].mxu0
  %v3400 = vpop.f32.mrb[0].mxu0
  %3401 = vdwg.mxu0
  %v3434 = vunpack.c.l.b16 %v3094
  %v3435 = vunpack.c.h.b16 %v3094
  %v3436 = vunpack.c.l.b16 %v3095
  %v3437 = vunpack.c.h.b16 %v3095
  %v3438 = vunpack.c.l.b16 %v3096
  %v3439 = vunpack.c.h.b16 %v3096
  %v3440 = vunpack.c.l.b16 %v3097
  %v3441 = vunpack.c.h.b16 %v3097
  %v3442 = vunpack.c.l.b16 %v3098
  %v3443 = vunpack.c.h.b16 %v3098
  %v3444 = vunpack.c.l.b16 %v3099
  %v3445 = vunpack.c.h.b16 %v3099
  %v3446 = vunpack.c.l.b16 %v3100
  %v3447 = vunpack.c.h.b16 %v3100
  %v3448 = vunpack.c.l.b16 %v3101
  %v3449 = vunpack.c.h.b16 %v3101
  %v3450 = vunpack.c.l.b16 %v3102
  %v3451 = vunpack.c.h.b16 %v3102
  %v3452 = vunpack.c.l.b16 %v3103
  %v3453 = vunpack.c.h.b16 %v3103
  %v3454 = vunpack.c.l.b16 %v3104
  %v3455 = vunpack.c.h.b16 %v3104
  %v3456 = vunpack.c.l.b16 %v3105
  %v3457 = vunpack.c.h.b16 %v3105
  %v3458 = vunpack.c.l.b16 %v3106
  %v3459 = vunpack.c.h.b16 %v3106
  %v3460 = vunpack.c.l.b16 %v3107
  %v3461 = vunpack.c.h.b16 %v3107
  %v3462 = vunpack.c.l.b16 %v3108
  %v3463 = vunpack.c.h.b16 %v3108
  %v3464 = vunpack.c.l.b16 %v3109
  %v3465 = vunpack.c.h.b16 %v3109
  %v3466 = vunpack.c.l.b16 %v3110
  %v3467 = vunpack.c.h.b16 %v3110
  %v3468 = vunpack.c.l.b16 %v3111
  %v3469 = vunpack.c.h.b16 %v3111
  %v3470 = vunpack.c.l.b16 %v3112
  %v3471 = vunpack.c.h.b16 %v3112
  %v3472 = vunpack.c.l.b16 %v3113
  %v3473 = vunpack.c.h.b16 %v3113
  %v3474 = vunpack.c.l.b16 %v3114
  %v3475 = vunpack.c.h.b16 %v3114
  %v3476 = vunpack.c.l.b16 %v3115
  %v3477 = vunpack.c.h.b16 %v3115
  %v3478 = vunpack.c.l.b16 %v3116
  %v3479 = vunpack.c.h.b16 %v3116
  %v3480 = vunpack.c.l.b16 %v3117
  %v3481 = vunpack.c.h.b16 %v3117
  %v3482 = vunpack.c.l.b16 %v3118
  %v3483 = vunpack.c.h.b16 %v3118
  %v3484 = vunpack.c.l.b16 %v3119
  %v3485 = vunpack.c.h.b16 %v3119
  %v3486 = vunpack.c.l.b16 %v3120
  %v3487 = vunpack.c.h.b16 %v3120
  %v3488 = vunpack.c.l.b16 %v3121
  %v3489 = vunpack.c.h.b16 %v3121
  %v3490 = vunpack.c.l.b16 %v3122
  %v3491 = vunpack.c.h.b16 %v3122
  %v3492 = vunpack.c.l.b16 %v3123
  %v3493 = vunpack.c.h.b16 %v3123
  %v3494 = vunpack.c.l.b16 %v3124
  %v3495 = vunpack.c.h.b16 %v3124
  %v3496 = vunpack.c.l.b16 %v3125
  %v3497 = vunpack.c.h.b16 %v3125
  %v3498 = vpack.c.b16 %v3438, %v3434
  %v3499 = vpack.c.b16 %v3439, %v3435
  %v3500 = vpack.c.b16 %v3440, %v3436
  %v3501 = vpack.c.b16 %v3441, %v3437
  %v3502 = vpack.c.b16 %v3446, %v3442
  %v3503 = vpack.c.b16 %v3447, %v3443
  %v3504 = vpack.c.b16 %v3448, %v3444
  %v3505 = vpack.c.b16 %v3449, %v3445
  %v3506 = vpack.c.b16 %v3454, %v3450
  %v3507 = vpack.c.b16 %v3455, %v3451
  %v3508 = vpack.c.b16 %v3456, %v3452
  %v3509 = vpack.c.b16 %v3457, %v3453
  %v3510 = vpack.c.b16 %v3462, %v3458
  %v3511 = vpack.c.b16 %v3463, %v3459
  %v3512 = vpack.c.b16 %v3464, %v3460
  %v3513 = vpack.c.b16 %v3465, %v3461
  %v3514 = vpack.c.b16 %v3470, %v3466
  %v3515 = vpack.c.b16 %v3471, %v3467
  %v3516 = vpack.c.b16 %v3472, %v3468
  %v3517 = vpack.c.b16 %v3473, %v3469
  %v3518 = vpack.c.b16 %v3478, %v3474
  %v3519 = vpack.c.b16 %v3479, %v3475
  %v3520 = vpack.c.b16 %v3480, %v3476
  %v3521 = vpack.c.b16 %v3481, %v3477
  %v3522 = vpack.c.b16 %v3486, %v3482
  %v3523 = vpack.c.b16 %v3487, %v3483
  %v3524 = vpack.c.b16 %v3488, %v3484
  %v3525 = vpack.c.b16 %v3489, %v3485
  %v3526 = vpack.c.b16 %v3494, %v3490
  %v3527 = vpack.c.b16 %v3495, %v3491
  %v3528 = vpack.c.b16 %v3496, %v3492
  %v3529 = vpack.c.b16 %v3497, %v3493
  %3562 = vmatprep.subr.bf16.mxu0 %v3499
  %3563 = vmatpush1.bf16.msra.mxu0 %v3498
  %3564 = vmatprep.subr.bf16.mxu0 %v3503
  %3565 = vmatpush1.bf16.msra.mxu0 %v3502
  %3566 = vmatprep.subr.bf16.mxu0 %v3507
  %3567 = vmatpush1.bf16.msra.mxu0 %v3506
  %3568 = vmatprep.subr.bf16.mxu0 %v3511
  %3569 = vmatpush1.bf16.msra.mxu0 %v3510
  %3570 = vmatprep.subr.bf16.mxu0 %v3515
  %3571 = vmatpush1.bf16.msra.mxu0 %v3514
  %3572 = vmatprep.subr.bf16.mxu0 %v3519
  %3573 = vmatpush1.bf16.msra.mxu0 %v3518
  %3574 = vmatprep.subr.bf16.mxu0 %v3523
  %3575 = vmatpush1.bf16.msra.mxu0 %v3522
  %3576 = vmatprep.subr.bf16.mxu0 %v3527
  %3577 = vmatpush1.bf16.msra.mxu0 %v3526
  %3578 = vmatprep.subr.bf16.mxu0 0
  %3579 = vmatpush1.bf16.msra.mxu0 0
  %3580 = vmatprep.subr.bf16.mxu0 0
  %3581 = vmatpush1.bf16.msra.mxu0 0
  %3582 = vmatprep.subr.bf16.mxu0 0
  %3583 = vmatpush1.bf16.msra.mxu0 0
  %3584 = vmatprep.subr.bf16.mxu0 0
  %3585 = vmatpush1.bf16.msra.mxu0 0
  %3586 = vmatprep.subr.bf16.mxu0 0
  %3587 = vmatpush1.bf16.msra.mxu0 0
  %3588 = vmatprep.subr.bf16.mxu0 0
  %3589 = vmatpush1.bf16.msra.mxu0 0
  %3590 = vmatprep.subr.bf16.mxu0 0
  %3591 = vmatpush1.bf16.msra.mxu0 0
  %3592 = vmatprep.subr.bf16.mxu0 0
  %3593 = vmatpush1.bf16.msra.mxu0 0
  %3594 = vmatprep.mubr.bf16.mxu0 0
  %3595 = vmatmul.mubr.bf16.gmra.mrb[0].mxu0 %v3093
  %v3596 = vpop.f32.mrb[0].mxu0
  %v3597 = vadd.f32 %v3355, %v3596
  %v3598 = vpop.f32.mrb[0].mxu0
  %v3599 = vadd.f32 %v3357, %v3598
  %v3600 = vpop.f32.mrb[0].mxu0
  %v3601 = vpop.f32.mrb[0].mxu0
  %3602 = vdwg.mxu0
  %3603 = vmatprep.subr.bf16.mxu0 %v3501
  %3604 = vmatpush1.bf16.msra.mxu0 %v3500
  %3605 = vmatprep.subr.bf16.mxu0 %v3505
  %3606 = vmatpush1.bf16.msra.mxu0 %v3504
  %3607 = vmatprep.subr.bf16.mxu0 %v3509
  %3608 = vmatpush1.bf16.msra.mxu0 %v3508
  %3609 = vmatprep.subr.bf16.mxu0 %v3513
  %3610 = vmatpush1.bf16.msra.mxu0 %v3512
  %3611 = vmatprep.subr.bf16.mxu0 %v3517
  %3612 = vmatpush1.bf16.msra.mxu0 %v3516
  %3613 = vmatprep.subr.bf16.mxu0 %v3521
  %3614 = vmatpush1.bf16.msra.mxu0 %v3520
  %3615 = vmatprep.subr.bf16.mxu0 %v3525
  %3616 = vmatpush1.bf16.msra.mxu0 %v3524
  %3617 = vmatprep.subr.bf16.mxu0 %v3529
  %3618 = vmatpush1.bf16.msra.mxu0 %v3528
  %3619 = vmatprep.subr.bf16.mxu0 0
  %3620 = vmatpush1.bf16.msra.mxu0 0
  %3621 = vmatprep.subr.bf16.mxu0 0
  %3622 = vmatpush1.bf16.msra.mxu0 0
  %3623 = vmatprep.subr.bf16.mxu0 0
  %3624 = vmatpush1.bf16.msra.mxu0 0
  %3625 = vmatprep.subr.bf16.mxu0 0
  %3626 = vmatpush1.bf16.msra.mxu0 0
  %3627 = vmatprep.subr.bf16.mxu0 0
  %3628 = vmatpush1.bf16.msra.mxu0 0
  %3629 = vmatprep.subr.bf16.mxu0 0
  %3630 = vmatpush1.bf16.msra.mxu0 0
  %3631 = vmatprep.subr.bf16.mxu0 0
  %3632 = vmatpush1.bf16.msra.mxu0 0
  %3633 = vmatprep.subr.bf16.mxu0 0
  %3634 = vmatpush1.bf16.msra.mxu0 0
  %3635 = vmatprep.mubr.bf16.mxu0 0
  %3636 = vmatmul.mubr.bf16.gmra.mrb[0].mxu0 %v3093
  %v3637 = vpop.f32.mrb[0].mxu0
  %v3638 = vadd.f32 %v3396, %v3637
  %v3639 = vpop.f32.mrb[0].mxu0
  %v3640 = vadd.f32 %v3398, %v3639
  %v3641 = vpop.f32.mrb[0].mxu0
  %v3642 = vpop.f32.mrb[0].mxu0
  %3643 = vdwg.mxu0
  %v3644 = vld [vmem:[%s4] sm:$0xf]
  %v3646 = vlaneseq
  %v3647 = vshrl.u32 %v3646, 7
  %v3648 = vsub.s32 0, %v3647
  %v3649 = vrot.slane %v3644, %v3648
  %v3650 = vlaneseq
  %v3651 = vshrl.u32 %v3650, 7
  %v3652 = vsub.s32 1, %v3651
  %v3653 = vrot.slane %v3644, %v3652
  %v3654 = vlaneseq
  %v3655 = vshrl.u32 %v3654, 7
  %v3656 = vsub.s32 2, %v3655
  %v3657 = vrot.slane %v3644, %v3656
  %v3658 = vlaneseq
  %v3659 = vshrl.u32 %v3658, 7
  %v3660 = vsub.s32 3, %v3659
  %v3661 = vrot.slane %v3644, %v3660
  %v3666 = vadd.f32 %v3597, %v3649
  %v3667 = vadd.f32 %v3599, %v3653
  %v3668 = vadd.f32 %v3638, %v3657
  %v3669 = vadd.f32 %v3640, %v3661
  %v3670 = vld [vmem:[#allocation5] sm:$0xff]
  %v3671 = vxor.u32 %v3666, 2147483648
  %v3672 = vmul.f32 %v3671, 1.442695
  %v3673 = vpow.pop %v3672
  %v3674 = vadd.f32 %v3673, 1.0
  %v3675 = vrcp.pop %v3674
  %v3676 = vmul.f32 1.0, %v3675
  %v3677 = vxor.u32 %v3667, 2147483648
  %v3678 = vmul.f32 %v3677, 1.442695
  %v3679 = vpow.pop %v3678
  %v3680 = vadd.f32 %v3679, 1.0
  %v3681 = vrcp.pop %v3680
  %v3682 = vmul.f32 1.0, %v3681
  %v3683 = vtanh.pop %v3668
  %v3684 = vxor.u32 %v3669, 2147483648
  %v3685 = vmul.f32 %v3684, 1.442695
  %v3686 = vpow.pop %v3685
  %v3687 = vadd.f32 %v3686, 1.0
  %v3688 = vrcp.pop %v3687
  %v3689 = vmul.f32 1.0, %v3688
  %v3690 = vmul.f32 %v3682, %v3670
  %v3691 = vmul.f32 %v3676, %v3683
  %v3692 = vadd.f32 %v3690, %v3691
  %v3693 = vtanh.pop %v3692
  %v3694 = vmul.f32 %v3689, %v3693
  %3695 = vst [vmem:[#allocation4] sm:$0xff] %v3694
  %3696 = vst [vmem:[#allocation5] sm:$0xff] %v3692
  %s3697 = scalar_lea.vmem %s5, 24
  %3698 = vst [vmem:[%s3697] sm:$0xff] %v3694
  %s3699 = scalar_lea.vmem %s0, 128
  %v3700 = vld [vmem:[%s3699] sm:$0xff]
  %v3701 = vld [vmem:[%s3699 + $0x8] sm:$0xff]
  %v3702 = vld [vmem:[%s3699 + $0x10] sm:$0xff]
  %v3703 = vld [vmem:[%s3699 + $0x18] sm:$0xff]
  %v3704 = vld [vmem:[#allocation2] sm:$0xff]
  %v3705 = vpack.c.bf16 %v3704, %v3704
  %v3706 = vld [vmem:[%s1] sm:$0xff]
  %v3707 = vld [vmem:[%s1 + $0x8] sm:$0xff]
  %v3708 = vld [vmem:[%s1 + $0x10] sm:$0xff]
  %v3709 = vld [vmem:[%s1 + $0x18] sm:$0xff]
  %v3710 = vld [vmem:[%s1 + $0x20] sm:$0xff]
  %v3711 = vld [vmem:[%s1 + $0x28] sm:$0xff]
  %v3712 = vld [vmem:[%s1 + $0x30] sm:$0xff]
  %v3713 = vld [vmem:[%s1 + $0x38] sm:$0xff]
  %v3714 = vld [vmem:[%s1 + $0x40] sm:$0xff]
  %v3715 = vld [vmem:[%s1 + $0x48] sm:$0xff]
  %v3716 = vld [vmem:[%s1 + $0x50] sm:$0xff]
  %v3717 = vld [vmem:[%s1 + $0x58] sm:$0xff]
  %v3718 = vld [vmem:[%s1 + $0x60] sm:$0xff]
  %v3719 = vld [vmem:[%s1 + $0x68] sm:$0xff]
  %v3720 = vld [vmem:[%s1 + $0x70] sm:$0xff]
  %v3721 = vld [vmem:[%s1 + $0x78] sm:$0xff]
  %v3722 = vld [vmem:[%s1 + $0x80] sm:$0xff]
  %v3723 = vld [vmem:[%s1 + $0x88] sm:$0xff]
  %v3724 = vld [vmem:[%s1 + $0x90] sm:$0xff]
  %v3725 = vld [vmem:[%s1 + $0x98] sm:$0xff]
  %v3726 = vld [vmem:[%s1 + $0xa0] sm:$0xff]
  %v3727 = vld [vmem:[%s1 + $0xa8] sm:$0xff]
  %v3728 = vld [vmem:[%s1 + $0xb0] sm:$0xff]
  %v3729 = vld [vmem:[%s1 + $0xb8] sm:$0xff]
  %v3730 = vld [vmem:[%s1 + $0xc0] sm:$0xff]
  %v3731 = vld [vmem:[%s1 + $0xc8] sm:$0xff]
  %v3732 = vld [vmem:[%s1 + $0xd0] sm:$0xff]
  %v3733 = vld [vmem:[%s1 + $0xd8] sm:$0xff]
  %v3734 = vld [vmem:[%s1 + $0xe0] sm:$0xff]
  %v3735 = vld [vmem:[%s1 + $0xe8] sm:$0xff]
  %v3736 = vld [vmem:[%s1 + $0xf0] sm:$0xff]
  %v3737 = vld [vmem:[%s1 + $0xf8] sm:$0xff]
  %v3770 = vunpack.c.l.b16 %v3706
  %v3771 = vunpack.c.h.b16 %v3706
  %v3772 = vunpack.c.l.b16 %v3707
  %v3773 = vunpack.c.h.b16 %v3707
  %v3774 = vunpack.c.l.b16 %v3708
  %v3775 = vunpack.c.h.b16 %v3708
  %v3776 = vunpack.c.l.b16 %v3709
  %v3777 = vunpack.c.h.b16 %v3709
  %v3778 = vunpack.c.l.b16 %v3710
  %v3779 = vunpack.c.h.b16 %v3710
  %v3780 = vunpack.c.l.b16 %v3711
  %v3781 = vunpack.c.h.b16 %v3711
  %v3782 = vunpack.c.l.b16 %v3712
  %v3783 = vunpack.c.h.b16 %v3712
  %v3784 = vunpack.c.l.b16 %v3713
  %v3785 = vunpack.c.h.b16 %v3713
  %v3786 = vunpack.c.l.b16 %v3714
  %v3787 = vunpack.c.h.b16 %v3714
  %v3788 = vunpack.c.l.b16 %v3715
  %v3789 = vunpack.c.h.b16 %v3715
  %v3790 = vunpack.c.l.b16 %v3716
  %v3791 = vunpack.c.h.b16 %v3716
  %v3792 = vunpack.c.l.b16 %v3717
  %v3793 = vunpack.c.h.b16 %v3717
  %v3794 = vunpack.c.l.b16 %v3718
  %v3795 = vunpack.c.h.b16 %v3718
  %v3796 = vunpack.c.l.b16 %v3719
  %v3797 = vunpack.c.h.b16 %v3719
  %v3798 = vunpack.c.l.b16 %v3720
  %v3799 = vunpack.c.h.b16 %v3720
  %v3800 = vunpack.c.l.b16 %v3721
  %v3801 = vunpack.c.h.b16 %v3721
  %v3802 = vunpack.c.l.b16 %v3722
  %v3803 = vunpack.c.h.b16 %v3722
  %v3804 = vunpack.c.l.b16 %v3723
  %v3805 = vunpack.c.h.b16 %v3723
  %v3806 = vunpack.c.l.b16 %v3724
  %v3807 = vunpack.c.h.b16 %v3724
  %v3808 = vunpack.c.l.b16 %v3725
  %v3809 = vunpack.c.h.b16 %v3725
  %v3810 = vunpack.c.l.b16 %v3726
  %v3811 = vunpack.c.h.b16 %v3726
  %v3812 = vunpack.c.l.b16 %v3727
  %v3813 = vunpack.c.h.b16 %v3727
  %v3814 = vunpack.c.l.b16 %v3728
  %v3815 = vunpack.c.h.b16 %v3728
  %v3816 = vunpack.c.l.b16 %v3729
  %v3817 = vunpack.c.h.b16 %v3729
  %v3818 = vunpack.c.l.b16 %v3730
  %v3819 = vunpack.c.h.b16 %v3730
  %v3820 = vunpack.c.l.b16 %v3731
  %v3821 = vunpack.c.h.b16 %v3731
  %v3822 = vunpack.c.l.b16 %v3732
  %v3823 = vunpack.c.h.b16 %v3732
  %v3824 = vunpack.c.l.b16 %v3733
  %v3825 = vunpack.c.h.b16 %v3733
  %v3826 = vunpack.c.l.b16 %v3734
  %v3827 = vunpack.c.h.b16 %v3734
  %v3828 = vunpack.c.l.b16 %v3735
  %v3829 = vunpack.c.h.b16 %v3735
  %v3830 = vunpack.c.l.b16 %v3736
  %v3831 = vunpack.c.h.b16 %v3736
  %v3832 = vunpack.c.l.b16 %v3737
  %v3833 = vunpack.c.h.b16 %v3737
  %v3834 = vpack.c.b16 %v3774, %v3770
  %v3835 = vpack.c.b16 %v3775, %v3771
  %v3836 = vpack.c.b16 %v3776, %v3772
  %v3837 = vpack.c.b16 %v3777, %v3773
  %v3838 = vpack.c.b16 %v3782, %v3778
  %v3839 = vpack.c.b16 %v3783, %v3779
  %v3840 = vpack.c.b16 %v3784, %v3780
  %v3841 = vpack.c.b16 %v3785, %v3781
  %v3842 = vpack.c.b16 %v3790, %v3786
  %v3843 = vpack.c.b16 %v3791, %v3787
  %v3844 = vpack.c.b16 %v3792, %v3788
  %v3845 = vpack.c.b16 %v3793, %v3789
  %v3846 = vpack.c.b16 %v3798, %v3794
  %v3847 = vpack.c.b16 %v3799, %v3795
  %v3848 = vpack.c.b16 %v3800, %v3796
  %v3849 = vpack.c.b16 %v3801, %v3797
  %v3850 = vpack.c.b16 %v3806, %v3802
  %v3851 = vpack.c.b16 %v3807, %v3803
  %v3852 = vpack.c.b16 %v3808, %v3804
  %v3853 = vpack.c.b16 %v3809, %v3805
  %v3854 = vpack.c.b16 %v3814, %v3810
  %v3855 = vpack.c.b16 %v3815, %v3811
  %v3856 = vpack.c.b16 %v3816, %v3812
  %v3857 = vpack.c.b16 %v3817, %v3813
  %v3858 = vpack.c.b16 %v3822, %v3818
  %v3859 = vpack.c.b16 %v3823, %v3819
  %v3860 = vpack.c.b16 %v3824, %v3820
  %v3861 = vpack.c.b16 %v3825, %v3821
  %v3862 = vpack.c.b16 %v3830, %v3826
  %v3863 = vpack.c.b16 %v3831, %v3827
  %v3864 = vpack.c.b16 %v3832, %v3828
  %v3865 = vpack.c.b16 %v3833, %v3829
  %3898 = vmatprep.subr.bf16.mxu0 %v3835
  %3899 = vmatpush1.bf16.msra.mxu0 %v3834
  %3900 = vmatprep.subr.bf16.mxu0 %v3839
  %3901 = vmatpush1.bf16.msra.mxu0 %v3838
  %3902 = vmatprep.subr.bf16.mxu0 %v3843
  %3903 = vmatpush1.bf16.msra.mxu0 %v3842
  %3904 = vmatprep.subr.bf16.mxu0 %v3847
  %3905 = vmatpush1.bf16.msra.mxu0 %v3846
  %3906 = vmatprep.subr.bf16.mxu0 %v3851
  %3907 = vmatpush1.bf16.msra.mxu0 %v3850
  %3908 = vmatprep.subr.bf16.mxu0 %v3855
  %3909 = vmatpush1.bf16.msra.mxu0 %v3854
  %3910 = vmatprep.subr.bf16.mxu0 %v3859
  %3911 = vmatpush1.bf16.msra.mxu0 %v3858
  %3912 = vmatprep.subr.bf16.mxu0 %v3863
  %3913 = vmatpush1.bf16.msra.mxu0 %v3862
  %3914 = vmatprep.subr.bf16.mxu0 0
  %3915 = vmatpush1.bf16.msra.mxu0 0
  %3916 = vmatprep.subr.bf16.mxu0 0
  %3917 = vmatpush1.bf16.msra.mxu0 0
  %3918 = vmatprep.subr.bf16.mxu0 0
  %3919 = vmatpush1.bf16.msra.mxu0 0
  %3920 = vmatprep.subr.bf16.mxu0 0
  %3921 = vmatpush1.bf16.msra.mxu0 0
  %3922 = vmatprep.subr.bf16.mxu0 0
  %3923 = vmatpush1.bf16.msra.mxu0 0
  %3924 = vmatprep.subr.bf16.mxu0 0
  %3925 = vmatpush1.bf16.msra.mxu0 0
  %3926 = vmatprep.subr.bf16.mxu0 0
  %3927 = vmatpush1.bf16.msra.mxu0 0
  %3928 = vmatprep.subr.bf16.mxu0 0
  %3929 = vmatpush1.bf16.msra.mxu0 0
  %3930 = vmatprep.mubr.bf16.mxu0 0
  %3931 = vmatmul.mubr.bf16.gmra.mrb[0].mxu0 %v3705
  %v3932 = vpop.f32.mrb[0].mxu0
  %v3933 = vadd.f32 0.0, %v3932
  %v3934 = vpop.f32.mrb[0].mxu0
  %v3935 = vadd.f32 0.0, %v3934
  %v3936 = vpop.f32.mrb[0].mxu0
  %v3937 = vpop.f32.mrb[0].mxu0
  %3938 = vdwg.mxu0
  %3939 = vmatprep.subr.bf16.mxu0 %v3837
  %3940 = vmatpush1.bf16.msra.mxu0 %v3836
  %3941 = vmatprep.subr.bf16.mxu0 %v3841
  %3942 = vmatpush1.bf16.msra.mxu0 %v3840
  %3943 = vmatprep.subr.bf16.mxu0 %v3845
  %3944 = vmatpush1.bf16.msra.mxu0 %v3844
  %3945 = vmatprep.subr.bf16.mxu0 %v3849
  %3946 = vmatpush1.bf16.msra.mxu0 %v3848
  %3947 = vmatprep.subr.bf16.mxu0 %v3853
  %3948 = vmatpush1.bf16.msra.mxu0 %v3852
  %3949 = vmatprep.subr.bf16.mxu0 %v3857
  %3950 = vmatpush1.bf16.msra.mxu0 %v3856
  %3951 = vmatprep.subr.bf16.mxu0 %v3861
  %3952 = vmatpush1.bf16.msra.mxu0 %v3860
  %3953 = vmatprep.subr.bf16.mxu0 %v3865
  %3954 = vmatpush1.bf16.msra.mxu0 %v3864
  %3955 = vmatprep.subr.bf16.mxu0 0
  %3956 = vmatpush1.bf16.msra.mxu0 0
  %3957 = vmatprep.subr.bf16.mxu0 0
  %3958 = vmatpush1.bf16.msra.mxu0 0
  %3959 = vmatprep.subr.bf16.mxu0 0
  %3960 = vmatpush1.bf16.msra.mxu0 0
  %3961 = vmatprep.subr.bf16.mxu0 0
  %3962 = vmatpush1.bf16.msra.mxu0 0
  %3963 = vmatprep.subr.bf16.mxu0 0
  %3964 = vmatpush1.bf16.msra.mxu0 0
  %3965 = vmatprep.subr.bf16.mxu0 0
  %3966 = vmatpush1.bf16.msra.mxu0 0
  %3967 = vmatprep.subr.bf16.mxu0 0
  %3968 = vmatpush1.bf16.msra.mxu0 0
  %3969 = vmatprep.subr.bf16.mxu0 0
  %3970 = vmatpush1.bf16.msra.mxu0 0
  %3971 = vmatprep.mubr.bf16.mxu0 0
  %3972 = vmatmul.mubr.bf16.gmra.mrb[0].mxu0 %v3705
  %v3973 = vpop.f32.mrb[0].mxu0
  %v3974 = vadd.f32 0.0, %v3973
  %v3975 = vpop.f32.mrb[0].mxu0
  %v3976 = vadd.f32 0.0, %v3975
  %v3977 = vpop.f32.mrb[0].mxu0
  %v3978 = vpop.f32.mrb[0].mxu0
  %3979 = vdwg.mxu0
  %v3980 = vadd.f32 %v3700, %v3933
  %v3981 = vadd.f32 %v3701, %v3935
  %v3982 = vadd.f32 %v3702, %v3974
  %v3983 = vadd.f32 %v3703, %v3976
  %v3984 = vld [vmem:[#allocation3] sm:$0xff]
  %v3985 = vxor.u32 %v3980, 2147483648
  %v3986 = vmul.f32 %v3985, 1.442695
  %v3987 = vpow.pop %v3986
  %v3988 = vadd.f32 %v3987, 1.0
  %v3989 = vrcp.pop %v3988
  %v3990 = vmul.f32 1.0, %v3989
  %v3991 = vxor.u32 %v3981, 2147483648
  %v3992 = vmul.f32 %v3991, 1.442695
  %v3993 = vpow.pop %v3992
  %v3994 = vadd.f32 %v3993, 1.0
  %v3995 = vrcp.pop %v3994
  %v3996 = vmul.f32 1.0, %v3995
  %v3997 = vtanh.pop %v3982
  %v3998 = vxor.u32 %v3983, 2147483648
  %v3999 = vmul.f32 %v3998, 1.442695
  %v4000 = vpow.pop %v3999
  %v4001 = vadd.f32 %v4000, 1.0
  %v4002 = vrcp.pop %v4001
  %v4003 = vmul.f32 1.0, %v4002
  %v4004 = vmul.f32 %v3996, %v3984
  %v4005 = vmul.f32 %v3990, %v3997
  %v4006 = vadd.f32 %v4004, %v4005
  %v4007 = vtanh.pop %v4006
  %v4008 = vmul.f32 %v4003, %v4007
  %4009 = vst [vmem:[#allocation2] sm:$0xff] %v4008
  %4010 = vst [vmem:[#allocation3] sm:$0xff] %v4006
  %v4011 = vpack.c.bf16 %v4008, %v4008
  %v4012 = vld [vmem:[%s2] sm:$0xff]
  %v4013 = vld [vmem:[%s2 + $0x8] sm:$0xff]
  %v4014 = vld [vmem:[%s2 + $0x10] sm:$0xff]
  %v4015 = vld [vmem:[%s2 + $0x18] sm:$0xff]
  %v4016 = vld [vmem:[%s2 + $0x20] sm:$0xff]
  %v4017 = vld [vmem:[%s2 + $0x28] sm:$0xff]
  %v4018 = vld [vmem:[%s2 + $0x30] sm:$0xff]
  %v4019 = vld [vmem:[%s2 + $0x38] sm:$0xff]
  %v4020 = vld [vmem:[%s2 + $0x40] sm:$0xff]
  %v4021 = vld [vmem:[%s2 + $0x48] sm:$0xff]
  %v4022 = vld [vmem:[%s2 + $0x50] sm:$0xff]
  %v4023 = vld [vmem:[%s2 + $0x58] sm:$0xff]
  %v4024 = vld [vmem:[%s2 + $0x60] sm:$0xff]
  %v4025 = vld [vmem:[%s2 + $0x68] sm:$0xff]
  %v4026 = vld [vmem:[%s2 + $0x70] sm:$0xff]
  %v4027 = vld [vmem:[%s2 + $0x78] sm:$0xff]
  %v4028 = vld [vmem:[%s2 + $0x80] sm:$0xff]
  %v4029 = vld [vmem:[%s2 + $0x88] sm:$0xff]
  %v4030 = vld [vmem:[%s2 + $0x90] sm:$0xff]
  %v4031 = vld [vmem:[%s2 + $0x98] sm:$0xff]
  %v4032 = vld [vmem:[%s2 + $0xa0] sm:$0xff]
  %v4033 = vld [vmem:[%s2 + $0xa8] sm:$0xff]
  %v4034 = vld [vmem:[%s2 + $0xb0] sm:$0xff]
  %v4035 = vld [vmem:[%s2 + $0xb8] sm:$0xff]
  %v4036 = vld [vmem:[%s2 + $0xc0] sm:$0xff]
  %v4037 = vld [vmem:[%s2 + $0xc8] sm:$0xff]
  %v4038 = vld [vmem:[%s2 + $0xd0] sm:$0xff]
  %v4039 = vld [vmem:[%s2 + $0xd8] sm:$0xff]
  %v4040 = vld [vmem:[%s2 + $0xe0] sm:$0xff]
  %v4041 = vld [vmem:[%s2 + $0xe8] sm:$0xff]
  %v4042 = vld [vmem:[%s2 + $0xf0] sm:$0xff]
  %v4043 = vld [vmem:[%s2 + $0xf8] sm:$0xff]
  %v4044 = vld [vmem:[#allocation4] sm:$0xff]
  %v4045 = vpack.c.bf16 %v4044, %v4044
  %v4046 = vld [vmem:[%s3] sm:$0xff]
  %v4047 = vld [vmem:[%s3 + $0x8] sm:$0xff]
  %v4048 = vld [vmem:[%s3 + $0x10] sm:$0xff]
  %v4049 = vld [vmem:[%s3 + $0x18] sm:$0xff]
  %v4050 = vld [vmem:[%s3 + $0x20] sm:$0xff]
  %v4051 = vld [vmem:[%s3 + $0x28] sm:$0xff]
  %v4052 = vld [vmem:[%s3 + $0x30] sm:$0xff]
  %v4053 = vld [vmem:[%s3 + $0x38] sm:$0xff]
  %v4054 = vld [vmem:[%s3 + $0x40] sm:$0xff]
  %v4055 = vld [vmem:[%s3 + $0x48] sm:$0xff]
  %v4056 = vld [vmem:[%s3 + $0x50] sm:$0xff]
  %v4057 = vld [vmem:[%s3 + $0x58] sm:$0xff]
  %v4058 = vld [vmem:[%s3 + $0x60] sm:$0xff]
  %v4059 = vld [vmem:[%s3 + $0x68] sm:$0xff]
  %v4060 = vld [vmem:[%s3 + $0x70] sm:$0xff]
  %v4061 = vld [vmem:[%s3 + $0x78] sm:$0xff]
  %v4062 = vld [vmem:[%s3 + $0x80] sm:$0xff]
  %v4063 = vld [vmem:[%s3 + $0x88] sm:$0xff]
  %v4064 = vld [vmem:[%s3 + $0x90] sm:$0xff]
  %v4065 = vld [vmem:[%s3 + $0x98] sm:$0xff]
  %v4066 = vld [vmem:[%s3 + $0xa0] sm:$0xff]
  %v4067 = vld [vmem:[%s3 + $0xa8] sm:$0xff]
  %v4068 = vld [vmem:[%s3 + $0xb0] sm:$0xff]
  %v4069 = vld [vmem:[%s3 + $0xb8] sm:$0xff]
  %v4070 = vld [vmem:[%s3 + $0xc0] sm:$0xff]
  %v4071 = vld [vmem:[%s3 + $0xc8] sm:$0xff]
  %v4072 = vld [vmem:[%s3 + $0xd0] sm:$0xff]
  %v4073 = vld [vmem:[%s3 + $0xd8] sm:$0xff]
  %v4074 = vld [vmem:[%s3 + $0xe0] sm:$0xff]
  %v4075 = vld [vmem:[%s3 + $0xe8] sm:$0xff]
  %v4076 = vld [vmem:[%s3 + $0xf0] sm:$0xff]
  %v4077 = vld [vmem:[%s3 + $0xf8] sm:$0xff]
  %v4110 = vunpack.c.l.b16 %v4046
  %v4111 = vunpack.c.h.b16 %v4046
  %v4112 = vunpack.c.l.b16 %v4047
  %v4113 = vunpack.c.h.b16 %v4047
  %v4114 = vunpack.c.l.b16 %v4048
  %v4115 = vunpack.c.h.b16 %v4048
  %v4116 = vunpack.c.l.b16 %v4049
  %v4117 = vunpack.c.h.b16 %v4049
  %v4118 = vunpack.c.l.b16 %v4050
  %v4119 = vunpack.c.h.b16 %v4050
  %v4120 = vunpack.c.l.b16 %v4051
  %v4121 = vunpack.c.h.b16 %v4051
  %v4122 = vunpack.c.l.b16 %v4052
  %v4123 = vunpack.c.h.b16 %v4052
  %v4124 = vunpack.c.l.b16 %v4053
  %v4125 = vunpack.c.h.b16 %v4053
  %v4126 = vunpack.c.l.b16 %v4054
  %v4127 = vunpack.c.h.b16 %v4054
  %v4128 = vunpack.c.l.b16 %v4055
  %v4129 = vunpack.c.h.b16 %v4055
  %v4130 = vunpack.c.l.b16 %v4056
  %v4131 = vunpack.c.h.b16 %v4056
  %v4132 = vunpack.c.l.b16 %v4057
  %v4133 = vunpack.c.h.b16 %v4057
  %v4134 = vunpack.c.l.b16 %v4058
  %v4135 = vunpack.c.h.b16 %v4058
  %v4136 = vunpack.c.l.b16 %v4059
  %v4137 = vunpack.c.h.b16 %v4059
  %v4138 = vunpack.c.l.b16 %v4060
  %v4139 = vunpack.c.h.b16 %v4060
  %v4140 = vunpack.c.l.b16 %v4061
  %v4141 = vunpack.c.h.b16 %v4061
  %v4142 = vunpack.c.l.b16 %v4062
  %v4143 = vunpack.c.h.b16 %v4062
  %v4144 = vunpack.c.l.b16 %v4063
  %v4145 = vunpack.c.h.b16 %v4063
  %v4146 = vunpack.c.l.b16 %v4064
  %v4147 = vunpack.c.h.b16 %v4064
  %v4148 = vunpack.c.l.b16 %v4065
  %v4149 = vunpack.c.h.b16 %v4065
  %v4150 = vunpack.c.l.b16 %v4066
  %v4151 = vunpack.c.h.b16 %v4066
  %v4152 = vunpack.c.l.b16 %v4067
  %v4153 = vunpack.c.h.b16 %v4067
  %v4154 = vunpack.c.l.b16 %v4068
  %v4155 = vunpack.c.h.b16 %v4068
  %v4156 = vunpack.c.l.b16 %v4069
  %v4157 = vunpack.c.h.b16 %v4069
  %v4158 = vunpack.c.l.b16 %v4070
  %v4159 = vunpack.c.h.b16 %v4070
  %v4160 = vunpack.c.l.b16 %v4071
  %v4161 = vunpack.c.h.b16 %v4071
  %v4162 = vunpack.c.l.b16 %v4072
  %v4163 = vunpack.c.h.b16 %v4072
  %v4164 = vunpack.c.l.b16 %v4073
  %v4165 = vunpack.c.h.b16 %v4073
  %v4166 = vunpack.c.l.b16 %v4074
  %v4167 = vunpack.c.h.b16 %v4074
  %v4168 = vunpack.c.l.b16 %v4075
  %v4169 = vunpack.c.h.b16 %v4075
  %v4170 = vunpack.c.l.b16 %v4076
  %v4171 = vunpack.c.h.b16 %v4076
  %v4172 = vunpack.c.l.b16 %v4077
  %v4173 = vunpack.c.h.b16 %v4077
  %v4174 = vpack.c.b16 %v4114, %v4110
  %v4175 = vpack.c.b16 %v4115, %v4111
  %v4176 = vpack.c.b16 %v4116, %v4112
  %v4177 = vpack.c.b16 %v4117, %v4113
  %v4178 = vpack.c.b16 %v4122, %v4118
  %v4179 = vpack.c.b16 %v4123, %v4119
  %v4180 = vpack.c.b16 %v4124, %v4120
  %v4181 = vpack.c.b16 %v4125, %v4121
  %v4182 = vpack.c.b16 %v4130, %v4126
  %v4183 = vpack.c.b16 %v4131, %v4127
  %v4184 = vpack.c.b16 %v4132, %v4128
  %v4185 = vpack.c.b16 %v4133, %v4129
  %v4186 = vpack.c.b16 %v4138, %v4134
  %v4187 = vpack.c.b16 %v4139, %v4135
  %v4188 = vpack.c.b16 %v4140, %v4136
  %v4189 = vpack.c.b16 %v4141, %v4137
  %v4190 = vpack.c.b16 %v4146, %v4142
  %v4191 = vpack.c.b16 %v4147, %v4143
  %v4192 = vpack.c.b16 %v4148, %v4144
  %v4193 = vpack.c.b16 %v4149, %v4145
  %v4194 = vpack.c.b16 %v4154, %v4150
  %v4195 = vpack.c.b16 %v4155, %v4151
  %v4196 = vpack.c.b16 %v4156, %v4152
  %v4197 = vpack.c.b16 %v4157, %v4153
  %v4198 = vpack.c.b16 %v4162, %v4158
  %v4199 = vpack.c.b16 %v4163, %v4159
  %v4200 = vpack.c.b16 %v4164, %v4160
  %v4201 = vpack.c.b16 %v4165, %v4161
  %v4202 = vpack.c.b16 %v4170, %v4166
  %v4203 = vpack.c.b16 %v4171, %v4167
  %v4204 = vpack.c.b16 %v4172, %v4168
  %v4205 = vpack.c.b16 %v4173, %v4169
  %4238 = vmatprep.subr.bf16.mxu0 %v4175
  %4239 = vmatpush1.bf16.msra.mxu0 %v4174
  %4240 = vmatprep.subr.bf16.mxu0 %v4179
  %4241 = vmatpush1.bf16.msra.mxu0 %v4178
  %4242 = vmatprep.subr.bf16.mxu0 %v4183
  %4243 = vmatpush1.bf16.msra.mxu0 %v4182
  %4244 = vmatprep.subr.bf16.mxu0 %v4187
  %4245 = vmatpush1.bf16.msra.mxu0 %v4186
  %4246 = vmatprep.subr.bf16.mxu0 %v4191
  %4247 = vmatpush1.bf16.msra.mxu0 %v4190
  %4248 = vmatprep.subr.bf16.mxu0 %v4195
  %4249 = vmatpush1.bf16.msra.mxu0 %v4194
  %4250 = vmatprep.subr.bf16.mxu0 %v4199
  %4251 = vmatpush1.bf16.msra.mxu0 %v4198
  %4252 = vmatprep.subr.bf16.mxu0 %v4203
  %4253 = vmatpush1.bf16.msra.mxu0 %v4202
  %4254 = vmatprep.subr.bf16.mxu0 0
  %4255 = vmatpush1.bf16.msra.mxu0 0
  %4256 = vmatprep.subr.bf16.mxu0 0
  %4257 = vmatpush1.bf16.msra.mxu0 0
  %4258 = vmatprep.subr.bf16.mxu0 0
  %4259 = vmatpush1.bf16.msra.mxu0 0
  %4260 = vmatprep.subr.bf16.mxu0 0
  %4261 = vmatpush1.bf16.msra.mxu0 0
  %4262 = vmatprep.subr.bf16.mxu0 0
  %4263 = vmatpush1.bf16.msra.mxu0 0
  %4264 = vmatprep.subr.bf16.mxu0 0
  %4265 = vmatpush1.bf16.msra.mxu0 0
  %4266 = vmatprep.subr.bf16.mxu0 0
  %4267 = vmatpush1.bf16.msra.mxu0 0
  %4268 = vmatprep.subr.bf16.mxu0 0
  %4269 = vmatpush1.bf16.msra.mxu0 0
  %4270 = vmatprep.mubr.bf16.mxu0 0
  %4271 = vmatmul.mubr.bf16.gmra.mrb[0].mxu0 %v4045
  %v4272 = vpop.f32.mrb[0].mxu0
  %v4273 = vadd.f32 0.0, %v4272
  %v4274 = vpop.f32.mrb[0].mxu0
  %v4275 = vadd.f32 0.0, %v4274
  %v4276 = vpop.f32.mrb[0].mxu0
  %v4277 = vpop.f32.mrb[0].mxu0
  %4278 = vdwg.mxu0
  %4279 = vmatprep.subr.bf16.mxu0 %v4177
  %4280 = vmatpush1.bf16.msra.mxu0 %v4176
  %4281 = vmatprep.subr.bf16.mxu0 %v4181
  %4282 = vmatpush1.bf16.msra.mxu0 %v4180
  %4283 = vmatprep.subr.bf16.mxu0 %v4185
  %4284 = vmatpush1.bf16.msra.mxu0 %v4184
  %4285 = vmatprep.subr.bf16.mxu0 %v4189
  %4286 = vmatpush1.bf16.msra.mxu0 %v4188
  %4287 = vmatprep.subr.bf16.mxu0 %v4193
  %4288 = vmatpush1.bf16.msra.mxu0 %v4192
  %4289 = vmatprep.subr.bf16.mxu0 %v4197
  %4290 = vmatpush1.bf16.msra.mxu0 %v4196
  %4291 = vmatprep.subr.bf16.mxu0 %v4201
  %4292 = vmatpush1.bf16.msra.mxu0 %v4200
  %4293 = vmatprep.subr.bf16.mxu0 %v4205
  %4294 = vmatpush1.bf16.msra.mxu0 %v4204
  %4295 = vmatprep.subr.bf16.mxu0 0
  %4296 = vmatpush1.bf16.msra.mxu0 0
  %4297 = vmatprep.subr.bf16.mxu0 0
  %4298 = vmatpush1.bf16.msra.mxu0 0
  %4299 = vmatprep.subr.bf16.mxu0 0
  %4300 = vmatpush1.bf16.msra.mxu0 0
  %4301 = vmatprep.subr.bf16.mxu0 0
  %4302 = vmatpush1.bf16.msra.mxu0 0
  %4303 = vmatprep.subr.bf16.mxu0 0
  %4304 = vmatpush1.bf16.msra.mxu0 0
  %4305 = vmatprep.subr.bf16.mxu0 0
  %4306 = vmatpush1.bf16.msra.mxu0 0
  %4307 = vmatprep.subr.bf16.mxu0 0
  %4308 = vmatpush1.bf16.msra.mxu0 0
  %4309 = vmatprep.subr.bf16.mxu0 0
  %4310 = vmatpush1.bf16.msra.mxu0 0
  %4311 = vmatprep.mubr.bf16.mxu0 0
  %4312 = vmatmul.mubr.bf16.gmra.mrb[0].mxu0 %v4045
  %v4313 = vpop.f32.mrb[0].mxu0
  %v4314 = vadd.f32 0.0, %v4313
  %v4315 = vpop.f32.mrb[0].mxu0
  %v4316 = vadd.f32 0.0, %v4315
  %v4317 = vpop.f32.mrb[0].mxu0
  %v4318 = vpop.f32.mrb[0].mxu0
  %4319 = vdwg.mxu0
  %v4352 = vunpack.c.l.b16 %v4012
  %v4353 = vunpack.c.h.b16 %v4012
  %v4354 = vunpack.c.l.b16 %v4013
  %v4355 = vunpack.c.h.b16 %v4013
  %v4356 = vunpack.c.l.b16 %v4014
  %v4357 = vunpack.c.h.b16 %v4014
  %v4358 = vunpack.c.l.b16 %v4015
  %v4359 = vunpack.c.h.b16 %v4015
  %v4360 = vunpack.c.l.b16 %v4016
  %v4361 = vunpack.c.h.b16 %v4016
  %v4362 = vunpack.c.l.b16 %v4017
  %v4363 = vunpack.c.h.b16 %v4017
  %v4364 = vunpack.c.l.b16 %v4018
  %v4365 = vunpack.c.h.b16 %v4018
  %v4366 = vunpack.c.l.b16 %v4019
  %v4367 = vunpack.c.h.b16 %v4019
  %v4368 = vunpack.c.l.b16 %v4020
  %v4369 = vunpack.c.h.b16 %v4020
  %v4370 = vunpack.c.l.b16 %v4021
  %v4371 = vunpack.c.h.b16 %v4021
  %v4372 = vunpack.c.l.b16 %v4022
  %v4373 = vunpack.c.h.b16 %v4022
  %v4374 = vunpack.c.l.b16 %v4023
  %v4375 = vunpack.c.h.b16 %v4023
  %v4376 = vunpack.c.l.b16 %v4024
  %v4377 = vunpack.c.h.b16 %v4024
  %v4378 = vunpack.c.l.b16 %v4025
  %v4379 = vunpack.c.h.b16 %v4025
  %v4380 = vunpack.c.l.b16 %v4026
  %v4381 = vunpack.c.h.b16 %v4026
  %v4382 = vunpack.c.l.b16 %v4027
  %v4383 = vunpack.c.h.b16 %v4027
  %v4384 = vunpack.c.l.b16 %v4028
  %v4385 = vunpack.c.h.b16 %v4028
  %v4386 = vunpack.c.l.b16 %v4029
  %v4387 = vunpack.c.h.b16 %v4029
  %v4388 = vunpack.c.l.b16 %v4030
  %v4389 = vunpack.c.h.b16 %v4030
  %v4390 = vunpack.c.l.b16 %v4031
  %v4391 = vunpack.c.h.b16 %v4031
  %v4392 = vunpack.c.l.b16 %v4032
  %v4393 = vunpack.c.h.b16 %v4032
  %v4394 = vunpack.c.l.b16 %v4033
  %v4395 = vunpack.c.h.b16 %v4033
  %v4396 = vunpack.c.l.b16 %v4034
  %v4397 = vunpack.c.h.b16 %v4034
  %v4398 = vunpack.c.l.b16 %v4035
  %v4399 = vunpack.c.h.b16 %v4035
  %v4400 = vunpack.c.l.b16 %v4036
  %v4401 = vunpack.c.h.b16 %v4036
  %v4402 = vunpack.c.l.b16 %v4037
  %v4403 = vunpack.c.h.b16 %v4037
  %v4404 = vunpack.c.l.b16 %v4038
  %v4405 = vunpack.c.h.b16 %v4038
  %v4406 = vunpack.c.l.b16 %v4039
  %v4407 = vunpack.c.h.b16 %v4039
  %v4408 = vunpack.c.l.b16 %v4040
  %v4409 = vunpack.c.h.b16 %v4040
  %v4410 = vunpack.c.l.b16 %v4041
  %v4411 = vunpack.c.h.b16 %v4041
  %v4412 = vunpack.c.l.b16 %v4042
  %v4413 = vunpack.c.h.b16 %v4042
  %v4414 = vunpack.c.l.b16 %v4043
  %v4415 = vunpack.c.h.b16 %v4043
  %v4416 = vpack.c.b16 %v4356, %v4352
  %v4417 = vpack.c.b16 %v4357, %v4353
  %v4418 = vpack.c.b16 %v4358, %v4354
  %v4419 = vpack.c.b16 %v4359, %v4355
  %v4420 = vpack.c.b16 %v4364, %v4360
  %v4421 = vpack.c.b16 %v4365, %v4361
  %v4422 = vpack.c.b16 %v4366, %v4362
  %v4423 = vpack.c.b16 %v4367, %v4363
  %v4424 = vpack.c.b16 %v4372, %v4368
  %v4425 = vpack.c.b16 %v4373, %v4369
  %v4426 = vpack.c.b16 %v4374, %v4370
  %v4427 = vpack.c.b16 %v4375, %v4371
  %v4428 = vpack.c.b16 %v4380, %v4376
  %v4429 = vpack.c.b16 %v4381, %v4377
  %v4430 = vpack.c.b16 %v4382, %v4378
  %v4431 = vpack.c.b16 %v4383, %v4379
  %v4432 = vpack.c.b16 %v4388, %v4384
  %v4433 = vpack.c.b16 %v4389, %v4385
  %v4434 = vpack.c.b16 %v4390, %v4386
  %v4435 = vpack.c.b16 %v4391, %v4387
  %v4436 = vpack.c.b16 %v4396, %v4392
  %v4437 = vpack.c.b16 %v4397, %v4393
  %v4438 = vpack.c.b16 %v4398, %v4394
  %v4439 = vpack.c.b16 %v4399, %v4395
  %v4440 = vpack.c.b16 %v4404, %v4400
  %v4441 = vpack.c.b16 %v4405, %v4401
  %v4442 = vpack.c.b16 %v4406, %v4402
  %v4443 = vpack.c.b16 %v4407, %v4403
  %v4444 = vpack.c.b16 %v4412, %v4408
  %v4445 = vpack.c.b16 %v4413, %v4409
  %v4446 = vpack.c.b16 %v4414, %v4410
  %v4447 = vpack.c.b16 %v4415, %v4411
  %4480 = vmatprep.subr.bf16.mxu0 %v4417
  %4481 = vmatpush1.bf16.msra.mxu0 %v4416
  %4482 = vmatprep.subr.bf16.mxu0 %v4421
  %4483 = vmatpush1.bf16.msra.mxu0 %v4420
  %4484 = vmatprep.subr.bf16.mxu0 %v4425
  %4485 = vmatpush1.bf16.msra.mxu0 %v4424
  %4486 = vmatprep.subr.bf16.mxu0 %v4429
  %4487 = vmatpush1.bf16.msra.mxu0 %v4428
  %4488 = vmatprep.subr.bf16.mxu0 %v4433
  %4489 = vmatpush1.bf16.msra.mxu0 %v4432
  %4490 = vmatprep.subr.bf16.mxu0 %v4437
  %4491 = vmatpush1.bf16.msra.mxu0 %v4436
  %4492 = vmatprep.subr.bf16.mxu0 %v4441
  %4493 = vmatpush1.bf16.msra.mxu0 %v4440
  %4494 = vmatprep.subr.bf16.mxu0 %v4445
  %4495 = vmatpush1.bf16.msra.mxu0 %v4444
  %4496 = vmatprep.subr.bf16.mxu0 0
  %4497 = vmatpush1.bf16.msra.mxu0 0
  %4498 = vmatprep.subr.bf16.mxu0 0
  %4499 = vmatpush1.bf16.msra.mxu0 0
  %4500 = vmatprep.subr.bf16.mxu0 0
  %4501 = vmatpush1.bf16.msra.mxu0 0
  %4502 = vmatprep.subr.bf16.mxu0 0
  %4503 = vmatpush1.bf16.msra.mxu0 0
  %4504 = vmatprep.subr.bf16.mxu0 0
  %4505 = vmatpush1.bf16.msra.mxu0 0
  %4506 = vmatprep.subr.bf16.mxu0 0
  %4507 = vmatpush1.bf16.msra.mxu0 0
  %4508 = vmatprep.subr.bf16.mxu0 0
  %4509 = vmatpush1.bf16.msra.mxu0 0
  %4510 = vmatprep.subr.bf16.mxu0 0
  %4511 = vmatpush1.bf16.msra.mxu0 0
  %4512 = vmatprep.mubr.bf16.mxu0 0
  %4513 = vmatmul.mubr.bf16.gmra.mrb[0].mxu0 %v4011
  %v4514 = vpop.f32.mrb[0].mxu0
  %v4515 = vadd.f32 %v4273, %v4514
  %v4516 = vpop.f32.mrb[0].mxu0
  %v4517 = vadd.f32 %v4275, %v4516
  %v4518 = vpop.f32.mrb[0].mxu0
  %v4519 = vpop.f32.mrb[0].mxu0
  %4520 = vdwg.mxu0
  %4521 = vmatprep.subr.bf16.mxu0 %v4419
  %4522 = vmatpush1.bf16.msra.mxu0 %v4418
  %4523 = vmatprep.subr.bf16.mxu0 %v4423
  %4524 = vmatpush1.bf16.msra.mxu0 %v4422
  %4525 = vmatprep.subr.bf16.mxu0 %v4427
  %4526 = vmatpush1.bf16.msra.mxu0 %v4426
  %4527 = vmatprep.subr.bf16.mxu0 %v4431
  %4528 = vmatpush1.bf16.msra.mxu0 %v4430
  %4529 = vmatprep.subr.bf16.mxu0 %v4435
  %4530 = vmatpush1.bf16.msra.mxu0 %v4434
  %4531 = vmatprep.subr.bf16.mxu0 %v4439
  %4532 = vmatpush1.bf16.msra.mxu0 %v4438
  %4533 = vmatprep.subr.bf16.mxu0 %v4443
  %4534 = vmatpush1.bf16.msra.mxu0 %v4442
  %4535 = vmatprep.subr.bf16.mxu0 %v4447
  %4536 = vmatpush1.bf16.msra.mxu0 %v4446
  %4537 = vmatprep.subr.bf16.mxu0 0
  %4538 = vmatpush1.bf16.msra.mxu0 0
  %4539 = vmatprep.subr.bf16.mxu0 0
  %4540 = vmatpush1.bf16.msra.mxu0 0
  %4541 = vmatprep.subr.bf16.mxu0 0
  %4542 = vmatpush1.bf16.msra.mxu0 0
  %4543 = vmatprep.subr.bf16.mxu0 0
  %4544 = vmatpush1.bf16.msra.mxu0 0
  %4545 = vmatprep.subr.bf16.mxu0 0
  %4546 = vmatpush1.bf16.msra.mxu0 0
  %4547 = vmatprep.subr.bf16.mxu0 0
  %4548 = vmatpush1.bf16.msra.mxu0 0
  %4549 = vmatprep.subr.bf16.mxu0 0
  %4550 = vmatpush1.bf16.msra.mxu0 0
  %4551 = vmatprep.subr.bf16.mxu0 0
  %4552 = vmatpush1.bf16.msra.mxu0 0
  %4553 = vmatprep.mubr.bf16.mxu0 0
  %4554 = vmatmul.mubr.bf16.gmra.mrb[0].mxu0 %v4011
  %v4555 = vpop.f32.mrb[0].mxu0
  %v4556 = vadd.f32 %v4314, %v4555
  %v4557 = vpop.f32.mrb[0].mxu0
  %v4558 = vadd.f32 %v4316, %v4557
  %v4559 = vpop.f32.mrb[0].mxu0
  %v4560 = vpop.f32.mrb[0].mxu0
  %4561 = vdwg.mxu0
  %v4562 = vld [vmem:[%s4] sm:$0xf]
  %v4564 = vlaneseq
  %v4565 = vshrl.u32 %v4564, 7
  %v4566 = vsub.s32 0, %v4565
  %v4567 = vrot.slane %v4562, %v4566
  %v4568 = vlaneseq
  %v4569 = vshrl.u32 %v4568, 7
  %v4570 = vsub.s32 1, %v4569
  %v4571 = vrot.slane %v4562, %v4570
  %v4572 = vlaneseq
  %v4573 = vshrl.u32 %v4572, 7
  %v4574 = vsub.s32 2, %v4573
  %v4575 = vrot.slane %v4562, %v4574
  %v4576 = vlaneseq
  %v4577 = vshrl.u32 %v4576, 7
  %v4578 = vsub.s32 3, %v4577
  %v4579 = vrot.slane %v4562, %v4578
  %v4584 = vadd.f32 %v4515, %v4567
  %v4585 = vadd.f32 %v4517, %v4571
  %v4586 = vadd.f32 %v4556, %v4575
  %v4587 = vadd.f32 %v4558, %v4579
  %v4588 = vld [vmem:[#allocation5] sm:$0xff]
  %v4589 = vxor.u32 %v4584, 2147483648
  %v4590 = vmul.f32 %v4589, 1.442695
  %v4591 = vpow.pop %v4590
  %v4592 = vadd.f32 %v4591, 1.0
  %v4593 = vrcp.pop %v4592
  %v4594 = vmul.f32 1.0, %v4593
  %v4595 = vxor.u32 %v4585, 2147483648
  %v4596 = vmul.f32 %v4595, 1.442695
  %v4597 = vpow.pop %v4596
  %v4598 = vadd.f32 %v4597, 1.0
  %v4599 = vrcp.pop %v4598
  %v4600 = vmul.f32 1.0, %v4599
  %v4601 = vtanh.pop %v4586
  %v4602 = vxor.u32 %v4587, 2147483648
  %v4603 = vmul.f32 %v4602, 1.442695
  %v4604 = vpow.pop %v4603
  %v4605 = vadd.f32 %v4604, 1.0
  %v4606 = vrcp.pop %v4605
  %v4607 = vmul.f32 1.0, %v4606
  %v4608 = vmul.f32 %v4600, %v4588
  %v4609 = vmul.f32 %v4594, %v4601
  %v4610 = vadd.f32 %v4608, %v4609
  %v4611 = vtanh.pop %v4610
  %v4612 = vmul.f32 %v4607, %v4611
  %4613 = vst [vmem:[#allocation4] sm:$0xff] %v4612
  %4614 = vst [vmem:[#allocation5] sm:$0xff] %v4610
  %s4615 = scalar_lea.vmem %s5, 32
  %4616 = vst [vmem:[%s4615] sm:$0xff] %v4612
  %s4617 = scalar_lea.vmem %s0, 160
  %v4618 = vld [vmem:[%s4617] sm:$0xff]
  %v4619 = vld [vmem:[%s4617 + $0x8] sm:$0xff]
  %v4620 = vld [vmem:[%s4617 + $0x10] sm:$0xff]
  %v4621 = vld [vmem:[%s4617 + $0x18] sm:$0xff]
  %v4622 = vld [vmem:[#allocation2] sm:$0xff]
  %v4623 = vpack.c.bf16 %v4622, %v4622
  %v4624 = vld [vmem:[%s1] sm:$0xff]
  %v4625 = vld [vmem:[%s1 + $0x8] sm:$0xff]
  %v4626 = vld [vmem:[%s1 + $0x10] sm:$0xff]
  %v4627 = vld [vmem:[%s1 + $0x18] sm:$0xff]
  %v4628 = vld [vmem:[%s1 + $0x20] sm:$0xff]
  %v4629 = vld [vmem:[%s1 + $0x28] sm:$0xff]
  %v4630 = vld [vmem:[%s1 + $0x30] sm:$0xff]
  %v4631 = vld [vmem:[%s1 + $0x38] sm:$0xff]
  %v4632 = vld [vmem:[%s1 + $0x40] sm:$0xff]
  %v4633 = vld [vmem:[%s1 + $0x48] sm:$0xff]
  %v4634 = vld [vmem:[%s1 + $0x50] sm:$0xff]
  %v4635 = vld [vmem:[%s1 + $0x58] sm:$0xff]
  %v4636 = vld [vmem:[%s1 + $0x60] sm:$0xff]
  %v4637 = vld [vmem:[%s1 + $0x68] sm:$0xff]
  %v4638 = vld [vmem:[%s1 + $0x70] sm:$0xff]
  %v4639 = vld [vmem:[%s1 + $0x78] sm:$0xff]
  %v4640 = vld [vmem:[%s1 + $0x80] sm:$0xff]
  %v4641 = vld [vmem:[%s1 + $0x88] sm:$0xff]
  %v4642 = vld [vmem:[%s1 + $0x90] sm:$0xff]
  %v4643 = vld [vmem:[%s1 + $0x98] sm:$0xff]
  %v4644 = vld [vmem:[%s1 + $0xa0] sm:$0xff]
  %v4645 = vld [vmem:[%s1 + $0xa8] sm:$0xff]
  %v4646 = vld [vmem:[%s1 + $0xb0] sm:$0xff]
  %v4647 = vld [vmem:[%s1 + $0xb8] sm:$0xff]
  %v4648 = vld [vmem:[%s1 + $0xc0] sm:$0xff]
  %v4649 = vld [vmem:[%s1 + $0xc8] sm:$0xff]
  %v4650 = vld [vmem:[%s1 + $0xd0] sm:$0xff]
  %v4651 = vld [vmem:[%s1 + $0xd8] sm:$0xff]
  %v4652 = vld [vmem:[%s1 + $0xe0] sm:$0xff]
  %v4653 = vld [vmem:[%s1 + $0xe8] sm:$0xff]
  %v4654 = vld [vmem:[%s1 + $0xf0] sm:$0xff]
  %v4655 = vld [vmem:[%s1 + $0xf8] sm:$0xff]
  %v4688 = vunpack.c.l.b16 %v4624
  %v4689 = vunpack.c.h.b16 %v4624
  %v4690 = vunpack.c.l.b16 %v4625
  %v4691 = vunpack.c.h.b16 %v4625
  %v4692 = vunpack.c.l.b16 %v4626
  %v4693 = vunpack.c.h.b16 %v4626
  %v4694 = vunpack.c.l.b16 %v4627
  %v4695 = vunpack.c.h.b16 %v4627
  %v4696 = vunpack.c.l.b16 %v4628
  %v4697 = vunpack.c.h.b16 %v4628
  %v4698 = vunpack.c.l.b16 %v4629
  %v4699 = vunpack.c.h.b16 %v4629
  %v4700 = vunpack.c.l.b16 %v4630
  %v4701 = vunpack.c.h.b16 %v4630
  %v4702 = vunpack.c.l.b16 %v4631
  %v4703 = vunpack.c.h.b16 %v4631
  %v4704 = vunpack.c.l.b16 %v4632
  %v4705 = vunpack.c.h.b16 %v4632
  %v4706 = vunpack.c.l.b16 %v4633
  %v4707 = vunpack.c.h.b16 %v4633
  %v4708 = vunpack.c.l.b16 %v4634
  %v4709 = vunpack.c.h.b16 %v4634
  %v4710 = vunpack.c.l.b16 %v4635
  %v4711 = vunpack.c.h.b16 %v4635
  %v4712 = vunpack.c.l.b16 %v4636
  %v4713 = vunpack.c.h.b16 %v4636
  %v4714 = vunpack.c.l.b16 %v4637
  %v4715 = vunpack.c.h.b16 %v4637
  %v4716 = vunpack.c.l.b16 %v4638
  %v4717 = vunpack.c.h.b16 %v4638
  %v4718 = vunpack.c.l.b16 %v4639
  %v4719 = vunpack.c.h.b16 %v4639
  %v4720 = vunpack.c.l.b16 %v4640
  %v4721 = vunpack.c.h.b16 %v4640
  %v4722 = vunpack.c.l.b16 %v4641
  %v4723 = vunpack.c.h.b16 %v4641
  %v4724 = vunpack.c.l.b16 %v4642
  %v4725 = vunpack.c.h.b16 %v4642
  %v4726 = vunpack.c.l.b16 %v4643
  %v4727 = vunpack.c.h.b16 %v4643
  %v4728 = vunpack.c.l.b16 %v4644
  %v4729 = vunpack.c.h.b16 %v4644
  %v4730 = vunpack.c.l.b16 %v4645
  %v4731 = vunpack.c.h.b16 %v4645
  %v4732 = vunpack.c.l.b16 %v4646
  %v4733 = vunpack.c.h.b16 %v4646
  %v4734 = vunpack.c.l.b16 %v4647
  %v4735 = vunpack.c.h.b16 %v4647
  %v4736 = vunpack.c.l.b16 %v4648
  %v4737 = vunpack.c.h.b16 %v4648
  %v4738 = vunpack.c.l.b16 %v4649
  %v4739 = vunpack.c.h.b16 %v4649
  %v4740 = vunpack.c.l.b16 %v4650
  %v4741 = vunpack.c.h.b16 %v4650
  %v4742 = vunpack.c.l.b16 %v4651
  %v4743 = vunpack.c.h.b16 %v4651
  %v4744 = vunpack.c.l.b16 %v4652
  %v4745 = vunpack.c.h.b16 %v4652
  %v4746 = vunpack.c.l.b16 %v4653
  %v4747 = vunpack.c.h.b16 %v4653
  %v4748 = vunpack.c.l.b16 %v4654
  %v4749 = vunpack.c.h.b16 %v4654
  %v4750 = vunpack.c.l.b16 %v4655
  %v4751 = vunpack.c.h.b16 %v4655
  %v4752 = vpack.c.b16 %v4692, %v4688
  %v4753 = vpack.c.b16 %v4693, %v4689
  %v4754 = vpack.c.b16 %v4694, %v4690
  %v4755 = vpack.c.b16 %v4695, %v4691
  %v4756 = vpack.c.b16 %v4700, %v4696
  %v4757 = vpack.c.b16 %v4701, %v4697
  %v4758 = vpack.c.b16 %v4702, %v4698
  %v4759 = vpack.c.b16 %v4703, %v4699
  %v4760 = vpack.c.b16 %v4708, %v4704
  %v4761 = vpack.c.b16 %v4709, %v4705
  %v4762 = vpack.c.b16 %v4710, %v4706
  %v4763 = vpack.c.b16 %v4711, %v4707
  %v4764 = vpack.c.b16 %v4716, %v4712
  %v4765 = vpack.c.b16 %v4717, %v4713
  %v4766 = vpack.c.b16 %v4718, %v4714
  %v4767 = vpack.c.b16 %v4719, %v4715
  %v4768 = vpack.c.b16 %v4724, %v4720
  %v4769 = vpack.c.b16 %v4725, %v4721
  %v4770 = vpack.c.b16 %v4726, %v4722
  %v4771 = vpack.c.b16 %v4727, %v4723
  %v4772 = vpack.c.b16 %v4732, %v4728
  %v4773 = vpack.c.b16 %v4733, %v4729
  %v4774 = vpack.c.b16 %v4734, %v4730
  %v4775 = vpack.c.b16 %v4735, %v4731
  %v4776 = vpack.c.b16 %v4740, %v4736
  %v4777 = vpack.c.b16 %v4741, %v4737
  %v4778 = vpack.c.b16 %v4742, %v4738
  %v4779 = vpack.c.b16 %v4743, %v4739
  %v4780 = vpack.c.b16 %v4748, %v4744
  %v4781 = vpack.c.b16 %v4749, %v4745
  %v4782 = vpack.c.b16 %v4750, %v4746
  %v4783 = vpack.c.b16 %v4751, %v4747
  %4816 = vmatprep.subr.bf16.mxu0 %v4753
  %4817 = vmatpush1.bf16.msra.mxu0 %v4752
  %4818 = vmatprep.subr.bf16.mxu0 %v4757
  %4819 = vmatpush1.bf16.msra.mxu0 %v4756
  %4820 = vmatprep.subr.bf16.mxu0 %v4761
  %4821 = vmatpush1.bf16.msra.mxu0 %v4760
  %4822 = vmatprep.subr.bf16.mxu0 %v4765
  %4823 = vmatpush1.bf16.msra.mxu0 %v4764
  %4824 = vmatprep.subr.bf16.mxu0 %v4769
  %4825 = vmatpush1.bf16.msra.mxu0 %v4768
  %4826 = vmatprep.subr.bf16.mxu0 %v4773
  %4827 = vmatpush1.bf16.msra.mxu0 %v4772
  %4828 = vmatprep.subr.bf16.mxu0 %v4777
  %4829 = vmatpush1.bf16.msra.mxu0 %v4776
  %4830 = vmatprep.subr.bf16.mxu0 %v4781
  %4831 = vmatpush1.bf16.msra.mxu0 %v4780
  %4832 = vmatprep.subr.bf16.mxu0 0
  %4833 = vmatpush1.bf16.msra.mxu0 0
  %4834 = vmatprep.subr.bf16.mxu0 0
  %4835 = vmatpush1.bf16.msra.mxu0 0
  %4836 = vmatprep.subr.bf16.mxu0 0
  %4837 = vmatpush1.bf16.msra.mxu0 0
  %4838 = vmatprep.subr.bf16.mxu0 0
  %4839 = vmatpush1.bf16.msra.mxu0 0
  %4840 = vmatprep.subr.bf16.mxu0 0
  %4841 = vmatpush1.bf16.msra.mxu0 0
  %4842 = vmatprep.subr.bf16.mxu0 0
  %4843 = vmatpush1.bf16.msra.mxu0 0
  %4844 = vmatprep.subr.bf16.mxu0 0
  %4845 = vmatpush1.bf16.msra.mxu0 0
  %4846 = vmatprep.subr.bf16.mxu0 0
  %4847 = vmatpush1.bf16.msra.mxu0 0
  %4848 = vmatprep.mubr.bf16.mxu0 0
  %4849 = vmatmul.mubr.bf16.gmra.mrb[0].mxu0 %v4623
  %v4850 = vpop.f32.mrb[0].mxu0
  %v4851 = vadd.f32 0.0, %v4850
  %v4852 = vpop.f32.mrb[0].mxu0
  %v4853 = vadd.f32 0.0, %v4852
  %v4854 = vpop.f32.mrb[0].mxu0
  %v4855 = vpop.f32.mrb[0].mxu0
  %4856 = vdwg.mxu0
  %4857 = vmatprep.subr.bf16.mxu0 %v4755
  %4858 = vmatpush1.bf16.msra.mxu0 %v4754
  %4859 = vmatprep.subr.bf16.mxu0 %v4759
  %4860 = vmatpush1.bf16.msra.mxu0 %v4758
  %4861 = vmatprep.subr.bf16.mxu0 %v4763
  %4862 = vmatpush1.bf16.msra.mxu0 %v4762
  %4863 = vmatprep.subr.bf16.mxu0 %v4767
  %4864 = vmatpush1.bf16.msra.mxu0 %v4766
  %4865 = vmatprep.subr.bf16.mxu0 %v4771
  %4866 = vmatpush1.bf16.msra.mxu0 %v4770
  %4867 = vmatprep.subr.bf16.mxu0 %v4775
  %4868 = vmatpush1.bf16.msra.mxu0 %v4774
  %4869 = vmatprep.subr.bf16.mxu0 %v4779
  %4870 = vmatpush1.bf16.msra.mxu0 %v4778
  %4871 = vmatprep.subr.bf16.mxu0 %v4783
  %4872 = vmatpush1.bf16.msra.mxu0 %v4782
  %4873 = vmatprep.subr.bf16.mxu0 0
  %4874 = vmatpush1.bf16.msra.mxu0 0
  %4875 = vmatprep.subr.bf16.mxu0 0
  %4876 = vmatpush1.bf16.msra.mxu0 0
  %4877 = vmatprep.subr.bf16.mxu0 0
  %4878 = vmatpush1.bf16.msra.mxu0 0
  %4879 = vmatprep.subr.bf16.mxu0 0
  %4880 = vmatpush1.bf16.msra.mxu0 0
  %4881 = vmatprep.subr.bf16.mxu0 0
  %4882 = vmatpush1.bf16.msra.mxu0 0
  %4883 = vmatprep.subr.bf16.mxu0 0
  %4884 = vmatpush1.bf16.msra.mxu0 0
  %4885 = vmatprep.subr.bf16.mxu0 0
  %4886 = vmatpush1.bf16.msra.mxu0 0
  %4887 = vmatprep.subr.bf16.mxu0 0
  %4888 = vmatpush1.bf16.msra.mxu0 0
  %4889 = vmatprep.mubr.bf16.mxu0 0
  %4890 = vmatmul.mubr.bf16.gmra.mrb[0].mxu0 %v4623
  %v4891 = vpop.f32.mrb[0].mxu0
  %v4892 = vadd.f32 0.0, %v4891
  %v4893 = vpop.f32.mrb[0].mxu0
  %v4894 = vadd.f32 0.0, %v4893
  %v4895 = vpop.f32.mrb[0].mxu0
  %v4896 = vpop.f32.mrb[0].mxu0
  %4897 = vdwg.mxu0
  %v4898 = vadd.f32 %v4618, %v4851
  %v4899 = vadd.f32 %v4619, %v4853
  %v4900 = vadd.f32 %v4620, %v4892
  %v4901 = vadd.f32 %v4621, %v4894
  %v4902 = vld [vmem:[#allocation3] sm:$0xff]
  %v4903 = vxor.u32 %v4898, 2147483648
  %v4904 = vmul.f32 %v4903, 1.442695
  %v4905 = vpow.pop %v4904
  %v4906 = vadd.f32 %v4905, 1.0
  %v4907 = vrcp.pop %v4906
  %v4908 = vmul.f32 1.0, %v4907
  %v4909 = vxor.u32 %v4899, 2147483648
  %v4910 = vmul.f32 %v4909, 1.442695
  %v4911 = vpow.pop %v4910
  %v4912 = vadd.f32 %v4911, 1.0
  %v4913 = vrcp.pop %v4912
  %v4914 = vmul.f32 1.0, %v4913
  %v4915 = vtanh.pop %v4900
  %v4916 = vxor.u32 %v4901, 2147483648
  %v4917 = vmul.f32 %v4916, 1.442695
  %v4918 = vpow.pop %v4917
  %v4919 = vadd.f32 %v4918, 1.0
  %v4920 = vrcp.pop %v4919
  %v4921 = vmul.f32 1.0, %v4920
  %v4922 = vmul.f32 %v4914, %v4902
  %v4923 = vmul.f32 %v4908, %v4915
  %v4924 = vadd.f32 %v4922, %v4923
  %v4925 = vtanh.pop %v4924
  %v4926 = vmul.f32 %v4921, %v4925
  %4927 = vst [vmem:[#allocation2] sm:$0xff] %v4926
  %4928 = vst [vmem:[#allocation3] sm:$0xff] %v4924
  %v4929 = vpack.c.bf16 %v4926, %v4926
  %v4930 = vld [vmem:[%s2] sm:$0xff]
  %v4931 = vld [vmem:[%s2 + $0x8] sm:$0xff]
  %v4932 = vld [vmem:[%s2 + $0x10] sm:$0xff]
  %v4933 = vld [vmem:[%s2 + $0x18] sm:$0xff]
  %v4934 = vld [vmem:[%s2 + $0x20] sm:$0xff]
  %v4935 = vld [vmem:[%s2 + $0x28] sm:$0xff]
  %v4936 = vld [vmem:[%s2 + $0x30] sm:$0xff]
  %v4937 = vld [vmem:[%s2 + $0x38] sm:$0xff]
  %v4938 = vld [vmem:[%s2 + $0x40] sm:$0xff]
  %v4939 = vld [vmem:[%s2 + $0x48] sm:$0xff]
  %v4940 = vld [vmem:[%s2 + $0x50] sm:$0xff]
  %v4941 = vld [vmem:[%s2 + $0x58] sm:$0xff]
  %v4942 = vld [vmem:[%s2 + $0x60] sm:$0xff]
  %v4943 = vld [vmem:[%s2 + $0x68] sm:$0xff]
  %v4944 = vld [vmem:[%s2 + $0x70] sm:$0xff]
  %v4945 = vld [vmem:[%s2 + $0x78] sm:$0xff]
  %v4946 = vld [vmem:[%s2 + $0x80] sm:$0xff]
  %v4947 = vld [vmem:[%s2 + $0x88] sm:$0xff]
  %v4948 = vld [vmem:[%s2 + $0x90] sm:$0xff]
  %v4949 = vld [vmem:[%s2 + $0x98] sm:$0xff]
  %v4950 = vld [vmem:[%s2 + $0xa0] sm:$0xff]
  %v4951 = vld [vmem:[%s2 + $0xa8] sm:$0xff]
  %v4952 = vld [vmem:[%s2 + $0xb0] sm:$0xff]
  %v4953 = vld [vmem:[%s2 + $0xb8] sm:$0xff]
  %v4954 = vld [vmem:[%s2 + $0xc0] sm:$0xff]
  %v4955 = vld [vmem:[%s2 + $0xc8] sm:$0xff]
  %v4956 = vld [vmem:[%s2 + $0xd0] sm:$0xff]
  %v4957 = vld [vmem:[%s2 + $0xd8] sm:$0xff]
  %v4958 = vld [vmem:[%s2 + $0xe0] sm:$0xff]
  %v4959 = vld [vmem:[%s2 + $0xe8] sm:$0xff]
  %v4960 = vld [vmem:[%s2 + $0xf0] sm:$0xff]
  %v4961 = vld [vmem:[%s2 + $0xf8] sm:$0xff]
  %v4962 = vld [vmem:[#allocation4] sm:$0xff]
  %v4963 = vpack.c.bf16 %v4962, %v4962
  %v4964 = vld [vmem:[%s3] sm:$0xff]
  %v4965 = vld [vmem:[%s3 + $0x8] sm:$0xff]
  %v4966 = vld [vmem:[%s3 + $0x10] sm:$0xff]
  %v4967 = vld [vmem:[%s3 + $0x18] sm:$0xff]
  %v4968 = vld [vmem:[%s3 + $0x20] sm:$0xff]
  %v4969 = vld [vmem:[%s3 + $0x28] sm:$0xff]
  %v4970 = vld [vmem:[%s3 + $0x30] sm:$0xff]
  %v4971 = vld [vmem:[%s3 + $0x38] sm:$0xff]
  %v4972 = vld [vmem:[%s3 + $0x40] sm:$0xff]
  %v4973 = vld [vmem:[%s3 + $0x48] sm:$0xff]
  %v4974 = vld [vmem:[%s3 + $0x50] sm:$0xff]
  %v4975 = vld [vmem:[%s3 + $0x58] sm:$0xff]
  %v4976 = vld [vmem:[%s3 + $0x60] sm:$0xff]
  %v4977 = vld [vmem:[%s3 + $0x68] sm:$0xff]
  %v4978 = vld [vmem:[%s3 + $0x70] sm:$0xff]
  %v4979 = vld [vmem:[%s3 + $0x78] sm:$0xff]
  %v4980 = vld [vmem:[%s3 + $0x80] sm:$0xff]
  %v4981 = vld [vmem:[%s3 + $0x88] sm:$0xff]
  %v4982 = vld [vmem:[%s3 + $0x90] sm:$0xff]
  %v4983 = vld [vmem:[%s3 + $0x98] sm:$0xff]
  %v4984 = vld [vmem:[%s3 + $0xa0] sm:$0xff]
  %v4985 = vld [vmem:[%s3 + $0xa8] sm:$0xff]
  %v4986 = vld [vmem:[%s3 + $0xb0] sm:$0xff]
  %v4987 = vld [vmem:[%s3 + $0xb8] sm:$0xff]
  %v4988 = vld [vmem:[%s3 + $0xc0] sm:$0xff]
  %v4989 = vld [vmem:[%s3 + $0xc8] sm:$0xff]
  %v4990 = vld [vmem:[%s3 + $0xd0] sm:$0xff]
  %v4991 = vld [vmem:[%s3 + $0xd8] sm:$0xff]
  %v4992 = vld [vmem:[%s3 + $0xe0] sm:$0xff]
  %v4993 = vld [vmem:[%s3 + $0xe8] sm:$0xff]
  %v4994 = vld [vmem:[%s3 + $0xf0] sm:$0xff]
  %v4995 = vld [vmem:[%s3 + $0xf8] sm:$0xff]
  %v5028 = vunpack.c.l.b16 %v4964
  %v5029 = vunpack.c.h.b16 %v4964
  %v5030 = vunpack.c.l.b16 %v4965
  %v5031 = vunpack.c.h.b16 %v4965
  %v5032 = vunpack.c.l.b16 %v4966
  %v5033 = vunpack.c.h.b16 %v4966
  %v5034 = vunpack.c.l.b16 %v4967
  %v5035 = vunpack.c.h.b16 %v4967
  %v5036 = vunpack.c.l.b16 %v4968
  %v5037 = vunpack.c.h.b16 %v4968
  %v5038 = vunpack.c.l.b16 %v4969
  %v5039 = vunpack.c.h.b16 %v4969
  %v5040 = vunpack.c.l.b16 %v4970
  %v5041 = vunpack.c.h.b16 %v4970
  %v5042 = vunpack.c.l.b16 %v4971
  %v5043 = vunpack.c.h.b16 %v4971
  %v5044 = vunpack.c.l.b16 %v4972
  %v5045 = vunpack.c.h.b16 %v4972
  %v5046 = vunpack.c.l.b16 %v4973
  %v5047 = vunpack.c.h.b16 %v4973
  %v5048 = vunpack.c.l.b16 %v4974
  %v5049 = vunpack.c.h.b16 %v4974
  %v5050 = vunpack.c.l.b16 %v4975
  %v5051 = vunpack.c.h.b16 %v4975
  %v5052 = vunpack.c.l.b16 %v4976
  %v5053 = vunpack.c.h.b16 %v4976
  %v5054 = vunpack.c.l.b16 %v4977
  %v5055 = vunpack.c.h.b16 %v4977
  %v5056 = vunpack.c.l.b16 %v4978
  %v5057 = vunpack.c.h.b16 %v4978
  %v5058 = vunpack.c.l.b16 %v4979
  %v5059 = vunpack.c.h.b16 %v4979
  %v5060 = vunpack.c.l.b16 %v4980
  %v5061 = vunpack.c.h.b16 %v4980
  %v5062 = vunpack.c.l.b16 %v4981
  %v5063 = vunpack.c.h.b16 %v4981
  %v5064 = vunpack.c.l.b16 %v4982
  %v5065 = vunpack.c.h.b16 %v4982
  %v5066 = vunpack.c.l.b16 %v4983
  %v5067 = vunpack.c.h.b16 %v4983
  %v5068 = vunpack.c.l.b16 %v4984
  %v5069 = vunpack.c.h.b16 %v4984
  %v5070 = vunpack.c.l.b16 %v4985
  %v5071 = vunpack.c.h.b16 %v4985
  %v5072 = vunpack.c.l.b16 %v4986
  %v5073 = vunpack.c.h.b16 %v4986
  %v5074 = vunpack.c.l.b16 %v4987
  %v5075 = vunpack.c.h.b16 %v4987
  %v5076 = vunpack.c.l.b16 %v4988
  %v5077 = vunpack.c.h.b16 %v4988
  %v5078 = vunpack.c.l.b16 %v4989
  %v5079 = vunpack.c.h.b16 %v4989
  %v5080 = vunpack.c.l.b16 %v4990
  %v5081 = vunpack.c.h.b16 %v4990
  %v5082 = vunpack.c.l.b16 %v4991
  %v5083 = vunpack.c.h.b16 %v4991
  %v5084 = vunpack.c.l.b16 %v4992
  %v5085 = vunpack.c.h.b16 %v4992
  %v5086 = vunpack.c.l.b16 %v4993
  %v5087 = vunpack.c.h.b16 %v4993
  %v5088 = vunpack.c.l.b16 %v4994
  %v5089 = vunpack.c.h.b16 %v4994
  %v5090 = vunpack.c.l.b16 %v4995
  %v5091 = vunpack.c.h.b16 %v4995
  %v5092 = vpack.c.b16 %v5032, %v5028
  %v5093 = vpack.c.b16 %v5033, %v5029
  %v5094 = vpack.c.b16 %v5034, %v5030
  %v5095 = vpack.c.b16 %v5035, %v5031
  %v5096 = vpack.c.b16 %v5040, %v5036
  %v5097 = vpack.c.b16 %v5041, %v5037
  %v5098 = vpack.c.b16 %v5042, %v5038
  %v5099 = vpack.c.b16 %v5043, %v5039
  %v5100 = vpack.c.b16 %v5048, %v5044
  %v5101 = vpack.c.b16 %v5049, %v5045
  %v5102 = vpack.c.b16 %v5050, %v5046
  %v5103 = vpack.c.b16 %v5051, %v5047
  %v5104 = vpack.c.b16 %v5056, %v5052
  %v5105 = vpack.c.b16 %v5057, %v5053
  %v5106 = vpack.c.b16 %v5058, %v5054
  %v5107 = vpack.c.b16 %v5059, %v5055
  %v5108 = vpack.c.b16 %v5064, %v5060
  %v5109 = vpack.c.b16 %v5065, %v5061
  %v5110 = vpack.c.b16 %v5066, %v5062
  %v5111 = vpack.c.b16 %v5067, %v5063
  %v5112 = vpack.c.b16 %v5072, %v5068
  %v5113 = vpack.c.b16 %v5073, %v5069
  %v5114 = vpack.c.b16 %v5074, %v5070
  %v5115 = vpack.c.b16 %v5075, %v5071
  %v5116 = vpack.c.b16 %v5080, %v5076
  %v5117 = vpack.c.b16 %v5081, %v5077
  %v5118 = vpack.c.b16 %v5082, %v5078
  %v5119 = vpack.c.b16 %v5083, %v5079
  %v5120 = vpack.c.b16 %v5088, %v5084
  %v5121 = vpack.c.b16 %v5089, %v5085
  %v5122 = vpack.c.b16 %v5090, %v5086
  %v5123 = vpack.c.b16 %v5091, %v5087
  %5156 = vmatprep.subr.bf16.mxu0 %v5093
  %5157 = vmatpush1.bf16.msra.mxu0 %v5092
  %5158 = vmatprep.subr.bf16.mxu0 %v5097
  %5159 = vmatpush1.bf16.msra.mxu0 %v5096
  %5160 = vmatprep.subr.bf16.mxu0 %v5101
  %5161 = vmatpush1.bf16.msra.mxu0 %v5100
  %5162 = vmatprep.subr.bf16.mxu0 %v5105
  %5163 = vmatpush1.bf16.msra.mxu0 %v5104
  %5164 = vmatprep.subr.bf16.mxu0 %v5109
  %5165 = vmatpush1.bf16.msra.mxu0 %v5108
  %5166 = vmatprep.subr.bf16.mxu0 %v5113
  %5167 = vmatpush1.bf16.msra.mxu0 %v5112
  %5168 = vmatprep.subr.bf16.mxu0 %v5117
  %5169 = vmatpush1.bf16.msra.mxu0 %v5116
  %5170 = vmatprep.subr.bf16.mxu0 %v5121
  %5171 = vmatpush1.bf16.msra.mxu0 %v5120
  %5172 = vmatprep.subr.bf16.mxu0 0
  %5173 = vmatpush1.bf16.msra.mxu0 0
  %5174 = vmatprep.subr.bf16.mxu0 0
  %5175 = vmatpush1.bf16.msra.mxu0 0
  %5176 = vmatprep.subr.bf16.mxu0 0
  %5177 = vmatpush1.bf16.msra.mxu0 0
  %5178 = vmatprep.subr.bf16.mxu0 0
  %5179 = vmatpush1.bf16.msra.mxu0 0
  %5180 = vmatprep.subr.bf16.mxu0 0
  %5181 = vmatpush1.bf16.msra.mxu0 0
  %5182 = vmatprep.subr.bf16.mxu0 0
  %5183 = vmatpush1.bf16.msra.mxu0 0
  %5184 = vmatprep.subr.bf16.mxu0 0
  %5185 = vmatpush1.bf16.msra.mxu0 0
  %5186 = vmatprep.subr.bf16.mxu0 0
  %5187 = vmatpush1.bf16.msra.mxu0 0
  %5188 = vmatprep.mubr.bf16.mxu0 0
  %5189 = vmatmul.mubr.bf16.gmra.mrb[0].mxu0 %v4963
  %v5190 = vpop.f32.mrb[0].mxu0
  %v5191 = vadd.f32 0.0, %v5190
  %v5192 = vpop.f32.mrb[0].mxu0
  %v5193 = vadd.f32 0.0, %v5192
  %v5194 = vpop.f32.mrb[0].mxu0
  %v5195 = vpop.f32.mrb[0].mxu0
  %5196 = vdwg.mxu0
  %5197 = vmatprep.subr.bf16.mxu0 %v5095
  %5198 = vmatpush1.bf16.msra.mxu0 %v5094
  %5199 = vmatprep.subr.bf16.mxu0 %v5099
  %5200 = vmatpush1.bf16.msra.mxu0 %v5098
  %5201 = vmatprep.subr.bf16.mxu0 %v5103
  %5202 = vmatpush1.bf16.msra.mxu0 %v5102
  %5203 = vmatprep.subr.bf16.mxu0 %v5107
  %5204 = vmatpush1.bf16.msra.mxu0 %v5106
  %5205 = vmatprep.subr.bf16.mxu0 %v5111
  %5206 = vmatpush1.bf16.msra.mxu0 %v5110
  %5207 = vmatprep.subr.bf16.mxu0 %v5115
  %5208 = vmatpush1.bf16.msra.mxu0 %v5114
  %5209 = vmatprep.subr.bf16.mxu0 %v5119
  %5210 = vmatpush1.bf16.msra.mxu0 %v5118
  %5211 = vmatprep.subr.bf16.mxu0 %v5123
  %5212 = vmatpush1.bf16.msra.mxu0 %v5122
  %5213 = vmatprep.subr.bf16.mxu0 0
  %5214 = vmatpush1.bf16.msra.mxu0 0
  %5215 = vmatprep.subr.bf16.mxu0 0
  %5216 = vmatpush1.bf16.msra.mxu0 0
  %5217 = vmatprep.subr.bf16.mxu0 0
  %5218 = vmatpush1.bf16.msra.mxu0 0
  %5219 = vmatprep.subr.bf16.mxu0 0
  %5220 = vmatpush1.bf16.msra.mxu0 0
  %5221 = vmatprep.subr.bf16.mxu0 0
  %5222 = vmatpush1.bf16.msra.mxu0 0
  %5223 = vmatprep.subr.bf16.mxu0 0
  %5224 = vmatpush1.bf16.msra.mxu0 0
  %5225 = vmatprep.subr.bf16.mxu0 0
  %5226 = vmatpush1.bf16.msra.mxu0 0
  %5227 = vmatprep.subr.bf16.mxu0 0
  %5228 = vmatpush1.bf16.msra.mxu0 0
  %5229 = vmatprep.mubr.bf16.mxu0 0
  %5230 = vmatmul.mubr.bf16.gmra.mrb[0].mxu0 %v4963
  %v5231 = vpop.f32.mrb[0].mxu0
  %v5232 = vadd.f32 0.0, %v5231
  %v5233 = vpop.f32.mrb[0].mxu0
  %v5234 = vadd.f32 0.0, %v5233
  %v5235 = vpop.f32.mrb[0].mxu0
  %v5236 = vpop.f32.mrb[0].mxu0
  %5237 = vdwg.mxu0
  %v5270 = vunpack.c.l.b16 %v4930
  %v5271 = vunpack.c.h.b16 %v4930
  %v5272 = vunpack.c.l.b16 %v4931
  %v5273 = vunpack.c.h.b16 %v4931
  %v5274 = vunpack.c.l.b16 %v4932
  %v5275 = vunpack.c.h.b16 %v4932
  %v5276 = vunpack.c.l.b16 %v4933
  %v5277 = vunpack.c.h.b16 %v4933
  %v5278 = vunpack.c.l.b16 %v4934
  %v5279 = vunpack.c.h.b16 %v4934
  %v5280 = vunpack.c.l.b16 %v4935
  %v5281 = vunpack.c.h.b16 %v4935
  %v5282 = vunpack.c.l.b16 %v4936
  %v5283 = vunpack.c.h.b16 %v4936
  %v5284 = vunpack.c.l.b16 %v4937
  %v5285 = vunpack.c.h.b16 %v4937
  %v5286 = vunpack.c.l.b16 %v4938
  %v5287 = vunpack.c.h.b16 %v4938
  %v5288 = vunpack.c.l.b16 %v4939
  %v5289 = vunpack.c.h.b16 %v4939
  %v5290 = vunpack.c.l.b16 %v4940
  %v5291 = vunpack.c.h.b16 %v4940
  %v5292 = vunpack.c.l.b16 %v4941
  %v5293 = vunpack.c.h.b16 %v4941
  %v5294 = vunpack.c.l.b16 %v4942
  %v5295 = vunpack.c.h.b16 %v4942
  %v5296 = vunpack.c.l.b16 %v4943
  %v5297 = vunpack.c.h.b16 %v4943
  %v5298 = vunpack.c.l.b16 %v4944
  %v5299 = vunpack.c.h.b16 %v4944
  %v5300 = vunpack.c.l.b16 %v4945
  %v5301 = vunpack.c.h.b16 %v4945
  %v5302 = vunpack.c.l.b16 %v4946
  %v5303 = vunpack.c.h.b16 %v4946
  %v5304 = vunpack.c.l.b16 %v4947
  %v5305 = vunpack.c.h.b16 %v4947
  %v5306 = vunpack.c.l.b16 %v4948
  %v5307 = vunpack.c.h.b16 %v4948
  %v5308 = vunpack.c.l.b16 %v4949
  %v5309 = vunpack.c.h.b16 %v4949
  %v5310 = vunpack.c.l.b16 %v4950
  %v5311 = vunpack.c.h.b16 %v4950
  %v5312 = vunpack.c.l.b16 %v4951
  %v5313 = vunpack.c.h.b16 %v4951
  %v5314 = vunpack.c.l.b16 %v4952
  %v5315 = vunpack.c.h.b16 %v4952
  %v5316 = vunpack.c.l.b16 %v4953
  %v5317 = vunpack.c.h.b16 %v4953
  %v5318 = vunpack.c.l.b16 %v4954
  %v5319 = vunpack.c.h.b16 %v4954
  %v5320 = vunpack.c.l.b16 %v4955
  %v5321 = vunpack.c.h.b16 %v4955
  %v5322 = vunpack.c.l.b16 %v4956
  %v5323 = vunpack.c.h.b16 %v4956
  %v5324 = vunpack.c.l.b16 %v4957
  %v5325 = vunpack.c.h.b16 %v4957
  %v5326 = vunpack.c.l.b16 %v4958
  %v5327 = vunpack.c.h.b16 %v4958
  %v5328 = vunpack.c.l.b16 %v4959
  %v5329 = vunpack.c.h.b16 %v4959
  %v5330 = vunpack.c.l.b16 %v4960
  %v5331 = vunpack.c.h.b16 %v4960
  %v5332 = vunpack.c.l.b16 %v4961
  %v5333 = vunpack.c.h.b16 %v4961
  %v5334 = vpack.c.b16 %v5274, %v5270
  %v5335 = vpack.c.b16 %v5275, %v5271
  %v5336 = vpack.c.b16 %v5276, %v5272
  %v5337 = vpack.c.b16 %v5277, %v5273
  %v5338 = vpack.c.b16 %v5282, %v5278
  %v5339 = vpack.c.b16 %v5283, %v5279
  %v5340 = vpack.c.b16 %v5284, %v5280
  %v5341 = vpack.c.b16 %v5285, %v5281
  %v5342 = vpack.c.b16 %v5290, %v5286
  %v5343 = vpack.c.b16 %v5291, %v5287
  %v5344 = vpack.c.b16 %v5292, %v5288
  %v5345 = vpack.c.b16 %v5293, %v5289
  %v5346 = vpack.c.b16 %v5298, %v5294
  %v5347 = vpack.c.b16 %v5299, %v5295
  %v5348 = vpack.c.b16 %v5300, %v5296
  %v5349 = vpack.c.b16 %v5301, %v5297
  %v5350 = vpack.c.b16 %v5306, %v5302
  %v5351 = vpack.c.b16 %v5307, %v5303
  %v5352 = vpack.c.b16 %v5308, %v5304
  %v5353 = vpack.c.b16 %v5309, %v5305
  %v5354 = vpack.c.b16 %v5314, %v5310
  %v5355 = vpack.c.b16 %v5315, %v5311
  %v5356 = vpack.c.b16 %v5316, %v5312
  %v5357 = vpack.c.b16 %v5317, %v5313
  %v5358 = vpack.c.b16 %v5322, %v5318
  %v5359 = vpack.c.b16 %v5323, %v5319
  %v5360 = vpack.c.b16 %v5324, %v5320
  %v5361 = vpack.c.b16 %v5325, %v5321
  %v5362 = vpack.c.b16 %v5330, %v5326
  %v5363 = vpack.c.b16 %v5331, %v5327
  %v5364 = vpack.c.b16 %v5332, %v5328
  %v5365 = vpack.c.b16 %v5333, %v5329
  %5398 = vmatprep.subr.bf16.mxu0 %v5335
  %5399 = vmatpush1.bf16.msra.mxu0 %v5334
  %5400 = vmatprep.subr.bf16.mxu0 %v5339
  %5401 = vmatpush1.bf16.msra.mxu0 %v5338
  %5402 = vmatprep.subr.bf16.mxu0 %v5343
  %5403 = vmatpush1.bf16.msra.mxu0 %v5342
  %5404 = vmatprep.subr.bf16.mxu0 %v5347
  %5405 = vmatpush1.bf16.msra.mxu0 %v5346
  %5406 = vmatprep.subr.bf16.mxu0 %v5351
  %5407 = vmatpush1.bf16.msra.mxu0 %v5350
  %5408 = vmatprep.subr.bf16.mxu0 %v5355
  %5409 = vmatpush1.bf16.msra.mxu0 %v5354
  %5410 = vmatprep.subr.bf16.mxu0 %v5359
  %5411 = vmatpush1.bf16.msra.mxu0 %v5358
  %5412 = vmatprep.subr.bf16.mxu0 %v5363
  %5413 = vmatpush1.bf16.msra.mxu0 %v5362
  %5414 = vmatprep.subr.bf16.mxu0 0
  %5415 = vmatpush1.bf16.msra.mxu0 0
  %5416 = vmatprep.subr.bf16.mxu0 0
  %5417 = vmatpush1.bf16.msra.mxu0 0
  %5418 = vmatprep.subr.bf16.mxu0 0
  %5419 = vmatpush1.bf16.msra.mxu0 0
  %5420 = vmatprep.subr.bf16.mxu0 0
  %5421 = vmatpush1.bf16.msra.mxu0 0
  %5422 = vmatprep.subr.bf16.mxu0 0
  %5423 = vmatpush1.bf16.msra.mxu0 0
  %5424 = vmatprep.subr.bf16.mxu0 0
  %5425 = vmatpush1.bf16.msra.mxu0 0
  %5426 = vmatprep.subr.bf16.mxu0 0
  %5427 = vmatpush1.bf16.msra.mxu0 0
  %5428 = vmatprep.subr.bf16.mxu0 0
  %5429 = vmatpush1.bf16.msra.mxu0 0
  %5430 = vmatprep.mubr.bf16.mxu0 0
  %5431 = vmatmul.mubr.bf16.gmra.mrb[0].mxu0 %v4929
  %v5432 = vpop.f32.mrb[0].mxu0
  %v5433 = vadd.f32 %v5191, %v5432
  %v5434 = vpop.f32.mrb[0].mxu0
  %v5435 = vadd.f32 %v5193, %v5434
  %v5436 = vpop.f32.mrb[0].mxu0
  %v5437 = vpop.f32.mrb[0].mxu0
  %5438 = vdwg.mxu0
  %5439 = vmatprep.subr.bf16.mxu0 %v5337
  %5440 = vmatpush1.bf16.msra.mxu0 %v5336
  %5441 = vmatprep.subr.bf16.mxu0 %v5341
  %5442 = vmatpush1.bf16.msra.mxu0 %v5340
  %5443 = vmatprep.subr.bf16.mxu0 %v5345
  %5444 = vmatpush1.bf16.msra.mxu0 %v5344
  %5445 = vmatprep.subr.bf16.mxu0 %v5349
  %5446 = vmatpush1.bf16.msra.mxu0 %v5348
  %5447 = vmatprep.subr.bf16.mxu0 %v5353
  %5448 = vmatpush1.bf16.msra.mxu0 %v5352
  %5449 = vmatprep.subr.bf16.mxu0 %v5357
  %5450 = vmatpush1.bf16.msra.mxu0 %v5356
  %5451 = vmatprep.subr.bf16.mxu0 %v5361
  %5452 = vmatpush1.bf16.msra.mxu0 %v5360
  %5453 = vmatprep.subr.bf16.mxu0 %v5365
  %5454 = vmatpush1.bf16.msra.mxu0 %v5364
  %5455 = vmatprep.subr.bf16.mxu0 0
  %5456 = vmatpush1.bf16.msra.mxu0 0
  %5457 = vmatprep.subr.bf16.mxu0 0
  %5458 = vmatpush1.bf16.msra.mxu0 0
  %5459 = vmatprep.subr.bf16.mxu0 0
  %5460 = vmatpush1.bf16.msra.mxu0 0
  %5461 = vmatprep.subr.bf16.mxu0 0
  %5462 = vmatpush1.bf16.msra.mxu0 0
  %5463 = vmatprep.subr.bf16.mxu0 0
  %5464 = vmatpush1.bf16.msra.mxu0 0
  %5465 = vmatprep.subr.bf16.mxu0 0
  %5466 = vmatpush1.bf16.msra.mxu0 0
  %5467 = vmatprep.subr.bf16.mxu0 0
  %5468 = vmatpush1.bf16.msra.mxu0 0
  %5469 = vmatprep.subr.bf16.mxu0 0
  %5470 = vmatpush1.bf16.msra.mxu0 0
  %5471 = vmatprep.mubr.bf16.mxu0 0
  %5472 = vmatmul.mubr.bf16.gmra.mrb[0].mxu0 %v4929
  %v5473 = vpop.f32.mrb[0].mxu0
  %v5474 = vadd.f32 %v5232, %v5473
  %v5475 = vpop.f32.mrb[0].mxu0
  %v5476 = vadd.f32 %v5234, %v5475
  %v5477 = vpop.f32.mrb[0].mxu0
  %v5478 = vpop.f32.mrb[0].mxu0
  %5479 = vdwg.mxu0
  %v5480 = vld [vmem:[%s4] sm:$0xf]
  %v5482 = vlaneseq
  %v5483 = vshrl.u32 %v5482, 7
  %v5484 = vsub.s32 0, %v5483
  %v5485 = vrot.slane %v5480, %v5484
  %v5486 = vlaneseq
  %v5487 = vshrl.u32 %v5486, 7
  %v5488 = vsub.s32 1, %v5487
  %v5489 = vrot.slane %v5480, %v5488
  %v5490 = vlaneseq
  %v5491 = vshrl.u32 %v5490, 7
  %v5492 = vsub.s32 2, %v5491
  %v5493 = vrot.slane %v5480, %v5492
  %v5494 = vlaneseq
  %v5495 = vshrl.u32 %v5494, 7
  %v5496 = vsub.s32 3, %v5495
  %v5497 = vrot.slane %v5480, %v5496
  %v5502 = vadd.f32 %v5433, %v5485
  %v5503 = vadd.f32 %v5435, %v5489
  %v5504 = vadd.f32 %v5474, %v5493
  %v5505 = vadd.f32 %v5476, %v5497
  %v5506 = vld [vmem:[#allocation5] sm:$0xff]
  %v5507 = vxor.u32 %v5502, 2147483648
  %v5508 = vmul.f32 %v5507, 1.442695
  %v5509 = vpow.pop %v5508
  %v5510 = vadd.f32 %v5509, 1.0
  %v5511 = vrcp.pop %v5510
  %v5512 = vmul.f32 1.0, %v5511
  %v5513 = vxor.u32 %v5503, 2147483648
  %v5514 = vmul.f32 %v5513, 1.442695
  %v5515 = vpow.pop %v5514
  %v5516 = vadd.f32 %v5515, 1.0
  %v5517 = vrcp.pop %v5516
  %v5518 = vmul.f32 1.0, %v5517
  %v5519 = vtanh.pop %v5504
  %v5520 = vxor.u32 %v5505, 2147483648
  %v5521 = vmul.f32 %v5520, 1.442695
  %v5522 = vpow.pop %v5521
  %v5523 = vadd.f32 %v5522, 1.0
  %v5524 = vrcp.pop %v5523
  %v5525 = vmul.f32 1.0, %v5524
  %v5526 = vmul.f32 %v5518, %v5506
  %v5527 = vmul.f32 %v5512, %v5519
  %v5528 = vadd.f32 %v5526, %v5527
  %v5529 = vtanh.pop %v5528
  %v5530 = vmul.f32 %v5525, %v5529
  %5531 = vst [vmem:[#allocation4] sm:$0xff] %v5530
  %5532 = vst [vmem:[#allocation5] sm:$0xff] %v5528
  %s5533 = scalar_lea.vmem %s5, 40
  %5534 = vst [vmem:[%s5533] sm:$0xff] %v5530
  %s5535 = scalar_lea.vmem %s0, 192
  %v5536 = vld [vmem:[%s5535] sm:$0xff]
  %v5537 = vld [vmem:[%s5535 + $0x8] sm:$0xff]
  %v5538 = vld [vmem:[%s5535 + $0x10] sm:$0xff]
  %v5539 = vld [vmem:[%s5535 + $0x18] sm:$0xff]
  %v5540 = vld [vmem:[#allocation2] sm:$0xff]
  %v5541 = vpack.c.bf16 %v5540, %v5540
  %v5542 = vld [vmem:[%s1] sm:$0xff]
  %v5543 = vld [vmem:[%s1 + $0x8] sm:$0xff]
  %v5544 = vld [vmem:[%s1 + $0x10] sm:$0xff]
  %v5545 = vld [vmem:[%s1 + $0x18] sm:$0xff]
  %v5546 = vld [vmem:[%s1 + $0x20] sm:$0xff]
  %v5547 = vld [vmem:[%s1 + $0x28] sm:$0xff]
  %v5548 = vld [vmem:[%s1 + $0x30] sm:$0xff]
  %v5549 = vld [vmem:[%s1 + $0x38] sm:$0xff]
  %v5550 = vld [vmem:[%s1 + $0x40] sm:$0xff]
  %v5551 = vld [vmem:[%s1 + $0x48] sm:$0xff]
  %v5552 = vld [vmem:[%s1 + $0x50] sm:$0xff]
  %v5553 = vld [vmem:[%s1 + $0x58] sm:$0xff]
  %v5554 = vld [vmem:[%s1 + $0x60] sm:$0xff]
  %v5555 = vld [vmem:[%s1 + $0x68] sm:$0xff]
  %v5556 = vld [vmem:[%s1 + $0x70] sm:$0xff]
  %v5557 = vld [vmem:[%s1 + $0x78] sm:$0xff]
  %v5558 = vld [vmem:[%s1 + $0x80] sm:$0xff]
  %v5559 = vld [vmem:[%s1 + $0x88] sm:$0xff]
  %v5560 = vld [vmem:[%s1 + $0x90] sm:$0xff]
  %v5561 = vld [vmem:[%s1 + $0x98] sm:$0xff]
  %v5562 = vld [vmem:[%s1 + $0xa0] sm:$0xff]
  %v5563 = vld [vmem:[%s1 + $0xa8] sm:$0xff]
  %v5564 = vld [vmem:[%s1 + $0xb0] sm:$0xff]
  %v5565 = vld [vmem:[%s1 + $0xb8] sm:$0xff]
  %v5566 = vld [vmem:[%s1 + $0xc0] sm:$0xff]
  %v5567 = vld [vmem:[%s1 + $0xc8] sm:$0xff]
  %v5568 = vld [vmem:[%s1 + $0xd0] sm:$0xff]
  %v5569 = vld [vmem:[%s1 + $0xd8] sm:$0xff]
  %v5570 = vld [vmem:[%s1 + $0xe0] sm:$0xff]
  %v5571 = vld [vmem:[%s1 + $0xe8] sm:$0xff]
  %v5572 = vld [vmem:[%s1 + $0xf0] sm:$0xff]
  %v5573 = vld [vmem:[%s1 + $0xf8] sm:$0xff]
  %v5606 = vunpack.c.l.b16 %v5542
  %v5607 = vunpack.c.h.b16 %v5542
  %v5608 = vunpack.c.l.b16 %v5543
  %v5609 = vunpack.c.h.b16 %v5543
  %v5610 = vunpack.c.l.b16 %v5544
  %v5611 = vunpack.c.h.b16 %v5544
  %v5612 = vunpack.c.l.b16 %v5545
  %v5613 = vunpack.c.h.b16 %v5545
  %v5614 = vunpack.c.l.b16 %v5546
  %v5615 = vunpack.c.h.b16 %v5546
  %v5616 = vunpack.c.l.b16 %v5547
  %v5617 = vunpack.c.h.b16 %v5547
  %v5618 = vunpack.c.l.b16 %v5548
  %v5619 = vunpack.c.h.b16 %v5548
  %v5620 = vunpack.c.l.b16 %v5549
  %v5621 = vunpack.c.h.b16 %v5549
  %v5622 = vunpack.c.l.b16 %v5550
  %v5623 = vunpack.c.h.b16 %v5550
  %v5624 = vunpack.c.l.b16 %v5551
  %v5625 = vunpack.c.h.b16 %v5551
  %v5626 = vunpack.c.l.b16 %v5552
  %v5627 = vunpack.c.h.b16 %v5552
  %v5628 = vunpack.c.l.b16 %v5553
  %v5629 = vunpack.c.h.b16 %v5553
  %v5630 = vunpack.c.l.b16 %v5554
  %v5631 = vunpack.c.h.b16 %v5554
  %v5632 = vunpack.c.l.b16 %v5555
  %v5633 = vunpack.c.h.b16 %v5555
  %v5634 = vunpack.c.l.b16 %v5556
  %v5635 = vunpack.c.h.b16 %v5556
  %v5636 = vunpack.c.l.b16 %v5557
  %v5637 = vunpack.c.h.b16 %v5557
  %v5638 = vunpack.c.l.b16 %v5558
  %v5639 = vunpack.c.h.b16 %v5558
  %v5640 = vunpack.c.l.b16 %v5559
  %v5641 = vunpack.c.h.b16 %v5559
  %v5642 = vunpack.c.l.b16 %v5560
  %v5643 = vunpack.c.h.b16 %v5560
  %v5644 = vunpack.c.l.b16 %v5561
  %v5645 = vunpack.c.h.b16 %v5561
  %v5646 = vunpack.c.l.b16 %v5562
  %v5647 = vunpack.c.h.b16 %v5562
  %v5648 = vunpack.c.l.b16 %v5563
  %v5649 = vunpack.c.h.b16 %v5563
  %v5650 = vunpack.c.l.b16 %v5564
  %v5651 = vunpack.c.h.b16 %v5564
  %v5652 = vunpack.c.l.b16 %v5565
  %v5653 = vunpack.c.h.b16 %v5565
  %v5654 = vunpack.c.l.b16 %v5566
  %v5655 = vunpack.c.h.b16 %v5566
  %v5656 = vunpack.c.l.b16 %v5567
  %v5657 = vunpack.c.h.b16 %v5567
  %v5658 = vunpack.c.l.b16 %v5568
  %v5659 = vunpack.c.h.b16 %v5568
  %v5660 = vunpack.c.l.b16 %v5569
  %v5661 = vunpack.c.h.b16 %v5569
  %v5662 = vunpack.c.l.b16 %v5570
  %v5663 = vunpack.c.h.b16 %v5570
  %v5664 = vunpack.c.l.b16 %v5571
  %v5665 = vunpack.c.h.b16 %v5571
  %v5666 = vunpack.c.l.b16 %v5572
  %v5667 = vunpack.c.h.b16 %v5572
  %v5668 = vunpack.c.l.b16 %v5573
  %v5669 = vunpack.c.h.b16 %v5573
  %v5670 = vpack.c.b16 %v5610, %v5606
  %v5671 = vpack.c.b16 %v5611, %v5607
  %v5672 = vpack.c.b16 %v5612, %v5608
  %v5673 = vpack.c.b16 %v5613, %v5609
  %v5674 = vpack.c.b16 %v5618, %v5614
  %v5675 = vpack.c.b16 %v5619, %v5615
  %v5676 = vpack.c.b16 %v5620, %v5616
  %v5677 = vpack.c.b16 %v5621, %v5617
  %v5678 = vpack.c.b16 %v5626, %v5622
  %v5679 = vpack.c.b16 %v5627, %v5623
  %v5680 = vpack.c.b16 %v5628, %v5624
  %v5681 = vpack.c.b16 %v5629, %v5625
  %v5682 = vpack.c.b16 %v5634, %v5630
  %v5683 = vpack.c.b16 %v5635, %v5631
  %v5684 = vpack.c.b16 %v5636, %v5632
  %v5685 = vpack.c.b16 %v5637, %v5633
  %v5686 = vpack.c.b16 %v5642, %v5638
  %v5687 = vpack.c.b16 %v5643, %v5639
  %v5688 = vpack.c.b16 %v5644, %v5640
  %v5689 = vpack.c.b16 %v5645, %v5641
  %v5690 = vpack.c.b16 %v5650, %v5646
  %v5691 = vpack.c.b16 %v5651, %v5647
  %v5692 = vpack.c.b16 %v5652, %v5648
  %v5693 = vpack.c.b16 %v5653, %v5649
  %v5694 = vpack.c.b16 %v5658, %v5654
  %v5695 = vpack.c.b16 %v5659, %v5655
  %v5696 = vpack.c.b16 %v5660, %v5656
  %v5697 = vpack.c.b16 %v5661, %v5657
  %v5698 = vpack.c.b16 %v5666, %v5662
  %v5699 = vpack.c.b16 %v5667, %v5663
  %v5700 = vpack.c.b16 %v5668, %v5664
  %v5701 = vpack.c.b16 %v5669, %v5665
  %5734 = vmatprep.subr.bf16.mxu0 %v5671
  %5735 = vmatpush1.bf16.msra.mxu0 %v5670
  %5736 = vmatprep.subr.bf16.mxu0 %v5675
  %5737 = vmatpush1.bf16.msra.mxu0 %v5674
  %5738 = vmatprep.subr.bf16.mxu0 %v5679
  %5739 = vmatpush1.bf16.msra.mxu0 %v5678
  %5740 = vmatprep.subr.bf16.mxu0 %v5683
  %5741 = vmatpush1.bf16.msra.mxu0 %v5682
  %5742 = vmatprep.subr.bf16.mxu0 %v5687
  %5743 = vmatpush1.bf16.msra.mxu0 %v5686
  %5744 = vmatprep.subr.bf16.mxu0 %v5691
  %5745 = vmatpush1.bf16.msra.mxu0 %v5690
  %5746 = vmatprep.subr.bf16.mxu0 %v5695
  %5747 = vmatpush1.bf16.msra.mxu0 %v5694
  %5748 = vmatprep.subr.bf16.mxu0 %v5699
  %5749 = vmatpush1.bf16.msra.mxu0 %v5698
  %5750 = vmatprep.subr.bf16.mxu0 0
  %5751 = vmatpush1.bf16.msra.mxu0 0
  %5752 = vmatprep.subr.bf16.mxu0 0
  %5753 = vmatpush1.bf16.msra.mxu0 0
  %5754 = vmatprep.subr.bf16.mxu0 0
  %5755 = vmatpush1.bf16.msra.mxu0 0
  %5756 = vmatprep.subr.bf16.mxu0 0
  %5757 = vmatpush1.bf16.msra.mxu0 0
  %5758 = vmatprep.subr.bf16.mxu0 0
  %5759 = vmatpush1.bf16.msra.mxu0 0
  %5760 = vmatprep.subr.bf16.mxu0 0
  %5761 = vmatpush1.bf16.msra.mxu0 0
  %5762 = vmatprep.subr.bf16.mxu0 0
  %5763 = vmatpush1.bf16.msra.mxu0 0
  %5764 = vmatprep.subr.bf16.mxu0 0
  %5765 = vmatpush1.bf16.msra.mxu0 0
  %5766 = vmatprep.mubr.bf16.mxu0 0
  %5767 = vmatmul.mubr.bf16.gmra.mrb[0].mxu0 %v5541
  %v5768 = vpop.f32.mrb[0].mxu0
  %v5769 = vadd.f32 0.0, %v5768
  %v5770 = vpop.f32.mrb[0].mxu0
  %v5771 = vadd.f32 0.0, %v5770
  %v5772 = vpop.f32.mrb[0].mxu0
  %v5773 = vpop.f32.mrb[0].mxu0
  %5774 = vdwg.mxu0
  %5775 = vmatprep.subr.bf16.mxu0 %v5673
  %5776 = vmatpush1.bf16.msra.mxu0 %v5672
  %5777 = vmatprep.subr.bf16.mxu0 %v5677
  %5778 = vmatpush1.bf16.msra.mxu0 %v5676
  %5779 = vmatprep.subr.bf16.mxu0 %v5681
  %5780 = vmatpush1.bf16.msra.mxu0 %v5680
  %5781 = vmatprep.subr.bf16.mxu0 %v5685
  %5782 = vmatpush1.bf16.msra.mxu0 %v5684
  %5783 = vmatprep.subr.bf16.mxu0 %v5689
  %5784 = vmatpush1.bf16.msra.mxu0 %v5688
  %5785 = vmatprep.subr.bf16.mxu0 %v5693
  %5786 = vmatpush1.bf16.msra.mxu0 %v5692
  %5787 = vmatprep.subr.bf16.mxu0 %v5697
  %5788 = vmatpush1.bf16.msra.mxu0 %v5696
  %5789 = vmatprep.subr.bf16.mxu0 %v5701
  %5790 = vmatpush1.bf16.msra.mxu0 %v5700
  %5791 = vmatprep.subr.bf16.mxu0 0
  %5792 = vmatpush1.bf16.msra.mxu0 0
  %5793 = vmatprep.subr.bf16.mxu0 0
  %5794 = vmatpush1.bf16.msra.mxu0 0
  %5795 = vmatprep.subr.bf16.mxu0 0
  %5796 = vmatpush1.bf16.msra.mxu0 0
  %5797 = vmatprep.subr.bf16.mxu0 0
  %5798 = vmatpush1.bf16.msra.mxu0 0
  %5799 = vmatprep.subr.bf16.mxu0 0
  %5800 = vmatpush1.bf16.msra.mxu0 0
  %5801 = vmatprep.subr.bf16.mxu0 0
  %5802 = vmatpush1.bf16.msra.mxu0 0
  %5803 = vmatprep.subr.bf16.mxu0 0
  %5804 = vmatpush1.bf16.msra.mxu0 0
  %5805 = vmatprep.subr.bf16.mxu0 0
  %5806 = vmatpush1.bf16.msra.mxu0 0
  %5807 = vmatprep.mubr.bf16.mxu0 0
  %5808 = vmatmul.mubr.bf16.gmra.mrb[0].mxu0 %v5541
  %v5809 = vpop.f32.mrb[0].mxu0
  %v5810 = vadd.f32 0.0, %v5809
  %v5811 = vpop.f32.mrb[0].mxu0
  %v5812 = vadd.f32 0.0, %v5811
  %v5813 = vpop.f32.mrb[0].mxu0
  %v5814 = vpop.f32.mrb[0].mxu0
  %5815 = vdwg.mxu0
  %v5816 = vadd.f32 %v5536, %v5769
  %v5817 = vadd.f32 %v5537, %v5771
  %v5818 = vadd.f32 %v5538, %v5810
  %v5819 = vadd.f32 %v5539, %v5812
  %v5820 = vld [vmem:[#allocation3] sm:$0xff]
  %v5821 = vxor.u32 %v5816, 2147483648
  %v5822 = vmul.f32 %v5821, 1.442695
  %v5823 = vpow.pop %v5822
  %v5824 = vadd.f32 %v5823, 1.0
  %v5825 = vrcp.pop %v5824
  %v5826 = vmul.f32 1.0, %v5825
  %v5827 = vxor.u32 %v5817, 2147483648
  %v5828 = vmul.f32 %v5827, 1.442695
  %v5829 = vpow.pop %v5828
  %v5830 = vadd.f32 %v5829, 1.0
  %v5831 = vrcp.pop %v5830
  %v5832 = vmul.f32 1.0, %v5831
  %v5833 = vtanh.pop %v5818
  %v5834 = vxor.u32 %v5819, 2147483648
  %v5835 = vmul.f32 %v5834, 1.442695
  %v5836 = vpow.pop %v5835
  %v5837 = vadd.f32 %v5836, 1.0
  %v5838 = vrcp.pop %v5837
  %v5839 = vmul.f32 1.0, %v5838
  %v5840 = vmul.f32 %v5832, %v5820
  %v5841 = vmul.f32 %v5826, %v5833
  %v5842 = vadd.f32 %v5840, %v5841
  %v5843 = vtanh.pop %v5842
  %v5844 = vmul.f32 %v5839, %v5843
  %5845 = vst [vmem:[#allocation2] sm:$0xff] %v5844
  %5846 = vst [vmem:[#allocation3] sm:$0xff] %v5842
  %v5847 = vpack.c.bf16 %v5844, %v5844
  %v5848 = vld [vmem:[%s2] sm:$0xff]
  %v5849 = vld [vmem:[%s2 + $0x8] sm:$0xff]
  %v5850 = vld [vmem:[%s2 + $0x10] sm:$0xff]
  %v5851 = vld [vmem:[%s2 + $0x18] sm:$0xff]
  %v5852 = vld [vmem:[%s2 + $0x20] sm:$0xff]
  %v5853 = vld [vmem:[%s2 + $0x28] sm:$0xff]
  %v5854 = vld [vmem:[%s2 + $0x30] sm:$0xff]
  %v5855 = vld [vmem:[%s2 + $0x38] sm:$0xff]
  %v5856 = vld [vmem:[%s2 + $0x40] sm:$0xff]
  %v5857 = vld [vmem:[%s2 + $0x48] sm:$0xff]
  %v5858 = vld [vmem:[%s2 + $0x50] sm:$0xff]
  %v5859 = vld [vmem:[%s2 + $0x58] sm:$0xff]
  %v5860 = vld [vmem:[%s2 + $0x60] sm:$0xff]
  %v5861 = vld [vmem:[%s2 + $0x68] sm:$0xff]
  %v5862 = vld [vmem:[%s2 + $0x70] sm:$0xff]
  %v5863 = vld [vmem:[%s2 + $0x78] sm:$0xff]
  %v5864 = vld [vmem:[%s2 + $0x80] sm:$0xff]
  %v5865 = vld [vmem:[%s2 + $0x88] sm:$0xff]
  %v5866 = vld [vmem:[%s2 + $0x90] sm:$0xff]
  %v5867 = vld [vmem:[%s2 + $0x98] sm:$0xff]
  %v5868 = vld [vmem:[%s2 + $0xa0] sm:$0xff]
  %v5869 = vld [vmem:[%s2 + $0xa8] sm:$0xff]
  %v5870 = vld [vmem:[%s2 + $0xb0] sm:$0xff]
  %v5871 = vld [vmem:[%s2 + $0xb8] sm:$0xff]
  %v5872 = vld [vmem:[%s2 + $0xc0] sm:$0xff]
  %v5873 = vld [vmem:[%s2 + $0xc8] sm:$0xff]
  %v5874 = vld [vmem:[%s2 + $0xd0] sm:$0xff]
  %v5875 = vld [vmem:[%s2 + $0xd8] sm:$0xff]
  %v5876 = vld [vmem:[%s2 + $0xe0] sm:$0xff]
  %v5877 = vld [vmem:[%s2 + $0xe8] sm:$0xff]
  %v5878 = vld [vmem:[%s2 + $0xf0] sm:$0xff]
  %v5879 = vld [vmem:[%s2 + $0xf8] sm:$0xff]
  %v5880 = vld [vmem:[#allocation4] sm:$0xff]
  %v5881 = vpack.c.bf16 %v5880, %v5880
  %v5882 = vld [vmem:[%s3] sm:$0xff]
  %v5883 = vld [vmem:[%s3 + $0x8] sm:$0xff]
  %v5884 = vld [vmem:[%s3 + $0x10] sm:$0xff]
  %v5885 = vld [vmem:[%s3 + $0x18] sm:$0xff]
  %v5886 = vld [vmem:[%s3 + $0x20] sm:$0xff]
  %v5887 = vld [vmem:[%s3 + $0x28] sm:$0xff]
  %v5888 = vld [vmem:[%s3 + $0x30] sm:$0xff]
  %v5889 = vld [vmem:[%s3 + $0x38] sm:$0xff]
  %v5890 = vld [vmem:[%s3 + $0x40] sm:$0xff]
  %v5891 = vld [vmem:[%s3 + $0x48] sm:$0xff]
  %v5892 = vld [vmem:[%s3 + $0x50] sm:$0xff]
  %v5893 = vld [vmem:[%s3 + $0x58] sm:$0xff]
  %v5894 = vld [vmem:[%s3 + $0x60] sm:$0xff]
  %v5895 = vld [vmem:[%s3 + $0x68] sm:$0xff]
  %v5896 = vld [vmem:[%s3 + $0x70] sm:$0xff]
  %v5897 = vld [vmem:[%s3 + $0x78] sm:$0xff]
  %v5898 = vld [vmem:[%s3 + $0x80] sm:$0xff]
  %v5899 = vld [vmem:[%s3 + $0x88] sm:$0xff]
  %v5900 = vld [vmem:[%s3 + $0x90] sm:$0xff]
  %v5901 = vld [vmem:[%s3 + $0x98] sm:$0xff]
  %v5902 = vld [vmem:[%s3 + $0xa0] sm:$0xff]
  %v5903 = vld [vmem:[%s3 + $0xa8] sm:$0xff]
  %v5904 = vld [vmem:[%s3 + $0xb0] sm:$0xff]
  %v5905 = vld [vmem:[%s3 + $0xb8] sm:$0xff]
  %v5906 = vld [vmem:[%s3 + $0xc0] sm:$0xff]
  %v5907 = vld [vmem:[%s3 + $0xc8] sm:$0xff]
  %v5908 = vld [vmem:[%s3 + $0xd0] sm:$0xff]
  %v5909 = vld [vmem:[%s3 + $0xd8] sm:$0xff]
  %v5910 = vld [vmem:[%s3 + $0xe0] sm:$0xff]
  %v5911 = vld [vmem:[%s3 + $0xe8] sm:$0xff]
  %v5912 = vld [vmem:[%s3 + $0xf0] sm:$0xff]
  %v5913 = vld [vmem:[%s3 + $0xf8] sm:$0xff]
  %v5946 = vunpack.c.l.b16 %v5882
  %v5947 = vunpack.c.h.b16 %v5882
  %v5948 = vunpack.c.l.b16 %v5883
  %v5949 = vunpack.c.h.b16 %v5883
  %v5950 = vunpack.c.l.b16 %v5884
  %v5951 = vunpack.c.h.b16 %v5884
  %v5952 = vunpack.c.l.b16 %v5885
  %v5953 = vunpack.c.h.b16 %v5885
  %v5954 = vunpack.c.l.b16 %v5886
  %v5955 = vunpack.c.h.b16 %v5886
  %v5956 = vunpack.c.l.b16 %v5887
  %v5957 = vunpack.c.h.b16 %v5887
  %v5958 = vunpack.c.l.b16 %v5888
  %v5959 = vunpack.c.h.b16 %v5888
  %v5960 = vunpack.c.l.b16 %v5889
  %v5961 = vunpack.c.h.b16 %v5889
  %v5962 = vunpack.c.l.b16 %v5890
  %v5963 = vunpack.c.h.b16 %v5890
  %v5964 = vunpack.c.l.b16 %v5891
  %v5965 = vunpack.c.h.b16 %v5891
  %v5966 = vunpack.c.l.b16 %v5892
  %v5967 = vunpack.c.h.b16 %v5892
  %v5968 = vunpack.c.l.b16 %v5893
  %v5969 = vunpack.c.h.b16 %v5893
  %v5970 = vunpack.c.l.b16 %v5894
  %v5971 = vunpack.c.h.b16 %v5894
  %v5972 = vunpack.c.l.b16 %v5895
  %v5973 = vunpack.c.h.b16 %v5895
  %v5974 = vunpack.c.l.b16 %v5896
  %v5975 = vunpack.c.h.b16 %v5896
  %v5976 = vunpack.c.l.b16 %v5897
  %v5977 = vunpack.c.h.b16 %v5897
  %v5978 = vunpack.c.l.b16 %v5898
  %v5979 = vunpack.c.h.b16 %v5898
  %v5980 = vunpack.c.l.b16 %v5899
  %v5981 = vunpack.c.h.b16 %v5899
  %v5982 = vunpack.c.l.b16 %v5900
  %v5983 = vunpack.c.h.b16 %v5900
  %v5984 = vunpack.c.l.b16 %v5901
  %v5985 = vunpack.c.h.b16 %v5901
  %v5986 = vunpack.c.l.b16 %v5902
  %v5987 = vunpack.c.h.b16 %v5902
  %v5988 = vunpack.c.l.b16 %v5903
  %v5989 = vunpack.c.h.b16 %v5903
  %v5990 = vunpack.c.l.b16 %v5904
  %v5991 = vunpack.c.h.b16 %v5904
  %v5992 = vunpack.c.l.b16 %v5905
  %v5993 = vunpack.c.h.b16 %v5905
  %v5994 = vunpack.c.l.b16 %v5906
  %v5995 = vunpack.c.h.b16 %v5906
  %v5996 = vunpack.c.l.b16 %v5907
  %v5997 = vunpack.c.h.b16 %v5907
  %v5998 = vunpack.c.l.b16 %v5908
  %v5999 = vunpack.c.h.b16 %v5908
  %v6000 = vunpack.c.l.b16 %v5909
  %v6001 = vunpack.c.h.b16 %v5909
  %v6002 = vunpack.c.l.b16 %v5910
  %v6003 = vunpack.c.h.b16 %v5910
  %v6004 = vunpack.c.l.b16 %v5911
  %v6005 = vunpack.c.h.b16 %v5911
  %v6006 = vunpack.c.l.b16 %v5912
  %v6007 = vunpack.c.h.b16 %v5912
  %v6008 = vunpack.c.l.b16 %v5913
  %v6009 = vunpack.c.h.b16 %v5913
  %v6010 = vpack.c.b16 %v5950, %v5946
  %v6011 = vpack.c.b16 %v5951, %v5947
  %v6012 = vpack.c.b16 %v5952, %v5948
  %v6013 = vpack.c.b16 %v5953, %v5949
  %v6014 = vpack.c.b16 %v5958, %v5954
  %v6015 = vpack.c.b16 %v5959, %v5955
  %v6016 = vpack.c.b16 %v5960, %v5956
  %v6017 = vpack.c.b16 %v5961, %v5957
  %v6018 = vpack.c.b16 %v5966, %v5962
  %v6019 = vpack.c.b16 %v5967, %v5963
  %v6020 = vpack.c.b16 %v5968, %v5964
  %v6021 = vpack.c.b16 %v5969, %v5965
  %v6022 = vpack.c.b16 %v5974, %v5970
  %v6023 = vpack.c.b16 %v5975, %v5971
  %v6024 = vpack.c.b16 %v5976, %v5972
  %v6025 = vpack.c.b16 %v5977, %v5973
  %v6026 = vpack.c.b16 %v5982, %v5978
  %v6027 = vpack.c.b16 %v5983, %v5979
  %v6028 = vpack.c.b16 %v5984, %v5980
  %v6029 = vpack.c.b16 %v5985, %v5981
  %v6030 = vpack.c.b16 %v5990, %v5986
  %v6031 = vpack.c.b16 %v5991, %v5987
  %v6032 = vpack.c.b16 %v5992, %v5988
  %v6033 = vpack.c.b16 %v5993, %v5989
  %v6034 = vpack.c.b16 %v5998, %v5994
  %v6035 = vpack.c.b16 %v5999, %v5995
  %v6036 = vpack.c.b16 %v6000, %v5996
  %v6037 = vpack.c.b16 %v6001, %v5997
  %v6038 = vpack.c.b16 %v6006, %v6002
  %v6039 = vpack.c.b16 %v6007, %v6003
  %v6040 = vpack.c.b16 %v6008, %v6004
  %v6041 = vpack.c.b16 %v6009, %v6005
  %6074 = vmatprep.subr.bf16.mxu0 %v6011
  %6075 = vmatpush1.bf16.msra.mxu0 %v6010
  %6076 = vmatprep.subr.bf16.mxu0 %v6015
  %6077 = vmatpush1.bf16.msra.mxu0 %v6014
  %6078 = vmatprep.subr.bf16.mxu0 %v6019
  %6079 = vmatpush1.bf16.msra.mxu0 %v6018
  %6080 = vmatprep.subr.bf16.mxu0 %v6023
  %6081 = vmatpush1.bf16.msra.mxu0 %v6022
  %6082 = vmatprep.subr.bf16.mxu0 %v6027
  %6083 = vmatpush1.bf16.msra.mxu0 %v6026
  %6084 = vmatprep.subr.bf16.mxu0 %v6031
  %6085 = vmatpush1.bf16.msra.mxu0 %v6030
  %6086 = vmatprep.subr.bf16.mxu0 %v6035
  %6087 = vmatpush1.bf16.msra.mxu0 %v6034
  %6088 = vmatprep.subr.bf16.mxu0 %v6039
  %6089 = vmatpush1.bf16.msra.mxu0 %v6038
  %6090 = vmatprep.subr.bf16.mxu0 0
  %6091 = vmatpush1.bf16.msra.mxu0 0
  %6092 = vmatprep.subr.bf16.mxu0 0
  %6093 = vmatpush1.bf16.msra.mxu0 0
  %6094 = vmatprep.subr.bf16.mxu0 0
  %6095 = vmatpush1.bf16.msra.mxu0 0
  %6096 = vmatprep.subr.bf16.mxu0 0
  %6097 = vmatpush1.bf16.msra.mxu0 0
  %6098 = vmatprep.subr.bf16.mxu0 0
  %6099 = vmatpush1.bf16.msra.mxu0 0
  %6100 = vmatprep.subr.bf16.mxu0 0
  %6101 = vmatpush1.bf16.msra.mxu0 0
  %6102 = vmatprep.subr.bf16.mxu0 0
  %6103 = vmatpush1.bf16.msra.mxu0 0
  %6104 = vmatprep.subr.bf16.mxu0 0
  %6105 = vmatpush1.bf16.msra.mxu0 0
  %6106 = vmatprep.mubr.bf16.mxu0 0
  %6107 = vmatmul.mubr.bf16.gmra.mrb[0].mxu0 %v5881
  %v6108 = vpop.f32.mrb[0].mxu0
  %v6109 = vadd.f32 0.0, %v6108
  %v6110 = vpop.f32.mrb[0].mxu0
  %v6111 = vadd.f32 0.0, %v6110
  %v6112 = vpop.f32.mrb[0].mxu0
  %v6113 = vpop.f32.mrb[0].mxu0
  %6114 = vdwg.mxu0
  %6115 = vmatprep.subr.bf16.mxu0 %v6013
  %6116 = vmatpush1.bf16.msra.mxu0 %v6012
  %6117 = vmatprep.subr.bf16.mxu0 %v6017
  %6118 = vmatpush1.bf16.msra.mxu0 %v6016
  %6119 = vmatprep.subr.bf16.mxu0 %v6021
  %6120 = vmatpush1.bf16.msra.mxu0 %v6020
  %6121 = vmatprep.subr.bf16.mxu0 %v6025
  %6122 = vmatpush1.bf16.msra.mxu0 %v6024
  %6123 = vmatprep.subr.bf16.mxu0 %v6029
  %6124 = vmatpush1.bf16.msra.mxu0 %v6028
  %6125 = vmatprep.subr.bf16.mxu0 %v6033
  %6126 = vmatpush1.bf16.msra.mxu0 %v6032
  %6127 = vmatprep.subr.bf16.mxu0 %v6037
  %6128 = vmatpush1.bf16.msra.mxu0 %v6036
  %6129 = vmatprep.subr.bf16.mxu0 %v6041
  %6130 = vmatpush1.bf16.msra.mxu0 %v6040
  %6131 = vmatprep.subr.bf16.mxu0 0
  %6132 = vmatpush1.bf16.msra.mxu0 0
  %6133 = vmatprep.subr.bf16.mxu0 0
  %6134 = vmatpush1.bf16.msra.mxu0 0
  %6135 = vmatprep.subr.bf16.mxu0 0
  %6136 = vmatpush1.bf16.msra.mxu0 0
  %6137 = vmatprep.subr.bf16.mxu0 0
  %6138 = vmatpush1.bf16.msra.mxu0 0
  %6139 = vmatprep.subr.bf16.mxu0 0
  %6140 = vmatpush1.bf16.msra.mxu0 0
  %6141 = vmatprep.subr.bf16.mxu0 0
  %6142 = vmatpush1.bf16.msra.mxu0 0
  %6143 = vmatprep.subr.bf16.mxu0 0
  %6144 = vmatpush1.bf16.msra.mxu0 0
  %6145 = vmatprep.subr.bf16.mxu0 0
  %6146 = vmatpush1.bf16.msra.mxu0 0
  %6147 = vmatprep.mubr.bf16.mxu0 0
  %6148 = vmatmul.mubr.bf16.gmra.mrb[0].mxu0 %v5881
  %v6149 = vpop.f32.mrb[0].mxu0
  %v6150 = vadd.f32 0.0, %v6149
  %v6151 = vpop.f32.mrb[0].mxu0
  %v6152 = vadd.f32 0.0, %v6151
  %v6153 = vpop.f32.mrb[0].mxu0
  %v6154 = vpop.f32.mrb[0].mxu0
  %6155 = vdwg.mxu0
  %v6188 = vunpack.c.l.b16 %v5848
  %v6189 = vunpack.c.h.b16 %v5848
  %v6190 = vunpack.c.l.b16 %v5849
  %v6191 = vunpack.c.h.b16 %v5849
  %v6192 = vunpack.c.l.b16 %v5850
  %v6193 = vunpack.c.h.b16 %v5850
  %v6194 = vunpack.c.l.b16 %v5851
  %v6195 = vunpack.c.h.b16 %v5851
  %v6196 = vunpack.c.l.b16 %v5852
  %v6197 = vunpack.c.h.b16 %v5852
  %v6198 = vunpack.c.l.b16 %v5853
  %v6199 = vunpack.c.h.b16 %v5853
  %v6200 = vunpack.c.l.b16 %v5854
  %v6201 = vunpack.c.h.b16 %v5854
  %v6202 = vunpack.c.l.b16 %v5855
  %v6203 = vunpack.c.h.b16 %v5855
  %v6204 = vunpack.c.l.b16 %v5856
  %v6205 = vunpack.c.h.b16 %v5856
  %v6206 = vunpack.c.l.b16 %v5857
  %v6207 = vunpack.c.h.b16 %v5857
  %v6208 = vunpack.c.l.b16 %v5858
  %v6209 = vunpack.c.h.b16 %v5858
  %v6210 = vunpack.c.l.b16 %v5859
  %v6211 = vunpack.c.h.b16 %v5859
  %v6212 = vunpack.c.l.b16 %v5860
  %v6213 = vunpack.c.h.b16 %v5860
  %v6214 = vunpack.c.l.b16 %v5861
  %v6215 = vunpack.c.h.b16 %v5861
  %v6216 = vunpack.c.l.b16 %v5862
  %v6217 = vunpack.c.h.b16 %v5862
  %v6218 = vunpack.c.l.b16 %v5863
  %v6219 = vunpack.c.h.b16 %v5863
  %v6220 = vunpack.c.l.b16 %v5864
  %v6221 = vunpack.c.h.b16 %v5864
  %v6222 = vunpack.c.l.b16 %v5865
  %v6223 = vunpack.c.h.b16 %v5865
  %v6224 = vunpack.c.l.b16 %v5866
  %v6225 = vunpack.c.h.b16 %v5866
  %v6226 = vunpack.c.l.b16 %v5867
  %v6227 = vunpack.c.h.b16 %v5867
  %v6228 = vunpack.c.l.b16 %v5868
  %v6229 = vunpack.c.h.b16 %v5868
  %v6230 = vunpack.c.l.b16 %v5869
  %v6231 = vunpack.c.h.b16 %v5869
  %v6232 = vunpack.c.l.b16 %v5870
  %v6233 = vunpack.c.h.b16 %v5870
  %v6234 = vunpack.c.l.b16 %v5871
  %v6235 = vunpack.c.h.b16 %v5871
  %v6236 = vunpack.c.l.b16 %v5872
  %v6237 = vunpack.c.h.b16 %v5872
  %v6238 = vunpack.c.l.b16 %v5873
  %v6239 = vunpack.c.h.b16 %v5873
  %v6240 = vunpack.c.l.b16 %v5874
  %v6241 = vunpack.c.h.b16 %v5874
  %v6242 = vunpack.c.l.b16 %v5875
  %v6243 = vunpack.c.h.b16 %v5875
  %v6244 = vunpack.c.l.b16 %v5876
  %v6245 = vunpack.c.h.b16 %v5876
  %v6246 = vunpack.c.l.b16 %v5877
  %v6247 = vunpack.c.h.b16 %v5877
  %v6248 = vunpack.c.l.b16 %v5878
  %v6249 = vunpack.c.h.b16 %v5878
  %v6250 = vunpack.c.l.b16 %v5879
  %v6251 = vunpack.c.h.b16 %v5879
  %v6252 = vpack.c.b16 %v6192, %v6188
  %v6253 = vpack.c.b16 %v6193, %v6189
  %v6254 = vpack.c.b16 %v6194, %v6190
  %v6255 = vpack.c.b16 %v6195, %v6191
  %v6256 = vpack.c.b16 %v6200, %v6196
  %v6257 = vpack.c.b16 %v6201, %v6197
  %v6258 = vpack.c.b16 %v6202, %v6198
  %v6259 = vpack.c.b16 %v6203, %v6199
  %v6260 = vpack.c.b16 %v6208, %v6204
  %v6261 = vpack.c.b16 %v6209, %v6205
  %v6262 = vpack.c.b16 %v6210, %v6206
  %v6263 = vpack.c.b16 %v6211, %v6207
  %v6264 = vpack.c.b16 %v6216, %v6212
  %v6265 = vpack.c.b16 %v6217, %v6213
  %v6266 = vpack.c.b16 %v6218, %v6214
  %v6267 = vpack.c.b16 %v6219, %v6215
  %v6268 = vpack.c.b16 %v6224, %v6220
  %v6269 = vpack.c.b16 %v6225, %v6221
  %v6270 = vpack.c.b16 %v6226, %v6222
  %v6271 = vpack.c.b16 %v6227, %v6223
  %v6272 = vpack.c.b16 %v6232, %v6228
  %v6273 = vpack.c.b16 %v6233, %v6229
  %v6274 = vpack.c.b16 %v6234, %v6230
  %v6275 = vpack.c.b16 %v6235, %v6231
  %v6276 = vpack.c.b16 %v6240, %v6236
  %v6277 = vpack.c.b16 %v6241, %v6237
  %v6278 = vpack.c.b16 %v6242, %v6238
  %v6279 = vpack.c.b16 %v6243, %v6239
  %v6280 = vpack.c.b16 %v6248, %v6244
  %v6281 = vpack.c.b16 %v6249, %v6245
  %v6282 = vpack.c.b16 %v6250, %v6246
  %v6283 = vpack.c.b16 %v6251, %v6247
  %6316 = vmatprep.subr.bf16.mxu0 %v6253
  %6317 = vmatpush1.bf16.msra.mxu0 %v6252
  %6318 = vmatprep.subr.bf16.mxu0 %v6257
  %6319 = vmatpush1.bf16.msra.mxu0 %v6256
  %6320 = vmatprep.subr.bf16.mxu0 %v6261
  %6321 = vmatpush1.bf16.msra.mxu0 %v6260
  %6322 = vmatprep.subr.bf16.mxu0 %v6265
  %6323 = vmatpush1.bf16.msra.mxu0 %v6264
  %6324 = vmatprep.subr.bf16.mxu0 %v6269
  %6325 = vmatpush1.bf16.msra.mxu0 %v6268
  %6326 = vmatprep.subr.bf16.mxu0 %v6273
  %6327 = vmatpush1.bf16.msra.mxu0 %v6272
  %6328 = vmatprep.subr.bf16.mxu0 %v6277
  %6329 = vmatpush1.bf16.msra.mxu0 %v6276
  %6330 = vmatprep.subr.bf16.mxu0 %v6281
  %6331 = vmatpush1.bf16.msra.mxu0 %v6280
  %6332 = vmatprep.subr.bf16.mxu0 0
  %6333 = vmatpush1.bf16.msra.mxu0 0
  %6334 = vmatprep.subr.bf16.mxu0 0
  %6335 = vmatpush1.bf16.msra.mxu0 0
  %6336 = vmatprep.subr.bf16.mxu0 0
  %6337 = vmatpush1.bf16.msra.mxu0 0
  %6338 = vmatprep.subr.bf16.mxu0 0
  %6339 = vmatpush1.bf16.msra.mxu0 0
  %6340 = vmatprep.subr.bf16.mxu0 0
  %6341 = vmatpush1.bf16.msra.mxu0 0
  %6342 = vmatprep.subr.bf16.mxu0 0
  %6343 = vmatpush1.bf16.msra.mxu0 0
  %6344 = vmatprep.subr.bf16.mxu0 0
  %6345 = vmatpush1.bf16.msra.mxu0 0
  %6346 = vmatprep.subr.bf16.mxu0 0
  %6347 = vmatpush1.bf16.msra.mxu0 0
  %6348 = vmatprep.mubr.bf16.mxu0 0
  %6349 = vmatmul.mubr.bf16.gmra.mrb[0].mxu0 %v5847
  %v6350 = vpop.f32.mrb[0].mxu0
  %v6351 = vadd.f32 %v6109, %v6350
  %v6352 = vpop.f32.mrb[0].mxu0
  %v6353 = vadd.f32 %v6111, %v6352
  %v6354 = vpop.f32.mrb[0].mxu0
  %v6355 = vpop.f32.mrb[0].mxu0
  %6356 = vdwg.mxu0
  %6357 = vmatprep.subr.bf16.mxu0 %v6255
  %6358 = vmatpush1.bf16.msra.mxu0 %v6254
  %6359 = vmatprep.subr.bf16.mxu0 %v6259
  %6360 = vmatpush1.bf16.msra.mxu0 %v6258
  %6361 = vmatprep.subr.bf16.mxu0 %v6263
  %6362 = vmatpush1.bf16.msra.mxu0 %v6262
  %6363 = vmatprep.subr.bf16.mxu0 %v6267
  %6364 = vmatpush1.bf16.msra.mxu0 %v6266
  %6365 = vmatprep.subr.bf16.mxu0 %v6271
  %6366 = vmatpush1.bf16.msra.mxu0 %v6270
  %6367 = vmatprep.subr.bf16.mxu0 %v6275
  %6368 = vmatpush1.bf16.msra.mxu0 %v6274
  %6369 = vmatprep.subr.bf16.mxu0 %v6279
  %6370 = vmatpush1.bf16.msra.mxu0 %v6278
  %6371 = vmatprep.subr.bf16.mxu0 %v6283
  %6372 = vmatpush1.bf16.msra.mxu0 %v6282
  %6373 = vmatprep.subr.bf16.mxu0 0
  %6374 = vmatpush1.bf16.msra.mxu0 0
  %6375 = vmatprep.subr.bf16.mxu0 0
  %6376 = vmatpush1.bf16.msra.mxu0 0
  %6377 = vmatprep.subr.bf16.mxu0 0
  %6378 = vmatpush1.bf16.msra.mxu0 0
  %6379 = vmatprep.subr.bf16.mxu0 0
  %6380 = vmatpush1.bf16.msra.mxu0 0
  %6381 = vmatprep.subr.bf16.mxu0 0
  %6382 = vmatpush1.bf16.msra.mxu0 0
  %6383 = vmatprep.subr.bf16.mxu0 0
  %6384 = vmatpush1.bf16.msra.mxu0 0
  %6385 = vmatprep.subr.bf16.mxu0 0
  %6386 = vmatpush1.bf16.msra.mxu0 0
  %6387 = vmatprep.subr.bf16.mxu0 0
  %6388 = vmatpush1.bf16.msra.mxu0 0
  %6389 = vmatprep.mubr.bf16.mxu0 0
  %6390 = vmatmul.mubr.bf16.gmra.mrb[0].mxu0 %v5847
  %v6391 = vpop.f32.mrb[0].mxu0
  %v6392 = vadd.f32 %v6150, %v6391
  %v6393 = vpop.f32.mrb[0].mxu0
  %v6394 = vadd.f32 %v6152, %v6393
  %v6395 = vpop.f32.mrb[0].mxu0
  %v6396 = vpop.f32.mrb[0].mxu0
  %6397 = vdwg.mxu0
  %v6398 = vld [vmem:[%s4] sm:$0xf]
  %v6400 = vlaneseq
  %v6401 = vshrl.u32 %v6400, 7
  %v6402 = vsub.s32 0, %v6401
  %v6403 = vrot.slane %v6398, %v6402
  %v6404 = vlaneseq
  %v6405 = vshrl.u32 %v6404, 7
  %v6406 = vsub.s32 1, %v6405
  %v6407 = vrot.slane %v6398, %v6406
  %v6408 = vlaneseq
  %v6409 = vshrl.u32 %v6408, 7
  %v6410 = vsub.s32 2, %v6409
  %v6411 = vrot.slane %v6398, %v6410
  %v6412 = vlaneseq
  %v6413 = vshrl.u32 %v6412, 7
  %v6414 = vsub.s32 3, %v6413
  %v6415 = vrot.slane %v6398, %v6414
  %v6420 = vadd.f32 %v6351, %v6403
  %v6421 = vadd.f32 %v6353, %v6407
  %v6422 = vadd.f32 %v6392, %v6411
  %v6423 = vadd.f32 %v6394, %v6415
  %v6424 = vld [vmem:[#allocation5] sm:$0xff]
  %v6425 = vxor.u32 %v6420, 2147483648
  %v6426 = vmul.f32 %v6425, 1.442695
  %v6427 = vpow.pop %v6426
  %v6428 = vadd.f32 %v6427, 1.0
  %v6429 = vrcp.pop %v6428
  %v6430 = vmul.f32 1.0, %v6429
  %v6431 = vxor.u32 %v6421, 2147483648
  %v6432 = vmul.f32 %v6431, 1.442695
  %v6433 = vpow.pop %v6432
  %v6434 = vadd.f32 %v6433, 1.0
  %v6435 = vrcp.pop %v6434
  %v6436 = vmul.f32 1.0, %v6435
  %v6437 = vtanh.pop %v6422
  %v6438 = vxor.u32 %v6423, 2147483648
  %v6439 = vmul.f32 %v6438, 1.442695
  %v6440 = vpow.pop %v6439
  %v6441 = vadd.f32 %v6440, 1.0
  %v6442 = vrcp.pop %v6441
  %v6443 = vmul.f32 1.0, %v6442
  %v6444 = vmul.f32 %v6436, %v6424
  %v6445 = vmul.f32 %v6430, %v6437
  %v6446 = vadd.f32 %v6444, %v6445
  %v6447 = vtanh.pop %v6446
  %v6448 = vmul.f32 %v6443, %v6447
  %6449 = vst [vmem:[#allocation4] sm:$0xff] %v6448
  %6450 = vst [vmem:[#allocation5] sm:$0xff] %v6446
  %s6451 = scalar_lea.vmem %s5, 48
  %6452 = vst [vmem:[%s6451] sm:$0xff] %v6448
  %s6453 = scalar_lea.vmem %s0, 224
  %v6454 = vld [vmem:[%s6453] sm:$0xff]
  %v6455 = vld [vmem:[%s6453 + $0x8] sm:$0xff]
  %v6456 = vld [vmem:[%s6453 + $0x10] sm:$0xff]
  %v6457 = vld [vmem:[%s6453 + $0x18] sm:$0xff]
  %v6458 = vld [vmem:[#allocation2] sm:$0xff]
  %v6459 = vpack.c.bf16 %v6458, %v6458
  %v6460 = vld [vmem:[%s1] sm:$0xff]
  %v6461 = vld [vmem:[%s1 + $0x8] sm:$0xff]
  %v6462 = vld [vmem:[%s1 + $0x10] sm:$0xff]
  %v6463 = vld [vmem:[%s1 + $0x18] sm:$0xff]
  %v6464 = vld [vmem:[%s1 + $0x20] sm:$0xff]
  %v6465 = vld [vmem:[%s1 + $0x28] sm:$0xff]
  %v6466 = vld [vmem:[%s1 + $0x30] sm:$0xff]
  %v6467 = vld [vmem:[%s1 + $0x38] sm:$0xff]
  %v6468 = vld [vmem:[%s1 + $0x40] sm:$0xff]
  %v6469 = vld [vmem:[%s1 + $0x48] sm:$0xff]
  %v6470 = vld [vmem:[%s1 + $0x50] sm:$0xff]
  %v6471 = vld [vmem:[%s1 + $0x58] sm:$0xff]
  %v6472 = vld [vmem:[%s1 + $0x60] sm:$0xff]
  %v6473 = vld [vmem:[%s1 + $0x68] sm:$0xff]
  %v6474 = vld [vmem:[%s1 + $0x70] sm:$0xff]
  %v6475 = vld [vmem:[%s1 + $0x78] sm:$0xff]
  %v6476 = vld [vmem:[%s1 + $0x80] sm:$0xff]
  %v6477 = vld [vmem:[%s1 + $0x88] sm:$0xff]
  %v6478 = vld [vmem:[%s1 + $0x90] sm:$0xff]
  %v6479 = vld [vmem:[%s1 + $0x98] sm:$0xff]
  %v6480 = vld [vmem:[%s1 + $0xa0] sm:$0xff]
  %v6481 = vld [vmem:[%s1 + $0xa8] sm:$0xff]
  %v6482 = vld [vmem:[%s1 + $0xb0] sm:$0xff]
  %v6483 = vld [vmem:[%s1 + $0xb8] sm:$0xff]
  %v6484 = vld [vmem:[%s1 + $0xc0] sm:$0xff]
  %v6485 = vld [vmem:[%s1 + $0xc8] sm:$0xff]
  %v6486 = vld [vmem:[%s1 + $0xd0] sm:$0xff]
  %v6487 = vld [vmem:[%s1 + $0xd8] sm:$0xff]
  %v6488 = vld [vmem:[%s1 + $0xe0] sm:$0xff]
  %v6489 = vld [vmem:[%s1 + $0xe8] sm:$0xff]
  %v6490 = vld [vmem:[%s1 + $0xf0] sm:$0xff]
  %v6491 = vld [vmem:[%s1 + $0xf8] sm:$0xff]
  %v6524 = vunpack.c.l.b16 %v6460
  %v6525 = vunpack.c.h.b16 %v6460
  %v6526 = vunpack.c.l.b16 %v6461
  %v6527 = vunpack.c.h.b16 %v6461
  %v6528 = vunpack.c.l.b16 %v6462
  %v6529 = vunpack.c.h.b16 %v6462
  %v6530 = vunpack.c.l.b16 %v6463
  %v6531 = vunpack.c.h.b16 %v6463
  %v6532 = vunpack.c.l.b16 %v6464
  %v6533 = vunpack.c.h.b16 %v6464
  %v6534 = vunpack.c.l.b16 %v6465
  %v6535 = vunpack.c.h.b16 %v6465
  %v6536 = vunpack.c.l.b16 %v6466
  %v6537 = vunpack.c.h.b16 %v6466
  %v6538 = vunpack.c.l.b16 %v6467
  %v6539 = vunpack.c.h.b16 %v6467
  %v6540 = vunpack.c.l.b16 %v6468
  %v6541 = vunpack.c.h.b16 %v6468
  %v6542 = vunpack.c.l.b16 %v6469
  %v6543 = vunpack.c.h.b16 %v6469
  %v6544 = vunpack.c.l.b16 %v6470
  %v6545 = vunpack.c.h.b16 %v6470
  %v6546 = vunpack.c.l.b16 %v6471
  %v6547 = vunpack.c.h.b16 %v6471
  %v6548 = vunpack.c.l.b16 %v6472
  %v6549 = vunpack.c.h.b16 %v6472
  %v6550 = vunpack.c.l.b16 %v6473
  %v6551 = vunpack.c.h.b16 %v6473
  %v6552 = vunpack.c.l.b16 %v6474
  %v6553 = vunpack.c.h.b16 %v6474
  %v6554 = vunpack.c.l.b16 %v6475
  %v6555 = vunpack.c.h.b16 %v6475
  %v6556 = vunpack.c.l.b16 %v6476
  %v6557 = vunpack.c.h.b16 %v6476
  %v6558 = vunpack.c.l.b16 %v6477
  %v6559 = vunpack.c.h.b16 %v6477
  %v6560 = vunpack.c.l.b16 %v6478
  %v6561 = vunpack.c.h.b16 %v6478
  %v6562 = vunpack.c.l.b16 %v6479
  %v6563 = vunpack.c.h.b16 %v6479
  %v6564 = vunpack.c.l.b16 %v6480
  %v6565 = vunpack.c.h.b16 %v6480
  %v6566 = vunpack.c.l.b16 %v6481
  %v6567 = vunpack.c.h.b16 %v6481
  %v6568 = vunpack.c.l.b16 %v6482
  %v6569 = vunpack.c.h.b16 %v6482
  %v6570 = vunpack.c.l.b16 %v6483
  %v6571 = vunpack.c.h.b16 %v6483
  %v6572 = vunpack.c.l.b16 %v6484
  %v6573 = vunpack.c.h.b16 %v6484
  %v6574 = vunpack.c.l.b16 %v6485
  %v6575 = vunpack.c.h.b16 %v6485
  %v6576 = vunpack.c.l.b16 %v6486
  %v6577 = vunpack.c.h.b16 %v6486
  %v6578 = vunpack.c.l.b16 %v6487
  %v6579 = vunpack.c.h.b16 %v6487
  %v6580 = vunpack.c.l.b16 %v6488
  %v6581 = vunpack.c.h.b16 %v6488
  %v6582 = vunpack.c.l.b16 %v6489
  %v6583 = vunpack.c.h.b16 %v6489
  %v6584 = vunpack.c.l.b16 %v6490
  %v6585 = vunpack.c.h.b16 %v6490
  %v6586 = vunpack.c.l.b16 %v6491
  %v6587 = vunpack.c.h.b16 %v6491
  %v6588 = vpack.c.b16 %v6528, %v6524
  %v6589 = vpack.c.b16 %v6529, %v6525
  %v6590 = vpack.c.b16 %v6530, %v6526
  %v6591 = vpack.c.b16 %v6531, %v6527
  %v6592 = vpack.c.b16 %v6536, %v6532
  %v6593 = vpack.c.b16 %v6537, %v6533
  %v6594 = vpack.c.b16 %v6538, %v6534
  %v6595 = vpack.c.b16 %v6539, %v6535
  %v6596 = vpack.c.b16 %v6544, %v6540
  %v6597 = vpack.c.b16 %v6545, %v6541
  %v6598 = vpack.c.b16 %v6546, %v6542
  %v6599 = vpack.c.b16 %v6547, %v6543
  %v6600 = vpack.c.b16 %v6552, %v6548
  %v6601 = vpack.c.b16 %v6553, %v6549
  %v6602 = vpack.c.b16 %v6554, %v6550
  %v6603 = vpack.c.b16 %v6555, %v6551
  %v6604 = vpack.c.b16 %v6560, %v6556
  %v6605 = vpack.c.b16 %v6561, %v6557
  %v6606 = vpack.c.b16 %v6562, %v6558
  %v6607 = vpack.c.b16 %v6563, %v6559
  %v6608 = vpack.c.b16 %v6568, %v6564
  %v6609 = vpack.c.b16 %v6569, %v6565
  %v6610 = vpack.c.b16 %v6570, %v6566
  %v6611 = vpack.c.b16 %v6571, %v6567
  %v6612 = vpack.c.b16 %v6576, %v6572
  %v6613 = vpack.c.b16 %v6577, %v6573
  %v6614 = vpack.c.b16 %v6578, %v6574
  %v6615 = vpack.c.b16 %v6579, %v6575
  %v6616 = vpack.c.b16 %v6584, %v6580
  %v6617 = vpack.c.b16 %v6585, %v6581
  %v6618 = vpack.c.b16 %v6586, %v6582
  %v6619 = vpack.c.b16 %v6587, %v6583
  %6652 = vmatprep.subr.bf16.mxu0 %v6589
  %6653 = vmatpush1.bf16.msra.mxu0 %v6588
  %6654 = vmatprep.subr.bf16.mxu0 %v6593
  %6655 = vmatpush1.bf16.msra.mxu0 %v6592
  %6656 = vmatprep.subr.bf16.mxu0 %v6597
  %6657 = vmatpush1.bf16.msra.mxu0 %v6596
  %6658 = vmatprep.subr.bf16.mxu0 %v6601
  %6659 = vmatpush1.bf16.msra.mxu0 %v6600
  %6660 = vmatprep.subr.bf16.mxu0 %v6605
  %6661 = vmatpush1.bf16.msra.mxu0 %v6604
  %6662 = vmatprep.subr.bf16.mxu0 %v6609
  %6663 = vmatpush1.bf16.msra.mxu0 %v6608
  %6664 = vmatprep.subr.bf16.mxu0 %v6613
  %6665 = vmatpush1.bf16.msra.mxu0 %v6612
  %6666 = vmatprep.subr.bf16.mxu0 %v6617
  %6667 = vmatpush1.bf16.msra.mxu0 %v6616
  %6668 = vmatprep.subr.bf16.mxu0 0
  %6669 = vmatpush1.bf16.msra.mxu0 0
  %6670 = vmatprep.subr.bf16.mxu0 0
  %6671 = vmatpush1.bf16.msra.mxu0 0
  %6672 = vmatprep.subr.bf16.mxu0 0
  %6673 = vmatpush1.bf16.msra.mxu0 0
  %6674 = vmatprep.subr.bf16.mxu0 0
  %6675 = vmatpush1.bf16.msra.mxu0 0
  %6676 = vmatprep.subr.bf16.mxu0 0
  %6677 = vmatpush1.bf16.msra.mxu0 0
  %6678 = vmatprep.subr.bf16.mxu0 0
  %6679 = vmatpush1.bf16.msra.mxu0 0
  %6680 = vmatprep.subr.bf16.mxu0 0
  %6681 = vmatpush1.bf16.msra.mxu0 0
  %6682 = vmatprep.subr.bf16.mxu0 0
  %6683 = vmatpush1.bf16.msra.mxu0 0
  %6684 = vmatprep.mubr.bf16.mxu0 0
  %6685 = vmatmul.mubr.bf16.gmra.mrb[0].mxu0 %v6459
  %v6686 = vpop.f32.mrb[0].mxu0
  %v6687 = vadd.f32 0.0, %v6686
  %v6688 = vpop.f32.mrb[0].mxu0
  %v6689 = vadd.f32 0.0, %v6688
  %v6690 = vpop.f32.mrb[0].mxu0
  %v6691 = vpop.f32.mrb[0].mxu0
  %6692 = vdwg.mxu0
  %6693 = vmatprep.subr.bf16.mxu0 %v6591
  %6694 = vmatpush1.bf16.msra.mxu0 %v6590
  %6695 = vmatprep.subr.bf16.mxu0 %v6595
  %6696 = vmatpush1.bf16.msra.mxu0 %v6594
  %6697 = vmatprep.subr.bf16.mxu0 %v6599
  %6698 = vmatpush1.bf16.msra.mxu0 %v6598
  %6699 = vmatprep.subr.bf16.mxu0 %v6603
  %6700 = vmatpush1.bf16.msra.mxu0 %v6602
  %6701 = vmatprep.subr.bf16.mxu0 %v6607
  %6702 = vmatpush1.bf16.msra.mxu0 %v6606
  %6703 = vmatprep.subr.bf16.mxu0 %v6611
  %6704 = vmatpush1.bf16.msra.mxu0 %v6610
  %6705 = vmatprep.subr.bf16.mxu0 %v6615
  %6706 = vmatpush1.bf16.msra.mxu0 %v6614
  %6707 = vmatprep.subr.bf16.mxu0 %v6619
  %6708 = vmatpush1.bf16.msra.mxu0 %v6618
  %6709 = vmatprep.subr.bf16.mxu0 0
  %6710 = vmatpush1.bf16.msra.mxu0 0
  %6711 = vmatprep.subr.bf16.mxu0 0
  %6712 = vmatpush1.bf16.msra.mxu0 0
  %6713 = vmatprep.subr.bf16.mxu0 0
  %6714 = vmatpush1.bf16.msra.mxu0 0
  %6715 = vmatprep.subr.bf16.mxu0 0
  %6716 = vmatpush1.bf16.msra.mxu0 0
  %6717 = vmatprep.subr.bf16.mxu0 0
  %6718 = vmatpush1.bf16.msra.mxu0 0
  %6719 = vmatprep.subr.bf16.mxu0 0
  %6720 = vmatpush1.bf16.msra.mxu0 0
  %6721 = vmatprep.subr.bf16.mxu0 0
  %6722 = vmatpush1.bf16.msra.mxu0 0
  %6723 = vmatprep.subr.bf16.mxu0 0
  %6724 = vmatpush1.bf16.msra.mxu0 0
  %6725 = vmatprep.mubr.bf16.mxu0 0
  %6726 = vmatmul.mubr.bf16.gmra.mrb[0].mxu0 %v6459
  %v6727 = vpop.f32.mrb[0].mxu0
  %v6728 = vadd.f32 0.0, %v6727
  %v6729 = vpop.f32.mrb[0].mxu0
  %v6730 = vadd.f32 0.0, %v6729
  %v6731 = vpop.f32.mrb[0].mxu0
  %v6732 = vpop.f32.mrb[0].mxu0
  %6733 = vdwg.mxu0
  %v6734 = vadd.f32 %v6454, %v6687
  %v6735 = vadd.f32 %v6455, %v6689
  %v6736 = vadd.f32 %v6456, %v6728
  %v6737 = vadd.f32 %v6457, %v6730
  %v6738 = vld [vmem:[#allocation3] sm:$0xff]
  %v6739 = vxor.u32 %v6734, 2147483648
  %v6740 = vmul.f32 %v6739, 1.442695
  %v6741 = vpow.pop %v6740
  %v6742 = vadd.f32 %v6741, 1.0
  %v6743 = vrcp.pop %v6742
  %v6744 = vmul.f32 1.0, %v6743
  %v6745 = vxor.u32 %v6735, 2147483648
  %v6746 = vmul.f32 %v6745, 1.442695
  %v6747 = vpow.pop %v6746
  %v6748 = vadd.f32 %v6747, 1.0
  %v6749 = vrcp.pop %v6748
  %v6750 = vmul.f32 1.0, %v6749
  %v6751 = vtanh.pop %v6736
  %v6752 = vxor.u32 %v6737, 2147483648
  %v6753 = vmul.f32 %v6752, 1.442695
  %v6754 = vpow.pop %v6753
  %v6755 = vadd.f32 %v6754, 1.0
  %v6756 = vrcp.pop %v6755
  %v6757 = vmul.f32 1.0, %v6756
  %v6758 = vmul.f32 %v6750, %v6738
  %v6759 = vmul.f32 %v6744, %v6751
  %v6760 = vadd.f32 %v6758, %v6759
  %v6761 = vtanh.pop %v6760
  %v6762 = vmul.f32 %v6757, %v6761
  %6763 = vst [vmem:[#allocation2] sm:$0xff] %v6762
  %6764 = vst [vmem:[#allocation3] sm:$0xff] %v6760
  %v6765 = vpack.c.bf16 %v6762, %v6762
  %v6766 = vld [vmem:[%s2] sm:$0xff]
  %v6767 = vld [vmem:[%s2 + $0x8] sm:$0xff]
  %v6768 = vld [vmem:[%s2 + $0x10] sm:$0xff]
  %v6769 = vld [vmem:[%s2 + $0x18] sm:$0xff]
  %v6770 = vld [vmem:[%s2 + $0x20] sm:$0xff]
  %v6771 = vld [vmem:[%s2 + $0x28] sm:$0xff]
  %v6772 = vld [vmem:[%s2 + $0x30] sm:$0xff]
  %v6773 = vld [vmem:[%s2 + $0x38] sm:$0xff]
  %v6774 = vld [vmem:[%s2 + $0x40] sm:$0xff]
  %v6775 = vld [vmem:[%s2 + $0x48] sm:$0xff]
  %v6776 = vld [vmem:[%s2 + $0x50] sm:$0xff]
  %v6777 = vld [vmem:[%s2 + $0x58] sm:$0xff]
  %v6778 = vld [vmem:[%s2 + $0x60] sm:$0xff]
  %v6779 = vld [vmem:[%s2 + $0x68] sm:$0xff]
  %v6780 = vld [vmem:[%s2 + $0x70] sm:$0xff]
  %v6781 = vld [vmem:[%s2 + $0x78] sm:$0xff]
  %v6782 = vld [vmem:[%s2 + $0x80] sm:$0xff]
  %v6783 = vld [vmem:[%s2 + $0x88] sm:$0xff]
  %v6784 = vld [vmem:[%s2 + $0x90] sm:$0xff]
  %v6785 = vld [vmem:[%s2 + $0x98] sm:$0xff]
  %v6786 = vld [vmem:[%s2 + $0xa0] sm:$0xff]
  %v6787 = vld [vmem:[%s2 + $0xa8] sm:$0xff]
  %v6788 = vld [vmem:[%s2 + $0xb0] sm:$0xff]
  %v6789 = vld [vmem:[%s2 + $0xb8] sm:$0xff]
  %v6790 = vld [vmem:[%s2 + $0xc0] sm:$0xff]
  %v6791 = vld [vmem:[%s2 + $0xc8] sm:$0xff]
  %v6792 = vld [vmem:[%s2 + $0xd0] sm:$0xff]
  %v6793 = vld [vmem:[%s2 + $0xd8] sm:$0xff]
  %v6794 = vld [vmem:[%s2 + $0xe0] sm:$0xff]
  %v6795 = vld [vmem:[%s2 + $0xe8] sm:$0xff]
  %v6796 = vld [vmem:[%s2 + $0xf0] sm:$0xff]
  %v6797 = vld [vmem:[%s2 + $0xf8] sm:$0xff]
  %v6798 = vld [vmem:[#allocation4] sm:$0xff]
  %v6799 = vpack.c.bf16 %v6798, %v6798
  %v6800 = vld [vmem:[%s3] sm:$0xff]
  %v6801 = vld [vmem:[%s3 + $0x8] sm:$0xff]
  %v6802 = vld [vmem:[%s3 + $0x10] sm:$0xff]
  %v6803 = vld [vmem:[%s3 + $0x18] sm:$0xff]
  %v6804 = vld [vmem:[%s3 + $0x20] sm:$0xff]
  %v6805 = vld [vmem:[%s3 + $0x28] sm:$0xff]
  %v6806 = vld [vmem:[%s3 + $0x30] sm:$0xff]
  %v6807 = vld [vmem:[%s3 + $0x38] sm:$0xff]
  %v6808 = vld [vmem:[%s3 + $0x40] sm:$0xff]
  %v6809 = vld [vmem:[%s3 + $0x48] sm:$0xff]
  %v6810 = vld [vmem:[%s3 + $0x50] sm:$0xff]
  %v6811 = vld [vmem:[%s3 + $0x58] sm:$0xff]
  %v6812 = vld [vmem:[%s3 + $0x60] sm:$0xff]
  %v6813 = vld [vmem:[%s3 + $0x68] sm:$0xff]
  %v6814 = vld [vmem:[%s3 + $0x70] sm:$0xff]
  %v6815 = vld [vmem:[%s3 + $0x78] sm:$0xff]
  %v6816 = vld [vmem:[%s3 + $0x80] sm:$0xff]
  %v6817 = vld [vmem:[%s3 + $0x88] sm:$0xff]
  %v6818 = vld [vmem:[%s3 + $0x90] sm:$0xff]
  %v6819 = vld [vmem:[%s3 + $0x98] sm:$0xff]
  %v6820 = vld [vmem:[%s3 + $0xa0] sm:$0xff]
  %v6821 = vld [vmem:[%s3 + $0xa8] sm:$0xff]
  %v6822 = vld [vmem:[%s3 + $0xb0] sm:$0xff]
  %v6823 = vld [vmem:[%s3 + $0xb8] sm:$0xff]
  %v6824 = vld [vmem:[%s3 + $0xc0] sm:$0xff]
  %v6825 = vld [vmem:[%s3 + $0xc8] sm:$0xff]
  %v6826 = vld [vmem:[%s3 + $0xd0] sm:$0xff]
  %v6827 = vld [vmem:[%s3 + $0xd8] sm:$0xff]
  %v6828 = vld [vmem:[%s3 + $0xe0] sm:$0xff]
  %v6829 = vld [vmem:[%s3 + $0xe8] sm:$0xff]
  %v6830 = vld [vmem:[%s3 + $0xf0] sm:$0xff]
  %v6831 = vld [vmem:[%s3 + $0xf8] sm:$0xff]
  %v6864 = vunpack.c.l.b16 %v6800
  %v6865 = vunpack.c.h.b16 %v6800
  %v6866 = vunpack.c.l.b16 %v6801
  %v6867 = vunpack.c.h.b16 %v6801
  %v6868 = vunpack.c.l.b16 %v6802
  %v6869 = vunpack.c.h.b16 %v6802
  %v6870 = vunpack.c.l.b16 %v6803
  %v6871 = vunpack.c.h.b16 %v6803
  %v6872 = vunpack.c.l.b16 %v6804
  %v6873 = vunpack.c.h.b16 %v6804
  %v6874 = vunpack.c.l.b16 %v6805
  %v6875 = vunpack.c.h.b16 %v6805
  %v6876 = vunpack.c.l.b16 %v6806
  %v6877 = vunpack.c.h.b16 %v6806
  %v6878 = vunpack.c.l.b16 %v6807
  %v6879 = vunpack.c.h.b16 %v6807
  %v6880 = vunpack.c.l.b16 %v6808
  %v6881 = vunpack.c.h.b16 %v6808
  %v6882 = vunpack.c.l.b16 %v6809
  %v6883 = vunpack.c.h.b16 %v6809
  %v6884 = vunpack.c.l.b16 %v6810
  %v6885 = vunpack.c.h.b16 %v6810
  %v6886 = vunpack.c.l.b16 %v6811
  %v6887 = vunpack.c.h.b16 %v6811
  %v6888 = vunpack.c.l.b16 %v6812
  %v6889 = vunpack.c.h.b16 %v6812
  %v6890 = vunpack.c.l.b16 %v6813
  %v6891 = vunpack.c.h.b16 %v6813
  %v6892 = vunpack.c.l.b16 %v6814
  %v6893 = vunpack.c.h.b16 %v6814
  %v6894 = vunpack.c.l.b16 %v6815
  %v6895 = vunpack.c.h.b16 %v6815
  %v6896 = vunpack.c.l.b16 %v6816
  %v6897 = vunpack.c.h.b16 %v6816
  %v6898 = vunpack.c.l.b16 %v6817
  %v6899 = vunpack.c.h.b16 %v6817
  %v6900 = vunpack.c.l.b16 %v6818
  %v6901 = vunpack.c.h.b16 %v6818
  %v6902 = vunpack.c.l.b16 %v6819
  %v6903 = vunpack.c.h.b16 %v6819
  %v6904 = vunpack.c.l.b16 %v6820
  %v6905 = vunpack.c.h.b16 %v6820
  %v6906 = vunpack.c.l.b16 %v6821
  %v6907 = vunpack.c.h.b16 %v6821
  %v6908 = vunpack.c.l.b16 %v6822
  %v6909 = vunpack.c.h.b16 %v6822
  %v6910 = vunpack.c.l.b16 %v6823
  %v6911 = vunpack.c.h.b16 %v6823
  %v6912 = vunpack.c.l.b16 %v6824
  %v6913 = vunpack.c.h.b16 %v6824
  %v6914 = vunpack.c.l.b16 %v6825
  %v6915 = vunpack.c.h.b16 %v6825
  %v6916 = vunpack.c.l.b16 %v6826
  %v6917 = vunpack.c.h.b16 %v6826
  %v6918 = vunpack.c.l.b16 %v6827
  %v6919 = vunpack.c.h.b16 %v6827
  %v6920 = vunpack.c.l.b16 %v6828
  %v6921 = vunpack.c.h.b16 %v6828
  %v6922 = vunpack.c.l.b16 %v6829
  %v6923 = vunpack.c.h.b16 %v6829
  %v6924 = vunpack.c.l.b16 %v6830
  %v6925 = vunpack.c.h.b16 %v6830
  %v6926 = vunpack.c.l.b16 %v6831
  %v6927 = vunpack.c.h.b16 %v6831
  %v6928 = vpack.c.b16 %v6868, %v6864
  %v6929 = vpack.c.b16 %v6869, %v6865
  %v6930 = vpack.c.b16 %v6870, %v6866
  %v6931 = vpack.c.b16 %v6871, %v6867
  %v6932 = vpack.c.b16 %v6876, %v6872
  %v6933 = vpack.c.b16 %v6877, %v6873
  %v6934 = vpack.c.b16 %v6878, %v6874
  %v6935 = vpack.c.b16 %v6879, %v6875
  %v6936 = vpack.c.b16 %v6884, %v6880
  %v6937 = vpack.c.b16 %v6885, %v6881
  %v6938 = vpack.c.b16 %v6886, %v6882
  %v6939 = vpack.c.b16 %v6887, %v6883
  %v6940 = vpack.c.b16 %v6892, %v6888
  %v6941 = vpack.c.b16 %v6893, %v6889
  %v6942 = vpack.c.b16 %v6894, %v6890
  %v6943 = vpack.c.b16 %v6895, %v6891
  %v6944 = vpack.c.b16 %v6900, %v6896
  %v6945 = vpack.c.b16 %v6901, %v6897
  %v6946 = vpack.c.b16 %v6902, %v6898
  %v6947 = vpack.c.b16 %v6903, %v6899
  %v6948 = vpack.c.b16 %v6908, %v6904
  %v6949 = vpack.c.b16 %v6909, %v6905
  %v6950 = vpack.c.b16 %v6910, %v6906
  %v6951 = vpack.c.b16 %v6911, %v6907
  %v6952 = vpack.c.b16 %v6916, %v6912
  %v6953 = vpack.c.b16 %v6917, %v6913
  %v6954 = vpack.c.b16 %v6918, %v6914
  %v6955 = vpack.c.b16 %v6919, %v6915
  %v6956 = vpack.c.b16 %v6924, %v6920
  %v6957 = vpack.c.b16 %v6925, %v6921
  %v6958 = vpack.c.b16 %v6926, %v6922
  %v6959 = vpack.c.b16 %v6927, %v6923
  %6992 = vmatprep.subr.bf16.mxu0 %v6929
  %6993 = vmatpush1.bf16.msra.mxu0 %v6928
  %6994 = vmatprep.subr.bf16.mxu0 %v6933
  %6995 = vmatpush1.bf16.msra.mxu0 %v6932
  %6996 = vmatprep.subr.bf16.mxu0 %v6937
  %6997 = vmatpush1.bf16.msra.mxu0 %v6936
  %6998 = vmatprep.subr.bf16.mxu0 %v6941
  %6999 = vmatpush1.bf16.msra.mxu0 %v6940
  %7000 = vmatprep.subr.bf16.mxu0 %v6945
  %7001 = vmatpush1.bf16.msra.mxu0 %v6944
  %7002 = vmatprep.subr.bf16.mxu0 %v6949
  %7003 = vmatpush1.bf16.msra.mxu0 %v6948
  %7004 = vmatprep.subr.bf16.mxu0 %v6953
  %7005 = vmatpush1.bf16.msra.mxu0 %v6952
  %7006 = vmatprep.subr.bf16.mxu0 %v6957
  %7007 = vmatpush1.bf16.msra.mxu0 %v6956
  %7008 = vmatprep.subr.bf16.mxu0 0
  %7009 = vmatpush1.bf16.msra.mxu0 0
  %7010 = vmatprep.subr.bf16.mxu0 0
  %7011 = vmatpush1.bf16.msra.mxu0 0
  %7012 = vmatprep.subr.bf16.mxu0 0
  %7013 = vmatpush1.bf16.msra.mxu0 0
  %7014 = vmatprep.subr.bf16.mxu0 0
  %7015 = vmatpush1.bf16.msra.mxu0 0
  %7016 = vmatprep.subr.bf16.mxu0 0
  %7017 = vmatpush1.bf16.msra.mxu0 0
  %7018 = vmatprep.subr.bf16.mxu0 0
  %7019 = vmatpush1.bf16.msra.mxu0 0
  %7020 = vmatprep.subr.bf16.mxu0 0
  %7021 = vmatpush1.bf16.msra.mxu0 0
  %7022 = vmatprep.subr.bf16.mxu0 0
  %7023 = vmatpush1.bf16.msra.mxu0 0
  %7024 = vmatprep.mubr.bf16.mxu0 0
  %7025 = vmatmul.mubr.bf16.gmra.mrb[0].mxu0 %v6799
  %v7026 = vpop.f32.mrb[0].mxu0
  %v7027 = vadd.f32 0.0, %v7026
  %v7028 = vpop.f32.mrb[0].mxu0
  %v7029 = vadd.f32 0.0, %v7028
  %v7030 = vpop.f32.mrb[0].mxu0
  %v7031 = vpop.f32.mrb[0].mxu0
  %7032 = vdwg.mxu0
  %7033 = vmatprep.subr.bf16.mxu0 %v6931
  %7034 = vmatpush1.bf16.msra.mxu0 %v6930
  %7035 = vmatprep.subr.bf16.mxu0 %v6935
  %7036 = vmatpush1.bf16.msra.mxu0 %v6934
  %7037 = vmatprep.subr.bf16.mxu0 %v6939
  %7038 = vmatpush1.bf16.msra.mxu0 %v6938
  %7039 = vmatprep.subr.bf16.mxu0 %v6943
  %7040 = vmatpush1.bf16.msra.mxu0 %v6942
  %7041 = vmatprep.subr.bf16.mxu0 %v6947
  %7042 = vmatpush1.bf16.msra.mxu0 %v6946
  %7043 = vmatprep.subr.bf16.mxu0 %v6951
  %7044 = vmatpush1.bf16.msra.mxu0 %v6950
  %7045 = vmatprep.subr.bf16.mxu0 %v6955
  %7046 = vmatpush1.bf16.msra.mxu0 %v6954
  %7047 = vmatprep.subr.bf16.mxu0 %v6959
  %7048 = vmatpush1.bf16.msra.mxu0 %v6958
  %7049 = vmatprep.subr.bf16.mxu0 0
  %7050 = vmatpush1.bf16.msra.mxu0 0
  %7051 = vmatprep.subr.bf16.mxu0 0
  %7052 = vmatpush1.bf16.msra.mxu0 0
  %7053 = vmatprep.subr.bf16.mxu0 0
  %7054 = vmatpush1.bf16.msra.mxu0 0
  %7055 = vmatprep.subr.bf16.mxu0 0
  %7056 = vmatpush1.bf16.msra.mxu0 0
  %7057 = vmatprep.subr.bf16.mxu0 0
  %7058 = vmatpush1.bf16.msra.mxu0 0
  %7059 = vmatprep.subr.bf16.mxu0 0
  %7060 = vmatpush1.bf16.msra.mxu0 0
  %7061 = vmatprep.subr.bf16.mxu0 0
  %7062 = vmatpush1.bf16.msra.mxu0 0
  %7063 = vmatprep.subr.bf16.mxu0 0
  %7064 = vmatpush1.bf16.msra.mxu0 0
  %7065 = vmatprep.mubr.bf16.mxu0 0
  %7066 = vmatmul.mubr.bf16.gmra.mrb[0].mxu0 %v6799
  %v7067 = vpop.f32.mrb[0].mxu0
  %v7068 = vadd.f32 0.0, %v7067
  %v7069 = vpop.f32.mrb[0].mxu0
  %v7070 = vadd.f32 0.0, %v7069
  %v7071 = vpop.f32.mrb[0].mxu0
  %v7072 = vpop.f32.mrb[0].mxu0
  %7073 = vdwg.mxu0
  %v7106 = vunpack.c.l.b16 %v6766
  %v7107 = vunpack.c.h.b16 %v6766
  %v7108 = vunpack.c.l.b16 %v6767
  %v7109 = vunpack.c.h.b16 %v6767
  %v7110 = vunpack.c.l.b16 %v6768
  %v7111 = vunpack.c.h.b16 %v6768
  %v7112 = vunpack.c.l.b16 %v6769
  %v7113 = vunpack.c.h.b16 %v6769
  %v7114 = vunpack.c.l.b16 %v6770
  %v7115 = vunpack.c.h.b16 %v6770
  %v7116 = vunpack.c.l.b16 %v6771
  %v7117 = vunpack.c.h.b16 %v6771
  %v7118 = vunpack.c.l.b16 %v6772
  %v7119 = vunpack.c.h.b16 %v6772
  %v7120 = vunpack.c.l.b16 %v6773
  %v7121 = vunpack.c.h.b16 %v6773
  %v7122 = vunpack.c.l.b16 %v6774
  %v7123 = vunpack.c.h.b16 %v6774
  %v7124 = vunpack.c.l.b16 %v6775
  %v7125 = vunpack.c.h.b16 %v6775
  %v7126 = vunpack.c.l.b16 %v6776
  %v7127 = vunpack.c.h.b16 %v6776
  %v7128 = vunpack.c.l.b16 %v6777
  %v7129 = vunpack.c.h.b16 %v6777
  %v7130 = vunpack.c.l.b16 %v6778
  %v7131 = vunpack.c.h.b16 %v6778
  %v7132 = vunpack.c.l.b16 %v6779
  %v7133 = vunpack.c.h.b16 %v6779
  %v7134 = vunpack.c.l.b16 %v6780
  %v7135 = vunpack.c.h.b16 %v6780
  %v7136 = vunpack.c.l.b16 %v6781
  %v7137 = vunpack.c.h.b16 %v6781
  %v7138 = vunpack.c.l.b16 %v6782
  %v7139 = vunpack.c.h.b16 %v6782
  %v7140 = vunpack.c.l.b16 %v6783
  %v7141 = vunpack.c.h.b16 %v6783
  %v7142 = vunpack.c.l.b16 %v6784
  %v7143 = vunpack.c.h.b16 %v6784
  %v7144 = vunpack.c.l.b16 %v6785
  %v7145 = vunpack.c.h.b16 %v6785
  %v7146 = vunpack.c.l.b16 %v6786
  %v7147 = vunpack.c.h.b16 %v6786
  %v7148 = vunpack.c.l.b16 %v6787
  %v7149 = vunpack.c.h.b16 %v6787
  %v7150 = vunpack.c.l.b16 %v6788
  %v7151 = vunpack.c.h.b16 %v6788
  %v7152 = vunpack.c.l.b16 %v6789
  %v7153 = vunpack.c.h.b16 %v6789
  %v7154 = vunpack.c.l.b16 %v6790
  %v7155 = vunpack.c.h.b16 %v6790
  %v7156 = vunpack.c.l.b16 %v6791
  %v7157 = vunpack.c.h.b16 %v6791
  %v7158 = vunpack.c.l.b16 %v6792
  %v7159 = vunpack.c.h.b16 %v6792
  %v7160 = vunpack.c.l.b16 %v6793
  %v7161 = vunpack.c.h.b16 %v6793
  %v7162 = vunpack.c.l.b16 %v6794
  %v7163 = vunpack.c.h.b16 %v6794
  %v7164 = vunpack.c.l.b16 %v6795
  %v7165 = vunpack.c.h.b16 %v6795
  %v7166 = vunpack.c.l.b16 %v6796
  %v7167 = vunpack.c.h.b16 %v6796
  %v7168 = vunpack.c.l.b16 %v6797
  %v7169 = vunpack.c.h.b16 %v6797
  %v7170 = vpack.c.b16 %v7110, %v7106
  %v7171 = vpack.c.b16 %v7111, %v7107
  %v7172 = vpack.c.b16 %v7112, %v7108
  %v7173 = vpack.c.b16 %v7113, %v7109
  %v7174 = vpack.c.b16 %v7118, %v7114
  %v7175 = vpack.c.b16 %v7119, %v7115
  %v7176 = vpack.c.b16 %v7120, %v7116
  %v7177 = vpack.c.b16 %v7121, %v7117
  %v7178 = vpack.c.b16 %v7126, %v7122
  %v7179 = vpack.c.b16 %v7127, %v7123
  %v7180 = vpack.c.b16 %v7128, %v7124
  %v7181 = vpack.c.b16 %v7129, %v7125
  %v7182 = vpack.c.b16 %v7134, %v7130
  %v7183 = vpack.c.b16 %v7135, %v7131
  %v7184 = vpack.c.b16 %v7136, %v7132
  %v7185 = vpack.c.b16 %v7137, %v7133
  %v7186 = vpack.c.b16 %v7142, %v7138
  %v7187 = vpack.c.b16 %v7143, %v7139
  %v7188 = vpack.c.b16 %v7144, %v7140
  %v7189 = vpack.c.b16 %v7145, %v7141
  %v7190 = vpack.c.b16 %v7150, %v7146
  %v7191 = vpack.c.b16 %v7151, %v7147
  %v7192 = vpack.c.b16 %v7152, %v7148
  %v7193 = vpack.c.b16 %v7153, %v7149
  %v7194 = vpack.c.b16 %v7158, %v7154
  %v7195 = vpack.c.b16 %v7159, %v7155
  %v7196 = vpack.c.b16 %v7160, %v7156
  %v7197 = vpack.c.b16 %v7161, %v7157
  %v7198 = vpack.c.b16 %v7166, %v7162
  %v7199 = vpack.c.b16 %v7167, %v7163
  %v7200 = vpack.c.b16 %v7168, %v7164
  %v7201 = vpack.c.b16 %v7169, %v7165
  %7234 = vmatprep.subr.bf16.mxu0 %v7171
  %7235 = vmatpush1.bf16.msra.mxu0 %v7170
  %7236 = vmatprep.subr.bf16.mxu0 %v7175
  %7237 = vmatpush1.bf16.msra.mxu0 %v7174
  %7238 = vmatprep.subr.bf16.mxu0 %v7179
  %7239 = vmatpush1.bf16.msra.mxu0 %v7178
  %7240 = vmatprep.subr.bf16.mxu0 %v7183
  %7241 = vmatpush1.bf16.msra.mxu0 %v7182
  %7242 = vmatprep.subr.bf16.mxu0 %v7187
  %7243 = vmatpush1.bf16.msra.mxu0 %v7186
  %7244 = vmatprep.subr.bf16.mxu0 %v7191
  %7245 = vmatpush1.bf16.msra.mxu0 %v7190
  %7246 = vmatprep.subr.bf16.mxu0 %v7195
  %7247 = vmatpush1.bf16.msra.mxu0 %v7194
  %7248 = vmatprep.subr.bf16.mxu0 %v7199
  %7249 = vmatpush1.bf16.msra.mxu0 %v7198
  %7250 = vmatprep.subr.bf16.mxu0 0
  %7251 = vmatpush1.bf16.msra.mxu0 0
  %7252 = vmatprep.subr.bf16.mxu0 0
  %7253 = vmatpush1.bf16.msra.mxu0 0
  %7254 = vmatprep.subr.bf16.mxu0 0
  %7255 = vmatpush1.bf16.msra.mxu0 0
  %7256 = vmatprep.subr.bf16.mxu0 0
  %7257 = vmatpush1.bf16.msra.mxu0 0
  %7258 = vmatprep.subr.bf16.mxu0 0
  %7259 = vmatpush1.bf16.msra.mxu0 0
  %7260 = vmatprep.subr.bf16.mxu0 0
  %7261 = vmatpush1.bf16.msra.mxu0 0
  %7262 = vmatprep.subr.bf16.mxu0 0
  %7263 = vmatpush1.bf16.msra.mxu0 0
  %7264 = vmatprep.subr.bf16.mxu0 0
  %7265 = vmatpush1.bf16.msra.mxu0 0
  %7266 = vmatprep.mubr.bf16.mxu0 0
  %7267 = vmatmul.mubr.bf16.gmra.mrb[0].mxu0 %v6765
  %v7268 = vpop.f32.mrb[0].mxu0
  %v7269 = vadd.f32 %v7027, %v7268
  %v7270 = vpop.f32.mrb[0].mxu0
  %v7271 = vadd.f32 %v7029, %v7270
  %v7272 = vpop.f32.mrb[0].mxu0
  %v7273 = vpop.f32.mrb[0].mxu0
  %7274 = vdwg.mxu0
  %7275 = vmatprep.subr.bf16.mxu0 %v7173
  %7276 = vmatpush1.bf16.msra.mxu0 %v7172
  %7277 = vmatprep.subr.bf16.mxu0 %v7177
  %7278 = vmatpush1.bf16.msra.mxu0 %v7176
  %7279 = vmatprep.subr.bf16.mxu0 %v7181
  %7280 = vmatpush1.bf16.msra.mxu0 %v7180
  %7281 = vmatprep.subr.bf16.mxu0 %v7185
  %7282 = vmatpush1.bf16.msra.mxu0 %v7184
  %7283 = vmatprep.subr.bf16.mxu0 %v7189
  %7284 = vmatpush1.bf16.msra.mxu0 %v7188
  %7285 = vmatprep.subr.bf16.mxu0 %v7193
  %7286 = vmatpush1.bf16.msra.mxu0 %v7192
  %7287 = vmatprep.subr.bf16.mxu0 %v7197
  %7288 = vmatpush1.bf16.msra.mxu0 %v7196
  %7289 = vmatprep.subr.bf16.mxu0 %v7201
  %7290 = vmatpush1.bf16.msra.mxu0 %v7200
  %7291 = vmatprep.subr.bf16.mxu0 0
  %7292 = vmatpush1.bf16.msra.mxu0 0
  %7293 = vmatprep.subr.bf16.mxu0 0
  %7294 = vmatpush1.bf16.msra.mxu0 0
  %7295 = vmatprep.subr.bf16.mxu0 0
  %7296 = vmatpush1.bf16.msra.mxu0 0
  %7297 = vmatprep.subr.bf16.mxu0 0
  %7298 = vmatpush1.bf16.msra.mxu0 0
  %7299 = vmatprep.subr.bf16.mxu0 0
  %7300 = vmatpush1.bf16.msra.mxu0 0
  %7301 = vmatprep.subr.bf16.mxu0 0
  %7302 = vmatpush1.bf16.msra.mxu0 0
  %7303 = vmatprep.subr.bf16.mxu0 0
  %7304 = vmatpush1.bf16.msra.mxu0 0
  %7305 = vmatprep.subr.bf16.mxu0 0
  %7306 = vmatpush1.bf16.msra.mxu0 0
  %7307 = vmatprep.mubr.bf16.mxu0 0
  %7308 = vmatmul.mubr.bf16.gmra.mrb[0].mxu0 %v6765
  %v7309 = vpop.f32.mrb[0].mxu0
  %v7310 = vadd.f32 %v7068, %v7309
  %v7311 = vpop.f32.mrb[0].mxu0
  %v7312 = vadd.f32 %v7070, %v7311
  %v7313 = vpop.f32.mrb[0].mxu0
  %v7314 = vpop.f32.mrb[0].mxu0
  %7315 = vdwg.mxu0
  %v7316 = vld [vmem:[%s4] sm:$0xf]
  %v7318 = vlaneseq
  %v7319 = vshrl.u32 %v7318, 7
  %v7320 = vsub.s32 0, %v7319
  %v7321 = vrot.slane %v7316, %v7320
  %v7322 = vlaneseq
  %v7323 = vshrl.u32 %v7322, 7
  %v7324 = vsub.s32 1, %v7323
  %v7325 = vrot.slane %v7316, %v7324
  %v7326 = vlaneseq
  %v7327 = vshrl.u32 %v7326, 7
  %v7328 = vsub.s32 2, %v7327
  %v7329 = vrot.slane %v7316, %v7328
  %v7330 = vlaneseq
  %v7331 = vshrl.u32 %v7330, 7
  %v7332 = vsub.s32 3, %v7331
  %v7333 = vrot.slane %v7316, %v7332
  %v7338 = vadd.f32 %v7269, %v7321
  %v7339 = vadd.f32 %v7271, %v7325
  %v7340 = vadd.f32 %v7310, %v7329
  %v7341 = vadd.f32 %v7312, %v7333
  %v7342 = vld [vmem:[#allocation5] sm:$0xff]
  %v7343 = vxor.u32 %v7338, 2147483648
  %v7344 = vmul.f32 %v7343, 1.442695
  %v7345 = vpow.pop %v7344
  %v7346 = vadd.f32 %v7345, 1.0
  %v7347 = vrcp.pop %v7346
  %v7348 = vmul.f32 1.0, %v7347
  %v7349 = vxor.u32 %v7339, 2147483648
  %v7350 = vmul.f32 %v7349, 1.442695
  %v7351 = vpow.pop %v7350
  %v7352 = vadd.f32 %v7351, 1.0
  %v7353 = vrcp.pop %v7352
  %v7354 = vmul.f32 1.0, %v7353
  %v7355 = vtanh.pop %v7340
  %v7356 = vxor.u32 %v7341, 2147483648
  %v7357 = vmul.f32 %v7356, 1.442695
  %v7358 = vpow.pop %v7357
  %v7359 = vadd.f32 %v7358, 1.0
  %v7360 = vrcp.pop %v7359
  %v7361 = vmul.f32 1.0, %v7360
  %v7362 = vmul.f32 %v7354, %v7342
  %v7363 = vmul.f32 %v7348, %v7355
  %v7364 = vadd.f32 %v7362, %v7363
  %v7365 = vtanh.pop %v7364
  %v7366 = vmul.f32 %v7361, %v7365
  %7367 = vst [vmem:[#allocation4] sm:$0xff] %v7366
  %7368 = vst [vmem:[#allocation5] sm:$0xff] %v7364
  %s7369 = scalar_lea.vmem %s5, 56
  %7370 = vst [vmem:[%s7369] sm:$0xff] %v7366
  // Predicated region
  $region26: #{multi_layer_lstm.1} parent=0 // pred_check
    _
  $region27: #{multi_layer_lstm.1} parent=0 // pred_check_branch
    %7372 = sbr.rel (0) target = $region29
  $region28: #{multi_layer_lstm.1} parent=0 // pred_region
    _
  $region29: #{multi_layer_lstm.1} parent=0 // pred_fallthru
    _
  // Predicated region
  $region30: #{multi_layer_lstm.1} parent=0 // pred_check
    _
  $region31: #{multi_layer_lstm.1} parent=0 // pred_check_branch
    %7374 = sbr.rel (0) target = $region33
  $region32: #{multi_layer_lstm.1} parent=0 // pred_region
    _
  $region33: #{multi_layer_lstm.1} parent=0 // pred_fallthru
    _

</llo_original>
